<compile_context>
chip_gen: v5e
topology: v5e:2x2
jax: 0.10.0
libtpu: 0.0.40
codegen_flags: <defaults>
</compile_context>

<pallas_src>
import random

import jax
import jax.numpy as jnp
from jax import lax
from jax.experimental import pallas as pl
from jax.experimental.pallas import tpu as pltpu

# static sizes implied by the module
C_IN, G, H, W = 64, 16, 7, 7
P_OUT, L_OUT = 32, 32          # outputs of weights[1] and weights[0]
HW = H * W                     # 49 (h,w) positions
HWP = 64                       # (h,w) block padded to 64 lanes (lane-aligned blocks)
NCOL = P_OUT * HWP             # 2048 = stage-2 / output column count
N_TAPS = 9                     # 3x3 taps from the two unfolds
K2 = N_TAPS * G                # 144 = contraction depth of the tap matmul


# ------------------------------------------------------------------ fused kernel
def _fused_kernel(x_ref, w2_ref, w1f_ref, o_ref, t_scr, r_scr):
    # ---- stage 1: t4[p, g*64+hw] = sum_c W2[p,c] * x[c, g*64+hw]  (one MXU matmul) ----
    t4 = jnp.dot(w2_ref[...], x_ref[...], preferred_element_type=jnp.float32)  # (32, 1024)

    # ---- relayout (p, (g,hw)) -> (g, (p,hw)) with lane-aligned 64-wide strips ----
    # T[g, p*64+hw] = t4[p, g*64+hw]; every strip is a 64-lane, 64-aligned block.
    for p in range(P_OUT):
        src_row = t4[p:p + 1, :]                                     # (1, 1024)
        for g in range(G):
            t_scr[g:g + 1, pl.ds(p * HWP, HWP)] = src_row[:, g * HWP:(g + 1) * HWP]

    # ---- per-lane coordinates, hoisted once (static lane patterns) ----
    lane = lax.broadcasted_iota(jnp.int32, (1, NCOL), 1)
    hw = lane % HWP            # position inside the 64-lane (h,w) block
    wpos = hw % W              # w index (only meaningful where hw < 49)
    in_img = hw < HW           # real (h,w) lanes vs padding lanes

    T = t_scr[...]                                                   # (16, 2048)

    # ---- build R[(j*3+k)*16+g, p*64+hw] = T[g, p*64+hw+s] * mask  (full-width rolls) ----
    # Wrap-around / cross-block lanes of the cyclic roll only land on lanes that are
    # masked (padding lanes or w+s out of range), so correctness is preserved.
    for j in range(3):
        for k in range(3):
            s = j + k - 2                                            # w shift of this tap
            lo = max(0, 1 - k, -s)                                   # combined unfold masks
            hi = min(W - 1, W - k, W - 1 - s)
            valid = in_img & (wpos >= lo) & (wpos <= hi)             # (1, 2048)
            rolled = pltpu.roll(T, shift=(-s) % NCOL, axis=1) if s != 0 else T
            t_idx = j * 3 + k
            r_scr[pl.ds(t_idx * G, G), :] = jnp.where(valid, rolled, 0.0)

    # ---- stage 2: out[l, p*64+hw] = W1_flat @ R  (one MXU matmul, K=144) ----
    o_ref[...] = jnp.dot(w1f_ref[...], r_scr[...], preferred_element_type=jnp.float32)


# ------------------------------------------------------------------ wrapper
def forward(x, w1, w2, shift_direction):
    # torch.roll along h commutes with the whole pipeline (every stage is pointwise
    # in h), so it is applied to the input here and folded into the XLA input copy.
    x5 = x.reshape(C_IN, G, H, W)
    x5 = jnp.roll(x5, shift_direction, axis=2)
    # pad each 49-lane (h,w) block to 64 lanes -> all in-kernel accesses lane-aligned
    x5 = x5.reshape(C_IN, G, HW)
    x5 = jnp.pad(x5, ((0, 0), (0, 0), (0, HWP - HW)))
    x_mat = x5.reshape(C_IN, G * HWP)                                # (64, 1024)

    # W1 (l,g,j,k) -> (32,144) [l, (j,k,g)]  (tiny weight reorder, matches R's rows)
    w1f = jnp.transpose(w1, (0, 2, 3, 1)).reshape(L_OUT, K2)

    out = pl.pallas_call(
        _fused_kernel,
        out_shape=jax.ShapeDtypeStruct((L_OUT, NCOL), jnp.float32),
        grid=(1,),
        in_specs=[
            pl.BlockSpec((C_IN, G * HWP), lambda i: (0, 0)),
            pl.BlockSpec((P_OUT, C_IN), lambda i: (0, 0)),
            pl.BlockSpec((L_OUT, K2), lambda i: (0, 0)),
        ],
        out_specs=pl.BlockSpec((L_OUT, NCOL), lambda i: (0, 0)),
        scratch_shapes=[
            pltpu.VMEM((G, NCOL), jnp.float32),      # T,  [g, (p,hw)]
            pltpu.VMEM((K2, NCOL), jnp.float32),     # R,  [(j,k,g), (p,hw)]
        ],
        compiler_params=pltpu.CompilerParams(dimension_semantics=("arbitrary",)),
        cost_estimate=pl.CostEstimate(
            flops=2 * (P_OUT * C_IN * G * HWP + L_OUT * K2 * NCOL),
            transcendentals=0,
            bytes_accessed=4 * (C_IN * G * HWP + P_OUT * C_IN + L_OUT * K2 + L_OUT * NCOL),
        ),
    )(x_mat, w2, w1f)

    # (32, 2048) [l, p*64+hw] -> strip the 64->49 padding -> (1, 1024, 7, 7), ch = l*32+p
    out = out.reshape(L_OUT, P_OUT, HWP)[:, :, :HW]
    return out.reshape(1, L_OUT * P_OUT, H, W)


_forward_jit = jax.jit(forward, static_argnums=(3,))


# -------------------------------------------------- pure-JAX reference (torch semantics)
def reference(x, w1, w2, shift_direction):
    t3 = x.reshape(1, 64, 16, 7, 7)
    t4 = jnp.einsum('kjlmn,ij->kilmn', t3, w2, precision='highest')
    a = jnp.pad(t4.reshape(3584, 7), ((0, 0), (1, 1)))
    u1 = jnp.stack([a[:, d:d + 7] for d in range(3)], axis=1)        # (3584, 3, 7)
    b = jnp.pad(u1.reshape(10752, 7), ((0, 0), (1, 1)))
    u2 = jnp.stack([b[:, d:d + 7] for d in range(3)], axis=1)        # (10752, 3, 7)
    t5 = u2.reshape(1, 32, 16, 7, 3, 3, 7)
    t6 = jnp.einsum('mpiojkn,lijk->mlpon', t5, w1, precision='highest')
    t7 = t6.reshape(1, 1024, 7, 7)
    return jnp.roll(t7, shift_direction, axis=2)


if __name__ == "__main__":
    # deterministic replication of the module's __init__
    random.seed(0)
    shift_direction = (random.random() > 0.5) * 2 - 1                # -> +1 with seed 0

    key = jax.random.PRNGKey(0)
    k1, k2, k3 = jax.random.split(key, 3)
    w1 = jax.random.normal(k1, (32, 16, 3, 3), dtype=jnp.float32)    # weights[0]
    w2 = jax.random.normal(k2, (32, 64), dtype=jnp.float32)          # weights[1]
    x = jax.random.normal(k3, (1, 1024, 7, 7), dtype=jnp.float32)    # reshapeable to (1,64,16,7,7)

    y = jax.block_until_ready(_forward_jit(x, w1, w2, shift_direction))
    assert y.shape == (1, 1024, 7, 7), y.shape

    y_ref = reference(x, w1, w2, shift_direction)
    rel_err = jnp.max(jnp.abs(y - y_ref)) / (jnp.max(jnp.abs(y_ref)) + 1e-6)
    assert float(rel_err) < 5e-2, f"relative error too large: {float(rel_err)}"

    print("KERNEL_OK")
</pallas_src>

<mosaic_0001>
module attributes {stable_mosaic.version = 11 : i64} {
  func.func @_fused_kernel(%arg0: i32, %arg1: memref<64x1024xf32, #tpu.memory_space<vmem>>, %arg2: memref<32x64xf32, #tpu.memory_space<vmem>>, %arg3: memref<32x144xf32, #tpu.memory_space<vmem>>, %arg4: memref<32x2048xf32, #tpu.memory_space<vmem>>, %arg5: memref<16x2048xf32, #tpu.memory_space<vmem>>, %arg6: memref<144x2048xf32, #tpu.memory_space<vmem>>) attributes {dimension_semantics = [#tpu.dimension_semantics<arbitrary>], iteration_bounds = array<i64: 1>, scalar_prefetch = 0 : i64, scratch_operands = 2 : i64, tpu.core_type = #tpu.core_type<tc>, window_params = [{pipeline_mode = #tpu.pipeline_mode<synchronous>, transform_indices = @transform_0, window_bounds = array<i64: 64, 1024>}, {pipeline_mode = #tpu.pipeline_mode<synchronous>, transform_indices = @transform_1, window_bounds = array<i64: 32, 64>}, {pipeline_mode = #tpu.pipeline_mode<synchronous>, transform_indices = @transform_2, window_bounds = array<i64: 32, 144>}, {pipeline_mode = #tpu.pipeline_mode<synchronous>, transform_indices = @transform_3, window_bounds = array<i64: 32, 2048>}]} {
    %c0 = arith.constant 0 : index
    %c0_0 = arith.constant 0 : index
    %0 = vector.load %arg2[%c0, %c0_0] : memref<32x64xf32, #tpu.memory_space<vmem>>, vector<32x64xf32>
    %c0_1 = arith.constant 0 : index
    %c0_2 = arith.constant 0 : index
    %1 = vector.load %arg1[%c0_1, %c0_2] : memref<64x1024xf32, #tpu.memory_space<vmem>>, vector<64x1024xf32>
    %cst = arith.constant dense<0.000000e+00> : vector<32x1024xf32>
    %2 = tpu.matmul %0, %1, %cst {dimension_numbers = #tpu.dot_dimension_numbers<[1], [0], [0], [1], [0, 0, 1, 1], [], []>} : vector<32x64xf32>, vector<64x1024xf32>, vector<32x1024xf32> -> vector<32x1024xf32>
    %3 = vector.extract_strided_slice %2 {offsets = [0, 0], sizes = [1, 1024], strides = [1, 1]} : vector<32x1024xf32> to vector<1x1024xf32>
    %4 = vector.extract_strided_slice %3 {offsets = [0, 0], sizes = [1, 64], strides = [1, 1]} : vector<1x1024xf32> to vector<1x64xf32>
    %c0_3 = arith.constant 0 : index
    %c0_4 = arith.constant 0 : index
    %5 = vector.load %arg5[%c0_3, %c0_4] : memref<16x2048xf32, #tpu.memory_space<vmem>>, vector<1x64xf32>
    tpu.vector_store %arg5[%c0_3, %c0_4], %4 {strides = array<i32>} : memref<16x2048xf32, #tpu.memory_space<vmem>>, vector<1x64xf32>,
    %6 = vector.extract_strided_slice %3 {offsets = [0, 64], sizes = [1, 64], strides = [1, 1]} : vector<1x1024xf32> to vector<1x64xf32>
    %c1 = arith.constant 1 : index
    %c0_5 = arith.constant 0 : index
    %7 = vector.load %arg5[%c1, %c0_5] : memref<16x2048xf32, #tpu.memory_space<vmem>>, vector<1x64xf32>
    tpu.vector_store %arg5[%c1, %c0_5], %6 {strides = array<i32>} : memref<16x2048xf32, #tpu.memory_space<vmem>>, vector<1x64xf32>,
    %8 = vector.extract_strided_slice %3 {offsets = [0, 128], sizes = [1, 64], strides = [1, 1]} : vector<1x1024xf32> to vector<1x64xf32>
    %c2 = arith.constant 2 : index
    %c0_6 = arith.constant 0 : index
    %9 = vector.load %arg5[%c2, %c0_6] : memref<16x2048xf32, #tpu.memory_space<vmem>>, vector<1x64xf32>
    tpu.vector_store %arg5[%c2, %c0_6], %8 {strides = array<i32>} : memref<16x2048xf32, #tpu.memory_space<vmem>>, vector<1x64xf32>,
    %10 = vector.extract_strided_slice %3 {offsets = [0, 192], sizes = [1, 64], strides = [1, 1]} : vector<1x1024xf32> to vector<1x64xf32>
    %c3 = arith.constant 3 : index
    %c0_7 = arith.constant 0 : index
    %11 = vector.load %arg5[%c3, %c0_7] : memref<16x2048xf32, #tpu.memory_space<vmem>>, vector<1x64xf32>
    tpu.vector_store %arg5[%c3, %c0_7], %10 {strides = array<i32>} : memref<16x2048xf32, #tpu.memory_space<vmem>>, vector<1x64xf32>,
    %12 = vector.extract_strided_slice %3 {offsets = [0, 256], sizes = [1, 64], strides = [1, 1]} : vector<1x1024xf32> to vector<1x64xf32>
    %c4 = arith.constant 4 : index
    %c0_8 = arith.constant 0 : index
    %13 = vector.load %arg5[%c4, %c0_8] : memref<16x2048xf32, #tpu.memory_space<vmem>>, vector<1x64xf32>
    tpu.vector_store %arg5[%c4, %c0_8], %12 {strides = array<i32>} : memref<16x2048xf32, #tpu.memory_space<vmem>>, vector<1x64xf32>,
    %14 = vector.extract_strided_slice %3 {offsets = [0, 320], sizes = [1, 64], strides = [1, 1]} : vector<1x1024xf32> to vector<1x64xf32>
    %c5 = arith.constant 5 : index
    %c0_9 = arith.constant 0 : index
    %15 = vector.load %arg5[%c5, %c0_9] : memref<16x2048xf32, #tpu.memory_space<vmem>>, vector<1x64xf32>
    tpu.vector_store %arg5[%c5, %c0_9], %14 {strides = array<i32>} : memref<16x2048xf32, #tpu.memory_space<vmem>>, vector<1x64xf32>,
    %16 = vector.extract_strided_slice %3 {offsets = [0, 384], sizes = [1, 64], strides = [1, 1]} : vector<1x1024xf32> to vector<1x64xf32>
    %c6 = arith.constant 6 : index
    %c0_10 = arith.constant 0 : index
    %17 = vector.load %arg5[%c6, %c0_10] : memref<16x2048xf32, #tpu.memory_space<vmem>>, vector<1x64xf32>
    tpu.vector_store %arg5[%c6, %c0_10], %16 {strides = array<i32>} : memref<16x2048xf32, #tpu.memory_space<vmem>>, vector<1x64xf32>,
    %18 = vector.extract_strided_slice %3 {offsets = [0, 448], sizes = [1, 64], strides = [1, 1]} : vector<1x1024xf32> to vector<1x64xf32>
    %c7 = arith.constant 7 : index
    %c0_11 = arith.constant 0 : index
    %19 = vector.load %arg5[%c7, %c0_11] : memref<16x2048xf32, #tpu.memory_space<vmem>>, vector<1x64xf32>
    tpu.vector_store %arg5[%c7, %c0_11], %18 {strides = array<i32>} : memref<16x2048xf32, #tpu.memory_space<vmem>>, vector<1x64xf32>,
    %20 = vector.extract_strided_slice %3 {offsets = [0, 512], sizes = [1, 64], strides = [1, 1]} : vector<1x1024xf32> to vector<1x64xf32>
    %c8 = arith.constant 8 : index
    %c0_12 = arith.constant 0 : index
    %21 = vector.load %arg5[%c8, %c0_12] : memref<16x2048xf32, #tpu.memory_space<vmem>>, vector<1x64xf32>
    tpu.vector_store %arg5[%c8, %c0_12], %20 {strides = array<i32>} : memref<16x2048xf32, #tpu.memory_space<vmem>>, vector<1x64xf32>,
    %22 = vector.extract_strided_slice %3 {offsets = [0, 576], sizes = [1, 64], strides = [1, 1]} : vector<1x1024xf32> to vector<1x64xf32>
    %c9 = arith.constant 9 : index
    %c0_13 = arith.constant 0 : index
    %23 = vector.load %arg5[%c9, %c0_13] : memref<16x2048xf32, #tpu.memory_space<vmem>>, vector<1x64xf32>
    tpu.vector_store %arg5[%c9, %c0_13], %22 {strides = array<i32>} : memref<16x2048xf32, #tpu.memory_space<vmem>>, vector<1x64xf32>,
    %24 = vector.extract_strided_slice %3 {offsets = [0, 640], sizes = [1, 64], strides = [1, 1]} : vector<1x1024xf32> to vector<1x64xf32>
    %c10 = arith.constant 10 : index
    %c0_14 = arith.constant 0 : index
    %25 = vector.load %arg5[%c10, %c0_14] : memref<16x2048xf32, #tpu.memory_space<vmem>>, vector<1x64xf32>
    tpu.vector_store %arg5[%c10, %c0_14], %24 {strides = array<i32>} : memref<16x2048xf32, #tpu.memory_space<vmem>>, vector<1x64xf32>,
    %26 = vector.extract_strided_slice %3 {offsets = [0, 704], sizes = [1, 64], strides = [1, 1]} : vector<1x1024xf32> to vector<1x64xf32>
    %c11 = arith.constant 11 : index
    %c0_15 = arith.constant 0 : index
    %27 = vector.load %arg5[%c11, %c0_15] : memref<16x2048xf32, #tpu.memory_space<vmem>>, vector<1x64xf32>
    tpu.vector_store %arg5[%c11, %c0_15], %26 {strides = array<i32>} : memref<16x2048xf32, #tpu.memory_space<vmem>>, vector<1x64xf32>,
    %28 = vector.extract_strided_slice %3 {offsets = [0, 768], sizes = [1, 64], strides = [1, 1]} : vector<1x1024xf32> to vector<1x64xf32>
    %c12 = arith.constant 12 : index
    %c0_16 = arith.constant 0 : index
    %29 = vector.load %arg5[%c12, %c0_16] : memref<16x2048xf32, #tpu.memory_space<vmem>>, vector<1x64xf32>
    tpu.vector_store %arg5[%c12, %c0_16], %28 {strides = array<i32>} : memref<16x2048xf32, #tpu.memory_space<vmem>>, vector<1x64xf32>,
    %30 = vector.extract_strided_slice %3 {offsets = [0, 832], sizes = [1, 64], strides = [1, 1]} : vector<1x1024xf32> to vector<1x64xf32>
    %c13 = arith.constant 13 : index
    %c0_17 = arith.constant 0 : index
    %31 = vector.load %arg5[%c13, %c0_17] : memref<16x2048xf32, #tpu.memory_space<vmem>>, vector<1x64xf32>
    tpu.vector_store %arg5[%c13, %c0_17], %30 {strides = array<i32>} : memref<16x2048xf32, #tpu.memory_space<vmem>>, vector<1x64xf32>,
    %32 = vector.extract_strided_slice %3 {offsets = [0, 896], sizes = [1, 64], strides = [1, 1]} : vector<1x1024xf32> to vector<1x64xf32>
    %c14 = arith.constant 14 : index
    %c0_18 = arith.constant 0 : index
    %33 = vector.load %arg5[%c14, %c0_18] : memref<16x2048xf32, #tpu.memory_space<vmem>>, vector<1x64xf32>
    tpu.vector_store %arg5[%c14, %c0_18], %32 {strides = array<i32>} : memref<16x2048xf32, #tpu.memory_space<vmem>>, vector<1x64xf32>,
    %34 = vector.extract_strided_slice %3 {offsets = [0, 960], sizes = [1, 64], strides = [1, 1]} : vector<1x1024xf32> to vector<1x64xf32>
    %c15 = arith.constant 15 : index
    %c0_19 = arith.constant 0 : index
    %35 = vector.load %arg5[%c15, %c0_19] : memref<16x2048xf32, #tpu.memory_space<vmem>>, vector<1x64xf32>
    tpu.vector_store %arg5[%c15, %c0_19], %34 {strides = array<i32>} : memref<16x2048xf32, #tpu.memory_space<vmem>>, vector<1x64xf32>,
    %36 = vector.extract_strided_slice %2 {offsets = [1, 0], sizes = [1, 1024], strides = [1, 1]} : vector<32x1024xf32> to vector<1x1024xf32>
    %37 = vector.extract_strided_slice %36 {offsets = [0, 0], sizes = [1, 64], strides = [1, 1]} : vector<1x1024xf32> to vector<1x64xf32>
    %c0_20 = arith.constant 0 : index
    %c64 = arith.constant 64 : index
    %38 = vector.load %arg5[%c0_20, %c64] : memref<16x2048xf32, #tpu.memory_space<vmem>>, vector<1x64xf32>
    tpu.vector_store %arg5[%c0_20, %c64], %37 {strides = array<i32>} : memref<16x2048xf32, #tpu.memory_space<vmem>>, vector<1x64xf32>,
    %39 = vector.extract_strided_slice %36 {offsets = [0, 64], sizes = [1, 64], strides = [1, 1]} : vector<1x1024xf32> to vector<1x64xf32>
    %c1_21 = arith.constant 1 : index
    %c64_22 = arith.constant 64 : index
    %40 = vector.load %arg5[%c1_21, %c64_22] : memref<16x2048xf32, #tpu.memory_space<vmem>>, vector<1x64xf32>
    tpu.vector_store %arg5[%c1_21, %c64_22], %39 {strides = array<i32>} : memref<16x2048xf32, #tpu.memory_space<vmem>>, vector<1x64xf32>,
    %41 = vector.extract_strided_slice %36 {offsets = [0, 128], sizes = [1, 64], strides = [1, 1]} : vector<1x1024xf32> to vector<1x64xf32>
    %c2_23 = arith.constant 2 : index
    %c64_24 = arith.constant 64 : index
    %42 = vector.load %arg5[%c2_23, %c64_24] : memref<16x2048xf32, #tpu.memory_space<vmem>>, vector<1x64xf32>
    tpu.vector_store %arg5[%c2_23, %c64_24], %41 {strides = array<i32>} : memref<16x2048xf32, #tpu.memory_space<vmem>>, vector<1x64xf32>,
    %43 = vector.extract_strided_slice %36 {offsets = [0, 192], sizes = [1, 64], strides = [1, 1]} : vector<1x1024xf32> to vector<1x64xf32>
    %c3_25 = arith.constant 3 : index
    %c64_26 = arith.constant 64 : index
    %44 = vector.load %arg5[%c3_25, %c64_26] : memref<16x2048xf32, #tpu.memory_space<vmem>>, vector<1x64xf32>
    tpu.vector_store %arg5[%c3_25, %c64_26], %43 {strides = array<i32>} : memref<16x2048xf32, #tpu.memory_space<vmem>>, vector<1x64xf32>,
    %45 = vector.extract_strided_slice %36 {offsets = [0, 256], sizes = [1, 64], strides = [1, 1]} : vector<1x1024xf32> to vector<1x64xf32>
    %c4_27 = arith.constant 4 : index
    %c64_28 = arith.constant 64 : index
    %46 = vector.load %arg5[%c4_27, %c64_28] : memref<16x2048xf32, #tpu.memory_space<vmem>>, vector<1x64xf32>
    tpu.vector_store %arg5[%c4_27, %c64_28], %45 {strides = array<i32>} : memref<16x2048xf32, #tpu.memory_space<vmem>>, vector<1x64xf32>,
    %47 = vector.extract_strided_slice %36 {offsets = [0, 320], sizes = [1, 64], strides = [1, 1]} : vector<1x1024xf32> to vector<1x64xf32>
    %c5_29 = arith.constant 5 : index
    %c64_30 = arith.constant 64 : index
    %48 = vector.load %arg5[%c5_29, %c64_30] : memref<16x2048xf32, #tpu.memory_space<vmem>>, vector<1x64xf32>
    tpu.vector_store %arg5[%c5_29, %c64_30], %47 {strides = array<i32>} : memref<16x2048xf32, #tpu.memory_space<vmem>>, vector<1x64xf32>,
    %49 = vector.extract_strided_slice %36 {offsets = [0, 384], sizes = [1, 64], strides = [1, 1]} : vector<1x1024xf32> to vector<1x64xf32>
    %c6_31 = arith.constant 6 : index
    %c64_32 = arith.constant 64 : index
    %50 = vector.load %arg5[%c6_31, %c64_32] : memref<16x2048xf32, #tpu.memory_space<vmem>>, vector<1x64xf32>
    tpu.vector_store %arg5[%c6_31, %c64_32], %49 {strides = array<i32>} : memref<16x2048xf32, #tpu.memory_space<vmem>>, vector<1x64xf32>,
    %51 = vector.extract_strided_slice %36 {offsets = [0, 448], sizes = [1, 64], strides = [1, 1]} : vector<1x1024xf32> to vector<1x64xf32>
    %c7_33 = arith.constant 7 : index
    %c64_34 = arith.constant 64 : index
    %52 = vector.load %arg5[%c7_33, %c64_34] : memref<16x2048xf32, #tpu.memory_space<vmem>>, vector<1x64xf32>
    tpu.vector_store %arg5[%c7_33, %c64_34], %51 {strides = array<i32>} : memref<16x2048xf32, #tpu.memory_space<vmem>>, vector<1x64xf32>,
    %53 = vector.extract_strided_slice %36 {offsets = [0, 512], sizes = [1, 64], strides = [1, 1]} : vector<1x1024xf32> to vector<1x64xf32>
    %c8_35 = arith.constant 8 : index
    %c64_36 = arith.constant 64 : index
    %54 = vector.load %arg5[%c8_35, %c64_36] : memref<16x2048xf32, #tpu.memory_space<vmem>>, vector<1x64xf32>
    tpu.vector_store %arg5[%c8_35, %c64_36], %53 {strides = array<i32>} : memref<16x2048xf32, #tpu.memory_space<vmem>>, vector<1x64xf32>,
    %55 = vector.extract_strided_slice %36 {offsets = [0, 576], sizes = [1, 64], strides = [1, 1]} : vector<1x1024xf32> to vector<1x64xf32>
    %c9_37 = arith.constant 9 : index
    %c64_38 = arith.constant 64 : index
    %56 = vector.load %arg5[%c9_37, %c64_38] : memref<16x2048xf32, #tpu.memory_space<vmem>>, vector<1x64xf32>
    tpu.vector_store %arg5[%c9_37, %c64_38], %55 {strides = array<i32>} : memref<16x2048xf32, #tpu.memory_space<vmem>>, vector<1x64xf32>,
    %57 = vector.extract_strided_slice %36 {offsets = [0, 640], sizes = [1, 64], strides = [1, 1]} : vector<1x1024xf32> to vector<1x64xf32>
    %c10_39 = arith.constant 10 : index
    %c64_40 = arith.constant 64 : index
    %58 = vector.load %arg5[%c10_39, %c64_40] : memref<16x2048xf32, #tpu.memory_space<vmem>>, vector<1x64xf32>
    tpu.vector_store %arg5[%c10_39, %c64_40], %57 {strides = array<i32>} : memref<16x2048xf32, #tpu.memory_space<vmem>>, vector<1x64xf32>,
    %59 = vector.extract_strided_slice %36 {offsets = [0, 704], sizes = [1, 64], strides = [1, 1]} : vector<1x1024xf32> to vector<1x64xf32>
    %c11_41 = arith.constant 11 : index
    %c64_42 = arith.constant 64 : index
    %60 = vector.load %arg5[%c11_41, %c64_42] : memref<16x2048xf32, #tpu.memory_space<vmem>>, vector<1x64xf32>
    tpu.vector_store %arg5[%c11_41, %c64_42], %59 {strides = array<i32>} : memref<16x2048xf32, #tpu.memory_space<vmem>>, vector<1x64xf32>,
    %61 = vector.extract_strided_slice %36 {offsets = [0, 768], sizes = [1, 64], strides = [1, 1]} : vector<1x1024xf32> to vector<1x64xf32>
    %c12_43 = arith.constant 12 : index
    %c64_44 = arith.constant 64 : index
    %62 = vector.load %arg5[%c12_43, %c64_44] : memref<16x2048xf32, #tpu.memory_space<vmem>>, vector<1x64xf32>
    tpu.vector_store %arg5[%c12_43, %c64_44], %61 {strides = array<i32>} : memref<16x2048xf32, #tpu.memory_space<vmem>>, vector<1x64xf32>,
    %63 = vector.extract_strided_slice %36 {offsets = [0, 832], sizes = [1, 64], strides = [1, 1]} : vector<1x1024xf32> to vector<1x64xf32>
    %c13_45 = arith.constant 13 : index
    %c64_46 = arith.constant 64 : index
    %64 = vector.load %arg5[%c13_45, %c64_46] : memref<16x2048xf32, #tpu.memory_space<vmem>>, vector<1x64xf32>
    tpu.vector_store %arg5[%c13_45, %c64_46], %63 {strides = array<i32>} : memref<16x2048xf32, #tpu.memory_space<vmem>>, vector<1x64xf32>,
    %65 = vector.extract_strided_slice %36 {offsets = [0, 896], sizes = [1, 64], strides = [1, 1]} : vector<1x1024xf32> to vector<1x64xf32>
    %c14_47 = arith.constant 14 : index
    %c64_48 = arith.constant 64 : index
    %66 = vector.load %arg5[%c14_47, %c64_48] : memref<16x2048xf32, #tpu.memory_space<vmem>>, vector<1x64xf32>
    tpu.vector_store %arg5[%c14_47, %c64_48], %65 {strides = array<i32>} : memref<16x2048xf32, #tpu.memory_space<vmem>>, vector<1x64xf32>,
    %67 = vector.extract_strided_slice %36 {offsets = [0, 960], sizes = [1, 64], strides = [1, 1]} : vector<1x1024xf32> to vector<1x64xf32>
    %c15_49 = arith.constant 15 : index
    %c64_50 = arith.constant 64 : index
    %68 = vector.load %arg5[%c15_49, %c64_50] : memref<16x2048xf32, #tpu.memory_space<vmem>>, vector<1x64xf32>
    tpu.vector_store %arg5[%c15_49, %c64_50], %67 {strides = array<i32>} : memref<16x2048xf32, #tpu.memory_space<vmem>>, vector<1x64xf32>,
    %69 = vector.extract_strided_slice %2 {offsets = [2, 0], sizes = [1, 1024], strides = [1, 1]} : vector<32x1024xf32> to vector<1x1024xf32>
    %70 = vector.extract_strided_slice %69 {offsets = [0, 0], sizes = [1, 64], strides = [1, 1]} : vector<1x1024xf32> to vector<1x64xf32>
    %c0_51 = arith.constant 0 : index
    %c128 = arith.constant 128 : index
    %71 = vector.load %arg5[%c0_51, %c128] : memref<16x2048xf32, #tpu.memory_space<vmem>>, vector<1x64xf32>
    tpu.vector_store %arg5[%c0_51, %c128], %70 {strides = array<i32>} : memref<16x2048xf32, #tpu.memory_space<vmem>>, vector<1x64xf32>,
    %72 = vector.extract_strided_slice %69 {offsets = [0, 64], sizes = [1, 64], strides = [1, 1]} : vector<1x1024xf32> to vector<1x64xf32>
    %c1_52 = arith.constant 1 : index
    %c128_53 = arith.constant 128 : index
    %73 = vector.load %arg5[%c1_52, %c128_53] : memref<16x2048xf32, #tpu.memory_space<vmem>>, vector<1x64xf32>
    tpu.vector_store %arg5[%c1_52, %c128_53], %72 {strides = array<i32>} : memref<16x2048xf32, #tpu.memory_space<vmem>>, vector<1x64xf32>,
    %74 = vector.extract_strided_slice %69 {offsets = [0, 128], sizes = [1, 64], strides = [1, 1]} : vector<1x1024xf32> to vector<1x64xf32>
    %c2_54 = arith.constant 2 : index
    %c128_55 = arith.constant 128 : index
    %75 = vector.load %arg5[%c2_54, %c128_55] : memref<16x2048xf32, #tpu.memory_space<vmem>>, vector<1x64xf32>
    tpu.vector_store %arg5[%c2_54, %c128_55], %74 {strides = array<i32>} : memref<16x2048xf32, #tpu.memory_space<vmem>>, vector<1x64xf32>,
    %76 = vector.extract_strided_slice %69 {offsets = [0, 192], sizes = [1, 64], strides = [1, 1]} : vector<1x1024xf32> to vector<1x64xf32>
    %c3_56 = arith.constant 3 : index
    %c128_57 = arith.constant 128 : index
    %77 = vector.load %arg5[%c3_56, %c128_57] : memref<16x2048xf32, #tpu.memory_space<vmem>>, vector<1x64xf32>
    tpu.vector_store %arg5[%c3_56, %c128_57], %76 {strides = array<i32>} : memref<16x2048xf32, #tpu.memory_space<vmem>>, vector<1x64xf32>,
    %78 = vector.extract_strided_slice %69 {offsets = [0, 256], sizes = [1, 64], strides = [1, 1]} : vector<1x1024xf32> to vector<1x64xf32>
    %c4_58 = arith.constant 4 : index
    %c128_59 = arith.constant 128 : index
    %79 = vector.load %arg5[%c4_58, %c128_59] : memref<16x2048xf32, #tpu.memory_space<vmem>>, vector<1x64xf32>
    tpu.vector_store %arg5[%c4_58, %c128_59], %78 {strides = array<i32>} : memref<16x2048xf32, #tpu.memory_space<vmem>>, vector<1x64xf32>,
    %80 = vector.extract_strided_slice %69 {offsets = [0, 320], sizes = [1, 64], strides = [1, 1]} : vector<1x1024xf32> to vector<1x64xf32>
    %c5_60 = arith.constant 5 : index
    %c128_61 = arith.constant 128 : index
    %81 = vector.load %arg5[%c5_60, %c128_61] : memref<16x2048xf32, #tpu.memory_space<vmem>>, vector<1x64xf32>
    tpu.vector_store %arg5[%c5_60, %c128_61], %80 {strides = array<i32>} : memref<16x2048xf32, #tpu.memory_space<vmem>>, vector<1x64xf32>,
    %82 = vector.extract_strided_slice %69 {offsets = [0, 384], sizes = [1, 64], strides = [1, 1]} : vector<1x1024xf32> to vector<1x64xf32>
    %c6_62 = arith.constant 6 : index
    %c128_63 = arith.constant 128 : index
    %83 = vector.load %arg5[%c6_62, %c128_63] : memref<16x2048xf32, #tpu.memory_space<vmem>>, vector<1x64xf32>
    tpu.vector_store %arg5[%c6_62, %c128_63], %82 {strides = array<i32>} : memref<16x2048xf32, #tpu.memory_space<vmem>>, vector<1x64xf32>,
    %84 = vector.extract_strided_slice %69 {offsets = [0, 448], sizes = [1, 64], strides = [1, 1]} : vector<1x1024xf32> to vector<1x64xf32>
    %c7_64 = arith.constant 7 : index
    %c128_65 = arith.constant 128 : index
    %85 = vector.load %arg5[%c7_64, %c128_65] : memref<16x2048xf32, #tpu.memory_space<vmem>>, vector<1x64xf32>
    tpu.vector_store %arg5[%c7_64, %c128_65], %84 {strides = array<i32>} : memref<16x2048xf32, #tpu.memory_space<vmem>>, vector<1x64xf32>,
    %86 = vector.extract_strided_slice %69 {offsets = [0, 512], sizes = [1, 64], strides = [1, 1]} : vector<1x1024xf32> to vector<1x64xf32>
    %c8_66 = arith.constant 8 : index
    %c128_67 = arith.constant 128 : index
    %87 = vector.load %arg5[%c8_66, %c128_67] : memref<16x2048xf32, #tpu.memory_space<vmem>>, vector<1x64xf32>
    tpu.vector_store %arg5[%c8_66, %c128_67], %86 {strides = array<i32>} : memref<16x2048xf32, #tpu.memory_space<vmem>>, vector<1x64xf32>,
    %88 = vector.extract_strided_slice %69 {offsets = [0, 576], sizes = [1, 64], strides = [1, 1]} : vector<1x1024xf32> to vector<1x64xf32>
    %c9_68 = arith.constant 9 : index
    %c128_69 = arith.constant 128 : index
    %89 = vector.load %arg5[%c9_68, %c128_69] : memref<16x2048xf32, #tpu.memory_space<vmem>>, vector<1x64xf32>
    tpu.vector_store %arg5[%c9_68, %c128_69], %88 {strides = array<i32>} : memref<16x2048xf32, #tpu.memory_space<vmem>>, vector<1x64xf32>,
    %90 = vector.extract_strided_slice %69 {offsets = [0, 640], sizes = [1, 64], strides = [1, 1]} : vector<1x1024xf32> to vector<1x64xf32>
    %c10_70 = arith.constant 10 : index
    %c128_71 = arith.constant 128 : index
    %91 = vector.load %arg5[%c10_70, %c128_71] : memref<16x2048xf32, #tpu.memory_space<vmem>>, vector<1x64xf32>
    tpu.vector_store %arg5[%c10_70, %c128_71], %90 {strides = array<i32>} : memref<16x2048xf32, #tpu.memory_space<vmem>>, vector<1x64xf32>,
    %92 = vector.extract_strided_slice %69 {offsets = [0, 704], sizes = [1, 64], strides = [1, 1]} : vector<1x1024xf32> to vector<1x64xf32>
    %c11_72 = arith.constant 11 : index
    %c128_73 = arith.constant 128 : index
    %93 = vector.load %arg5[%c11_72, %c128_73] : memref<16x2048xf32, #tpu.memory_space<vmem>>, vector<1x64xf32>
    tpu.vector_store %arg5[%c11_72, %c128_73], %92 {strides = array<i32>} : memref<16x2048xf32, #tpu.memory_space<vmem>>, vector<1x64xf32>,
    %94 = vector.extract_strided_slice %69 {offsets = [0, 768], sizes = [1, 64], strides = [1, 1]} : vector<1x1024xf32> to vector<1x64xf32>
    %c12_74 = arith.constant 12 : index
    %c128_75 = arith.constant 128 : index
    %95 = vector.load %arg5[%c12_74, %c128_75] : memref<16x2048xf32, #tpu.memory_space<vmem>>, vector<1x64xf32>
    tpu.vector_store %arg5[%c12_74, %c128_75], %94 {strides = array<i32>} : memref<16x2048xf32, #tpu.memory_space<vmem>>, vector<1x64xf32>,
    %96 = vector.extract_strided_slice %69 {offsets = [0, 832], sizes = [1, 64], strides = [1, 1]} : vector<1x1024xf32> to vector<1x64xf32>
    %c13_76 = arith.constant 13 : index
    %c128_77 = arith.constant 128 : index
    %97 = vector.load %arg5[%c13_76, %c128_77] : memref<16x2048xf32, #tpu.memory_space<vmem>>, vector<1x64xf32>
    tpu.vector_store %arg5[%c13_76, %c128_77], %96 {strides = array<i32>} : memref<16x2048xf32, #tpu.memory_space<vmem>>, vector<1x64xf32>,
    %98 = vector.extract_strided_slice %69 {offsets = [0, 896], sizes = [1, 64], strides = [1, 1]} : vector<1x1024xf32> to vector<1x64xf32>
    %c14_78 = arith.constant 14 : index
    %c128_79 = arith.constant 128 : index
    %99 = vector.load %arg5[%c14_78, %c128_79] : memref<16x2048xf32, #tpu.memory_space<vmem>>, vector<1x64xf32>
    tpu.vector_store %arg5[%c14_78, %c128_79], %98 {strides = array<i32>} : memref<16x2048xf32, #tpu.memory_space<vmem>>, vector<1x64xf32>,
    %100 = vector.extract_strided_slice %69 {offsets = [0, 960], sizes = [1, 64], strides = [1, 1]} : vector<1x1024xf32> to vector<1x64xf32>
    %c15_80 = arith.constant 15 : index
    %c128_81 = arith.constant 128 : index
    %101 = vector.load %arg5[%c15_80, %c128_81] : memref<16x2048xf32, #tpu.memory_space<vmem>>, vector<1x64xf32>
    tpu.vector_store %arg5[%c15_80, %c128_81], %100 {strides = array<i32>} : memref<16x2048xf32, #tpu.memory_space<vmem>>, vector<1x64xf32>,
    %102 = vector.extract_strided_slice %2 {offsets = [3, 0], sizes = [1, 1024], strides = [1, 1]} : vector<32x1024xf32> to vector<1x1024xf32>
    %103 = vector.extract_strided_slice %102 {offsets = [0, 0], sizes = [1, 64], strides = [1, 1]} : vector<1x1024xf32> to vector<1x64xf32>
    %c0_82 = arith.constant 0 : index
    %c192 = arith.constant 192 : index
    %104 = vector.load %arg5[%c0_82, %c192] : memref<16x2048xf32, #tpu.memory_space<vmem>>, vector<1x64xf32>
    tpu.vector_store %arg5[%c0_82, %c192], %103 {strides = array<i32>} : memref<16x2048xf32, #tpu.memory_space<vmem>>, vector<1x64xf32>,
    %105 = vector.extract_strided_slice %102 {offsets = [0, 64], sizes = [1, 64], strides = [1, 1]} : vector<1x1024xf32> to vector<1x64xf32>
    %c1_83 = arith.constant 1 : index
    %c192_84 = arith.constant 192 : index
    %106 = vector.load %arg5[%c1_83, %c192_84] : memref<16x2048xf32, #tpu.memory_space<vmem>>, vector<1x64xf32>
    tpu.vector_store %arg5[%c1_83, %c192_84], %105 {strides = array<i32>} : memref<16x2048xf32, #tpu.memory_space<vmem>>, vector<1x64xf32>,
    %107 = vector.extract_strided_slice %102 {offsets = [0, 128], sizes = [1, 64], strides = [1, 1]} : vector<1x1024xf32> to vector<1x64xf32>
    %c2_85 = arith.constant 2 : index
    %c192_86 = arith.constant 192 : index
    %108 = vector.load %arg5[%c2_85, %c192_86] : memref<16x2048xf32, #tpu.memory_space<vmem>>, vector<1x64xf32>
    tpu.vector_store %arg5[%c2_85, %c192_86], %107 {strides = array<i32>} : memref<16x2048xf32, #tpu.memory_space<vmem>>, vector<1x64xf32>,
    %109 = vector.extract_strided_slice %102 {offsets = [0, 192], sizes = [1, 64], strides = [1, 1]} : vector<1x1024xf32> to vector<1x64xf32>
    %c3_87 = arith.constant 3 : index
    %c192_88 = arith.constant 192 : index
    %110 = vector.load %arg5[%c3_87, %c192_88] : memref<16x2048xf32, #tpu.memory_space<vmem>>, vector<1x64xf32>
    tpu.vector_store %arg5[%c3_87, %c192_88], %109 {strides = array<i32>} : memref<16x2048xf32, #tpu.memory_space<vmem>>, vector<1x64xf32>,
    %111 = vector.extract_strided_slice %102 {offsets = [0, 256], sizes = [1, 64], strides = [1, 1]} : vector<1x1024xf32> to vector<1x64xf32>
    %c4_89 = arith.constant 4 : index
    %c192_90 = arith.constant 192 : index
    %112 = vector.load %arg5[%c4_89, %c192_90] : memref<16x2048xf32, #tpu.memory_space<vmem>>, vector<1x64xf32>
    tpu.vector_store %arg5[%c4_89, %c192_90], %111 {strides = array<i32>} : memref<16x2048xf32, #tpu.memory_space<vmem>>, vector<1x64xf32>,
    %113 = vector.extract_strided_slice %102 {offsets = [0, 320], sizes = [1, 64], strides = [1, 1]} : vector<1x1024xf32> to vector<1x64xf32>
    %c5_91 = arith.constant 5 : index
    %c192_92 = arith.constant 192 : index
    %114 = vector.load %arg5[%c5_91, %c192_92] : memref<16x2048xf32, #tpu.memory_space<vmem>>, vector<1x64xf32>
    tpu.vector_store %arg5[%c5_91, %c192_92], %113 {strides = array<i32>} : memref<16x2048xf32, #tpu.memory_space<vmem>>, vector<1x64xf32>,
    %115 = vector.extract_strided_slice %102 {offsets = [0, 384], sizes = [1, 64], strides = [1, 1]} : vector<1x1024xf32> to vector<1x64xf32>
    %c6_93 = arith.constant 6 : index
    %c192_94 = arith.constant 192 : index
    %116 = vector.load %arg5[%c6_93, %c192_94] : memref<16x2048xf32, #tpu.memory_space<vmem>>, vector<1x64xf32>
    tpu.vector_store %arg5[%c6_93, %c192_94], %115 {strides = array<i32>} : memref<16x2048xf32, #tpu.memory_space<vmem>>, vector<1x64xf32>,
    %117 = vector.extract_strided_slice %102 {offsets = [0, 448], sizes = [1, 64], strides = [1, 1]} : vector<1x1024xf32> to vector<1x64xf32>
    %c7_95 = arith.constant 7 : index
    %c192_96 = arith.constant 192 : index
    %118 = vector.load %arg5[%c7_95, %c192_96] : memref<16x2048xf32, #tpu.memory_space<vmem>>, vector<1x64xf32>
    tpu.vector_store %arg5[%c7_95, %c192_96], %117 {strides = array<i32>} : memref<16x2048xf32, #tpu.memory_space<vmem>>, vector<1x64xf32>,
    %119 = vector.extract_strided_slice %102 {offsets = [0, 512], sizes = [1, 64], strides = [1, 1]} : vector<1x1024xf32> to vector<1x64xf32>
    %c8_97 = arith.constant 8 : index
    %c192_98 = arith.constant 192 : index
    %120 = vector.load %arg5[%c8_97, %c192_98] : memref<16x2048xf32, #tpu.memory_space<vmem>>, vector<1x64xf32>
    tpu.vector_store %arg5[%c8_97, %c192_98], %119 {strides = array<i32>} : memref<16x2048xf32, #tpu.memory_space<vmem>>, vector<1x64xf32>,
    %121 = vector.extract_strided_slice %102 {offsets = [0, 576], sizes = [1, 64], strides = [1, 1]} : vector<1x1024xf32> to vector<1x64xf32>
    %c9_99 = arith.constant 9 : index
    %c192_100 = arith.constant 192 : index
    %122 = vector.load %arg5[%c9_99, %c192_100] : memref<16x2048xf32, #tpu.memory_space<vmem>>, vector<1x64xf32>
    tpu.vector_store %arg5[%c9_99, %c192_100], %121 {strides = array<i32>} : memref<16x2048xf32, #tpu.memory_space<vmem>>, vector<1x64xf32>,
    %123 = vector.extract_strided_slice %102 {offsets = [0, 640], sizes = [1, 64], strides = [1, 1]} : vector<1x1024xf32> to vector<1x64xf32>
    %c10_101 = arith.constant 10 : index
    %c192_102 = arith.constant 192 : index
    %124 = vector.load %arg5[%c10_101, %c192_102] : memref<16x2048xf32, #tpu.memory_space<vmem>>, vector<1x64xf32>
    tpu.vector_store %arg5[%c10_101, %c192_102], %123 {strides = array<i32>} : memref<16x2048xf32, #tpu.memory_space<vmem>>, vector<1x64xf32>,
    %125 = vector.extract_strided_slice %102 {offsets = [0, 704], sizes = [1, 64], strides = [1, 1]} : vector<1x1024xf32> to vector<1x64xf32>
    %c11_103 = arith.constant 11 : index
    %c192_104 = arith.constant 192 : index
    %126 = vector.load %arg5[%c11_103, %c192_104] : memref<16x2048xf32, #tpu.memory_space<vmem>>, vector<1x64xf32>
    tpu.vector_store %arg5[%c11_103, %c192_104], %125 {strides = array<i32>} : memref<16x2048xf32, #tpu.memory_space<vmem>>, vector<1x64xf32>,
    %127 = vector.extract_strided_slice %102 {offsets = [0, 768], sizes = [1, 64], strides = [1, 1]} : vector<1x1024xf32> to vector<1x64xf32>
    %c12_105 = arith.constant 12 : index
    %c192_106 = arith.constant 192 : index
    %128 = vector.load %arg5[%c12_105, %c192_106] : memref<16x2048xf32, #tpu.memory_space<vmem>>, vector<1x64xf32>
    tpu.vector_store %arg5[%c12_105, %c192_106], %127 {strides = array<i32>} : memref<16x2048xf32, #tpu.memory_space<vmem>>, vector<1x64xf32>,
    %129 = vector.extract_strided_slice %102 {offsets = [0, 832], sizes = [1, 64], strides = [1, 1]} : vector<1x1024xf32> to vector<1x64xf32>
    %c13_107 = arith.constant 13 : index
    %c192_108 = arith.constant 192 : index
    %130 = vector.load %arg5[%c13_107, %c192_108] : memref<16x2048xf32, #tpu.memory_space<vmem>>, vector<1x64xf32>
    tpu.vector_store %arg5[%c13_107, %c192_108], %129 {strides = array<i32>} : memref<16x2048xf32, #tpu.memory_space<vmem>>, vector<1x64xf32>,
    %131 = vector.extract_strided_slice %102 {offsets = [0, 896], sizes = [1, 64], strides = [1, 1]} : vector<1x1024xf32> to vector<1x64xf32>
    %c14_109 = arith.constant 14 : index
    %c192_110 = arith.constant 192 : index
    %132 = vector.load %arg5[%c14_109, %c192_110] : memref<16x2048xf32, #tpu.memory_space<vmem>>, vector<1x64xf32>
    tpu.vector_store %arg5[%c14_109, %c192_110], %131 {strides = array<i32>} : memref<16x2048xf32, #tpu.memory_space<vmem>>, vector<1x64xf32>,
    %133 = vector.extract_strided_slice %102 {offsets = [0, 960], sizes = [1, 64], strides = [1, 1]} : vector<1x1024xf32> to vector<1x64xf32>
    %c15_111 = arith.constant 15 : index
    %c192_112 = arith.constant 192 : index
    %134 = vector.load %arg5[%c15_111, %c192_112] : memref<16x2048xf32, #tpu.memory_space<vmem>>, vector<1x64xf32>
    tpu.vector_store %arg5[%c15_111, %c192_112], %133 {strides = array<i32>} : memref<16x2048xf32, #tpu.memory_space<vmem>>, vector<1x64xf32>,
    %135 = vector.extract_strided_slice %2 {offsets = [4, 0], sizes = [1, 1024], strides = [1, 1]} : vector<32x1024xf32> to vector<1x1024xf32>
    %136 = vector.extract_strided_slice %135 {offsets = [0, 0], sizes = [1, 64], strides = [1, 1]} : vector<1x1024xf32> to vector<1x64xf32>
    %c0_113 = arith.constant 0 : index
    %c256 = arith.constant 256 : index
    %137 = vector.load %arg5[%c0_113, %c256] : memref<16x2048xf32, #tpu.memory_space<vmem>>, vector<1x64xf32>
    tpu.vector_store %arg5[%c0_113, %c256], %136 {strides = array<i32>} : memref<16x2048xf32, #tpu.memory_space<vmem>>, vector<1x64xf32>,
    %138 = vector.extract_strided_slice %135 {offsets = [0, 64], sizes = [1, 64], strides = [1, 1]} : vector<1x1024xf32> to vector<1x64xf32>
    %c1_114 = arith.constant 1 : index
    %c256_115 = arith.constant 256 : index
    %139 = vector.load %arg5[%c1_114, %c256_115] : memref<16x2048xf32, #tpu.memory_space<vmem>>, vector<1x64xf32>
    tpu.vector_store %arg5[%c1_114, %c256_115], %138 {strides = array<i32>} : memref<16x2048xf32, #tpu.memory_space<vmem>>, vector<1x64xf32>,
    %140 = vector.extract_strided_slice %135 {offsets = [0, 128], sizes = [1, 64], strides = [1, 1]} : vector<1x1024xf32> to vector<1x64xf32>
    %c2_116 = arith.constant 2 : index
    %c256_117 = arith.constant 256 : index
    %141 = vector.load %arg5[%c2_116, %c256_117] : memref<16x2048xf32, #tpu.memory_space<vmem>>, vector<1x64xf32>
    tpu.vector_store %arg5[%c2_116, %c256_117], %140 {strides = array<i32>} : memref<16x2048xf32, #tpu.memory_space<vmem>>, vector<1x64xf32>,
    %142 = vector.extract_strided_slice %135 {offsets = [0, 192], sizes = [1, 64], strides = [1, 1]} : vector<1x1024xf32> to vector<1x64xf32>
    %c3_118 = arith.constant 3 : index
    %c256_119 = arith.constant 256 : index
    %143 = vector.load %arg5[%c3_118, %c256_119] : memref<16x2048xf32, #tpu.memory_space<vmem>>, vector<1x64xf32>
    tpu.vector_store %arg5[%c3_118, %c256_119], %142 {strides = array<i32>} : memref<16x2048xf32, #tpu.memory_space<vmem>>, vector<1x64xf32>,
    %144 = vector.extract_strided_slice %135 {offsets = [0, 256], sizes = [1, 64], strides = [1, 1]} : vector<1x1024xf32> to vector<1x64xf32>
    %c4_120 = arith.constant 4 : index
    %c256_121 = arith.constant 256 : index
    %145 = vector.load %arg5[%c4_120, %c256_121] : memref<16x2048xf32, #tpu.memory_space<vmem>>, vector<1x64xf32>
    tpu.vector_store %arg5[%c4_120, %c256_121], %144 {strides = array<i32>} : memref<16x2048xf32, #tpu.memory_space<vmem>>, vector<1x64xf32>,
    %146 = vector.extract_strided_slice %135 {offsets = [0, 320], sizes = [1, 64], strides = [1, 1]} : vector<1x1024xf32> to vector<1x64xf32>
    %c5_122 = arith.constant 5 : index
    %c256_123 = arith.constant 256 : index
    %147 = vector.load %arg5[%c5_122, %c256_123] : memref<16x2048xf32, #tpu.memory_space<vmem>>, vector<1x64xf32>
    tpu.vector_store %arg5[%c5_122, %c256_123], %146 {strides = array<i32>} : memref<16x2048xf32, #tpu.memory_space<vmem>>, vector<1x64xf32>,
    %148 = vector.extract_strided_slice %135 {offsets = [0, 384], sizes = [1, 64], strides = [1, 1]} : vector<1x1024xf32> to vector<1x64xf32>
    %c6_124 = arith.constant 6 : index
    %c256_125 = arith.constant 256 : index
    %149 = vector.load %arg5[%c6_124, %c256_125] : memref<16x2048xf32, #tpu.memory_space<vmem>>, vector<1x64xf32>
    tpu.vector_store %arg5[%c6_124, %c256_125], %148 {strides = array<i32>} : memref<16x2048xf32, #tpu.memory_space<vmem>>, vector<1x64xf32>,
    %150 = vector.extract_strided_slice %135 {offsets = [0, 448], sizes = [1, 64], strides = [1, 1]} : vector<1x1024xf32> to vector<1x64xf32>
    %c7_126 = arith.constant 7 : index
    %c256_127 = arith.constant 256 : index
    %151 = vector.load %arg5[%c7_126, %c256_127] : memref<16x2048xf32, #tpu.memory_space<vmem>>, vector<1x64xf32>
    tpu.vector_store %arg5[%c7_126, %c256_127], %150 {strides = array<i32>} : memref<16x2048xf32, #tpu.memory_space<vmem>>, vector<1x64xf32>,
    %152 = vector.extract_strided_slice %135 {offsets = [0, 512], sizes = [1, 64], strides = [1, 1]} : vector<1x1024xf32> to vector<1x64xf32>
    %c8_128 = arith.constant 8 : index
    %c256_129 = arith.constant 256 : index
    %153 = vector.load %arg5[%c8_128, %c256_129] : memref<16x2048xf32, #tpu.memory_space<vmem>>, vector<1x64xf32>
    tpu.vector_store %arg5[%c8_128, %c256_129], %152 {strides = array<i32>} : memref<16x2048xf32, #tpu.memory_space<vmem>>, vector<1x64xf32>,
    %154 = vector.extract_strided_slice %135 {offsets = [0, 576], sizes = [1, 64], strides = [1, 1]} : vector<1x1024xf32> to vector<1x64xf32>
    %c9_130 = arith.constant 9 : index
    %c256_131 = arith.constant 256 : index
    %155 = vector.load %arg5[%c9_130, %c256_131] : memref<16x2048xf32, #tpu.memory_space<vmem>>, vector<1x64xf32>
    tpu.vector_store %arg5[%c9_130, %c256_131], %154 {strides = array<i32>} : memref<16x2048xf32, #tpu.memory_space<vmem>>, vector<1x64xf32>,
    %156 = vector.extract_strided_slice %135 {offsets = [0, 640], sizes = [1, 64], strides = [1, 1]} : vector<1x1024xf32> to vector<1x64xf32>
    %c10_132 = arith.constant 10 : index
    %c256_133 = arith.constant 256 : index
    %157 = vector.load %arg5[%c10_132, %c256_133] : memref<16x2048xf32, #tpu.memory_space<vmem>>, vector<1x64xf32>
    tpu.vector_store %arg5[%c10_132, %c256_133], %156 {strides = array<i32>} : memref<16x2048xf32, #tpu.memory_space<vmem>>, vector<1x64xf32>,
    %158 = vector.extract_strided_slice %135 {offsets = [0, 704], sizes = [1, 64], strides = [1, 1]} : vector<1x1024xf32> to vector<1x64xf32>
    %c11_134 = arith.constant 11 : index
    %c256_135 = arith.constant 256 : index
    %159 = vector.load %arg5[%c11_134, %c256_135] : memref<16x2048xf32, #tpu.memory_space<vmem>>, vector<1x64xf32>
    tpu.vector_store %arg5[%c11_134, %c256_135], %158 {strides = array<i32>} : memref<16x2048xf32, #tpu.memory_space<vmem>>, vector<1x64xf32>,
    %160 = vector.extract_strided_slice %135 {offsets = [0, 768], sizes = [1, 64], strides = [1, 1]} : vector<1x1024xf32> to vector<1x64xf32>
    %c12_136 = arith.constant 12 : index
    %c256_137 = arith.constant 256 : index
    %161 = vector.load %arg5[%c12_136, %c256_137] : memref<16x2048xf32, #tpu.memory_space<vmem>>, vector<1x64xf32>
    tpu.vector_store %arg5[%c12_136, %c256_137], %160 {strides = array<i32>} : memref<16x2048xf32, #tpu.memory_space<vmem>>, vector<1x64xf32>,
    %162 = vector.extract_strided_slice %135 {offsets = [0, 832], sizes = [1, 64], strides = [1, 1]} : vector<1x1024xf32> to vector<1x64xf32>
    %c13_138 = arith.constant 13 : index
    %c256_139 = arith.constant 256 : index
    %163 = vector.load %arg5[%c13_138, %c256_139] : memref<16x2048xf32, #tpu.memory_space<vmem>>, vector<1x64xf32>
    tpu.vector_store %arg5[%c13_138, %c256_139], %162 {strides = array<i32>} : memref<16x2048xf32, #tpu.memory_space<vmem>>, vector<1x64xf32>,
    %164 = vector.extract_strided_slice %135 {offsets = [0, 896], sizes = [1, 64], strides = [1, 1]} : vector<1x1024xf32> to vector<1x64xf32>
    %c14_140 = arith.constant 14 : index
    %c256_141 = arith.constant 256 : index
    %165 = vector.load %arg5[%c14_140, %c256_141] : memref<16x2048xf32, #tpu.memory_space<vmem>>, vector<1x64xf32>
    tpu.vector_store %arg5[%c14_140, %c256_141], %164 {strides = array<i32>} : memref<16x2048xf32, #tpu.memory_space<vmem>>, vector<1x64xf32>,
    %166 = vector.extract_strided_slice %135 {offsets = [0, 960], sizes = [1, 64], strides = [1, 1]} : vector<1x1024xf32> to vector<1x64xf32>
    %c15_142 = arith.constant 15 : index
    %c256_143 = arith.constant 256 : index
    %167 = vector.load %arg5[%c15_142, %c256_143] : memref<16x2048xf32, #tpu.memory_space<vmem>>, vector<1x64xf32>
    tpu.vector_store %arg5[%c15_142, %c256_143], %166 {strides = array<i32>} : memref<16x2048xf32, #tpu.memory_space<vmem>>, vector<1x64xf32>,
    %168 = vector.extract_strided_slice %2 {offsets = [5, 0], sizes = [1, 1024], strides = [1, 1]} : vector<32x1024xf32> to vector<1x1024xf32>
    %169 = vector.extract_strided_slice %168 {offsets = [0, 0], sizes = [1, 64], strides = [1, 1]} : vector<1x1024xf32> to vector<1x64xf32>
    %c0_144 = arith.constant 0 : index
    %c320 = arith.constant 320 : index
    %170 = vector.load %arg5[%c0_144, %c320] : memref<16x2048xf32, #tpu.memory_space<vmem>>, vector<1x64xf32>
    tpu.vector_store %arg5[%c0_144, %c320], %169 {strides = array<i32>} : memref<16x2048xf32, #tpu.memory_space<vmem>>, vector<1x64xf32>,
    %171 = vector.extract_strided_slice %168 {offsets = [0, 64], sizes = [1, 64], strides = [1, 1]} : vector<1x1024xf32> to vector<1x64xf32>
    %c1_145 = arith.constant 1 : index
    %c320_146 = arith.constant 320 : index
    %172 = vector.load %arg5[%c1_145, %c320_146] : memref<16x2048xf32, #tpu.memory_space<vmem>>, vector<1x64xf32>
    tpu.vector_store %arg5[%c1_145, %c320_146], %171 {strides = array<i32>} : memref<16x2048xf32, #tpu.memory_space<vmem>>, vector<1x64xf32>,
    %173 = vector.extract_strided_slice %168 {offsets = [0, 128], sizes = [1, 64], strides = [1, 1]} : vector<1x1024xf32> to vector<1x64xf32>
    %c2_147 = arith.constant 2 : index
    %c320_148 = arith.constant 320 : index
    %174 = vector.load %arg5[%c2_147, %c320_148] : memref<16x2048xf32, #tpu.memory_space<vmem>>, vector<1x64xf32>
    tpu.vector_store %arg5[%c2_147, %c320_148], %173 {strides = array<i32>} : memref<16x2048xf32, #tpu.memory_space<vmem>>, vector<1x64xf32>,
    %175 = vector.extract_strided_slice %168 {offsets = [0, 192], sizes = [1, 64], strides = [1, 1]} : vector<1x1024xf32> to vector<1x64xf32>
    %c3_149 = arith.constant 3 : index
    %c320_150 = arith.constant 320 : index
    %176 = vector.load %arg5[%c3_149, %c320_150] : memref<16x2048xf32, #tpu.memory_space<vmem>>, vector<1x64xf32>
    tpu.vector_store %arg5[%c3_149, %c320_150], %175 {strides = array<i32>} : memref<16x2048xf32, #tpu.memory_space<vmem>>, vector<1x64xf32>,
    %177 = vector.extract_strided_slice %168 {offsets = [0, 256], sizes = [1, 64], strides = [1, 1]} : vector<1x1024xf32> to vector<1x64xf32>
    %c4_151 = arith.constant 4 : index
    %c320_152 = arith.constant 320 : index
    %178 = vector.load %arg5[%c4_151, %c320_152] : memref<16x2048xf32, #tpu.memory_space<vmem>>, vector<1x64xf32>
    tpu.vector_store %arg5[%c4_151, %c320_152], %177 {strides = array<i32>} : memref<16x2048xf32, #tpu.memory_space<vmem>>, vector<1x64xf32>,
    %179 = vector.extract_strided_slice %168 {offsets = [0, 320], sizes = [1, 64], strides = [1, 1]} : vector<1x1024xf32> to vector<1x64xf32>
    %c5_153 = arith.constant 5 : index
    %c320_154 = arith.constant 320 : index
    %180 = vector.load %arg5[%c5_153, %c320_154] : memref<16x2048xf32, #tpu.memory_space<vmem>>, vector<1x64xf32>
    tpu.vector_store %arg5[%c5_153, %c320_154], %179 {strides = array<i32>} : memref<16x2048xf32, #tpu.memory_space<vmem>>, vector<1x64xf32>,
    %181 = vector.extract_strided_slice %168 {offsets = [0, 384], sizes = [1, 64], strides = [1, 1]} : vector<1x1024xf32> to vector<1x64xf32>
    %c6_155 = arith.constant 6 : index
    %c320_156 = arith.constant 320 : index
    %182 = vector.load %arg5[%c6_155, %c320_156] : memref<16x2048xf32, #tpu.memory_space<vmem>>, vector<1x64xf32>
    tpu.vector_store %arg5[%c6_155, %c320_156], %181 {strides = array<i32>} : memref<16x2048xf32, #tpu.memory_space<vmem>>, vector<1x64xf32>,
    %183 = vector.extract_strided_slice %168 {offsets = [0, 448], sizes = [1, 64], strides = [1, 1]} : vector<1x1024xf32> to vector<1x64xf32>
    %c7_157 = arith.constant 7 : index
    %c320_158 = arith.constant 320 : index
    %184 = vector.load %arg5[%c7_157, %c320_158] : memref<16x2048xf32, #tpu.memory_space<vmem>>, vector<1x64xf32>
    tpu.vector_store %arg5[%c7_157, %c320_158], %183 {strides = array<i32>} : memref<16x2048xf32, #tpu.memory_space<vmem>>, vector<1x64xf32>,
    %185 = vector.extract_strided_slice %168 {offsets = [0, 512], sizes = [1, 64], strides = [1, 1]} : vector<1x1024xf32> to vector<1x64xf32>
    %c8_159 = arith.constant 8 : index
    %c320_160 = arith.constant 320 : index
    %186 = vector.load %arg5[%c8_159, %c320_160] : memref<16x2048xf32, #tpu.memory_space<vmem>>, vector<1x64xf32>
    tpu.vector_store %arg5[%c8_159, %c320_160], %185 {strides = array<i32>} : memref<16x2048xf32, #tpu.memory_space<vmem>>, vector<1x64xf32>,
    %187 = vector.extract_strided_slice %168 {offsets = [0, 576], sizes = [1, 64], strides = [1, 1]} : vector<1x1024xf32> to vector<1x64xf32>
    %c9_161 = arith.constant 9 : index
    %c320_162 = arith.constant 320 : index
    %188 = vector.load %arg5[%c9_161, %c320_162] : memref<16x2048xf32, #tpu.memory_space<vmem>>, vector<1x64xf32>
    tpu.vector_store %arg5[%c9_161, %c320_162], %187 {strides = array<i32>} : memref<16x2048xf32, #tpu.memory_space<vmem>>, vector<1x64xf32>,
    %189 = vector.extract_strided_slice %168 {offsets = [0, 640], sizes = [1, 64], strides = [1, 1]} : vector<1x1024xf32> to vector<1x64xf32>
    %c10_163 = arith.constant 10 : index
    %c320_164 = arith.constant 320 : index
    %190 = vector.load %arg5[%c10_163, %c320_164] : memref<16x2048xf32, #tpu.memory_space<vmem>>, vector<1x64xf32>
    tpu.vector_store %arg5[%c10_163, %c320_164], %189 {strides = array<i32>} : memref<16x2048xf32, #tpu.memory_space<vmem>>, vector<1x64xf32>,
    %191 = vector.extract_strided_slice %168 {offsets = [0, 704], sizes = [1, 64], strides = [1, 1]} : vector<1x1024xf32> to vector<1x64xf32>
    %c11_165 = arith.constant 11 : index
    %c320_166 = arith.constant 320 : index
    %192 = vector.load %arg5[%c11_165, %c320_166] : memref<16x2048xf32, #tpu.memory_space<vmem>>, vector<1x64xf32>
    tpu.vector_store %arg5[%c11_165, %c320_166], %191 {strides = array<i32>} : memref<16x2048xf32, #tpu.memory_space<vmem>>, vector<1x64xf32>,
    %193 = vector.extract_strided_slice %168 {offsets = [0, 768], sizes = [1, 64], strides = [1, 1]} : vector<1x1024xf32> to vector<1x64xf32>
    %c12_167 = arith.constant 12 : index
    %c320_168 = arith.constant 320 : index
    %194 = vector.load %arg5[%c12_167, %c320_168] : memref<16x2048xf32, #tpu.memory_space<vmem>>, vector<1x64xf32>
    tpu.vector_store %arg5[%c12_167, %c320_168], %193 {strides = array<i32>} : memref<16x2048xf32, #tpu.memory_space<vmem>>, vector<1x64xf32>,
    %195 = vector.extract_strided_slice %168 {offsets = [0, 832], sizes = [1, 64], strides = [1, 1]} : vector<1x1024xf32> to vector<1x64xf32>
    %c13_169 = arith.constant 13 : index
    %c320_170 = arith.constant 320 : index
    %196 = vector.load %arg5[%c13_169, %c320_170] : memref<16x2048xf32, #tpu.memory_space<vmem>>, vector<1x64xf32>
    tpu.vector_store %arg5[%c13_169, %c320_170], %195 {strides = array<i32>} : memref<16x2048xf32, #tpu.memory_space<vmem>>, vector<1x64xf32>,
    %197 = vector.extract_strided_slice %168 {offsets = [0, 896], sizes = [1, 64], strides = [1, 1]} : vector<1x1024xf32> to vector<1x64xf32>
    %c14_171 = arith.constant 14 : index
    %c320_172 = arith.constant 320 : index
    %198 = vector.load %arg5[%c14_171, %c320_172] : memref<16x2048xf32, #tpu.memory_space<vmem>>, vector<1x64xf32>
    tpu.vector_store %arg5[%c14_171, %c320_172], %197 {strides = array<i32>} : memref<16x2048xf32, #tpu.memory_space<vmem>>, vector<1x64xf32>,
    %199 = vector.extract_strided_slice %168 {offsets = [0, 960], sizes = [1, 64], strides = [1, 1]} : vector<1x1024xf32> to vector<1x64xf32>
    %c15_173 = arith.constant 15 : index
    %c320_174 = arith.constant 320 : index
    %200 = vector.load %arg5[%c15_173, %c320_174] : memref<16x2048xf32, #tpu.memory_space<vmem>>, vector<1x64xf32>
    tpu.vector_store %arg5[%c15_173, %c320_174], %199 {strides = array<i32>} : memref<16x2048xf32, #tpu.memory_space<vmem>>, vector<1x64xf32>,
    %201 = vector.extract_strided_slice %2 {offsets = [6, 0], sizes = [1, 1024], strides = [1, 1]} : vector<32x1024xf32> to vector<1x1024xf32>
    %202 = vector.extract_strided_slice %201 {offsets = [0, 0], sizes = [1, 64], strides = [1, 1]} : vector<1x1024xf32> to vector<1x64xf32>
    %c0_175 = arith.constant 0 : index
    %c384 = arith.constant 384 : index
    %203 = vector.load %arg5[%c0_175, %c384] : memref<16x2048xf32, #tpu.memory_space<vmem>>, vector<1x64xf32>
    tpu.vector_store %arg5[%c0_175, %c384], %202 {strides = array<i32>} : memref<16x2048xf32, #tpu.memory_space<vmem>>, vector<1x64xf32>,
    %204 = vector.extract_strided_slice %201 {offsets = [0, 64], sizes = [1, 64], strides = [1, 1]} : vector<1x1024xf32> to vector<1x64xf32>
    %c1_176 = arith.constant 1 : index
    %c384_177 = arith.constant 384 : index
    %205 = vector.load %arg5[%c1_176, %c384_177] : memref<16x2048xf32, #tpu.memory_space<vmem>>, vector<1x64xf32>
    tpu.vector_store %arg5[%c1_176, %c384_177], %204 {strides = array<i32>} : memref<16x2048xf32, #tpu.memory_space<vmem>>, vector<1x64xf32>,
    %206 = vector.extract_strided_slice %201 {offsets = [0, 128], sizes = [1, 64], strides = [1, 1]} : vector<1x1024xf32> to vector<1x64xf32>
    %c2_178 = arith.constant 2 : index
    %c384_179 = arith.constant 384 : index
    %207 = vector.load %arg5[%c2_178, %c384_179] : memref<16x2048xf32, #tpu.memory_space<vmem>>, vector<1x64xf32>
    tpu.vector_store %arg5[%c2_178, %c384_179], %206 {strides = array<i32>} : memref<16x2048xf32, #tpu.memory_space<vmem>>, vector<1x64xf32>,
    %208 = vector.extract_strided_slice %201 {offsets = [0, 192], sizes = [1, 64], strides = [1, 1]} : vector<1x1024xf32> to vector<1x64xf32>
    %c3_180 = arith.constant 3 : index
    %c384_181 = arith.constant 384 : index
    %209 = vector.load %arg5[%c3_180, %c384_181] : memref<16x2048xf32, #tpu.memory_space<vmem>>, vector<1x64xf32>
    tpu.vector_store %arg5[%c3_180, %c384_181], %208 {strides = array<i32>} : memref<16x2048xf32, #tpu.memory_space<vmem>>, vector<1x64xf32>,
    %210 = vector.extract_strided_slice %201 {offsets = [0, 256], sizes = [1, 64], strides = [1, 1]} : vector<1x1024xf32> to vector<1x64xf32>
    %c4_182 = arith.constant 4 : index
    %c384_183 = arith.constant 384 : index
    %211 = vector.load %arg5[%c4_182, %c384_183] : memref<16x2048xf32, #tpu.memory_space<vmem>>, vector<1x64xf32>
    tpu.vector_store %arg5[%c4_182, %c384_183], %210 {strides = array<i32>} : memref<16x2048xf32, #tpu.memory_space<vmem>>, vector<1x64xf32>,
    %212 = vector.extract_strided_slice %201 {offsets = [0, 320], sizes = [1, 64], strides = [1, 1]} : vector<1x1024xf32> to vector<1x64xf32>
    %c5_184 = arith.constant 5 : index
    %c384_185 = arith.constant 384 : index
    %213 = vector.load %arg5[%c5_184, %c384_185] : memref<16x2048xf32, #tpu.memory_space<vmem>>, vector<1x64xf32>
    tpu.vector_store %arg5[%c5_184, %c384_185], %212 {strides = array<i32>} : memref<16x2048xf32, #tpu.memory_space<vmem>>, vector<1x64xf32>,
    %214 = vector.extract_strided_slice %201 {offsets = [0, 384], sizes = [1, 64], strides = [1, 1]} : vector<1x1024xf32> to vector<1x64xf32>
    %c6_186 = arith.constant 6 : index
    %c384_187 = arith.constant 384 : index
    %215 = vector.load %arg5[%c6_186, %c384_187] : memref<16x2048xf32, #tpu.memory_space<vmem>>, vector<1x64xf32>
    tpu.vector_store %arg5[%c6_186, %c384_187], %214 {strides = array<i32>} : memref<16x2048xf32, #tpu.memory_space<vmem>>, vector<1x64xf32>,
    %216 = vector.extract_strided_slice %201 {offsets = [0, 448], sizes = [1, 64], strides = [1, 1]} : vector<1x1024xf32> to vector<1x64xf32>
    %c7_188 = arith.constant 7 : index
    %c384_189 = arith.constant 384 : index
    %217 = vector.load %arg5[%c7_188, %c384_189] : memref<16x2048xf32, #tpu.memory_space<vmem>>, vector<1x64xf32>
    tpu.vector_store %arg5[%c7_188, %c384_189], %216 {strides = array<i32>} : memref<16x2048xf32, #tpu.memory_space<vmem>>, vector<1x64xf32>,
    %218 = vector.extract_strided_slice %201 {offsets = [0, 512], sizes = [1, 64], strides = [1, 1]} : vector<1x1024xf32> to vector<1x64xf32>
    %c8_190 = arith.constant 8 : index
    %c384_191 = arith.constant 384 : index
    %219 = vector.load %arg5[%c8_190, %c384_191] : memref<16x2048xf32, #tpu.memory_space<vmem>>, vector<1x64xf32>
    tpu.vector_store %arg5[%c8_190, %c384_191], %218 {strides = array<i32>} : memref<16x2048xf32, #tpu.memory_space<vmem>>, vector<1x64xf32>,
    %220 = vector.extract_strided_slice %201 {offsets = [0, 576], sizes = [1, 64], strides = [1, 1]} : vector<1x1024xf32> to vector<1x64xf32>
    %c9_192 = arith.constant 9 : index
    %c384_193 = arith.constant 384 : index
    %221 = vector.load %arg5[%c9_192, %c384_193] : memref<16x2048xf32, #tpu.memory_space<vmem>>, vector<1x64xf32>
    tpu.vector_store %arg5[%c9_192, %c384_193], %220 {strides = array<i32>} : memref<16x2048xf32, #tpu.memory_space<vmem>>, vector<1x64xf32>,
    %222 = vector.extract_strided_slice %201 {offsets = [0, 640], sizes = [1, 64], strides = [1, 1]} : vector<1x1024xf32> to vector<1x64xf32>
    %c10_194 = arith.constant 10 : index
    %c384_195 = arith.constant 384 : index
    %223 = vector.load %arg5[%c10_194, %c384_195] : memref<16x2048xf32, #tpu.memory_space<vmem>>, vector<1x64xf32>
    tpu.vector_store %arg5[%c10_194, %c384_195], %222 {strides = array<i32>} : memref<16x2048xf32, #tpu.memory_space<vmem>>, vector<1x64xf32>,
    %224 = vector.extract_strided_slice %201 {offsets = [0, 704], sizes = [1, 64], strides = [1, 1]} : vector<1x1024xf32> to vector<1x64xf32>
    %c11_196 = arith.constant 11 : index
    %c384_197 = arith.constant 384 : index
    %225 = vector.load %arg5[%c11_196, %c384_197] : memref<16x2048xf32, #tpu.memory_space<vmem>>, vector<1x64xf32>
    tpu.vector_store %arg5[%c11_196, %c384_197], %224 {strides = array<i32>} : memref<16x2048xf32, #tpu.memory_space<vmem>>, vector<1x64xf32>,
    %226 = vector.extract_strided_slice %201 {offsets = [0, 768], sizes = [1, 64], strides = [1, 1]} : vector<1x1024xf32> to vector<1x64xf32>
    %c12_198 = arith.constant 12 : index
    %c384_199 = arith.constant 384 : index
    %227 = vector.load %arg5[%c12_198, %c384_199] : memref<16x2048xf32, #tpu.memory_space<vmem>>, vector<1x64xf32>
    tpu.vector_store %arg5[%c12_198, %c384_199], %226 {strides = array<i32>} : memref<16x2048xf32, #tpu.memory_space<vmem>>, vector<1x64xf32>,
    %228 = vector.extract_strided_slice %201 {offsets = [0, 832], sizes = [1, 64], strides = [1, 1]} : vector<1x1024xf32> to vector<1x64xf32>
    %c13_200 = arith.constant 13 : index
    %c384_201 = arith.constant 384 : index
    %229 = vector.load %arg5[%c13_200, %c384_201] : memref<16x2048xf32, #tpu.memory_space<vmem>>, vector<1x64xf32>
    tpu.vector_store %arg5[%c13_200, %c384_201], %228 {strides = array<i32>} : memref<16x2048xf32, #tpu.memory_space<vmem>>, vector<1x64xf32>,
    %230 = vector.extract_strided_slice %201 {offsets = [0, 896], sizes = [1, 64], strides = [1, 1]} : vector<1x1024xf32> to vector<1x64xf32>
    %c14_202 = arith.constant 14 : index
    %c384_203 = arith.constant 384 : index
    %231 = vector.load %arg5[%c14_202, %c384_203] : memref<16x2048xf32, #tpu.memory_space<vmem>>, vector<1x64xf32>
    tpu.vector_store %arg5[%c14_202, %c384_203], %230 {strides = array<i32>} : memref<16x2048xf32, #tpu.memory_space<vmem>>, vector<1x64xf32>,
    %232 = vector.extract_strided_slice %201 {offsets = [0, 960], sizes = [1, 64], strides = [1, 1]} : vector<1x1024xf32> to vector<1x64xf32>
    %c15_204 = arith.constant 15 : index
    %c384_205 = arith.constant 384 : index
    %233 = vector.load %arg5[%c15_204, %c384_205] : memref<16x2048xf32, #tpu.memory_space<vmem>>, vector<1x64xf32>
    tpu.vector_store %arg5[%c15_204, %c384_205], %232 {strides = array<i32>} : memref<16x2048xf32, #tpu.memory_space<vmem>>, vector<1x64xf32>,
    %234 = vector.extract_strided_slice %2 {offsets = [7, 0], sizes = [1, 1024], strides = [1, 1]} : vector<32x1024xf32> to vector<1x1024xf32>
    %235 = vector.extract_strided_slice %234 {offsets = [0, 0], sizes = [1, 64], strides = [1, 1]} : vector<1x1024xf32> to vector<1x64xf32>
    %c0_206 = arith.constant 0 : index
    %c448 = arith.constant 448 : index
    %236 = vector.load %arg5[%c0_206, %c448] : memref<16x2048xf32, #tpu.memory_space<vmem>>, vector<1x64xf32>
    tpu.vector_store %arg5[%c0_206, %c448], %235 {strides = array<i32>} : memref<16x2048xf32, #tpu.memory_space<vmem>>, vector<1x64xf32>,
    %237 = vector.extract_strided_slice %234 {offsets = [0, 64], sizes = [1, 64], strides = [1, 1]} : vector<1x1024xf32> to vector<1x64xf32>
    %c1_207 = arith.constant 1 : index
    %c448_208 = arith.constant 448 : index
    %238 = vector.load %arg5[%c1_207, %c448_208] : memref<16x2048xf32, #tpu.memory_space<vmem>>, vector<1x64xf32>
    tpu.vector_store %arg5[%c1_207, %c448_208], %237 {strides = array<i32>} : memref<16x2048xf32, #tpu.memory_space<vmem>>, vector<1x64xf32>,
    %239 = vector.extract_strided_slice %234 {offsets = [0, 128], sizes = [1, 64], strides = [1, 1]} : vector<1x1024xf32> to vector<1x64xf32>
    %c2_209 = arith.constant 2 : index
    %c448_210 = arith.constant 448 : index
    %240 = vector.load %arg5[%c2_209, %c448_210] : memref<16x2048xf32, #tpu.memory_space<vmem>>, vector<1x64xf32>
    tpu.vector_store %arg5[%c2_209, %c448_210], %239 {strides = array<i32>} : memref<16x2048xf32, #tpu.memory_space<vmem>>, vector<1x64xf32>,
    %241 = vector.extract_strided_slice %234 {offsets = [0, 192], sizes = [1, 64], strides = [1, 1]} : vector<1x1024xf32> to vector<1x64xf32>
    %c3_211 = arith.constant 3 : index
    %c448_212 = arith.constant 448 : index
    %242 = vector.load %arg5[%c3_211, %c448_212] : memref<16x2048xf32, #tpu.memory_space<vmem>>, vector<1x64xf32>
    tpu.vector_store %arg5[%c3_211, %c448_212], %241 {strides = array<i32>} : memref<16x2048xf32, #tpu.memory_space<vmem>>, vector<1x64xf32>,
    %243 = vector.extract_strided_slice %234 {offsets = [0, 256], sizes = [1, 64], strides = [1, 1]} : vector<1x1024xf32> to vector<1x64xf32>
    %c4_213 = arith.constant 4 : index
    %c448_214 = arith.constant 448 : index
    %244 = vector.load %arg5[%c4_213, %c448_214] : memref<16x2048xf32, #tpu.memory_space<vmem>>, vector<1x64xf32>
    tpu.vector_store %arg5[%c4_213, %c448_214], %243 {strides = array<i32>} : memref<16x2048xf32, #tpu.memory_space<vmem>>, vector<1x64xf32>,
    %245 = vector.extract_strided_slice %234 {offsets = [0, 320], sizes = [1, 64], strides = [1, 1]} : vector<1x1024xf32> to vector<1x64xf32>
    %c5_215 = arith.constant 5 : index
    %c448_216 = arith.constant 448 : index
    %246 = vector.load %arg5[%c5_215, %c448_216] : memref<16x2048xf32, #tpu.memory_space<vmem>>, vector<1x64xf32>
    tpu.vector_store %arg5[%c5_215, %c448_216], %245 {strides = array<i32>} : memref<16x2048xf32, #tpu.memory_space<vmem>>, vector<1x64xf32>,
    %247 = vector.extract_strided_slice %234 {offsets = [0, 384], sizes = [1, 64], strides = [1, 1]} : vector<1x1024xf32> to vector<1x64xf32>
    %c6_217 = arith.constant 6 : index
    %c448_218 = arith.constant 448 : index
    %248 = vector.load %arg5[%c6_217, %c448_218] : memref<16x2048xf32, #tpu.memory_space<vmem>>, vector<1x64xf32>
    tpu.vector_store %arg5[%c6_217, %c448_218], %247 {strides = array<i32>} : memref<16x2048xf32, #tpu.memory_space<vmem>>, vector<1x64xf32>,
    %249 = vector.extract_strided_slice %234 {offsets = [0, 448], sizes = [1, 64], strides = [1, 1]} : vector<1x1024xf32> to vector<1x64xf32>
    %c7_219 = arith.constant 7 : index
    %c448_220 = arith.constant 448 : index
    %250 = vector.load %arg5[%c7_219, %c448_220] : memref<16x2048xf32, #tpu.memory_space<vmem>>, vector<1x64xf32>
    tpu.vector_store %arg5[%c7_219, %c448_220], %249 {strides = array<i32>} : memref<16x2048xf32, #tpu.memory_space<vmem>>, vector<1x64xf32>,
    %251 = vector.extract_strided_slice %234 {offsets = [0, 512], sizes = [1, 64], strides = [1, 1]} : vector<1x1024xf32> to vector<1x64xf32>
    %c8_221 = arith.constant 8 : index
    %c448_222 = arith.constant 448 : index
    %252 = vector.load %arg5[%c8_221, %c448_222] : memref<16x2048xf32, #tpu.memory_space<vmem>>, vector<1x64xf32>
    tpu.vector_store %arg5[%c8_221, %c448_222], %251 {strides = array<i32>} : memref<16x2048xf32, #tpu.memory_space<vmem>>, vector<1x64xf32>,
    %253 = vector.extract_strided_slice %234 {offsets = [0, 576], sizes = [1, 64], strides = [1, 1]} : vector<1x1024xf32> to vector<1x64xf32>
    %c9_223 = arith.constant 9 : index
    %c448_224 = arith.constant 448 : index
    %254 = vector.load %arg5[%c9_223, %c448_224] : memref<16x2048xf32, #tpu.memory_space<vmem>>, vector<1x64xf32>
    tpu.vector_store %arg5[%c9_223, %c448_224], %253 {strides = array<i32>} : memref<16x2048xf32, #tpu.memory_space<vmem>>, vector<1x64xf32>,
    %255 = vector.extract_strided_slice %234 {offsets = [0, 640], sizes = [1, 64], strides = [1, 1]} : vector<1x1024xf32> to vector<1x64xf32>
    %c10_225 = arith.constant 10 : index
    %c448_226 = arith.constant 448 : index
    %256 = vector.load %arg5[%c10_225, %c448_226] : memref<16x2048xf32, #tpu.memory_space<vmem>>, vector<1x64xf32>
    tpu.vector_store %arg5[%c10_225, %c448_226], %255 {strides = array<i32>} : memref<16x2048xf32, #tpu.memory_space<vmem>>, vector<1x64xf32>,
    %257 = vector.extract_strided_slice %234 {offsets = [0, 704], sizes = [1, 64], strides = [1, 1]} : vector<1x1024xf32> to vector<1x64xf32>
    %c11_227 = arith.constant 11 : index
    %c448_228 = arith.constant 448 : index
    %258 = vector.load %arg5[%c11_227, %c448_228] : memref<16x2048xf32, #tpu.memory_space<vmem>>, vector<1x64xf32>
    tpu.vector_store %arg5[%c11_227, %c448_228], %257 {strides = array<i32>} : memref<16x2048xf32, #tpu.memory_space<vmem>>, vector<1x64xf32>,
    %259 = vector.extract_strided_slice %234 {offsets = [0, 768], sizes = [1, 64], strides = [1, 1]} : vector<1x1024xf32> to vector<1x64xf32>
    %c12_229 = arith.constant 12 : index
    %c448_230 = arith.constant 448 : index
    %260 = vector.load %arg5[%c12_229, %c448_230] : memref<16x2048xf32, #tpu.memory_space<vmem>>, vector<1x64xf32>
    tpu.vector_store %arg5[%c12_229, %c448_230], %259 {strides = array<i32>} : memref<16x2048xf32, #tpu.memory_space<vmem>>, vector<1x64xf32>,
    %261 = vector.extract_strided_slice %234 {offsets = [0, 832], sizes = [1, 64], strides = [1, 1]} : vector<1x1024xf32> to vector<1x64xf32>
    %c13_231 = arith.constant 13 : index
    %c448_232 = arith.constant 448 : index
    %262 = vector.load %arg5[%c13_231, %c448_232] : memref<16x2048xf32, #tpu.memory_space<vmem>>, vector<1x64xf32>
    tpu.vector_store %arg5[%c13_231, %c448_232], %261 {strides = array<i32>} : memref<16x2048xf32, #tpu.memory_space<vmem>>, vector<1x64xf32>,
    %263 = vector.extract_strided_slice %234 {offsets = [0, 896], sizes = [1, 64], strides = [1, 1]} : vector<1x1024xf32> to vector<1x64xf32>
    %c14_233 = arith.constant 14 : index
    %c448_234 = arith.constant 448 : index
    %264 = vector.load %arg5[%c14_233, %c448_234] : memref<16x2048xf32, #tpu.memory_space<vmem>>, vector<1x64xf32>
    tpu.vector_store %arg5[%c14_233, %c448_234], %263 {strides = array<i32>} : memref<16x2048xf32, #tpu.memory_space<vmem>>, vector<1x64xf32>,
    %265 = vector.extract_strided_slice %234 {offsets = [0, 960], sizes = [1, 64], strides = [1, 1]} : vector<1x1024xf32> to vector<1x64xf32>
    %c15_235 = arith.constant 15 : index
    %c448_236 = arith.constant 448 : index
    %266 = vector.load %arg5[%c15_235, %c448_236] : memref<16x2048xf32, #tpu.memory_space<vmem>>, vector<1x64xf32>
    tpu.vector_store %arg5[%c15_235, %c448_236], %265 {strides = array<i32>} : memref<16x2048xf32, #tpu.memory_space<vmem>>, vector<1x64xf32>,
    %267 = vector.extract_strided_slice %2 {offsets = [8, 0], sizes = [1, 1024], strides = [1, 1]} : vector<32x1024xf32> to vector<1x1024xf32>
    %268 = vector.extract_strided_slice %267 {offsets = [0, 0], sizes = [1, 64], strides = [1, 1]} : vector<1x1024xf32> to vector<1x64xf32>
    %c0_237 = arith.constant 0 : index
    %c512 = arith.constant 512 : index
    %269 = vector.load %arg5[%c0_237, %c512] : memref<16x2048xf32, #tpu.memory_space<vmem>>, vector<1x64xf32>
    tpu.vector_store %arg5[%c0_237, %c512], %268 {strides = array<i32>} : memref<16x2048xf32, #tpu.memory_space<vmem>>, vector<1x64xf32>,
    %270 = vector.extract_strided_slice %267 {offsets = [0, 64], sizes = [1, 64], strides = [1, 1]} : vector<1x1024xf32> to vector<1x64xf32>
    %c1_238 = arith.constant 1 : index
    %c512_239 = arith.constant 512 : index
    %271 = vector.load %arg5[%c1_238, %c512_239] : memref<16x2048xf32, #tpu.memory_space<vmem>>, vector<1x64xf32>
    tpu.vector_store %arg5[%c1_238, %c512_239], %270 {strides = array<i32>} : memref<16x2048xf32, #tpu.memory_space<vmem>>, vector<1x64xf32>,
    %272 = vector.extract_strided_slice %267 {offsets = [0, 128], sizes = [1, 64], strides = [1, 1]} : vector<1x1024xf32> to vector<1x64xf32>
    %c2_240 = arith.constant 2 : index
    %c512_241 = arith.constant 512 : index
    %273 = vector.load %arg5[%c2_240, %c512_241] : memref<16x2048xf32, #tpu.memory_space<vmem>>, vector<1x64xf32>
    tpu.vector_store %arg5[%c2_240, %c512_241], %272 {strides = array<i32>} : memref<16x2048xf32, #tpu.memory_space<vmem>>, vector<1x64xf32>,
    %274 = vector.extract_strided_slice %267 {offsets = [0, 192], sizes = [1, 64], strides = [1, 1]} : vector<1x1024xf32> to vector<1x64xf32>
    %c3_242 = arith.constant 3 : index
    %c512_243 = arith.constant 512 : index
    %275 = vector.load %arg5[%c3_242, %c512_243] : memref<16x2048xf32, #tpu.memory_space<vmem>>, vector<1x64xf32>
    tpu.vector_store %arg5[%c3_242, %c512_243], %274 {strides = array<i32>} : memref<16x2048xf32, #tpu.memory_space<vmem>>, vector<1x64xf32>,
    %276 = vector.extract_strided_slice %267 {offsets = [0, 256], sizes = [1, 64], strides = [1, 1]} : vector<1x1024xf32> to vector<1x64xf32>
    %c4_244 = arith.constant 4 : index
    %c512_245 = arith.constant 512 : index
    %277 = vector.load %arg5[%c4_244, %c512_245] : memref<16x2048xf32, #tpu.memory_space<vmem>>, vector<1x64xf32>
    tpu.vector_store %arg5[%c4_244, %c512_245], %276 {strides = array<i32>} : memref<16x2048xf32, #tpu.memory_space<vmem>>, vector<1x64xf32>,
    %278 = vector.extract_strided_slice %267 {offsets = [0, 320], sizes = [1, 64], strides = [1, 1]} : vector<1x1024xf32> to vector<1x64xf32>
    %c5_246 = arith.constant 5 : index
    %c512_247 = arith.constant 512 : index
    %279 = vector.load %arg5[%c5_246, %c512_247] : memref<16x2048xf32, #tpu.memory_space<vmem>>, vector<1x64xf32>
    tpu.vector_store %arg5[%c5_246, %c512_247], %278 {strides = array<i32>} : memref<16x2048xf32, #tpu.memory_space<vmem>>, vector<1x64xf32>,
    %280 = vector.extract_strided_slice %267 {offsets = [0, 384], sizes = [1, 64], strides = [1, 1]} : vector<1x1024xf32> to vector<1x64xf32>
    %c6_248 = arith.constant 6 : index
    %c512_249 = arith.constant 512 : index
    %281 = vector.load %arg5[%c6_248, %c512_249] : memref<16x2048xf32, #tpu.memory_space<vmem>>, vector<1x64xf32>
    tpu.vector_store %arg5[%c6_248, %c512_249], %280 {strides = array<i32>} : memref<16x2048xf32, #tpu.memory_space<vmem>>, vector<1x64xf32>,
    %282 = vector.extract_strided_slice %267 {offsets = [0, 448], sizes = [1, 64], strides = [1, 1]} : vector<1x1024xf32> to vector<1x64xf32>
    %c7_250 = arith.constant 7 : index
    %c512_251 = arith.constant 512 : index
    %283 = vector.load %arg5[%c7_250, %c512_251] : memref<16x2048xf32, #tpu.memory_space<vmem>>, vector<1x64xf32>
    tpu.vector_store %arg5[%c7_250, %c512_251], %282 {strides = array<i32>} : memref<16x2048xf32, #tpu.memory_space<vmem>>, vector<1x64xf32>,
    %284 = vector.extract_strided_slice %267 {offsets = [0, 512], sizes = [1, 64], strides = [1, 1]} : vector<1x1024xf32> to vector<1x64xf32>
    %c8_252 = arith.constant 8 : index
    %c512_253 = arith.constant 512 : index
    %285 = vector.load %arg5[%c8_252, %c512_253] : memref<16x2048xf32, #tpu.memory_space<vmem>>, vector<1x64xf32>
    tpu.vector_store %arg5[%c8_252, %c512_253], %284 {strides = array<i32>} : memref<16x2048xf32, #tpu.memory_space<vmem>>, vector<1x64xf32>,
    %286 = vector.extract_strided_slice %267 {offsets = [0, 576], sizes = [1, 64], strides = [1, 1]} : vector<1x1024xf32> to vector<1x64xf32>
    %c9_254 = arith.constant 9 : index
    %c512_255 = arith.constant 512 : index
    %287 = vector.load %arg5[%c9_254, %c512_255] : memref<16x2048xf32, #tpu.memory_space<vmem>>, vector<1x64xf32>
    tpu.vector_store %arg5[%c9_254, %c512_255], %286 {strides = array<i32>} : memref<16x2048xf32, #tpu.memory_space<vmem>>, vector<1x64xf32>,
    %288 = vector.extract_strided_slice %267 {offsets = [0, 640], sizes = [1, 64], strides = [1, 1]} : vector<1x1024xf32> to vector<1x64xf32>
    %c10_256 = arith.constant 10 : index
    %c512_257 = arith.constant 512 : index
    %289 = vector.load %arg5[%c10_256, %c512_257] : memref<16x2048xf32, #tpu.memory_space<vmem>>, vector<1x64xf32>
    tpu.vector_store %arg5[%c10_256, %c512_257], %288 {strides = array<i32>} : memref<16x2048xf32, #tpu.memory_space<vmem>>, vector<1x64xf32>,
    %290 = vector.extract_strided_slice %267 {offsets = [0, 704], sizes = [1, 64], strides = [1, 1]} : vector<1x1024xf32> to vector<1x64xf32>
    %c11_258 = arith.constant 11 : index
    %c512_259 = arith.constant 512 : index
    %291 = vector.load %arg5[%c11_258, %c512_259] : memref<16x2048xf32, #tpu.memory_space<vmem>>, vector<1x64xf32>
    tpu.vector_store %arg5[%c11_258, %c512_259], %290 {strides = array<i32>} : memref<16x2048xf32, #tpu.memory_space<vmem>>, vector<1x64xf32>,
    %292 = vector.extract_strided_slice %267 {offsets = [0, 768], sizes = [1, 64], strides = [1, 1]} : vector<1x1024xf32> to vector<1x64xf32>
    %c12_260 = arith.constant 12 : index
    %c512_261 = arith.constant 512 : index
    %293 = vector.load %arg5[%c12_260, %c512_261] : memref<16x2048xf32, #tpu.memory_space<vmem>>, vector<1x64xf32>
    tpu.vector_store %arg5[%c12_260, %c512_261], %292 {strides = array<i32>} : memref<16x2048xf32, #tpu.memory_space<vmem>>, vector<1x64xf32>,
    %294 = vector.extract_strided_slice %267 {offsets = [0, 832], sizes = [1, 64], strides = [1, 1]} : vector<1x1024xf32> to vector<1x64xf32>
    %c13_262 = arith.constant 13 : index
    %c512_263 = arith.constant 512 : index
    %295 = vector.load %arg5[%c13_262, %c512_263] : memref<16x2048xf32, #tpu.memory_space<vmem>>, vector<1x64xf32>
    tpu.vector_store %arg5[%c13_262, %c512_263], %294 {strides = array<i32>} : memref<16x2048xf32, #tpu.memory_space<vmem>>, vector<1x64xf32>,
    %296 = vector.extract_strided_slice %267 {offsets = [0, 896], sizes = [1, 64], strides = [1, 1]} : vector<1x1024xf32> to vector<1x64xf32>
    %c14_264 = arith.constant 14 : index
    %c512_265 = arith.constant 512 : index
    %297 = vector.load %arg5[%c14_264, %c512_265] : memref<16x2048xf32, #tpu.memory_space<vmem>>, vector<1x64xf32>
    tpu.vector_store %arg5[%c14_264, %c512_265], %296 {strides = array<i32>} : memref<16x2048xf32, #tpu.memory_space<vmem>>, vector<1x64xf32>,
    %298 = vector.extract_strided_slice %267 {offsets = [0, 960], sizes = [1, 64], strides = [1, 1]} : vector<1x1024xf32> to vector<1x64xf32>
    %c15_266 = arith.constant 15 : index
    %c512_267 = arith.constant 512 : index
    %299 = vector.load %arg5[%c15_266, %c512_267] : memref<16x2048xf32, #tpu.memory_space<vmem>>, vector<1x64xf32>
    tpu.vector_store %arg5[%c15_266, %c512_267], %298 {strides = array<i32>} : memref<16x2048xf32, #tpu.memory_space<vmem>>, vector<1x64xf32>,
    %300 = vector.extract_strided_slice %2 {offsets = [9, 0], sizes = [1, 1024], strides = [1, 1]} : vector<32x1024xf32> to vector<1x1024xf32>
    %301 = vector.extract_strided_slice %300 {offsets = [0, 0], sizes = [1, 64], strides = [1, 1]} : vector<1x1024xf32> to vector<1x64xf32>
    %c0_268 = arith.constant 0 : index
    %c576 = arith.constant 576 : index
    %302 = vector.load %arg5[%c0_268, %c576] : memref<16x2048xf32, #tpu.memory_space<vmem>>, vector<1x64xf32>
    tpu.vector_store %arg5[%c0_268, %c576], %301 {strides = array<i32>} : memref<16x2048xf32, #tpu.memory_space<vmem>>, vector<1x64xf32>,
    %303 = vector.extract_strided_slice %300 {offsets = [0, 64], sizes = [1, 64], strides = [1, 1]} : vector<1x1024xf32> to vector<1x64xf32>
    %c1_269 = arith.constant 1 : index
    %c576_270 = arith.constant 576 : index
    %304 = vector.load %arg5[%c1_269, %c576_270] : memref<16x2048xf32, #tpu.memory_space<vmem>>, vector<1x64xf32>
    tpu.vector_store %arg5[%c1_269, %c576_270], %303 {strides = array<i32>} : memref<16x2048xf32, #tpu.memory_space<vmem>>, vector<1x64xf32>,
    %305 = vector.extract_strided_slice %300 {offsets = [0, 128], sizes = [1, 64], strides = [1, 1]} : vector<1x1024xf32> to vector<1x64xf32>
    %c2_271 = arith.constant 2 : index
    %c576_272 = arith.constant 576 : index
    %306 = vector.load %arg5[%c2_271, %c576_272] : memref<16x2048xf32, #tpu.memory_space<vmem>>, vector<1x64xf32>
    tpu.vector_store %arg5[%c2_271, %c576_272], %305 {strides = array<i32>} : memref<16x2048xf32, #tpu.memory_space<vmem>>, vector<1x64xf32>,
    %307 = vector.extract_strided_slice %300 {offsets = [0, 192], sizes = [1, 64], strides = [1, 1]} : vector<1x1024xf32> to vector<1x64xf32>
    %c3_273 = arith.constant 3 : index
    %c576_274 = arith.constant 576 : index
    %308 = vector.load %arg5[%c3_273, %c576_274] : memref<16x2048xf32, #tpu.memory_space<vmem>>, vector<1x64xf32>
    tpu.vector_store %arg5[%c3_273, %c576_274], %307 {strides = array<i32>} : memref<16x2048xf32, #tpu.memory_space<vmem>>, vector<1x64xf32>,
    %309 = vector.extract_strided_slice %300 {offsets = [0, 256], sizes = [1, 64], strides = [1, 1]} : vector<1x1024xf32> to vector<1x64xf32>
    %c4_275 = arith.constant 4 : index
    %c576_276 = arith.constant 576 : index
    %310 = vector.load %arg5[%c4_275, %c576_276] : memref<16x2048xf32, #tpu.memory_space<vmem>>, vector<1x64xf32>
    tpu.vector_store %arg5[%c4_275, %c576_276], %309 {strides = array<i32>} : memref<16x2048xf32, #tpu.memory_space<vmem>>, vector<1x64xf32>,
    %311 = vector.extract_strided_slice %300 {offsets = [0, 320], sizes = [1, 64], strides = [1, 1]} : vector<1x1024xf32> to vector<1x64xf32>
    %c5_277 = arith.constant 5 : index
    %c576_278 = arith.constant 576 : index
    %312 = vector.load %arg5[%c5_277, %c576_278] : memref<16x2048xf32, #tpu.memory_space<vmem>>, vector<1x64xf32>
    tpu.vector_store %arg5[%c5_277, %c576_278], %311 {strides = array<i32>} : memref<16x2048xf32, #tpu.memory_space<vmem>>, vector<1x64xf32>,
    %313 = vector.extract_strided_slice %300 {offsets = [0, 384], sizes = [1, 64], strides = [1, 1]} : vector<1x1024xf32> to vector<1x64xf32>
    %c6_279 = arith.constant 6 : index
    %c576_280 = arith.constant 576 : index
    %314 = vector.load %arg5[%c6_279, %c576_280] : memref<16x2048xf32, #tpu.memory_space<vmem>>, vector<1x64xf32>
    tpu.vector_store %arg5[%c6_279, %c576_280], %313 {strides = array<i32>} : memref<16x2048xf32, #tpu.memory_space<vmem>>, vector<1x64xf32>,
    %315 = vector.extract_strided_slice %300 {offsets = [0, 448], sizes = [1, 64], strides = [1, 1]} : vector<1x1024xf32> to vector<1x64xf32>
    %c7_281 = arith.constant 7 : index
    %c576_282 = arith.constant 576 : index
    %316 = vector.load %arg5[%c7_281, %c576_282] : memref<16x2048xf32, #tpu.memory_space<vmem>>, vector<1x64xf32>
    tpu.vector_store %arg5[%c7_281, %c576_282], %315 {strides = array<i32>} : memref<16x2048xf32, #tpu.memory_space<vmem>>, vector<1x64xf32>,
    %317 = vector.extract_strided_slice %300 {offsets = [0, 512], sizes = [1, 64], strides = [1, 1]} : vector<1x1024xf32> to vector<1x64xf32>
    %c8_283 = arith.constant 8 : index
    %c576_284 = arith.constant 576 : index
    %318 = vector.load %arg5[%c8_283, %c576_284] : memref<16x2048xf32, #tpu.memory_space<vmem>>, vector<1x64xf32>
    tpu.vector_store %arg5[%c8_283, %c576_284], %317 {strides = array<i32>} : memref<16x2048xf32, #tpu.memory_space<vmem>>, vector<1x64xf32>,
    %319 = vector.extract_strided_slice %300 {offsets = [0, 576], sizes = [1, 64], strides = [1, 1]} : vector<1x1024xf32> to vector<1x64xf32>
    %c9_285 = arith.constant 9 : index
    %c576_286 = arith.constant 576 : index
    %320 = vector.load %arg5[%c9_285, %c576_286] : memref<16x2048xf32, #tpu.memory_space<vmem>>, vector<1x64xf32>
    tpu.vector_store %arg5[%c9_285, %c576_286], %319 {strides = array<i32>} : memref<16x2048xf32, #tpu.memory_space<vmem>>, vector<1x64xf32>,
    %321 = vector.extract_strided_slice %300 {offsets = [0, 640], sizes = [1, 64], strides = [1, 1]} : vector<1x1024xf32> to vector<1x64xf32>
    %c10_287 = arith.constant 10 : index
    %c576_288 = arith.constant 576 : index
    %322 = vector.load %arg5[%c10_287, %c576_288] : memref<16x2048xf32, #tpu.memory_space<vmem>>, vector<1x64xf32>
    tpu.vector_store %arg5[%c10_287, %c576_288], %321 {strides = array<i32>} : memref<16x2048xf32, #tpu.memory_space<vmem>>, vector<1x64xf32>,
    %323 = vector.extract_strided_slice %300 {offsets = [0, 704], sizes = [1, 64], strides = [1, 1]} : vector<1x1024xf32> to vector<1x64xf32>
    %c11_289 = arith.constant 11 : index
    %c576_290 = arith.constant 576 : index
    %324 = vector.load %arg5[%c11_289, %c576_290] : memref<16x2048xf32, #tpu.memory_space<vmem>>, vector<1x64xf32>
    tpu.vector_store %arg5[%c11_289, %c576_290], %323 {strides = array<i32>} : memref<16x2048xf32, #tpu.memory_space<vmem>>, vector<1x64xf32>,
    %325 = vector.extract_strided_slice %300 {offsets = [0, 768], sizes = [1, 64], strides = [1, 1]} : vector<1x1024xf32> to vector<1x64xf32>
    %c12_291 = arith.constant 12 : index
    %c576_292 = arith.constant 576 : index
    %326 = vector.load %arg5[%c12_291, %c576_292] : memref<16x2048xf32, #tpu.memory_space<vmem>>, vector<1x64xf32>
    tpu.vector_store %arg5[%c12_291, %c576_292], %325 {strides = array<i32>} : memref<16x2048xf32, #tpu.memory_space<vmem>>, vector<1x64xf32>,
    %327 = vector.extract_strided_slice %300 {offsets = [0, 832], sizes = [1, 64], strides = [1, 1]} : vector<1x1024xf32> to vector<1x64xf32>
    %c13_293 = arith.constant 13 : index
    %c576_294 = arith.constant 576 : index
    %328 = vector.load %arg5[%c13_293, %c576_294] : memref<16x2048xf32, #tpu.memory_space<vmem>>, vector<1x64xf32>
    tpu.vector_store %arg5[%c13_293, %c576_294], %327 {strides = array<i32>} : memref<16x2048xf32, #tpu.memory_space<vmem>>, vector<1x64xf32>,
    %329 = vector.extract_strided_slice %300 {offsets = [0, 896], sizes = [1, 64], strides = [1, 1]} : vector<1x1024xf32> to vector<1x64xf32>
    %c14_295 = arith.constant 14 : index
    %c576_296 = arith.constant 576 : index
    %330 = vector.load %arg5[%c14_295, %c576_296] : memref<16x2048xf32, #tpu.memory_space<vmem>>, vector<1x64xf32>
    tpu.vector_store %arg5[%c14_295, %c576_296], %329 {strides = array<i32>} : memref<16x2048xf32, #tpu.memory_space<vmem>>, vector<1x64xf32>,
    %331 = vector.extract_strided_slice %300 {offsets = [0, 960], sizes = [1, 64], strides = [1, 1]} : vector<1x1024xf32> to vector<1x64xf32>
    %c15_297 = arith.constant 15 : index
    %c576_298 = arith.constant 576 : index
    %332 = vector.load %arg5[%c15_297, %c576_298] : memref<16x2048xf32, #tpu.memory_space<vmem>>, vector<1x64xf32>
    tpu.vector_store %arg5[%c15_297, %c576_298], %331 {strides = array<i32>} : memref<16x2048xf32, #tpu.memory_space<vmem>>, vector<1x64xf32>,
    %333 = vector.extract_strided_slice %2 {offsets = [10, 0], sizes = [1, 1024], strides = [1, 1]} : vector<32x1024xf32> to vector<1x1024xf32>
    %334 = vector.extract_strided_slice %333 {offsets = [0, 0], sizes = [1, 64], strides = [1, 1]} : vector<1x1024xf32> to vector<1x64xf32>
    %c0_299 = arith.constant 0 : index
    %c640 = arith.constant 640 : index
    %335 = vector.load %arg5[%c0_299, %c640] : memref<16x2048xf32, #tpu.memory_space<vmem>>, vector<1x64xf32>
    tpu.vector_store %arg5[%c0_299, %c640], %334 {strides = array<i32>} : memref<16x2048xf32, #tpu.memory_space<vmem>>, vector<1x64xf32>,
    %336 = vector.extract_strided_slice %333 {offsets = [0, 64], sizes = [1, 64], strides = [1, 1]} : vector<1x1024xf32> to vector<1x64xf32>
    %c1_300 = arith.constant 1 : index
    %c640_301 = arith.constant 640 : index
    %337 = vector.load %arg5[%c1_300, %c640_301] : memref<16x2048xf32, #tpu.memory_space<vmem>>, vector<1x64xf32>
    tpu.vector_store %arg5[%c1_300, %c640_301], %336 {strides = array<i32>} : memref<16x2048xf32, #tpu.memory_space<vmem>>, vector<1x64xf32>,
    %338 = vector.extract_strided_slice %333 {offsets = [0, 128], sizes = [1, 64], strides = [1, 1]} : vector<1x1024xf32> to vector<1x64xf32>
    %c2_302 = arith.constant 2 : index
    %c640_303 = arith.constant 640 : index
    %339 = vector.load %arg5[%c2_302, %c640_303] : memref<16x2048xf32, #tpu.memory_space<vmem>>, vector<1x64xf32>
    tpu.vector_store %arg5[%c2_302, %c640_303], %338 {strides = array<i32>} : memref<16x2048xf32, #tpu.memory_space<vmem>>, vector<1x64xf32>,
    %340 = vector.extract_strided_slice %333 {offsets = [0, 192], sizes = [1, 64], strides = [1, 1]} : vector<1x1024xf32> to vector<1x64xf32>
    %c3_304 = arith.constant 3 : index
    %c640_305 = arith.constant 640 : index
    %341 = vector.load %arg5[%c3_304, %c640_305] : memref<16x2048xf32, #tpu.memory_space<vmem>>, vector<1x64xf32>
    tpu.vector_store %arg5[%c3_304, %c640_305], %340 {strides = array<i32>} : memref<16x2048xf32, #tpu.memory_space<vmem>>, vector<1x64xf32>,
    %342 = vector.extract_strided_slice %333 {offsets = [0, 256], sizes = [1, 64], strides = [1, 1]} : vector<1x1024xf32> to vector<1x64xf32>
    %c4_306 = arith.constant 4 : index
    %c640_307 = arith.constant 640 : index
    %343 = vector.load %arg5[%c4_306, %c640_307] : memref<16x2048xf32, #tpu.memory_space<vmem>>, vector<1x64xf32>
    tpu.vector_store %arg5[%c4_306, %c640_307], %342 {strides = array<i32>} : memref<16x2048xf32, #tpu.memory_space<vmem>>, vector<1x64xf32>,
    %344 = vector.extract_strided_slice %333 {offsets = [0, 320], sizes = [1, 64], strides = [1, 1]} : vector<1x1024xf32> to vector<1x64xf32>
    %c5_308 = arith.constant 5 : index
    %c640_309 = arith.constant 640 : index
    %345 = vector.load %arg5[%c5_308, %c640_309] : memref<16x2048xf32, #tpu.memory_space<vmem>>, vector<1x64xf32>
    tpu.vector_store %arg5[%c5_308, %c640_309], %344 {strides = array<i32>} : memref<16x2048xf32, #tpu.memory_space<vmem>>, vector<1x64xf32>,
    %346 = vector.extract_strided_slice %333 {offsets = [0, 384], sizes = [1, 64], strides = [1, 1]} : vector<1x1024xf32> to vector<1x64xf32>
    %c6_310 = arith.constant 6 : index
    %c640_311 = arith.constant 640 : index
    %347 = vector.load %arg5[%c6_310, %c640_311] : memref<16x2048xf32, #tpu.memory_space<vmem>>, vector<1x64xf32>
    tpu.vector_store %arg5[%c6_310, %c640_311], %346 {strides = array<i32>} : memref<16x2048xf32, #tpu.memory_space<vmem>>, vector<1x64xf32>,
    %348 = vector.extract_strided_slice %333 {offsets = [0, 448], sizes = [1, 64], strides = [1, 1]} : vector<1x1024xf32> to vector<1x64xf32>
    %c7_312 = arith.constant 7 : index
    %c640_313 = arith.constant 640 : index
    %349 = vector.load %arg5[%c7_312, %c640_313] : memref<16x2048xf32, #tpu.memory_space<vmem>>, vector<1x64xf32>
    tpu.vector_store %arg5[%c7_312, %c640_313], %348 {strides = array<i32>} : memref<16x2048xf32, #tpu.memory_space<vmem>>, vector<1x64xf32>,
    %350 = vector.extract_strided_slice %333 {offsets = [0, 512], sizes = [1, 64], strides = [1, 1]} : vector<1x1024xf32> to vector<1x64xf32>
    %c8_314 = arith.constant 8 : index
    %c640_315 = arith.constant 640 : index
    %351 = vector.load %arg5[%c8_314, %c640_315] : memref<16x2048xf32, #tpu.memory_space<vmem>>, vector<1x64xf32>
    tpu.vector_store %arg5[%c8_314, %c640_315], %350 {strides = array<i32>} : memref<16x2048xf32, #tpu.memory_space<vmem>>, vector<1x64xf32>,
    %352 = vector.extract_strided_slice %333 {offsets = [0, 576], sizes = [1, 64], strides = [1, 1]} : vector<1x1024xf32> to vector<1x64xf32>
    %c9_316 = arith.constant 9 : index
    %c640_317 = arith.constant 640 : index
    %353 = vector.load %arg5[%c9_316, %c640_317] : memref<16x2048xf32, #tpu.memory_space<vmem>>, vector<1x64xf32>
    tpu.vector_store %arg5[%c9_316, %c640_317], %352 {strides = array<i32>} : memref<16x2048xf32, #tpu.memory_space<vmem>>, vector<1x64xf32>,
    %354 = vector.extract_strided_slice %333 {offsets = [0, 640], sizes = [1, 64], strides = [1, 1]} : vector<1x1024xf32> to vector<1x64xf32>
    %c10_318 = arith.constant 10 : index
    %c640_319 = arith.constant 640 : index
    %355 = vector.load %arg5[%c10_318, %c640_319] : memref<16x2048xf32, #tpu.memory_space<vmem>>, vector<1x64xf32>
    tpu.vector_store %arg5[%c10_318, %c640_319], %354 {strides = array<i32>} : memref<16x2048xf32, #tpu.memory_space<vmem>>, vector<1x64xf32>,
    %356 = vector.extract_strided_slice %333 {offsets = [0, 704], sizes = [1, 64], strides = [1, 1]} : vector<1x1024xf32> to vector<1x64xf32>
    %c11_320 = arith.constant 11 : index
    %c640_321 = arith.constant 640 : index
    %357 = vector.load %arg5[%c11_320, %c640_321] : memref<16x2048xf32, #tpu.memory_space<vmem>>, vector<1x64xf32>
    tpu.vector_store %arg5[%c11_320, %c640_321], %356 {strides = array<i32>} : memref<16x2048xf32, #tpu.memory_space<vmem>>, vector<1x64xf32>,
    %358 = vector.extract_strided_slice %333 {offsets = [0, 768], sizes = [1, 64], strides = [1, 1]} : vector<1x1024xf32> to vector<1x64xf32>
    %c12_322 = arith.constant 12 : index
    %c640_323 = arith.constant 640 : index
    %359 = vector.load %arg5[%c12_322, %c640_323] : memref<16x2048xf32, #tpu.memory_space<vmem>>, vector<1x64xf32>
    tpu.vector_store %arg5[%c12_322, %c640_323], %358 {strides = array<i32>} : memref<16x2048xf32, #tpu.memory_space<vmem>>, vector<1x64xf32>,
    %360 = vector.extract_strided_slice %333 {offsets = [0, 832], sizes = [1, 64], strides = [1, 1]} : vector<1x1024xf32> to vector<1x64xf32>
    %c13_324 = arith.constant 13 : index
    %c640_325 = arith.constant 640 : index
    %361 = vector.load %arg5[%c13_324, %c640_325] : memref<16x2048xf32, #tpu.memory_space<vmem>>, vector<1x64xf32>
    tpu.vector_store %arg5[%c13_324, %c640_325], %360 {strides = array<i32>} : memref<16x2048xf32, #tpu.memory_space<vmem>>, vector<1x64xf32>,
    %362 = vector.extract_strided_slice %333 {offsets = [0, 896], sizes = [1, 64], strides = [1, 1]} : vector<1x1024xf32> to vector<1x64xf32>
    %c14_326 = arith.constant 14 : index
    %c640_327 = arith.constant 640 : index
    %363 = vector.load %arg5[%c14_326, %c640_327] : memref<16x2048xf32, #tpu.memory_space<vmem>>, vector<1x64xf32>
    tpu.vector_store %arg5[%c14_326, %c640_327], %362 {strides = array<i32>} : memref<16x2048xf32, #tpu.memory_space<vmem>>, vector<1x64xf32>,
    %364 = vector.extract_strided_slice %333 {offsets = [0, 960], sizes = [1, 64], strides = [1, 1]} : vector<1x1024xf32> to vector<1x64xf32>
    %c15_328 = arith.constant 15 : index
    %c640_329 = arith.constant 640 : index
    %365 = vector.load %arg5[%c15_328, %c640_329] : memref<16x2048xf32, #tpu.memory_space<vmem>>, vector<1x64xf32>
    tpu.vector_store %arg5[%c15_328, %c640_329], %364 {strides = array<i32>} : memref<16x2048xf32, #tpu.memory_space<vmem>>, vector<1x64xf32>,
    %366 = vector.extract_strided_slice %2 {offsets = [11, 0], sizes = [1, 1024], strides = [1, 1]} : vector<32x1024xf32> to vector<1x1024xf32>
    %367 = vector.extract_strided_slice %366 {offsets = [0, 0], sizes = [1, 64], strides = [1, 1]} : vector<1x1024xf32> to vector<1x64xf32>
    %c0_330 = arith.constant 0 : index
    %c704 = arith.constant 704 : index
    %368 = vector.load %arg5[%c0_330, %c704] : memref<16x2048xf32, #tpu.memory_space<vmem>>, vector<1x64xf32>
    tpu.vector_store %arg5[%c0_330, %c704], %367 {strides = array<i32>} : memref<16x2048xf32, #tpu.memory_space<vmem>>, vector<1x64xf32>,
    %369 = vector.extract_strided_slice %366 {offsets = [0, 64], sizes = [1, 64], strides = [1, 1]} : vector<1x1024xf32> to vector<1x64xf32>
    %c1_331 = arith.constant 1 : index
    %c704_332 = arith.constant 704 : index
    %370 = vector.load %arg5[%c1_331, %c704_332] : memref<16x2048xf32, #tpu.memory_space<vmem>>, vector<1x64xf32>
    tpu.vector_store %arg5[%c1_331, %c704_332], %369 {strides = array<i32>} : memref<16x2048xf32, #tpu.memory_space<vmem>>, vector<1x64xf32>,
    %371 = vector.extract_strided_slice %366 {offsets = [0, 128], sizes = [1, 64], strides = [1, 1]} : vector<1x1024xf32> to vector<1x64xf32>
    %c2_333 = arith.constant 2 : index
    %c704_334 = arith.constant 704 : index
    %372 = vector.load %arg5[%c2_333, %c704_334] : memref<16x2048xf32, #tpu.memory_space<vmem>>, vector<1x64xf32>
    tpu.vector_store %arg5[%c2_333, %c704_334], %371 {strides = array<i32>} : memref<16x2048xf32, #tpu.memory_space<vmem>>, vector<1x64xf32>,
    %373 = vector.extract_strided_slice %366 {offsets = [0, 192], sizes = [1, 64], strides = [1, 1]} : vector<1x1024xf32> to vector<1x64xf32>
    %c3_335 = arith.constant 3 : index
    %c704_336 = arith.constant 704 : index
    %374 = vector.load %arg5[%c3_335, %c704_336] : memref<16x2048xf32, #tpu.memory_space<vmem>>, vector<1x64xf32>
    tpu.vector_store %arg5[%c3_335, %c704_336], %373 {strides = array<i32>} : memref<16x2048xf32, #tpu.memory_space<vmem>>, vector<1x64xf32>,
    %375 = vector.extract_strided_slice %366 {offsets = [0, 256], sizes = [1, 64], strides = [1, 1]} : vector<1x1024xf32> to vector<1x64xf32>
    %c4_337 = arith.constant 4 : index
    %c704_338 = arith.constant 704 : index
    %376 = vector.load %arg5[%c4_337, %c704_338] : memref<16x2048xf32, #tpu.memory_space<vmem>>, vector<1x64xf32>
    tpu.vector_store %arg5[%c4_337, %c704_338], %375 {strides = array<i32>} : memref<16x2048xf32, #tpu.memory_space<vmem>>, vector<1x64xf32>,
    %377 = vector.extract_strided_slice %366 {offsets = [0, 320], sizes = [1, 64], strides = [1, 1]} : vector<1x1024xf32> to vector<1x64xf32>
    %c5_339 = arith.constant 5 : index
    %c704_340 = arith.constant 704 : index
    %378 = vector.load %arg5[%c5_339, %c704_340] : memref<16x2048xf32, #tpu.memory_space<vmem>>, vector<1x64xf32>
    tpu.vector_store %arg5[%c5_339, %c704_340], %377 {strides = array<i32>} : memref<16x2048xf32, #tpu.memory_space<vmem>>, vector<1x64xf32>,
    %379 = vector.extract_strided_slice %366 {offsets = [0, 384], sizes = [1, 64], strides = [1, 1]} : vector<1x1024xf32> to vector<1x64xf32>
    %c6_341 = arith.constant 6 : index
    %c704_342 = arith.constant 704 : index
    %380 = vector.load %arg5[%c6_341, %c704_342] : memref<16x2048xf32, #tpu.memory_space<vmem>>, vector<1x64xf32>
    tpu.vector_store %arg5[%c6_341, %c704_342], %379 {strides = array<i32>} : memref<16x2048xf32, #tpu.memory_space<vmem>>, vector<1x64xf32>,
    %381 = vector.extract_strided_slice %366 {offsets = [0, 448], sizes = [1, 64], strides = [1, 1]} : vector<1x1024xf32> to vector<1x64xf32>
    %c7_343 = arith.constant 7 : index
    %c704_344 = arith.constant 704 : index
    %382 = vector.load %arg5[%c7_343, %c704_344] : memref<16x2048xf32, #tpu.memory_space<vmem>>, vector<1x64xf32>
    tpu.vector_store %arg5[%c7_343, %c704_344], %381 {strides = array<i32>} : memref<16x2048xf32, #tpu.memory_space<vmem>>, vector<1x64xf32>,
    %383 = vector.extract_strided_slice %366 {offsets = [0, 512], sizes = [1, 64], strides = [1, 1]} : vector<1x1024xf32> to vector<1x64xf32>
    %c8_345 = arith.constant 8 : index
    %c704_346 = arith.constant 704 : index
    %384 = vector.load %arg5[%c8_345, %c704_346] : memref<16x2048xf32, #tpu.memory_space<vmem>>, vector<1x64xf32>
    tpu.vector_store %arg5[%c8_345, %c704_346], %383 {strides = array<i32>} : memref<16x2048xf32, #tpu.memory_space<vmem>>, vector<1x64xf32>,
    %385 = vector.extract_strided_slice %366 {offsets = [0, 576], sizes = [1, 64], strides = [1, 1]} : vector<1x1024xf32> to vector<1x64xf32>
    %c9_347 = arith.constant 9 : index
    %c704_348 = arith.constant 704 : index
    %386 = vector.load %arg5[%c9_347, %c704_348] : memref<16x2048xf32, #tpu.memory_space<vmem>>, vector<1x64xf32>
    tpu.vector_store %arg5[%c9_347, %c704_348], %385 {strides = array<i32>} : memref<16x2048xf32, #tpu.memory_space<vmem>>, vector<1x64xf32>,
    %387 = vector.extract_strided_slice %366 {offsets = [0, 640], sizes = [1, 64], strides = [1, 1]} : vector<1x1024xf32> to vector<1x64xf32>
    %c10_349 = arith.constant 10 : index
    %c704_350 = arith.constant 704 : index
    %388 = vector.load %arg5[%c10_349, %c704_350] : memref<16x2048xf32, #tpu.memory_space<vmem>>, vector<1x64xf32>
    tpu.vector_store %arg5[%c10_349, %c704_350], %387 {strides = array<i32>} : memref<16x2048xf32, #tpu.memory_space<vmem>>, vector<1x64xf32>,
    %389 = vector.extract_strided_slice %366 {offsets = [0, 704], sizes = [1, 64], strides = [1, 1]} : vector<1x1024xf32> to vector<1x64xf32>
    %c11_351 = arith.constant 11 : index
    %c704_352 = arith.constant 704 : index
    %390 = vector.load %arg5[%c11_351, %c704_352] : memref<16x2048xf32, #tpu.memory_space<vmem>>, vector<1x64xf32>
    tpu.vector_store %arg5[%c11_351, %c704_352], %389 {strides = array<i32>} : memref<16x2048xf32, #tpu.memory_space<vmem>>, vector<1x64xf32>,
    %391 = vector.extract_strided_slice %366 {offsets = [0, 768], sizes = [1, 64], strides = [1, 1]} : vector<1x1024xf32> to vector<1x64xf32>
    %c12_353 = arith.constant 12 : index
    %c704_354 = arith.constant 704 : index
    %392 = vector.load %arg5[%c12_353, %c704_354] : memref<16x2048xf32, #tpu.memory_space<vmem>>, vector<1x64xf32>
    tpu.vector_store %arg5[%c12_353, %c704_354], %391 {strides = array<i32>} : memref<16x2048xf32, #tpu.memory_space<vmem>>, vector<1x64xf32>,
    %393 = vector.extract_strided_slice %366 {offsets = [0, 832], sizes = [1, 64], strides = [1, 1]} : vector<1x1024xf32> to vector<1x64xf32>
    %c13_355 = arith.constant 13 : index
    %c704_356 = arith.constant 704 : index
    %394 = vector.load %arg5[%c13_355, %c704_356] : memref<16x2048xf32, #tpu.memory_space<vmem>>, vector<1x64xf32>
    tpu.vector_store %arg5[%c13_355, %c704_356], %393 {strides = array<i32>} : memref<16x2048xf32, #tpu.memory_space<vmem>>, vector<1x64xf32>,
    %395 = vector.extract_strided_slice %366 {offsets = [0, 896], sizes = [1, 64], strides = [1, 1]} : vector<1x1024xf32> to vector<1x64xf32>
    %c14_357 = arith.constant 14 : index
    %c704_358 = arith.constant 704 : index
    %396 = vector.load %arg5[%c14_357, %c704_358] : memref<16x2048xf32, #tpu.memory_space<vmem>>, vector<1x64xf32>
    tpu.vector_store %arg5[%c14_357, %c704_358], %395 {strides = array<i32>} : memref<16x2048xf32, #tpu.memory_space<vmem>>, vector<1x64xf32>,
    %397 = vector.extract_strided_slice %366 {offsets = [0, 960], sizes = [1, 64], strides = [1, 1]} : vector<1x1024xf32> to vector<1x64xf32>
    %c15_359 = arith.constant 15 : index
    %c704_360 = arith.constant 704 : index
    %398 = vector.load %arg5[%c15_359, %c704_360] : memref<16x2048xf32, #tpu.memory_space<vmem>>, vector<1x64xf32>
    tpu.vector_store %arg5[%c15_359, %c704_360], %397 {strides = array<i32>} : memref<16x2048xf32, #tpu.memory_space<vmem>>, vector<1x64xf32>,
    %399 = vector.extract_strided_slice %2 {offsets = [12, 0], sizes = [1, 1024], strides = [1, 1]} : vector<32x1024xf32> to vector<1x1024xf32>
    %400 = vector.extract_strided_slice %399 {offsets = [0, 0], sizes = [1, 64], strides = [1, 1]} : vector<1x1024xf32> to vector<1x64xf32>
    %c0_361 = arith.constant 0 : index
    %c768 = arith.constant 768 : index
    %401 = vector.load %arg5[%c0_361, %c768] : memref<16x2048xf32, #tpu.memory_space<vmem>>, vector<1x64xf32>
    tpu.vector_store %arg5[%c0_361, %c768], %400 {strides = array<i32>} : memref<16x2048xf32, #tpu.memory_space<vmem>>, vector<1x64xf32>,
    %402 = vector.extract_strided_slice %399 {offsets = [0, 64], sizes = [1, 64], strides = [1, 1]} : vector<1x1024xf32> to vector<1x64xf32>
    %c1_362 = arith.constant 1 : index
    %c768_363 = arith.constant 768 : index
    %403 = vector.load %arg5[%c1_362, %c768_363] : memref<16x2048xf32, #tpu.memory_space<vmem>>, vector<1x64xf32>
    tpu.vector_store %arg5[%c1_362, %c768_363], %402 {strides = array<i32>} : memref<16x2048xf32, #tpu.memory_space<vmem>>, vector<1x64xf32>,
    %404 = vector.extract_strided_slice %399 {offsets = [0, 128], sizes = [1, 64], strides = [1, 1]} : vector<1x1024xf32> to vector<1x64xf32>
    %c2_364 = arith.constant 2 : index
    %c768_365 = arith.constant 768 : index
    %405 = vector.load %arg5[%c2_364, %c768_365] : memref<16x2048xf32, #tpu.memory_space<vmem>>, vector<1x64xf32>
    tpu.vector_store %arg5[%c2_364, %c768_365], %404 {strides = array<i32>} : memref<16x2048xf32, #tpu.memory_space<vmem>>, vector<1x64xf32>,
    %406 = vector.extract_strided_slice %399 {offsets = [0, 192], sizes = [1, 64], strides = [1, 1]} : vector<1x1024xf32> to vector<1x64xf32>
    %c3_366 = arith.constant 3 : index
    %c768_367 = arith.constant 768 : index
    %407 = vector.load %arg5[%c3_366, %c768_367] : memref<16x2048xf32, #tpu.memory_space<vmem>>, vector<1x64xf32>
    tpu.vector_store %arg5[%c3_366, %c768_367], %406 {strides = array<i32>} : memref<16x2048xf32, #tpu.memory_space<vmem>>, vector<1x64xf32>,
    %408 = vector.extract_strided_slice %399 {offsets = [0, 256], sizes = [1, 64], strides = [1, 1]} : vector<1x1024xf32> to vector<1x64xf32>
    %c4_368 = arith.constant 4 : index
    %c768_369 = arith.constant 768 : index
    %409 = vector.load %arg5[%c4_368, %c768_369] : memref<16x2048xf32, #tpu.memory_space<vmem>>, vector<1x64xf32>
    tpu.vector_store %arg5[%c4_368, %c768_369], %408 {strides = array<i32>} : memref<16x2048xf32, #tpu.memory_space<vmem>>, vector<1x64xf32>,
    %410 = vector.extract_strided_slice %399 {offsets = [0, 320], sizes = [1, 64], strides = [1, 1]} : vector<1x1024xf32> to vector<1x64xf32>
    %c5_370 = arith.constant 5 : index
    %c768_371 = arith.constant 768 : index
    %411 = vector.load %arg5[%c5_370, %c768_371] : memref<16x2048xf32, #tpu.memory_space<vmem>>, vector<1x64xf32>
    tpu.vector_store %arg5[%c5_370, %c768_371], %410 {strides = array<i32>} : memref<16x2048xf32, #tpu.memory_space<vmem>>, vector<1x64xf32>,
    %412 = vector.extract_strided_slice %399 {offsets = [0, 384], sizes = [1, 64], strides = [1, 1]} : vector<1x1024xf32> to vector<1x64xf32>
    %c6_372 = arith.constant 6 : index
    %c768_373 = arith.constant 768 : index
    %413 = vector.load %arg5[%c6_372, %c768_373] : memref<16x2048xf32, #tpu.memory_space<vmem>>, vector<1x64xf32>
    tpu.vector_store %arg5[%c6_372, %c768_373], %412 {strides = array<i32>} : memref<16x2048xf32, #tpu.memory_space<vmem>>, vector<1x64xf32>,
    %414 = vector.extract_strided_slice %399 {offsets = [0, 448], sizes = [1, 64], strides = [1, 1]} : vector<1x1024xf32> to vector<1x64xf32>
    %c7_374 = arith.constant 7 : index
    %c768_375 = arith.constant 768 : index
    %415 = vector.load %arg5[%c7_374, %c768_375] : memref<16x2048xf32, #tpu.memory_space<vmem>>, vector<1x64xf32>
    tpu.vector_store %arg5[%c7_374, %c768_375], %414 {strides = array<i32>} : memref<16x2048xf32, #tpu.memory_space<vmem>>, vector<1x64xf32>,
    %416 = vector.extract_strided_slice %399 {offsets = [0, 512], sizes = [1, 64], strides = [1, 1]} : vector<1x1024xf32> to vector<1x64xf32>
    %c8_376 = arith.constant 8 : index
    %c768_377 = arith.constant 768 : index
    %417 = vector.load %arg5[%c8_376, %c768_377] : memref<16x2048xf32, #tpu.memory_space<vmem>>, vector<1x64xf32>
    tpu.vector_store %arg5[%c8_376, %c768_377], %416 {strides = array<i32>} : memref<16x2048xf32, #tpu.memory_space<vmem>>, vector<1x64xf32>,
    %418 = vector.extract_strided_slice %399 {offsets = [0, 576], sizes = [1, 64], strides = [1, 1]} : vector<1x1024xf32> to vector<1x64xf32>
    %c9_378 = arith.constant 9 : index
    %c768_379 = arith.constant 768 : index
    %419 = vector.load %arg5[%c9_378, %c768_379] : memref<16x2048xf32, #tpu.memory_space<vmem>>, vector<1x64xf32>
    tpu.vector_store %arg5[%c9_378, %c768_379], %418 {strides = array<i32>} : memref<16x2048xf32, #tpu.memory_space<vmem>>, vector<1x64xf32>,
    %420 = vector.extract_strided_slice %399 {offsets = [0, 640], sizes = [1, 64], strides = [1, 1]} : vector<1x1024xf32> to vector<1x64xf32>
    %c10_380 = arith.constant 10 : index
    %c768_381 = arith.constant 768 : index
    %421 = vector.load %arg5[%c10_380, %c768_381] : memref<16x2048xf32, #tpu.memory_space<vmem>>, vector<1x64xf32>
    tpu.vector_store %arg5[%c10_380, %c768_381], %420 {strides = array<i32>} : memref<16x2048xf32, #tpu.memory_space<vmem>>, vector<1x64xf32>,
    %422 = vector.extract_strided_slice %399 {offsets = [0, 704], sizes = [1, 64], strides = [1, 1]} : vector<1x1024xf32> to vector<1x64xf32>
    %c11_382 = arith.constant 11 : index
    %c768_383 = arith.constant 768 : index
    %423 = vector.load %arg5[%c11_382, %c768_383] : memref<16x2048xf32, #tpu.memory_space<vmem>>, vector<1x64xf32>
    tpu.vector_store %arg5[%c11_382, %c768_383], %422 {strides = array<i32>} : memref<16x2048xf32, #tpu.memory_space<vmem>>, vector<1x64xf32>,
    %424 = vector.extract_strided_slice %399 {offsets = [0, 768], sizes = [1, 64], strides = [1, 1]} : vector<1x1024xf32> to vector<1x64xf32>
    %c12_384 = arith.constant 12 : index
    %c768_385 = arith.constant 768 : index
    %425 = vector.load %arg5[%c12_384, %c768_385] : memref<16x2048xf32, #tpu.memory_space<vmem>>, vector<1x64xf32>
    tpu.vector_store %arg5[%c12_384, %c768_385], %424 {strides = array<i32>} : memref<16x2048xf32, #tpu.memory_space<vmem>>, vector<1x64xf32>,
    %426 = vector.extract_strided_slice %399 {offsets = [0, 832], sizes = [1, 64], strides = [1, 1]} : vector<1x1024xf32> to vector<1x64xf32>
    %c13_386 = arith.constant 13 : index
    %c768_387 = arith.constant 768 : index
    %427 = vector.load %arg5[%c13_386, %c768_387] : memref<16x2048xf32, #tpu.memory_space<vmem>>, vector<1x64xf32>
    tpu.vector_store %arg5[%c13_386, %c768_387], %426 {strides = array<i32>} : memref<16x2048xf32, #tpu.memory_space<vmem>>, vector<1x64xf32>,
    %428 = vector.extract_strided_slice %399 {offsets = [0, 896], sizes = [1, 64], strides = [1, 1]} : vector<1x1024xf32> to vector<1x64xf32>
    %c14_388 = arith.constant 14 : index
    %c768_389 = arith.constant 768 : index
    %429 = vector.load %arg5[%c14_388, %c768_389] : memref<16x2048xf32, #tpu.memory_space<vmem>>, vector<1x64xf32>
    tpu.vector_store %arg5[%c14_388, %c768_389], %428 {strides = array<i32>} : memref<16x2048xf32, #tpu.memory_space<vmem>>, vector<1x64xf32>,
    %430 = vector.extract_strided_slice %399 {offsets = [0, 960], sizes = [1, 64], strides = [1, 1]} : vector<1x1024xf32> to vector<1x64xf32>
    %c15_390 = arith.constant 15 : index
    %c768_391 = arith.constant 768 : index
    %431 = vector.load %arg5[%c15_390, %c768_391] : memref<16x2048xf32, #tpu.memory_space<vmem>>, vector<1x64xf32>
    tpu.vector_store %arg5[%c15_390, %c768_391], %430 {strides = array<i32>} : memref<16x2048xf32, #tpu.memory_space<vmem>>, vector<1x64xf32>,
    %432 = vector.extract_strided_slice %2 {offsets = [13, 0], sizes = [1, 1024], strides = [1, 1]} : vector<32x1024xf32> to vector<1x1024xf32>
    %433 = vector.extract_strided_slice %432 {offsets = [0, 0], sizes = [1, 64], strides = [1, 1]} : vector<1x1024xf32> to vector<1x64xf32>
    %c0_392 = arith.constant 0 : index
    %c832 = arith.constant 832 : index
    %434 = vector.load %arg5[%c0_392, %c832] : memref<16x2048xf32, #tpu.memory_space<vmem>>, vector<1x64xf32>
    tpu.vector_store %arg5[%c0_392, %c832], %433 {strides = array<i32>} : memref<16x2048xf32, #tpu.memory_space<vmem>>, vector<1x64xf32>,
    %435 = vector.extract_strided_slice %432 {offsets = [0, 64], sizes = [1, 64], strides = [1, 1]} : vector<1x1024xf32> to vector<1x64xf32>
    %c1_393 = arith.constant 1 : index
    %c832_394 = arith.constant 832 : index
    %436 = vector.load %arg5[%c1_393, %c832_394] : memref<16x2048xf32, #tpu.memory_space<vmem>>, vector<1x64xf32>
    tpu.vector_store %arg5[%c1_393, %c832_394], %435 {strides = array<i32>} : memref<16x2048xf32, #tpu.memory_space<vmem>>, vector<1x64xf32>,
    %437 = vector.extract_strided_slice %432 {offsets = [0, 128], sizes = [1, 64], strides = [1, 1]} : vector<1x1024xf32> to vector<1x64xf32>
    %c2_395 = arith.constant 2 : index
    %c832_396 = arith.constant 832 : index
    %438 = vector.load %arg5[%c2_395, %c832_396] : memref<16x2048xf32, #tpu.memory_space<vmem>>, vector<1x64xf32>
    tpu.vector_store %arg5[%c2_395, %c832_396], %437 {strides = array<i32>} : memref<16x2048xf32, #tpu.memory_space<vmem>>, vector<1x64xf32>,
    %439 = vector.extract_strided_slice %432 {offsets = [0, 192], sizes = [1, 64], strides = [1, 1]} : vector<1x1024xf32> to vector<1x64xf32>
    %c3_397 = arith.constant 3 : index
    %c832_398 = arith.constant 832 : index
    %440 = vector.load %arg5[%c3_397, %c832_398] : memref<16x2048xf32, #tpu.memory_space<vmem>>, vector<1x64xf32>
    tpu.vector_store %arg5[%c3_397, %c832_398], %439 {strides = array<i32>} : memref<16x2048xf32, #tpu.memory_space<vmem>>, vector<1x64xf32>,
    %441 = vector.extract_strided_slice %432 {offsets = [0, 256], sizes = [1, 64], strides = [1, 1]} : vector<1x1024xf32> to vector<1x64xf32>
    %c4_399 = arith.constant 4 : index
    %c832_400 = arith.constant 832 : index
    %442 = vector.load %arg5[%c4_399, %c832_400] : memref<16x2048xf32, #tpu.memory_space<vmem>>, vector<1x64xf32>
    tpu.vector_store %arg5[%c4_399, %c832_400], %441 {strides = array<i32>} : memref<16x2048xf32, #tpu.memory_space<vmem>>, vector<1x64xf32>,
    %443 = vector.extract_strided_slice %432 {offsets = [0, 320], sizes = [1, 64], strides = [1, 1]} : vector<1x1024xf32> to vector<1x64xf32>
    %c5_401 = arith.constant 5 : index
    %c832_402 = arith.constant 832 : index
    %444 = vector.load %arg5[%c5_401, %c832_402] : memref<16x2048xf32, #tpu.memory_space<vmem>>, vector<1x64xf32>
    tpu.vector_store %arg5[%c5_401, %c832_402], %443 {strides = array<i32>} : memref<16x2048xf32, #tpu.memory_space<vmem>>, vector<1x64xf32>,
    %445 = vector.extract_strided_slice %432 {offsets = [0, 384], sizes = [1, 64], strides = [1, 1]} : vector<1x1024xf32> to vector<1x64xf32>
    %c6_403 = arith.constant 6 : index
    %c832_404 = arith.constant 832 : index
    %446 = vector.load %arg5[%c6_403, %c832_404] : memref<16x2048xf32, #tpu.memory_space<vmem>>, vector<1x64xf32>
    tpu.vector_store %arg5[%c6_403, %c832_404], %445 {strides = array<i32>} : memref<16x2048xf32, #tpu.memory_space<vmem>>, vector<1x64xf32>,
    %447 = vector.extract_strided_slice %432 {offsets = [0, 448], sizes = [1, 64], strides = [1, 1]} : vector<1x1024xf32> to vector<1x64xf32>
    %c7_405 = arith.constant 7 : index
    %c832_406 = arith.constant 832 : index
    %448 = vector.load %arg5[%c7_405, %c832_406] : memref<16x2048xf32, #tpu.memory_space<vmem>>, vector<1x64xf32>
    tpu.vector_store %arg5[%c7_405, %c832_406], %447 {strides = array<i32>} : memref<16x2048xf32, #tpu.memory_space<vmem>>, vector<1x64xf32>,
    %449 = vector.extract_strided_slice %432 {offsets = [0, 512], sizes = [1, 64], strides = [1, 1]} : vector<1x1024xf32> to vector<1x64xf32>
    %c8_407 = arith.constant 8 : index
    %c832_408 = arith.constant 832 : index
    %450 = vector.load %arg5[%c8_407, %c832_408] : memref<16x2048xf32, #tpu.memory_space<vmem>>, vector<1x64xf32>
    tpu.vector_store %arg5[%c8_407, %c832_408], %449 {strides = array<i32>} : memref<16x2048xf32, #tpu.memory_space<vmem>>, vector<1x64xf32>,
    %451 = vector.extract_strided_slice %432 {offsets = [0, 576], sizes = [1, 64], strides = [1, 1]} : vector<1x1024xf32> to vector<1x64xf32>
    %c9_409 = arith.constant 9 : index
    %c832_410 = arith.constant 832 : index
    %452 = vector.load %arg5[%c9_409, %c832_410] : memref<16x2048xf32, #tpu.memory_space<vmem>>, vector<1x64xf32>
    tpu.vector_store %arg5[%c9_409, %c832_410], %451 {strides = array<i32>} : memref<16x2048xf32, #tpu.memory_space<vmem>>, vector<1x64xf32>,
    %453 = vector.extract_strided_slice %432 {offsets = [0, 640], sizes = [1, 64], strides = [1, 1]} : vector<1x1024xf32> to vector<1x64xf32>
    %c10_411 = arith.constant 10 : index
    %c832_412 = arith.constant 832 : index
    %454 = vector.load %arg5[%c10_411, %c832_412] : memref<16x2048xf32, #tpu.memory_space<vmem>>, vector<1x64xf32>
    tpu.vector_store %arg5[%c10_411, %c832_412], %453 {strides = array<i32>} : memref<16x2048xf32, #tpu.memory_space<vmem>>, vector<1x64xf32>,
    %455 = vector.extract_strided_slice %432 {offsets = [0, 704], sizes = [1, 64], strides = [1, 1]} : vector<1x1024xf32> to vector<1x64xf32>
    %c11_413 = arith.constant 11 : index
    %c832_414 = arith.constant 832 : index
    %456 = vector.load %arg5[%c11_413, %c832_414] : memref<16x2048xf32, #tpu.memory_space<vmem>>, vector<1x64xf32>
    tpu.vector_store %arg5[%c11_413, %c832_414], %455 {strides = array<i32>} : memref<16x2048xf32, #tpu.memory_space<vmem>>, vector<1x64xf32>,
    %457 = vector.extract_strided_slice %432 {offsets = [0, 768], sizes = [1, 64], strides = [1, 1]} : vector<1x1024xf32> to vector<1x64xf32>
    %c12_415 = arith.constant 12 : index
    %c832_416 = arith.constant 832 : index
    %458 = vector.load %arg5[%c12_415, %c832_416] : memref<16x2048xf32, #tpu.memory_space<vmem>>, vector<1x64xf32>
    tpu.vector_store %arg5[%c12_415, %c832_416], %457 {strides = array<i32>} : memref<16x2048xf32, #tpu.memory_space<vmem>>, vector<1x64xf32>,
    %459 = vector.extract_strided_slice %432 {offsets = [0, 832], sizes = [1, 64], strides = [1, 1]} : vector<1x1024xf32> to vector<1x64xf32>
    %c13_417 = arith.constant 13 : index
    %c832_418 = arith.constant 832 : index
    %460 = vector.load %arg5[%c13_417, %c832_418] : memref<16x2048xf32, #tpu.memory_space<vmem>>, vector<1x64xf32>
    tpu.vector_store %arg5[%c13_417, %c832_418], %459 {strides = array<i32>} : memref<16x2048xf32, #tpu.memory_space<vmem>>, vector<1x64xf32>,
    %461 = vector.extract_strided_slice %432 {offsets = [0, 896], sizes = [1, 64], strides = [1, 1]} : vector<1x1024xf32> to vector<1x64xf32>
    %c14_419 = arith.constant 14 : index
    %c832_420 = arith.constant 832 : index
    %462 = vector.load %arg5[%c14_419, %c832_420] : memref<16x2048xf32, #tpu.memory_space<vmem>>, vector<1x64xf32>
    tpu.vector_store %arg5[%c14_419, %c832_420], %461 {strides = array<i32>} : memref<16x2048xf32, #tpu.memory_space<vmem>>, vector<1x64xf32>,
    %463 = vector.extract_strided_slice %432 {offsets = [0, 960], sizes = [1, 64], strides = [1, 1]} : vector<1x1024xf32> to vector<1x64xf32>
    %c15_421 = arith.constant 15 : index
    %c832_422 = arith.constant 832 : index
    %464 = vector.load %arg5[%c15_421, %c832_422] : memref<16x2048xf32, #tpu.memory_space<vmem>>, vector<1x64xf32>
    tpu.vector_store %arg5[%c15_421, %c832_422], %463 {strides = array<i32>} : memref<16x2048xf32, #tpu.memory_space<vmem>>, vector<1x64xf32>,
    %465 = vector.extract_strided_slice %2 {offsets = [14, 0], sizes = [1, 1024], strides = [1, 1]} : vector<32x1024xf32> to vector<1x1024xf32>
    %466 = vector.extract_strided_slice %465 {offsets = [0, 0], sizes = [1, 64], strides = [1, 1]} : vector<1x1024xf32> to vector<1x64xf32>
    %c0_423 = arith.constant 0 : index
    %c896 = arith.constant 896 : index
    %467 = vector.load %arg5[%c0_423, %c896] : memref<16x2048xf32, #tpu.memory_space<vmem>>, vector<1x64xf32>
    tpu.vector_store %arg5[%c0_423, %c896], %466 {strides = array<i32>} : memref<16x2048xf32, #tpu.memory_space<vmem>>, vector<1x64xf32>,
    %468 = vector.extract_strided_slice %465 {offsets = [0, 64], sizes = [1, 64], strides = [1, 1]} : vector<1x1024xf32> to vector<1x64xf32>
    %c1_424 = arith.constant 1 : index
    %c896_425 = arith.constant 896 : index
    %469 = vector.load %arg5[%c1_424, %c896_425] : memref<16x2048xf32, #tpu.memory_space<vmem>>, vector<1x64xf32>
    tpu.vector_store %arg5[%c1_424, %c896_425], %468 {strides = array<i32>} : memref<16x2048xf32, #tpu.memory_space<vmem>>, vector<1x64xf32>,
    %470 = vector.extract_strided_slice %465 {offsets = [0, 128], sizes = [1, 64], strides = [1, 1]} : vector<1x1024xf32> to vector<1x64xf32>
    %c2_426 = arith.constant 2 : index
    %c896_427 = arith.constant 896 : index
    %471 = vector.load %arg5[%c2_426, %c896_427] : memref<16x2048xf32, #tpu.memory_space<vmem>>, vector<1x64xf32>
    tpu.vector_store %arg5[%c2_426, %c896_427], %470 {strides = array<i32>} : memref<16x2048xf32, #tpu.memory_space<vmem>>, vector<1x64xf32>,
    %472 = vector.extract_strided_slice %465 {offsets = [0, 192], sizes = [1, 64], strides = [1, 1]} : vector<1x1024xf32> to vector<1x64xf32>
    %c3_428 = arith.constant 3 : index
    %c896_429 = arith.constant 896 : index
    %473 = vector.load %arg5[%c3_428, %c896_429] : memref<16x2048xf32, #tpu.memory_space<vmem>>, vector<1x64xf32>
    tpu.vector_store %arg5[%c3_428, %c896_429], %472 {strides = array<i32>} : memref<16x2048xf32, #tpu.memory_space<vmem>>, vector<1x64xf32>,
    %474 = vector.extract_strided_slice %465 {offsets = [0, 256], sizes = [1, 64], strides = [1, 1]} : vector<1x1024xf32> to vector<1x64xf32>
    %c4_430 = arith.constant 4 : index
    %c896_431 = arith.constant 896 : index
    %475 = vector.load %arg5[%c4_430, %c896_431] : memref<16x2048xf32, #tpu.memory_space<vmem>>, vector<1x64xf32>
    tpu.vector_store %arg5[%c4_430, %c896_431], %474 {strides = array<i32>} : memref<16x2048xf32, #tpu.memory_space<vmem>>, vector<1x64xf32>,
    %476 = vector.extract_strided_slice %465 {offsets = [0, 320], sizes = [1, 64], strides = [1, 1]} : vector<1x1024xf32> to vector<1x64xf32>
    %c5_432 = arith.constant 5 : index
    %c896_433 = arith.constant 896 : index
    %477 = vector.load %arg5[%c5_432, %c896_433] : memref<16x2048xf32, #tpu.memory_space<vmem>>, vector<1x64xf32>
    tpu.vector_store %arg5[%c5_432, %c896_433], %476 {strides = array<i32>} : memref<16x2048xf32, #tpu.memory_space<vmem>>, vector<1x64xf32>,
    %478 = vector.extract_strided_slice %465 {offsets = [0, 384], sizes = [1, 64], strides = [1, 1]} : vector<1x1024xf32> to vector<1x64xf32>
    %c6_434 = arith.constant 6 : index
    %c896_435 = arith.constant 896 : index
    %479 = vector.load %arg5[%c6_434, %c896_435] : memref<16x2048xf32, #tpu.memory_space<vmem>>, vector<1x64xf32>
    tpu.vector_store %arg5[%c6_434, %c896_435], %478 {strides = array<i32>} : memref<16x2048xf32, #tpu.memory_space<vmem>>, vector<1x64xf32>,
    %480 = vector.extract_strided_slice %465 {offsets = [0, 448], sizes = [1, 64], strides = [1, 1]} : vector<1x1024xf32> to vector<1x64xf32>
    %c7_436 = arith.constant 7 : index
    %c896_437 = arith.constant 896 : index
    %481 = vector.load %arg5[%c7_436, %c896_437] : memref<16x2048xf32, #tpu.memory_space<vmem>>, vector<1x64xf32>
    tpu.vector_store %arg5[%c7_436, %c896_437], %480 {strides = array<i32>} : memref<16x2048xf32, #tpu.memory_space<vmem>>, vector<1x64xf32>,
    %482 = vector.extract_strided_slice %465 {offsets = [0, 512], sizes = [1, 64], strides = [1, 1]} : vector<1x1024xf32> to vector<1x64xf32>
    %c8_438 = arith.constant 8 : index
    %c896_439 = arith.constant 896 : index
    %483 = vector.load %arg5[%c8_438, %c896_439] : memref<16x2048xf32, #tpu.memory_space<vmem>>, vector<1x64xf32>
    tpu.vector_store %arg5[%c8_438, %c896_439], %482 {strides = array<i32>} : memref<16x2048xf32, #tpu.memory_space<vmem>>, vector<1x64xf32>,
    %484 = vector.extract_strided_slice %465 {offsets = [0, 576], sizes = [1, 64], strides = [1, 1]} : vector<1x1024xf32> to vector<1x64xf32>
    %c9_440 = arith.constant 9 : index
    %c896_441 = arith.constant 896 : index
    %485 = vector.load %arg5[%c9_440, %c896_441] : memref<16x2048xf32, #tpu.memory_space<vmem>>, vector<1x64xf32>
    tpu.vector_store %arg5[%c9_440, %c896_441], %484 {strides = array<i32>} : memref<16x2048xf32, #tpu.memory_space<vmem>>, vector<1x64xf32>,
    %486 = vector.extract_strided_slice %465 {offsets = [0, 640], sizes = [1, 64], strides = [1, 1]} : vector<1x1024xf32> to vector<1x64xf32>
    %c10_442 = arith.constant 10 : index
    %c896_443 = arith.constant 896 : index
    %487 = vector.load %arg5[%c10_442, %c896_443] : memref<16x2048xf32, #tpu.memory_space<vmem>>, vector<1x64xf32>
    tpu.vector_store %arg5[%c10_442, %c896_443], %486 {strides = array<i32>} : memref<16x2048xf32, #tpu.memory_space<vmem>>, vector<1x64xf32>,
    %488 = vector.extract_strided_slice %465 {offsets = [0, 704], sizes = [1, 64], strides = [1, 1]} : vector<1x1024xf32> to vector<1x64xf32>
    %c11_444 = arith.constant 11 : index
    %c896_445 = arith.constant 896 : index
    %489 = vector.load %arg5[%c11_444, %c896_445] : memref<16x2048xf32, #tpu.memory_space<vmem>>, vector<1x64xf32>
    tpu.vector_store %arg5[%c11_444, %c896_445], %488 {strides = array<i32>} : memref<16x2048xf32, #tpu.memory_space<vmem>>, vector<1x64xf32>,
    %490 = vector.extract_strided_slice %465 {offsets = [0, 768], sizes = [1, 64], strides = [1, 1]} : vector<1x1024xf32> to vector<1x64xf32>
    %c12_446 = arith.constant 12 : index
    %c896_447 = arith.constant 896 : index
    %491 = vector.load %arg5[%c12_446, %c896_447] : memref<16x2048xf32, #tpu.memory_space<vmem>>, vector<1x64xf32>
    tpu.vector_store %arg5[%c12_446, %c896_447], %490 {strides = array<i32>} : memref<16x2048xf32, #tpu.memory_space<vmem>>, vector<1x64xf32>,
    %492 = vector.extract_strided_slice %465 {offsets = [0, 832], sizes = [1, 64], strides = [1, 1]} : vector<1x1024xf32> to vector<1x64xf32>
    %c13_448 = arith.constant 13 : index
    %c896_449 = arith.constant 896 : index
    %493 = vector.load %arg5[%c13_448, %c896_449] : memref<16x2048xf32, #tpu.memory_space<vmem>>, vector<1x64xf32>
    tpu.vector_store %arg5[%c13_448, %c896_449], %492 {strides = array<i32>} : memref<16x2048xf32, #tpu.memory_space<vmem>>, vector<1x64xf32>,
    %494 = vector.extract_strided_slice %465 {offsets = [0, 896], sizes = [1, 64], strides = [1, 1]} : vector<1x1024xf32> to vector<1x64xf32>
    %c14_450 = arith.constant 14 : index
    %c896_451 = arith.constant 896 : index
    %495 = vector.load %arg5[%c14_450, %c896_451] : memref<16x2048xf32, #tpu.memory_space<vmem>>, vector<1x64xf32>
    tpu.vector_store %arg5[%c14_450, %c896_451], %494 {strides = array<i32>} : memref<16x2048xf32, #tpu.memory_space<vmem>>, vector<1x64xf32>,
    %496 = vector.extract_strided_slice %465 {offsets = [0, 960], sizes = [1, 64], strides = [1, 1]} : vector<1x1024xf32> to vector<1x64xf32>
    %c15_452 = arith.constant 15 : index
    %c896_453 = arith.constant 896 : index
    %497 = vector.load %arg5[%c15_452, %c896_453] : memref<16x2048xf32, #tpu.memory_space<vmem>>, vector<1x64xf32>
    tpu.vector_store %arg5[%c15_452, %c896_453], %496 {strides = array<i32>} : memref<16x2048xf32, #tpu.memory_space<vmem>>, vector<1x64xf32>,
    %498 = vector.extract_strided_slice %2 {offsets = [15, 0], sizes = [1, 1024], strides = [1, 1]} : vector<32x1024xf32> to vector<1x1024xf32>
    %499 = vector.extract_strided_slice %498 {offsets = [0, 0], sizes = [1, 64], strides = [1, 1]} : vector<1x1024xf32> to vector<1x64xf32>
    %c0_454 = arith.constant 0 : index
    %c960 = arith.constant 960 : index
    %500 = vector.load %arg5[%c0_454, %c960] : memref<16x2048xf32, #tpu.memory_space<vmem>>, vector<1x64xf32>
    tpu.vector_store %arg5[%c0_454, %c960], %499 {strides = array<i32>} : memref<16x2048xf32, #tpu.memory_space<vmem>>, vector<1x64xf32>,
    %501 = vector.extract_strided_slice %498 {offsets = [0, 64], sizes = [1, 64], strides = [1, 1]} : vector<1x1024xf32> to vector<1x64xf32>
    %c1_455 = arith.constant 1 : index
    %c960_456 = arith.constant 960 : index
    %502 = vector.load %arg5[%c1_455, %c960_456] : memref<16x2048xf32, #tpu.memory_space<vmem>>, vector<1x64xf32>
    tpu.vector_store %arg5[%c1_455, %c960_456], %501 {strides = array<i32>} : memref<16x2048xf32, #tpu.memory_space<vmem>>, vector<1x64xf32>,
    %503 = vector.extract_strided_slice %498 {offsets = [0, 128], sizes = [1, 64], strides = [1, 1]} : vector<1x1024xf32> to vector<1x64xf32>
    %c2_457 = arith.constant 2 : index
    %c960_458 = arith.constant 960 : index
    %504 = vector.load %arg5[%c2_457, %c960_458] : memref<16x2048xf32, #tpu.memory_space<vmem>>, vector<1x64xf32>
    tpu.vector_store %arg5[%c2_457, %c960_458], %503 {strides = array<i32>} : memref<16x2048xf32, #tpu.memory_space<vmem>>, vector<1x64xf32>,
    %505 = vector.extract_strided_slice %498 {offsets = [0, 192], sizes = [1, 64], strides = [1, 1]} : vector<1x1024xf32> to vector<1x64xf32>
    %c3_459 = arith.constant 3 : index
    %c960_460 = arith.constant 960 : index
    %506 = vector.load %arg5[%c3_459, %c960_460] : memref<16x2048xf32, #tpu.memory_space<vmem>>, vector<1x64xf32>
    tpu.vector_store %arg5[%c3_459, %c960_460], %505 {strides = array<i32>} : memref<16x2048xf32, #tpu.memory_space<vmem>>, vector<1x64xf32>,
    %507 = vector.extract_strided_slice %498 {offsets = [0, 256], sizes = [1, 64], strides = [1, 1]} : vector<1x1024xf32> to vector<1x64xf32>
    %c4_461 = arith.constant 4 : index
    %c960_462 = arith.constant 960 : index
    %508 = vector.load %arg5[%c4_461, %c960_462] : memref<16x2048xf32, #tpu.memory_space<vmem>>, vector<1x64xf32>
    tpu.vector_store %arg5[%c4_461, %c960_462], %507 {strides = array<i32>} : memref<16x2048xf32, #tpu.memory_space<vmem>>, vector<1x64xf32>,
    %509 = vector.extract_strided_slice %498 {offsets = [0, 320], sizes = [1, 64], strides = [1, 1]} : vector<1x1024xf32> to vector<1x64xf32>
    %c5_463 = arith.constant 5 : index
    %c960_464 = arith.constant 960 : index
    %510 = vector.load %arg5[%c5_463, %c960_464] : memref<16x2048xf32, #tpu.memory_space<vmem>>, vector<1x64xf32>
    tpu.vector_store %arg5[%c5_463, %c960_464], %509 {strides = array<i32>} : memref<16x2048xf32, #tpu.memory_space<vmem>>, vector<1x64xf32>,
    %511 = vector.extract_strided_slice %498 {offsets = [0, 384], sizes = [1, 64], strides = [1, 1]} : vector<1x1024xf32> to vector<1x64xf32>
    %c6_465 = arith.constant 6 : index
    %c960_466 = arith.constant 960 : index
    %512 = vector.load %arg5[%c6_465, %c960_466] : memref<16x2048xf32, #tpu.memory_space<vmem>>, vector<1x64xf32>
    tpu.vector_store %arg5[%c6_465, %c960_466], %511 {strides = array<i32>} : memref<16x2048xf32, #tpu.memory_space<vmem>>, vector<1x64xf32>,
    %513 = vector.extract_strided_slice %498 {offsets = [0, 448], sizes = [1, 64], strides = [1, 1]} : vector<1x1024xf32> to vector<1x64xf32>
    %c7_467 = arith.constant 7 : index
    %c960_468 = arith.constant 960 : index
    %514 = vector.load %arg5[%c7_467, %c960_468] : memref<16x2048xf32, #tpu.memory_space<vmem>>, vector<1x64xf32>
    tpu.vector_store %arg5[%c7_467, %c960_468], %513 {strides = array<i32>} : memref<16x2048xf32, #tpu.memory_space<vmem>>, vector<1x64xf32>,
    %515 = vector.extract_strided_slice %498 {offsets = [0, 512], sizes = [1, 64], strides = [1, 1]} : vector<1x1024xf32> to vector<1x64xf32>
    %c8_469 = arith.constant 8 : index
    %c960_470 = arith.constant 960 : index
    %516 = vector.load %arg5[%c8_469, %c960_470] : memref<16x2048xf32, #tpu.memory_space<vmem>>, vector<1x64xf32>
    tpu.vector_store %arg5[%c8_469, %c960_470], %515 {strides = array<i32>} : memref<16x2048xf32, #tpu.memory_space<vmem>>, vector<1x64xf32>,
    %517 = vector.extract_strided_slice %498 {offsets = [0, 576], sizes = [1, 64], strides = [1, 1]} : vector<1x1024xf32> to vector<1x64xf32>
    %c9_471 = arith.constant 9 : index
    %c960_472 = arith.constant 960 : index
    %518 = vector.load %arg5[%c9_471, %c960_472] : memref<16x2048xf32, #tpu.memory_space<vmem>>, vector<1x64xf32>
    tpu.vector_store %arg5[%c9_471, %c960_472], %517 {strides = array<i32>} : memref<16x2048xf32, #tpu.memory_space<vmem>>, vector<1x64xf32>,
    %519 = vector.extract_strided_slice %498 {offsets = [0, 640], sizes = [1, 64], strides = [1, 1]} : vector<1x1024xf32> to vector<1x64xf32>
    %c10_473 = arith.constant 10 : index
    %c960_474 = arith.constant 960 : index
    %520 = vector.load %arg5[%c10_473, %c960_474] : memref<16x2048xf32, #tpu.memory_space<vmem>>, vector<1x64xf32>
    tpu.vector_store %arg5[%c10_473, %c960_474], %519 {strides = array<i32>} : memref<16x2048xf32, #tpu.memory_space<vmem>>, vector<1x64xf32>,
    %521 = vector.extract_strided_slice %498 {offsets = [0, 704], sizes = [1, 64], strides = [1, 1]} : vector<1x1024xf32> to vector<1x64xf32>
    %c11_475 = arith.constant 11 : index
    %c960_476 = arith.constant 960 : index
    %522 = vector.load %arg5[%c11_475, %c960_476] : memref<16x2048xf32, #tpu.memory_space<vmem>>, vector<1x64xf32>
    tpu.vector_store %arg5[%c11_475, %c960_476], %521 {strides = array<i32>} : memref<16x2048xf32, #tpu.memory_space<vmem>>, vector<1x64xf32>,
    %523 = vector.extract_strided_slice %498 {offsets = [0, 768], sizes = [1, 64], strides = [1, 1]} : vector<1x1024xf32> to vector<1x64xf32>
    %c12_477 = arith.constant 12 : index
    %c960_478 = arith.constant 960 : index
    %524 = vector.load %arg5[%c12_477, %c960_478] : memref<16x2048xf32, #tpu.memory_space<vmem>>, vector<1x64xf32>
    tpu.vector_store %arg5[%c12_477, %c960_478], %523 {strides = array<i32>} : memref<16x2048xf32, #tpu.memory_space<vmem>>, vector<1x64xf32>,
    %525 = vector.extract_strided_slice %498 {offsets = [0, 832], sizes = [1, 64], strides = [1, 1]} : vector<1x1024xf32> to vector<1x64xf32>
    %c13_479 = arith.constant 13 : index
    %c960_480 = arith.constant 960 : index
    %526 = vector.load %arg5[%c13_479, %c960_480] : memref<16x2048xf32, #tpu.memory_space<vmem>>, vector<1x64xf32>
    tpu.vector_store %arg5[%c13_479, %c960_480], %525 {strides = array<i32>} : memref<16x2048xf32, #tpu.memory_space<vmem>>, vector<1x64xf32>,
    %527 = vector.extract_strided_slice %498 {offsets = [0, 896], sizes = [1, 64], strides = [1, 1]} : vector<1x1024xf32> to vector<1x64xf32>
    %c14_481 = arith.constant 14 : index
    %c960_482 = arith.constant 960 : index
    %528 = vector.load %arg5[%c14_481, %c960_482] : memref<16x2048xf32, #tpu.memory_space<vmem>>, vector<1x64xf32>
    tpu.vector_store %arg5[%c14_481, %c960_482], %527 {strides = array<i32>} : memref<16x2048xf32, #tpu.memory_space<vmem>>, vector<1x64xf32>,
    %529 = vector.extract_strided_slice %498 {offsets = [0, 960], sizes = [1, 64], strides = [1, 1]} : vector<1x1024xf32> to vector<1x64xf32>
    %c15_483 = arith.constant 15 : index
    %c960_484 = arith.constant 960 : index
    %530 = vector.load %arg5[%c15_483, %c960_484] : memref<16x2048xf32, #tpu.memory_space<vmem>>, vector<1x64xf32>
    tpu.vector_store %arg5[%c15_483, %c960_484], %529 {strides = array<i32>} : memref<16x2048xf32, #tpu.memory_space<vmem>>, vector<1x64xf32>,
    %531 = vector.extract_strided_slice %2 {offsets = [16, 0], sizes = [1, 1024], strides = [1, 1]} : vector<32x1024xf32> to vector<1x1024xf32>
    %532 = vector.extract_strided_slice %531 {offsets = [0, 0], sizes = [1, 64], strides = [1, 1]} : vector<1x1024xf32> to vector<1x64xf32>
    %c0_485 = arith.constant 0 : index
    %c1024 = arith.constant 1024 : index
    %533 = vector.load %arg5[%c0_485, %c1024] : memref<16x2048xf32, #tpu.memory_space<vmem>>, vector<1x64xf32>
    tpu.vector_store %arg5[%c0_485, %c1024], %532 {strides = array<i32>} : memref<16x2048xf32, #tpu.memory_space<vmem>>, vector<1x64xf32>,
    %534 = vector.extract_strided_slice %531 {offsets = [0, 64], sizes = [1, 64], strides = [1, 1]} : vector<1x1024xf32> to vector<1x64xf32>
    %c1_486 = arith.constant 1 : index
    %c1024_487 = arith.constant 1024 : index
    %535 = vector.load %arg5[%c1_486, %c1024_487] : memref<16x2048xf32, #tpu.memory_space<vmem>>, vector<1x64xf32>
    tpu.vector_store %arg5[%c1_486, %c1024_487], %534 {strides = array<i32>} : memref<16x2048xf32, #tpu.memory_space<vmem>>, vector<1x64xf32>,
    %536 = vector.extract_strided_slice %531 {offsets = [0, 128], sizes = [1, 64], strides = [1, 1]} : vector<1x1024xf32> to vector<1x64xf32>
    %c2_488 = arith.constant 2 : index
    %c1024_489 = arith.constant 1024 : index
    %537 = vector.load %arg5[%c2_488, %c1024_489] : memref<16x2048xf32, #tpu.memory_space<vmem>>, vector<1x64xf32>
    tpu.vector_store %arg5[%c2_488, %c1024_489], %536 {strides = array<i32>} : memref<16x2048xf32, #tpu.memory_space<vmem>>, vector<1x64xf32>,
    %538 = vector.extract_strided_slice %531 {offsets = [0, 192], sizes = [1, 64], strides = [1, 1]} : vector<1x1024xf32> to vector<1x64xf32>
    %c3_490 = arith.constant 3 : index
    %c1024_491 = arith.constant 1024 : index
    %539 = vector.load %arg5[%c3_490, %c1024_491] : memref<16x2048xf32, #tpu.memory_space<vmem>>, vector<1x64xf32>
    tpu.vector_store %arg5[%c3_490, %c1024_491], %538 {strides = array<i32>} : memref<16x2048xf32, #tpu.memory_space<vmem>>, vector<1x64xf32>,
    %540 = vector.extract_strided_slice %531 {offsets = [0, 256], sizes = [1, 64], strides = [1, 1]} : vector<1x1024xf32> to vector<1x64xf32>
    %c4_492 = arith.constant 4 : index
    %c1024_493 = arith.constant 1024 : index
    %541 = vector.load %arg5[%c4_492, %c1024_493] : memref<16x2048xf32, #tpu.memory_space<vmem>>, vector<1x64xf32>
    tpu.vector_store %arg5[%c4_492, %c1024_493], %540 {strides = array<i32>} : memref<16x2048xf32, #tpu.memory_space<vmem>>, vector<1x64xf32>,
    %542 = vector.extract_strided_slice %531 {offsets = [0, 320], sizes = [1, 64], strides = [1, 1]} : vector<1x1024xf32> to vector<1x64xf32>
    %c5_494 = arith.constant 5 : index
    %c1024_495 = arith.constant 1024 : index
    %543 = vector.load %arg5[%c5_494, %c1024_495] : memref<16x2048xf32, #tpu.memory_space<vmem>>, vector<1x64xf32>
    tpu.vector_store %arg5[%c5_494, %c1024_495], %542 {strides = array<i32>} : memref<16x2048xf32, #tpu.memory_space<vmem>>, vector<1x64xf32>,
    %544 = vector.extract_strided_slice %531 {offsets = [0, 384], sizes = [1, 64], strides = [1, 1]} : vector<1x1024xf32> to vector<1x64xf32>
    %c6_496 = arith.constant 6 : index
    %c1024_497 = arith.constant 1024 : index
    %545 = vector.load %arg5[%c6_496, %c1024_497] : memref<16x2048xf32, #tpu.memory_space<vmem>>, vector<1x64xf32>
    tpu.vector_store %arg5[%c6_496, %c1024_497], %544 {strides = array<i32>} : memref<16x2048xf32, #tpu.memory_space<vmem>>, vector<1x64xf32>,
    %546 = vector.extract_strided_slice %531 {offsets = [0, 448], sizes = [1, 64], strides = [1, 1]} : vector<1x1024xf32> to vector<1x64xf32>
    %c7_498 = arith.constant 7 : index
    %c1024_499 = arith.constant 1024 : index
    %547 = vector.load %arg5[%c7_498, %c1024_499] : memref<16x2048xf32, #tpu.memory_space<vmem>>, vector<1x64xf32>
    tpu.vector_store %arg5[%c7_498, %c1024_499], %546 {strides = array<i32>} : memref<16x2048xf32, #tpu.memory_space<vmem>>, vector<1x64xf32>,
    %548 = vector.extract_strided_slice %531 {offsets = [0, 512], sizes = [1, 64], strides = [1, 1]} : vector<1x1024xf32> to vector<1x64xf32>
    %c8_500 = arith.constant 8 : index
    %c1024_501 = arith.constant 1024 : index
    %549 = vector.load %arg5[%c8_500, %c1024_501] : memref<16x2048xf32, #tpu.memory_space<vmem>>, vector<1x64xf32>
    tpu.vector_store %arg5[%c8_500, %c1024_501], %548 {strides = array<i32>} : memref<16x2048xf32, #tpu.memory_space<vmem>>, vector<1x64xf32>,
    %550 = vector.extract_strided_slice %531 {offsets = [0, 576], sizes = [1, 64], strides = [1, 1]} : vector<1x1024xf32> to vector<1x64xf32>
    %c9_502 = arith.constant 9 : index
    %c1024_503 = arith.constant 1024 : index
    %551 = vector.load %arg5[%c9_502, %c1024_503] : memref<16x2048xf32, #tpu.memory_space<vmem>>, vector<1x64xf32>
    tpu.vector_store %arg5[%c9_502, %c1024_503], %550 {strides = array<i32>} : memref<16x2048xf32, #tpu.memory_space<vmem>>, vector<1x64xf32>,
    %552 = vector.extract_strided_slice %531 {offsets = [0, 640], sizes = [1, 64], strides = [1, 1]} : vector<1x1024xf32> to vector<1x64xf32>
    %c10_504 = arith.constant 10 : index
    %c1024_505 = arith.constant 1024 : index
    %553 = vector.load %arg5[%c10_504, %c1024_505] : memref<16x2048xf32, #tpu.memory_space<vmem>>, vector<1x64xf32>
    tpu.vector_store %arg5[%c10_504, %c1024_505], %552 {strides = array<i32>} : memref<16x2048xf32, #tpu.memory_space<vmem>>, vector<1x64xf32>,
    %554 = vector.extract_strided_slice %531 {offsets = [0, 704], sizes = [1, 64], strides = [1, 1]} : vector<1x1024xf32> to vector<1x64xf32>
    %c11_506 = arith.constant 11 : index
    %c1024_507 = arith.constant 1024 : index
    %555 = vector.load %arg5[%c11_506, %c1024_507] : memref<16x2048xf32, #tpu.memory_space<vmem>>, vector<1x64xf32>
    tpu.vector_store %arg5[%c11_506, %c1024_507], %554 {strides = array<i32>} : memref<16x2048xf32, #tpu.memory_space<vmem>>, vector<1x64xf32>,
    %556 = vector.extract_strided_slice %531 {offsets = [0, 768], sizes = [1, 64], strides = [1, 1]} : vector<1x1024xf32> to vector<1x64xf32>
    %c12_508 = arith.constant 12 : index
    %c1024_509 = arith.constant 1024 : index
    %557 = vector.load %arg5[%c12_508, %c1024_509] : memref<16x2048xf32, #tpu.memory_space<vmem>>, vector<1x64xf32>
    tpu.vector_store %arg5[%c12_508, %c1024_509], %556 {strides = array<i32>} : memref<16x2048xf32, #tpu.memory_space<vmem>>, vector<1x64xf32>,
    %558 = vector.extract_strided_slice %531 {offsets = [0, 832], sizes = [1, 64], strides = [1, 1]} : vector<1x1024xf32> to vector<1x64xf32>
    %c13_510 = arith.constant 13 : index
    %c1024_511 = arith.constant 1024 : index
    %559 = vector.load %arg5[%c13_510, %c1024_511] : memref<16x2048xf32, #tpu.memory_space<vmem>>, vector<1x64xf32>
    tpu.vector_store %arg5[%c13_510, %c1024_511], %558 {strides = array<i32>} : memref<16x2048xf32, #tpu.memory_space<vmem>>, vector<1x64xf32>,
    %560 = vector.extract_strided_slice %531 {offsets = [0, 896], sizes = [1, 64], strides = [1, 1]} : vector<1x1024xf32> to vector<1x64xf32>
    %c14_512 = arith.constant 14 : index
    %c1024_513 = arith.constant 1024 : index
    %561 = vector.load %arg5[%c14_512, %c1024_513] : memref<16x2048xf32, #tpu.memory_space<vmem>>, vector<1x64xf32>
    tpu.vector_store %arg5[%c14_512, %c1024_513], %560 {strides = array<i32>} : memref<16x2048xf32, #tpu.memory_space<vmem>>, vector<1x64xf32>,
    %562 = vector.extract_strided_slice %531 {offsets = [0, 960], sizes = [1, 64], strides = [1, 1]} : vector<1x1024xf32> to vector<1x64xf32>
    %c15_514 = arith.constant 15 : index
    %c1024_515 = arith.constant 1024 : index
    %563 = vector.load %arg5[%c15_514, %c1024_515] : memref<16x2048xf32, #tpu.memory_space<vmem>>, vector<1x64xf32>
    tpu.vector_store %arg5[%c15_514, %c1024_515], %562 {strides = array<i32>} : memref<16x2048xf32, #tpu.memory_space<vmem>>, vector<1x64xf32>,
    %564 = vector.extract_strided_slice %2 {offsets = [17, 0], sizes = [1, 1024], strides = [1, 1]} : vector<32x1024xf32> to vector<1x1024xf32>
    %565 = vector.extract_strided_slice %564 {offsets = [0, 0], sizes = [1, 64], strides = [1, 1]} : vector<1x1024xf32> to vector<1x64xf32>
    %c0_516 = arith.constant 0 : index
    %c1088 = arith.constant 1088 : index
    %566 = vector.load %arg5[%c0_516, %c1088] : memref<16x2048xf32, #tpu.memory_space<vmem>>, vector<1x64xf32>
    tpu.vector_store %arg5[%c0_516, %c1088], %565 {strides = array<i32>} : memref<16x2048xf32, #tpu.memory_space<vmem>>, vector<1x64xf32>,
    %567 = vector.extract_strided_slice %564 {offsets = [0, 64], sizes = [1, 64], strides = [1, 1]} : vector<1x1024xf32> to vector<1x64xf32>
    %c1_517 = arith.constant 1 : index
    %c1088_518 = arith.constant 1088 : index
    %568 = vector.load %arg5[%c1_517, %c1088_518] : memref<16x2048xf32, #tpu.memory_space<vmem>>, vector<1x64xf32>
    tpu.vector_store %arg5[%c1_517, %c1088_518], %567 {strides = array<i32>} : memref<16x2048xf32, #tpu.memory_space<vmem>>, vector<1x64xf32>,
    %569 = vector.extract_strided_slice %564 {offsets = [0, 128], sizes = [1, 64], strides = [1, 1]} : vector<1x1024xf32> to vector<1x64xf32>
    %c2_519 = arith.constant 2 : index
    %c1088_520 = arith.constant 1088 : index
    %570 = vector.load %arg5[%c2_519, %c1088_520] : memref<16x2048xf32, #tpu.memory_space<vmem>>, vector<1x64xf32>
    tpu.vector_store %arg5[%c2_519, %c1088_520], %569 {strides = array<i32>} : memref<16x2048xf32, #tpu.memory_space<vmem>>, vector<1x64xf32>,
    %571 = vector.extract_strided_slice %564 {offsets = [0, 192], sizes = [1, 64], strides = [1, 1]} : vector<1x1024xf32> to vector<1x64xf32>
    %c3_521 = arith.constant 3 : index
    %c1088_522 = arith.constant 1088 : index
    %572 = vector.load %arg5[%c3_521, %c1088_522] : memref<16x2048xf32, #tpu.memory_space<vmem>>, vector<1x64xf32>
    tpu.vector_store %arg5[%c3_521, %c1088_522], %571 {strides = array<i32>} : memref<16x2048xf32, #tpu.memory_space<vmem>>, vector<1x64xf32>,
    %573 = vector.extract_strided_slice %564 {offsets = [0, 256], sizes = [1, 64], strides = [1, 1]} : vector<1x1024xf32> to vector<1x64xf32>
    %c4_523 = arith.constant 4 : index
    %c1088_524 = arith.constant 1088 : index
    %574 = vector.load %arg5[%c4_523, %c1088_524] : memref<16x2048xf32, #tpu.memory_space<vmem>>, vector<1x64xf32>
    tpu.vector_store %arg5[%c4_523, %c1088_524], %573 {strides = array<i32>} : memref<16x2048xf32, #tpu.memory_space<vmem>>, vector<1x64xf32>,
    %575 = vector.extract_strided_slice %564 {offsets = [0, 320], sizes = [1, 64], strides = [1, 1]} : vector<1x1024xf32> to vector<1x64xf32>
    %c5_525 = arith.constant 5 : index
    %c1088_526 = arith.constant 1088 : index
    %576 = vector.load %arg5[%c5_525, %c1088_526] : memref<16x2048xf32, #tpu.memory_space<vmem>>, vector<1x64xf32>
    tpu.vector_store %arg5[%c5_525, %c1088_526], %575 {strides = array<i32>} : memref<16x2048xf32, #tpu.memory_space<vmem>>, vector<1x64xf32>,
    %577 = vector.extract_strided_slice %564 {offsets = [0, 384], sizes = [1, 64], strides = [1, 1]} : vector<1x1024xf32> to vector<1x64xf32>
    %c6_527 = arith.constant 6 : index
    %c1088_528 = arith.constant 1088 : index
    %578 = vector.load %arg5[%c6_527, %c1088_528] : memref<16x2048xf32, #tpu.memory_space<vmem>>, vector<1x64xf32>
    tpu.vector_store %arg5[%c6_527, %c1088_528], %577 {strides = array<i32>} : memref<16x2048xf32, #tpu.memory_space<vmem>>, vector<1x64xf32>,
    %579 = vector.extract_strided_slice %564 {offsets = [0, 448], sizes = [1, 64], strides = [1, 1]} : vector<1x1024xf32> to vector<1x64xf32>
    %c7_529 = arith.constant 7 : index
    %c1088_530 = arith.constant 1088 : index
    %580 = vector.load %arg5[%c7_529, %c1088_530] : memref<16x2048xf32, #tpu.memory_space<vmem>>, vector<1x64xf32>
    tpu.vector_store %arg5[%c7_529, %c1088_530], %579 {strides = array<i32>} : memref<16x2048xf32, #tpu.memory_space<vmem>>, vector<1x64xf32>,
    %581 = vector.extract_strided_slice %564 {offsets = [0, 512], sizes = [1, 64], strides = [1, 1]} : vector<1x1024xf32> to vector<1x64xf32>
    %c8_531 = arith.constant 8 : index
    %c1088_532 = arith.constant 1088 : index
    %582 = vector.load %arg5[%c8_531, %c1088_532] : memref<16x2048xf32, #tpu.memory_space<vmem>>, vector<1x64xf32>
    tpu.vector_store %arg5[%c8_531, %c1088_532], %581 {strides = array<i32>} : memref<16x2048xf32, #tpu.memory_space<vmem>>, vector<1x64xf32>,
    %583 = vector.extract_strided_slice %564 {offsets = [0, 576], sizes = [1, 64], strides = [1, 1]} : vector<1x1024xf32> to vector<1x64xf32>
    %c9_533 = arith.constant 9 : index
    %c1088_534 = arith.constant 1088 : index
    %584 = vector.load %arg5[%c9_533, %c1088_534] : memref<16x2048xf32, #tpu.memory_space<vmem>>, vector<1x64xf32>
    tpu.vector_store %arg5[%c9_533, %c1088_534], %583 {strides = array<i32>} : memref<16x2048xf32, #tpu.memory_space<vmem>>, vector<1x64xf32>,
    %585 = vector.extract_strided_slice %564 {offsets = [0, 640], sizes = [1, 64], strides = [1, 1]} : vector<1x1024xf32> to vector<1x64xf32>
    %c10_535 = arith.constant 10 : index
    %c1088_536 = arith.constant 1088 : index
    %586 = vector.load %arg5[%c10_535, %c1088_536] : memref<16x2048xf32, #tpu.memory_space<vmem>>, vector<1x64xf32>
    tpu.vector_store %arg5[%c10_535, %c1088_536], %585 {strides = array<i32>} : memref<16x2048xf32, #tpu.memory_space<vmem>>, vector<1x64xf32>,
    %587 = vector.extract_strided_slice %564 {offsets = [0, 704], sizes = [1, 64], strides = [1, 1]} : vector<1x1024xf32> to vector<1x64xf32>
    %c11_537 = arith.constant 11 : index
    %c1088_538 = arith.constant 1088 : index
    %588 = vector.load %arg5[%c11_537, %c1088_538] : memref<16x2048xf32, #tpu.memory_space<vmem>>, vector<1x64xf32>
    tpu.vector_store %arg5[%c11_537, %c1088_538], %587 {strides = array<i32>} : memref<16x2048xf32, #tpu.memory_space<vmem>>, vector<1x64xf32>,
    %589 = vector.extract_strided_slice %564 {offsets = [0, 768], sizes = [1, 64], strides = [1, 1]} : vector<1x1024xf32> to vector<1x64xf32>
    %c12_539 = arith.constant 12 : index
    %c1088_540 = arith.constant 1088 : index
    %590 = vector.load %arg5[%c12_539, %c1088_540] : memref<16x2048xf32, #tpu.memory_space<vmem>>, vector<1x64xf32>
    tpu.vector_store %arg5[%c12_539, %c1088_540], %589 {strides = array<i32>} : memref<16x2048xf32, #tpu.memory_space<vmem>>, vector<1x64xf32>,
    %591 = vector.extract_strided_slice %564 {offsets = [0, 832], sizes = [1, 64], strides = [1, 1]} : vector<1x1024xf32> to vector<1x64xf32>
    %c13_541 = arith.constant 13 : index
    %c1088_542 = arith.constant 1088 : index
    %592 = vector.load %arg5[%c13_541, %c1088_542] : memref<16x2048xf32, #tpu.memory_space<vmem>>, vector<1x64xf32>
    tpu.vector_store %arg5[%c13_541, %c1088_542], %591 {strides = array<i32>} : memref<16x2048xf32, #tpu.memory_space<vmem>>, vector<1x64xf32>,
    %593 = vector.extract_strided_slice %564 {offsets = [0, 896], sizes = [1, 64], strides = [1, 1]} : vector<1x1024xf32> to vector<1x64xf32>
    %c14_543 = arith.constant 14 : index
    %c1088_544 = arith.constant 1088 : index
    %594 = vector.load %arg5[%c14_543, %c1088_544] : memref<16x2048xf32, #tpu.memory_space<vmem>>, vector<1x64xf32>
    tpu.vector_store %arg5[%c14_543, %c1088_544], %593 {strides = array<i32>} : memref<16x2048xf32, #tpu.memory_space<vmem>>, vector<1x64xf32>,
    %595 = vector.extract_strided_slice %564 {offsets = [0, 960], sizes = [1, 64], strides = [1, 1]} : vector<1x1024xf32> to vector<1x64xf32>
    %c15_545 = arith.constant 15 : index
    %c1088_546 = arith.constant 1088 : index
    %596 = vector.load %arg5[%c15_545, %c1088_546] : memref<16x2048xf32, #tpu.memory_space<vmem>>, vector<1x64xf32>
    tpu.vector_store %arg5[%c15_545, %c1088_546], %595 {strides = array<i32>} : memref<16x2048xf32, #tpu.memory_space<vmem>>, vector<1x64xf32>,
    %597 = vector.extract_strided_slice %2 {offsets = [18, 0], sizes = [1, 1024], strides = [1, 1]} : vector<32x1024xf32> to vector<1x1024xf32>
    %598 = vector.extract_strided_slice %597 {offsets = [0, 0], sizes = [1, 64], strides = [1, 1]} : vector<1x1024xf32> to vector<1x64xf32>
    %c0_547 = arith.constant 0 : index
    %c1152 = arith.constant 1152 : index
    %599 = vector.load %arg5[%c0_547, %c1152] : memref<16x2048xf32, #tpu.memory_space<vmem>>, vector<1x64xf32>
    tpu.vector_store %arg5[%c0_547, %c1152], %598 {strides = array<i32>} : memref<16x2048xf32, #tpu.memory_space<vmem>>, vector<1x64xf32>,
    %600 = vector.extract_strided_slice %597 {offsets = [0, 64], sizes = [1, 64], strides = [1, 1]} : vector<1x1024xf32> to vector<1x64xf32>
    %c1_548 = arith.constant 1 : index
    %c1152_549 = arith.constant 1152 : index
    %601 = vector.load %arg5[%c1_548, %c1152_549] : memref<16x2048xf32, #tpu.memory_space<vmem>>, vector<1x64xf32>
    tpu.vector_store %arg5[%c1_548, %c1152_549], %600 {strides = array<i32>} : memref<16x2048xf32, #tpu.memory_space<vmem>>, vector<1x64xf32>,
    %602 = vector.extract_strided_slice %597 {offsets = [0, 128], sizes = [1, 64], strides = [1, 1]} : vector<1x1024xf32> to vector<1x64xf32>
    %c2_550 = arith.constant 2 : index
    %c1152_551 = arith.constant 1152 : index
    %603 = vector.load %arg5[%c2_550, %c1152_551] : memref<16x2048xf32, #tpu.memory_space<vmem>>, vector<1x64xf32>
    tpu.vector_store %arg5[%c2_550, %c1152_551], %602 {strides = array<i32>} : memref<16x2048xf32, #tpu.memory_space<vmem>>, vector<1x64xf32>,
    %604 = vector.extract_strided_slice %597 {offsets = [0, 192], sizes = [1, 64], strides = [1, 1]} : vector<1x1024xf32> to vector<1x64xf32>
    %c3_552 = arith.constant 3 : index
    %c1152_553 = arith.constant 1152 : index
    %605 = vector.load %arg5[%c3_552, %c1152_553] : memref<16x2048xf32, #tpu.memory_space<vmem>>, vector<1x64xf32>
    tpu.vector_store %arg5[%c3_552, %c1152_553], %604 {strides = array<i32>} : memref<16x2048xf32, #tpu.memory_space<vmem>>, vector<1x64xf32>,
    %606 = vector.extract_strided_slice %597 {offsets = [0, 256], sizes = [1, 64], strides = [1, 1]} : vector<1x1024xf32> to vector<1x64xf32>
    %c4_554 = arith.constant 4 : index
    %c1152_555 = arith.constant 1152 : index
    %607 = vector.load %arg5[%c4_554, %c1152_555] : memref<16x2048xf32, #tpu.memory_space<vmem>>, vector<1x64xf32>
    tpu.vector_store %arg5[%c4_554, %c1152_555], %606 {strides = array<i32>} : memref<16x2048xf32, #tpu.memory_space<vmem>>, vector<1x64xf32>,
    %608 = vector.extract_strided_slice %597 {offsets = [0, 320], sizes = [1, 64], strides = [1, 1]} : vector<1x1024xf32> to vector<1x64xf32>
    %c5_556 = arith.constant 5 : index
    %c1152_557 = arith.constant 1152 : index
    %609 = vector.load %arg5[%c5_556, %c1152_557] : memref<16x2048xf32, #tpu.memory_space<vmem>>, vector<1x64xf32>
    tpu.vector_store %arg5[%c5_556, %c1152_557], %608 {strides = array<i32>} : memref<16x2048xf32, #tpu.memory_space<vmem>>, vector<1x64xf32>,
    %610 = vector.extract_strided_slice %597 {offsets = [0, 384], sizes = [1, 64], strides = [1, 1]} : vector<1x1024xf32> to vector<1x64xf32>
    %c6_558 = arith.constant 6 : index
    %c1152_559 = arith.constant 1152 : index
    %611 = vector.load %arg5[%c6_558, %c1152_559] : memref<16x2048xf32, #tpu.memory_space<vmem>>, vector<1x64xf32>
    tpu.vector_store %arg5[%c6_558, %c1152_559], %610 {strides = array<i32>} : memref<16x2048xf32, #tpu.memory_space<vmem>>, vector<1x64xf32>,
    %612 = vector.extract_strided_slice %597 {offsets = [0, 448], sizes = [1, 64], strides = [1, 1]} : vector<1x1024xf32> to vector<1x64xf32>
    %c7_560 = arith.constant 7 : index
    %c1152_561 = arith.constant 1152 : index
    %613 = vector.load %arg5[%c7_560, %c1152_561] : memref<16x2048xf32, #tpu.memory_space<vmem>>, vector<1x64xf32>
    tpu.vector_store %arg5[%c7_560, %c1152_561], %612 {strides = array<i32>} : memref<16x2048xf32, #tpu.memory_space<vmem>>, vector<1x64xf32>,
    %614 = vector.extract_strided_slice %597 {offsets = [0, 512], sizes = [1, 64], strides = [1, 1]} : vector<1x1024xf32> to vector<1x64xf32>
    %c8_562 = arith.constant 8 : index
    %c1152_563 = arith.constant 1152 : index
    %615 = vector.load %arg5[%c8_562, %c1152_563] : memref<16x2048xf32, #tpu.memory_space<vmem>>, vector<1x64xf32>
    tpu.vector_store %arg5[%c8_562, %c1152_563], %614 {strides = array<i32>} : memref<16x2048xf32, #tpu.memory_space<vmem>>, vector<1x64xf32>,
    %616 = vector.extract_strided_slice %597 {offsets = [0, 576], sizes = [1, 64], strides = [1, 1]} : vector<1x1024xf32> to vector<1x64xf32>
    %c9_564 = arith.constant 9 : index
    %c1152_565 = arith.constant 1152 : index
    %617 = vector.load %arg5[%c9_564, %c1152_565] : memref<16x2048xf32, #tpu.memory_space<vmem>>, vector<1x64xf32>
    tpu.vector_store %arg5[%c9_564, %c1152_565], %616 {strides = array<i32>} : memref<16x2048xf32, #tpu.memory_space<vmem>>, vector<1x64xf32>,
    %618 = vector.extract_strided_slice %597 {offsets = [0, 640], sizes = [1, 64], strides = [1, 1]} : vector<1x1024xf32> to vector<1x64xf32>
    %c10_566 = arith.constant 10 : index
    %c1152_567 = arith.constant 1152 : index
    %619 = vector.load %arg5[%c10_566, %c1152_567] : memref<16x2048xf32, #tpu.memory_space<vmem>>, vector<1x64xf32>
    tpu.vector_store %arg5[%c10_566, %c1152_567], %618 {strides = array<i32>} : memref<16x2048xf32, #tpu.memory_space<vmem>>, vector<1x64xf32>,
    %620 = vector.extract_strided_slice %597 {offsets = [0, 704], sizes = [1, 64], strides = [1, 1]} : vector<1x1024xf32> to vector<1x64xf32>
    %c11_568 = arith.constant 11 : index
    %c1152_569 = arith.constant 1152 : index
    %621 = vector.load %arg5[%c11_568, %c1152_569] : memref<16x2048xf32, #tpu.memory_space<vmem>>, vector<1x64xf32>
    tpu.vector_store %arg5[%c11_568, %c1152_569], %620 {strides = array<i32>} : memref<16x2048xf32, #tpu.memory_space<vmem>>, vector<1x64xf32>,
    %622 = vector.extract_strided_slice %597 {offsets = [0, 768], sizes = [1, 64], strides = [1, 1]} : vector<1x1024xf32> to vector<1x64xf32>
    %c12_570 = arith.constant 12 : index
    %c1152_571 = arith.constant 1152 : index
    %623 = vector.load %arg5[%c12_570, %c1152_571] : memref<16x2048xf32, #tpu.memory_space<vmem>>, vector<1x64xf32>
    tpu.vector_store %arg5[%c12_570, %c1152_571], %622 {strides = array<i32>} : memref<16x2048xf32, #tpu.memory_space<vmem>>, vector<1x64xf32>,
    %624 = vector.extract_strided_slice %597 {offsets = [0, 832], sizes = [1, 64], strides = [1, 1]} : vector<1x1024xf32> to vector<1x64xf32>
    %c13_572 = arith.constant 13 : index
    %c1152_573 = arith.constant 1152 : index
    %625 = vector.load %arg5[%c13_572, %c1152_573] : memref<16x2048xf32, #tpu.memory_space<vmem>>, vector<1x64xf32>
    tpu.vector_store %arg5[%c13_572, %c1152_573], %624 {strides = array<i32>} : memref<16x2048xf32, #tpu.memory_space<vmem>>, vector<1x64xf32>,
    %626 = vector.extract_strided_slice %597 {offsets = [0, 896], sizes = [1, 64], strides = [1, 1]} : vector<1x1024xf32> to vector<1x64xf32>
    %c14_574 = arith.constant 14 : index
    %c1152_575 = arith.constant 1152 : index
    %627 = vector.load %arg5[%c14_574, %c1152_575] : memref<16x2048xf32, #tpu.memory_space<vmem>>, vector<1x64xf32>
    tpu.vector_store %arg5[%c14_574, %c1152_575], %626 {strides = array<i32>} : memref<16x2048xf32, #tpu.memory_space<vmem>>, vector<1x64xf32>,
    %628 = vector.extract_strided_slice %597 {offsets = [0, 960], sizes = [1, 64], strides = [1, 1]} : vector<1x1024xf32> to vector<1x64xf32>
    %c15_576 = arith.constant 15 : index
    %c1152_577 = arith.constant 1152 : index
    %629 = vector.load %arg5[%c15_576, %c1152_577] : memref<16x2048xf32, #tpu.memory_space<vmem>>, vector<1x64xf32>
    tpu.vector_store %arg5[%c15_576, %c1152_577], %628 {strides = array<i32>} : memref<16x2048xf32, #tpu.memory_space<vmem>>, vector<1x64xf32>,
    %630 = vector.extract_strided_slice %2 {offsets = [19, 0], sizes = [1, 1024], strides = [1, 1]} : vector<32x1024xf32> to vector<1x1024xf32>
    %631 = vector.extract_strided_slice %630 {offsets = [0, 0], sizes = [1, 64], strides = [1, 1]} : vector<1x1024xf32> to vector<1x64xf32>
    %c0_578 = arith.constant 0 : index
    %c1216 = arith.constant 1216 : index
    %632 = vector.load %arg5[%c0_578, %c1216] : memref<16x2048xf32, #tpu.memory_space<vmem>>, vector<1x64xf32>
    tpu.vector_store %arg5[%c0_578, %c1216], %631 {strides = array<i32>} : memref<16x2048xf32, #tpu.memory_space<vmem>>, vector<1x64xf32>,
    %633 = vector.extract_strided_slice %630 {offsets = [0, 64], sizes = [1, 64], strides = [1, 1]} : vector<1x1024xf32> to vector<1x64xf32>
    %c1_579 = arith.constant 1 : index
    %c1216_580 = arith.constant 1216 : index
    %634 = vector.load %arg5[%c1_579, %c1216_580] : memref<16x2048xf32, #tpu.memory_space<vmem>>, vector<1x64xf32>
    tpu.vector_store %arg5[%c1_579, %c1216_580], %633 {strides = array<i32>} : memref<16x2048xf32, #tpu.memory_space<vmem>>, vector<1x64xf32>,
    %635 = vector.extract_strided_slice %630 {offsets = [0, 128], sizes = [1, 64], strides = [1, 1]} : vector<1x1024xf32> to vector<1x64xf32>
    %c2_581 = arith.constant 2 : index
    %c1216_582 = arith.constant 1216 : index
    %636 = vector.load %arg5[%c2_581, %c1216_582] : memref<16x2048xf32, #tpu.memory_space<vmem>>, vector<1x64xf32>
    tpu.vector_store %arg5[%c2_581, %c1216_582], %635 {strides = array<i32>} : memref<16x2048xf32, #tpu.memory_space<vmem>>, vector<1x64xf32>,
    %637 = vector.extract_strided_slice %630 {offsets = [0, 192], sizes = [1, 64], strides = [1, 1]} : vector<1x1024xf32> to vector<1x64xf32>
    %c3_583 = arith.constant 3 : index
    %c1216_584 = arith.constant 1216 : index
    %638 = vector.load %arg5[%c3_583, %c1216_584] : memref<16x2048xf32, #tpu.memory_space<vmem>>, vector<1x64xf32>
    tpu.vector_store %arg5[%c3_583, %c1216_584], %637 {strides = array<i32>} : memref<16x2048xf32, #tpu.memory_space<vmem>>, vector<1x64xf32>,
    %639 = vector.extract_strided_slice %630 {offsets = [0, 256], sizes = [1, 64], strides = [1, 1]} : vector<1x1024xf32> to vector<1x64xf32>
    %c4_585 = arith.constant 4 : index
    %c1216_586 = arith.constant 1216 : index
    %640 = vector.load %arg5[%c4_585, %c1216_586] : memref<16x2048xf32, #tpu.memory_space<vmem>>, vector<1x64xf32>
    tpu.vector_store %arg5[%c4_585, %c1216_586], %639 {strides = array<i32>} : memref<16x2048xf32, #tpu.memory_space<vmem>>, vector<1x64xf32>,
    %641 = vector.extract_strided_slice %630 {offsets = [0, 320], sizes = [1, 64], strides = [1, 1]} : vector<1x1024xf32> to vector<1x64xf32>
    %c5_587 = arith.constant 5 : index
    %c1216_588 = arith.constant 1216 : index
    %642 = vector.load %arg5[%c5_587, %c1216_588] : memref<16x2048xf32, #tpu.memory_space<vmem>>, vector<1x64xf32>
    tpu.vector_store %arg5[%c5_587, %c1216_588], %641 {strides = array<i32>} : memref<16x2048xf32, #tpu.memory_space<vmem>>, vector<1x64xf32>,
    %643 = vector.extract_strided_slice %630 {offsets = [0, 384], sizes = [1, 64], strides = [1, 1]} : vector<1x1024xf32> to vector<1x64xf32>
    %c6_589 = arith.constant 6 : index
    %c1216_590 = arith.constant 1216 : index
    %644 = vector.load %arg5[%c6_589, %c1216_590] : memref<16x2048xf32, #tpu.memory_space<vmem>>, vector<1x64xf32>
    tpu.vector_store %arg5[%c6_589, %c1216_590], %643 {strides = array<i32>} : memref<16x2048xf32, #tpu.memory_space<vmem>>, vector<1x64xf32>,
    %645 = vector.extract_strided_slice %630 {offsets = [0, 448], sizes = [1, 64], strides = [1, 1]} : vector<1x1024xf32> to vector<1x64xf32>
    %c7_591 = arith.constant 7 : index
    %c1216_592 = arith.constant 1216 : index
    %646 = vector.load %arg5[%c7_591, %c1216_592] : memref<16x2048xf32, #tpu.memory_space<vmem>>, vector<1x64xf32>
    tpu.vector_store %arg5[%c7_591, %c1216_592], %645 {strides = array<i32>} : memref<16x2048xf32, #tpu.memory_space<vmem>>, vector<1x64xf32>,
    %647 = vector.extract_strided_slice %630 {offsets = [0, 512], sizes = [1, 64], strides = [1, 1]} : vector<1x1024xf32> to vector<1x64xf32>
    %c8_593 = arith.constant 8 : index
    %c1216_594 = arith.constant 1216 : index
    %648 = vector.load %arg5[%c8_593, %c1216_594] : memref<16x2048xf32, #tpu.memory_space<vmem>>, vector<1x64xf32>
    tpu.vector_store %arg5[%c8_593, %c1216_594], %647 {strides = array<i32>} : memref<16x2048xf32, #tpu.memory_space<vmem>>, vector<1x64xf32>,
    %649 = vector.extract_strided_slice %630 {offsets = [0, 576], sizes = [1, 64], strides = [1, 1]} : vector<1x1024xf32> to vector<1x64xf32>
    %c9_595 = arith.constant 9 : index
    %c1216_596 = arith.constant 1216 : index
    %650 = vector.load %arg5[%c9_595, %c1216_596] : memref<16x2048xf32, #tpu.memory_space<vmem>>, vector<1x64xf32>
    tpu.vector_store %arg5[%c9_595, %c1216_596], %649 {strides = array<i32>} : memref<16x2048xf32, #tpu.memory_space<vmem>>, vector<1x64xf32>,
    %651 = vector.extract_strided_slice %630 {offsets = [0, 640], sizes = [1, 64], strides = [1, 1]} : vector<1x1024xf32> to vector<1x64xf32>
    %c10_597 = arith.constant 10 : index
    %c1216_598 = arith.constant 1216 : index
    %652 = vector.load %arg5[%c10_597, %c1216_598] : memref<16x2048xf32, #tpu.memory_space<vmem>>, vector<1x64xf32>
    tpu.vector_store %arg5[%c10_597, %c1216_598], %651 {strides = array<i32>} : memref<16x2048xf32, #tpu.memory_space<vmem>>, vector<1x64xf32>,
    %653 = vector.extract_strided_slice %630 {offsets = [0, 704], sizes = [1, 64], strides = [1, 1]} : vector<1x1024xf32> to vector<1x64xf32>
    %c11_599 = arith.constant 11 : index
    %c1216_600 = arith.constant 1216 : index
    %654 = vector.load %arg5[%c11_599, %c1216_600] : memref<16x2048xf32, #tpu.memory_space<vmem>>, vector<1x64xf32>
    tpu.vector_store %arg5[%c11_599, %c1216_600], %653 {strides = array<i32>} : memref<16x2048xf32, #tpu.memory_space<vmem>>, vector<1x64xf32>,
    %655 = vector.extract_strided_slice %630 {offsets = [0, 768], sizes = [1, 64], strides = [1, 1]} : vector<1x1024xf32> to vector<1x64xf32>
    %c12_601 = arith.constant 12 : index
    %c1216_602 = arith.constant 1216 : index
    %656 = vector.load %arg5[%c12_601, %c1216_602] : memref<16x2048xf32, #tpu.memory_space<vmem>>, vector<1x64xf32>
    tpu.vector_store %arg5[%c12_601, %c1216_602], %655 {strides = array<i32>} : memref<16x2048xf32, #tpu.memory_space<vmem>>, vector<1x64xf32>,
    %657 = vector.extract_strided_slice %630 {offsets = [0, 832], sizes = [1, 64], strides = [1, 1]} : vector<1x1024xf32> to vector<1x64xf32>
    %c13_603 = arith.constant 13 : index
    %c1216_604 = arith.constant 1216 : index
    %658 = vector.load %arg5[%c13_603, %c1216_604] : memref<16x2048xf32, #tpu.memory_space<vmem>>, vector<1x64xf32>
    tpu.vector_store %arg5[%c13_603, %c1216_604], %657 {strides = array<i32>} : memref<16x2048xf32, #tpu.memory_space<vmem>>, vector<1x64xf32>,
    %659 = vector.extract_strided_slice %630 {offsets = [0, 896], sizes = [1, 64], strides = [1, 1]} : vector<1x1024xf32> to vector<1x64xf32>
    %c14_605 = arith.constant 14 : index
    %c1216_606 = arith.constant 1216 : index
    %660 = vector.load %arg5[%c14_605, %c1216_606] : memref<16x2048xf32, #tpu.memory_space<vmem>>, vector<1x64xf32>
    tpu.vector_store %arg5[%c14_605, %c1216_606], %659 {strides = array<i32>} : memref<16x2048xf32, #tpu.memory_space<vmem>>, vector<1x64xf32>,
    %661 = vector.extract_strided_slice %630 {offsets = [0, 960], sizes = [1, 64], strides = [1, 1]} : vector<1x1024xf32> to vector<1x64xf32>
    %c15_607 = arith.constant 15 : index
    %c1216_608 = arith.constant 1216 : index
    %662 = vector.load %arg5[%c15_607, %c1216_608] : memref<16x2048xf32, #tpu.memory_space<vmem>>, vector<1x64xf32>
    tpu.vector_store %arg5[%c15_607, %c1216_608], %661 {strides = array<i32>} : memref<16x2048xf32, #tpu.memory_space<vmem>>, vector<1x64xf32>,
    %663 = vector.extract_strided_slice %2 {offsets = [20, 0], sizes = [1, 1024], strides = [1, 1]} : vector<32x1024xf32> to vector<1x1024xf32>
    %664 = vector.extract_strided_slice %663 {offsets = [0, 0], sizes = [1, 64], strides = [1, 1]} : vector<1x1024xf32> to vector<1x64xf32>
    %c0_609 = arith.constant 0 : index
    %c1280 = arith.constant 1280 : index
    %665 = vector.load %arg5[%c0_609, %c1280] : memref<16x2048xf32, #tpu.memory_space<vmem>>, vector<1x64xf32>
    tpu.vector_store %arg5[%c0_609, %c1280], %664 {strides = array<i32>} : memref<16x2048xf32, #tpu.memory_space<vmem>>, vector<1x64xf32>,
    %666 = vector.extract_strided_slice %663 {offsets = [0, 64], sizes = [1, 64], strides = [1, 1]} : vector<1x1024xf32> to vector<1x64xf32>
    %c1_610 = arith.constant 1 : index
    %c1280_611 = arith.constant 1280 : index
    %667 = vector.load %arg5[%c1_610, %c1280_611] : memref<16x2048xf32, #tpu.memory_space<vmem>>, vector<1x64xf32>
    tpu.vector_store %arg5[%c1_610, %c1280_611], %666 {strides = array<i32>} : memref<16x2048xf32, #tpu.memory_space<vmem>>, vector<1x64xf32>,
    %668 = vector.extract_strided_slice %663 {offsets = [0, 128], sizes = [1, 64], strides = [1, 1]} : vector<1x1024xf32> to vector<1x64xf32>
    %c2_612 = arith.constant 2 : index
    %c1280_613 = arith.constant 1280 : index
    %669 = vector.load %arg5[%c2_612, %c1280_613] : memref<16x2048xf32, #tpu.memory_space<vmem>>, vector<1x64xf32>
    tpu.vector_store %arg5[%c2_612, %c1280_613], %668 {strides = array<i32>} : memref<16x2048xf32, #tpu.memory_space<vmem>>, vector<1x64xf32>,
    %670 = vector.extract_strided_slice %663 {offsets = [0, 192], sizes = [1, 64], strides = [1, 1]} : vector<1x1024xf32> to vector<1x64xf32>
    %c3_614 = arith.constant 3 : index
    %c1280_615 = arith.constant 1280 : index
    %671 = vector.load %arg5[%c3_614, %c1280_615] : memref<16x2048xf32, #tpu.memory_space<vmem>>, vector<1x64xf32>
    tpu.vector_store %arg5[%c3_614, %c1280_615], %670 {strides = array<i32>} : memref<16x2048xf32, #tpu.memory_space<vmem>>, vector<1x64xf32>,
    %672 = vector.extract_strided_slice %663 {offsets = [0, 256], sizes = [1, 64], strides = [1, 1]} : vector<1x1024xf32> to vector<1x64xf32>
    %c4_616 = arith.constant 4 : index
    %c1280_617 = arith.constant 1280 : index
    %673 = vector.load %arg5[%c4_616, %c1280_617] : memref<16x2048xf32, #tpu.memory_space<vmem>>, vector<1x64xf32>
    tpu.vector_store %arg5[%c4_616, %c1280_617], %672 {strides = array<i32>} : memref<16x2048xf32, #tpu.memory_space<vmem>>, vector<1x64xf32>,
    %674 = vector.extract_strided_slice %663 {offsets = [0, 320], sizes = [1, 64], strides = [1, 1]} : vector<1x1024xf32> to vector<1x64xf32>
    %c5_618 = arith.constant 5 : index
    %c1280_619 = arith.constant 1280 : index
    %675 = vector.load %arg5[%c5_618, %c1280_619] : memref<16x2048xf32, #tpu.memory_space<vmem>>, vector<1x64xf32>
    tpu.vector_store %arg5[%c5_618, %c1280_619], %674 {strides = array<i32>} : memref<16x2048xf32, #tpu.memory_space<vmem>>, vector<1x64xf32>,
    %676 = vector.extract_strided_slice %663 {offsets = [0, 384], sizes = [1, 64], strides = [1, 1]} : vector<1x1024xf32> to vector<1x64xf32>
    %c6_620 = arith.constant 6 : index
    %c1280_621 = arith.constant 1280 : index
    %677 = vector.load %arg5[%c6_620, %c1280_621] : memref<16x2048xf32, #tpu.memory_space<vmem>>, vector<1x64xf32>
    tpu.vector_store %arg5[%c6_620, %c1280_621], %676 {strides = array<i32>} : memref<16x2048xf32, #tpu.memory_space<vmem>>, vector<1x64xf32>,
    %678 = vector.extract_strided_slice %663 {offsets = [0, 448], sizes = [1, 64], strides = [1, 1]} : vector<1x1024xf32> to vector<1x64xf32>
    %c7_622 = arith.constant 7 : index
    %c1280_623 = arith.constant 1280 : index
    %679 = vector.load %arg5[%c7_622, %c1280_623] : memref<16x2048xf32, #tpu.memory_space<vmem>>, vector<1x64xf32>
    tpu.vector_store %arg5[%c7_622, %c1280_623], %678 {strides = array<i32>} : memref<16x2048xf32, #tpu.memory_space<vmem>>, vector<1x64xf32>,
    %680 = vector.extract_strided_slice %663 {offsets = [0, 512], sizes = [1, 64], strides = [1, 1]} : vector<1x1024xf32> to vector<1x64xf32>
    %c8_624 = arith.constant 8 : index
    %c1280_625 = arith.constant 1280 : index
    %681 = vector.load %arg5[%c8_624, %c1280_625] : memref<16x2048xf32, #tpu.memory_space<vmem>>, vector<1x64xf32>
    tpu.vector_store %arg5[%c8_624, %c1280_625], %680 {strides = array<i32>} : memref<16x2048xf32, #tpu.memory_space<vmem>>, vector<1x64xf32>,
    %682 = vector.extract_strided_slice %663 {offsets = [0, 576], sizes = [1, 64], strides = [1, 1]} : vector<1x1024xf32> to vector<1x64xf32>
    %c9_626 = arith.constant 9 : index
    %c1280_627 = arith.constant 1280 : index
    %683 = vector.load %arg5[%c9_626, %c1280_627] : memref<16x2048xf32, #tpu.memory_space<vmem>>, vector<1x64xf32>
    tpu.vector_store %arg5[%c9_626, %c1280_627], %682 {strides = array<i32>} : memref<16x2048xf32, #tpu.memory_space<vmem>>, vector<1x64xf32>,
    %684 = vector.extract_strided_slice %663 {offsets = [0, 640], sizes = [1, 64], strides = [1, 1]} : vector<1x1024xf32> to vector<1x64xf32>
    %c10_628 = arith.constant 10 : index
    %c1280_629 = arith.constant 1280 : index
    %685 = vector.load %arg5[%c10_628, %c1280_629] : memref<16x2048xf32, #tpu.memory_space<vmem>>, vector<1x64xf32>
    tpu.vector_store %arg5[%c10_628, %c1280_629], %684 {strides = array<i32>} : memref<16x2048xf32, #tpu.memory_space<vmem>>, vector<1x64xf32>,
    %686 = vector.extract_strided_slice %663 {offsets = [0, 704], sizes = [1, 64], strides = [1, 1]} : vector<1x1024xf32> to vector<1x64xf32>
    %c11_630 = arith.constant 11 : index
    %c1280_631 = arith.constant 1280 : index
    %687 = vector.load %arg5[%c11_630, %c1280_631] : memref<16x2048xf32, #tpu.memory_space<vmem>>, vector<1x64xf32>
    tpu.vector_store %arg5[%c11_630, %c1280_631], %686 {strides = array<i32>} : memref<16x2048xf32, #tpu.memory_space<vmem>>, vector<1x64xf32>,
    %688 = vector.extract_strided_slice %663 {offsets = [0, 768], sizes = [1, 64], strides = [1, 1]} : vector<1x1024xf32> to vector<1x64xf32>
    %c12_632 = arith.constant 12 : index
    %c1280_633 = arith.constant 1280 : index
    %689 = vector.load %arg5[%c12_632, %c1280_633] : memref<16x2048xf32, #tpu.memory_space<vmem>>, vector<1x64xf32>
    tpu.vector_store %arg5[%c12_632, %c1280_633], %688 {strides = array<i32>} : memref<16x2048xf32, #tpu.memory_space<vmem>>, vector<1x64xf32>,
    %690 = vector.extract_strided_slice %663 {offsets = [0, 832], sizes = [1, 64], strides = [1, 1]} : vector<1x1024xf32> to vector<1x64xf32>
    %c13_634 = arith.constant 13 : index
    %c1280_635 = arith.constant 1280 : index
    %691 = vector.load %arg5[%c13_634, %c1280_635] : memref<16x2048xf32, #tpu.memory_space<vmem>>, vector<1x64xf32>
    tpu.vector_store %arg5[%c13_634, %c1280_635], %690 {strides = array<i32>} : memref<16x2048xf32, #tpu.memory_space<vmem>>, vector<1x64xf32>,
    %692 = vector.extract_strided_slice %663 {offsets = [0, 896], sizes = [1, 64], strides = [1, 1]} : vector<1x1024xf32> to vector<1x64xf32>
    %c14_636 = arith.constant 14 : index
    %c1280_637 = arith.constant 1280 : index
    %693 = vector.load %arg5[%c14_636, %c1280_637] : memref<16x2048xf32, #tpu.memory_space<vmem>>, vector<1x64xf32>
    tpu.vector_store %arg5[%c14_636, %c1280_637], %692 {strides = array<i32>} : memref<16x2048xf32, #tpu.memory_space<vmem>>, vector<1x64xf32>,
    %694 = vector.extract_strided_slice %663 {offsets = [0, 960], sizes = [1, 64], strides = [1, 1]} : vector<1x1024xf32> to vector<1x64xf32>
    %c15_638 = arith.constant 15 : index
    %c1280_639 = arith.constant 1280 : index
    %695 = vector.load %arg5[%c15_638, %c1280_639] : memref<16x2048xf32, #tpu.memory_space<vmem>>, vector<1x64xf32>
    tpu.vector_store %arg5[%c15_638, %c1280_639], %694 {strides = array<i32>} : memref<16x2048xf32, #tpu.memory_space<vmem>>, vector<1x64xf32>,
    %696 = vector.extract_strided_slice %2 {offsets = [21, 0], sizes = [1, 1024], strides = [1, 1]} : vector<32x1024xf32> to vector<1x1024xf32>
    %697 = vector.extract_strided_slice %696 {offsets = [0, 0], sizes = [1, 64], strides = [1, 1]} : vector<1x1024xf32> to vector<1x64xf32>
    %c0_640 = arith.constant 0 : index
    %c1344 = arith.constant 1344 : index
    %698 = vector.load %arg5[%c0_640, %c1344] : memref<16x2048xf32, #tpu.memory_space<vmem>>, vector<1x64xf32>
    tpu.vector_store %arg5[%c0_640, %c1344], %697 {strides = array<i32>} : memref<16x2048xf32, #tpu.memory_space<vmem>>, vector<1x64xf32>,
    %699 = vector.extract_strided_slice %696 {offsets = [0, 64], sizes = [1, 64], strides = [1, 1]} : vector<1x1024xf32> to vector<1x64xf32>
    %c1_641 = arith.constant 1 : index
    %c1344_642 = arith.constant 1344 : index
    %700 = vector.load %arg5[%c1_641, %c1344_642] : memref<16x2048xf32, #tpu.memory_space<vmem>>, vector<1x64xf32>
    tpu.vector_store %arg5[%c1_641, %c1344_642], %699 {strides = array<i32>} : memref<16x2048xf32, #tpu.memory_space<vmem>>, vector<1x64xf32>,
    %701 = vector.extract_strided_slice %696 {offsets = [0, 128], sizes = [1, 64], strides = [1, 1]} : vector<1x1024xf32> to vector<1x64xf32>
    %c2_643 = arith.constant 2 : index
    %c1344_644 = arith.constant 1344 : index
    %702 = vector.load %arg5[%c2_643, %c1344_644] : memref<16x2048xf32, #tpu.memory_space<vmem>>, vector<1x64xf32>
    tpu.vector_store %arg5[%c2_643, %c1344_644], %701 {strides = array<i32>} : memref<16x2048xf32, #tpu.memory_space<vmem>>, vector<1x64xf32>,
    %703 = vector.extract_strided_slice %696 {offsets = [0, 192], sizes = [1, 64], strides = [1, 1]} : vector<1x1024xf32> to vector<1x64xf32>
    %c3_645 = arith.constant 3 : index
    %c1344_646 = arith.constant 1344 : index
    %704 = vector.load %arg5[%c3_645, %c1344_646] : memref<16x2048xf32, #tpu.memory_space<vmem>>, vector<1x64xf32>
    tpu.vector_store %arg5[%c3_645, %c1344_646], %703 {strides = array<i32>} : memref<16x2048xf32, #tpu.memory_space<vmem>>, vector<1x64xf32>,
    %705 = vector.extract_strided_slice %696 {offsets = [0, 256], sizes = [1, 64], strides = [1, 1]} : vector<1x1024xf32> to vector<1x64xf32>
    %c4_647 = arith.constant 4 : index
    %c1344_648 = arith.constant 1344 : index
    %706 = vector.load %arg5[%c4_647, %c1344_648] : memref<16x2048xf32, #tpu.memory_space<vmem>>, vector<1x64xf32>
    tpu.vector_store %arg5[%c4_647, %c1344_648], %705 {strides = array<i32>} : memref<16x2048xf32, #tpu.memory_space<vmem>>, vector<1x64xf32>,
    %707 = vector.extract_strided_slice %696 {offsets = [0, 320], sizes = [1, 64], strides = [1, 1]} : vector<1x1024xf32> to vector<1x64xf32>
    %c5_649 = arith.constant 5 : index
    %c1344_650 = arith.constant 1344 : index
    %708 = vector.load %arg5[%c5_649, %c1344_650] : memref<16x2048xf32, #tpu.memory_space<vmem>>, vector<1x64xf32>
    tpu.vector_store %arg5[%c5_649, %c1344_650], %707 {strides = array<i32>} : memref<16x2048xf32, #tpu.memory_space<vmem>>, vector<1x64xf32>,
    %709 = vector.extract_strided_slice %696 {offsets = [0, 384], sizes = [1, 64], strides = [1, 1]} : vector<1x1024xf32> to vector<1x64xf32>
    %c6_651 = arith.constant 6 : index
    %c1344_652 = arith.constant 1344 : index
    %710 = vector.load %arg5[%c6_651, %c1344_652] : memref<16x2048xf32, #tpu.memory_space<vmem>>, vector<1x64xf32>
    tpu.vector_store %arg5[%c6_651, %c1344_652], %709 {strides = array<i32>} : memref<16x2048xf32, #tpu.memory_space<vmem>>, vector<1x64xf32>,
    %711 = vector.extract_strided_slice %696 {offsets = [0, 448], sizes = [1, 64], strides = [1, 1]} : vector<1x1024xf32> to vector<1x64xf32>
    %c7_653 = arith.constant 7 : index
    %c1344_654 = arith.constant 1344 : index
    %712 = vector.load %arg5[%c7_653, %c1344_654] : memref<16x2048xf32, #tpu.memory_space<vmem>>, vector<1x64xf32>
    tpu.vector_store %arg5[%c7_653, %c1344_654], %711 {strides = array<i32>} : memref<16x2048xf32, #tpu.memory_space<vmem>>, vector<1x64xf32>,
    %713 = vector.extract_strided_slice %696 {offsets = [0, 512], sizes = [1, 64], strides = [1, 1]} : vector<1x1024xf32> to vector<1x64xf32>
    %c8_655 = arith.constant 8 : index
    %c1344_656 = arith.constant 1344 : index
    %714 = vector.load %arg5[%c8_655, %c1344_656] : memref<16x2048xf32, #tpu.memory_space<vmem>>, vector<1x64xf32>
    tpu.vector_store %arg5[%c8_655, %c1344_656], %713 {strides = array<i32>} : memref<16x2048xf32, #tpu.memory_space<vmem>>, vector<1x64xf32>,
    %715 = vector.extract_strided_slice %696 {offsets = [0, 576], sizes = [1, 64], strides = [1, 1]} : vector<1x1024xf32> to vector<1x64xf32>
    %c9_657 = arith.constant 9 : index
    %c1344_658 = arith.constant 1344 : index
    %716 = vector.load %arg5[%c9_657, %c1344_658] : memref<16x2048xf32, #tpu.memory_space<vmem>>, vector<1x64xf32>
    tpu.vector_store %arg5[%c9_657, %c1344_658], %715 {strides = array<i32>} : memref<16x2048xf32, #tpu.memory_space<vmem>>, vector<1x64xf32>,
    %717 = vector.extract_strided_slice %696 {offsets = [0, 640], sizes = [1, 64], strides = [1, 1]} : vector<1x1024xf32> to vector<1x64xf32>
    %c10_659 = arith.constant 10 : index
    %c1344_660 = arith.constant 1344 : index
    %718 = vector.load %arg5[%c10_659, %c1344_660] : memref<16x2048xf32, #tpu.memory_space<vmem>>, vector<1x64xf32>
    tpu.vector_store %arg5[%c10_659, %c1344_660], %717 {strides = array<i32>} : memref<16x2048xf32, #tpu.memory_space<vmem>>, vector<1x64xf32>,
    %719 = vector.extract_strided_slice %696 {offsets = [0, 704], sizes = [1, 64], strides = [1, 1]} : vector<1x1024xf32> to vector<1x64xf32>
    %c11_661 = arith.constant 11 : index
    %c1344_662 = arith.constant 1344 : index
    %720 = vector.load %arg5[%c11_661, %c1344_662] : memref<16x2048xf32, #tpu.memory_space<vmem>>, vector<1x64xf32>
    tpu.vector_store %arg5[%c11_661, %c1344_662], %719 {strides = array<i32>} : memref<16x2048xf32, #tpu.memory_space<vmem>>, vector<1x64xf32>,
    %721 = vector.extract_strided_slice %696 {offsets = [0, 768], sizes = [1, 64], strides = [1, 1]} : vector<1x1024xf32> to vector<1x64xf32>
    %c12_663 = arith.constant 12 : index
    %c1344_664 = arith.constant 1344 : index
    %722 = vector.load %arg5[%c12_663, %c1344_664] : memref<16x2048xf32, #tpu.memory_space<vmem>>, vector<1x64xf32>
    tpu.vector_store %arg5[%c12_663, %c1344_664], %721 {strides = array<i32>} : memref<16x2048xf32, #tpu.memory_space<vmem>>, vector<1x64xf32>,
    %723 = vector.extract_strided_slice %696 {offsets = [0, 832], sizes = [1, 64], strides = [1, 1]} : vector<1x1024xf32> to vector<1x64xf32>
    %c13_665 = arith.constant 13 : index
    %c1344_666 = arith.constant 1344 : index
    %724 = vector.load %arg5[%c13_665, %c1344_666] : memref<16x2048xf32, #tpu.memory_space<vmem>>, vector<1x64xf32>
    tpu.vector_store %arg5[%c13_665, %c1344_666], %723 {strides = array<i32>} : memref<16x2048xf32, #tpu.memory_space<vmem>>, vector<1x64xf32>,
    %725 = vector.extract_strided_slice %696 {offsets = [0, 896], sizes = [1, 64], strides = [1, 1]} : vector<1x1024xf32> to vector<1x64xf32>
    %c14_667 = arith.constant 14 : index
    %c1344_668 = arith.constant 1344 : index
    %726 = vector.load %arg5[%c14_667, %c1344_668] : memref<16x2048xf32, #tpu.memory_space<vmem>>, vector<1x64xf32>
    tpu.vector_store %arg5[%c14_667, %c1344_668], %725 {strides = array<i32>} : memref<16x2048xf32, #tpu.memory_space<vmem>>, vector<1x64xf32>,
    %727 = vector.extract_strided_slice %696 {offsets = [0, 960], sizes = [1, 64], strides = [1, 1]} : vector<1x1024xf32> to vector<1x64xf32>
    %c15_669 = arith.constant 15 : index
    %c1344_670 = arith.constant 1344 : index
    %728 = vector.load %arg5[%c15_669, %c1344_670] : memref<16x2048xf32, #tpu.memory_space<vmem>>, vector<1x64xf32>
    tpu.vector_store %arg5[%c15_669, %c1344_670], %727 {strides = array<i32>} : memref<16x2048xf32, #tpu.memory_space<vmem>>, vector<1x64xf32>,
    %729 = vector.extract_strided_slice %2 {offsets = [22, 0], sizes = [1, 1024], strides = [1, 1]} : vector<32x1024xf32> to vector<1x1024xf32>
    %730 = vector.extract_strided_slice %729 {offsets = [0, 0], sizes = [1, 64], strides = [1, 1]} : vector<1x1024xf32> to vector<1x64xf32>
    %c0_671 = arith.constant 0 : index
    %c1408 = arith.constant 1408 : index
    %731 = vector.load %arg5[%c0_671, %c1408] : memref<16x2048xf32, #tpu.memory_space<vmem>>, vector<1x64xf32>
    tpu.vector_store %arg5[%c0_671, %c1408], %730 {strides = array<i32>} : memref<16x2048xf32, #tpu.memory_space<vmem>>, vector<1x64xf32>,
    %732 = vector.extract_strided_slice %729 {offsets = [0, 64], sizes = [1, 64], strides = [1, 1]} : vector<1x1024xf32> to vector<1x64xf32>
    %c1_672 = arith.constant 1 : index
    %c1408_673 = arith.constant 1408 : index
    %733 = vector.load %arg5[%c1_672, %c1408_673] : memref<16x2048xf32, #tpu.memory_space<vmem>>, vector<1x64xf32>
    tpu.vector_store %arg5[%c1_672, %c1408_673], %732 {strides = array<i32>} : memref<16x2048xf32, #tpu.memory_space<vmem>>, vector<1x64xf32>,
    %734 = vector.extract_strided_slice %729 {offsets = [0, 128], sizes = [1, 64], strides = [1, 1]} : vector<1x1024xf32> to vector<1x64xf32>
    %c2_674 = arith.constant 2 : index
    %c1408_675 = arith.constant 1408 : index
    %735 = vector.load %arg5[%c2_674, %c1408_675] : memref<16x2048xf32, #tpu.memory_space<vmem>>, vector<1x64xf32>
    tpu.vector_store %arg5[%c2_674, %c1408_675], %734 {strides = array<i32>} : memref<16x2048xf32, #tpu.memory_space<vmem>>, vector<1x64xf32>,
    %736 = vector.extract_strided_slice %729 {offsets = [0, 192], sizes = [1, 64], strides = [1, 1]} : vector<1x1024xf32> to vector<1x64xf32>
    %c3_676 = arith.constant 3 : index
    %c1408_677 = arith.constant 1408 : index
    %737 = vector.load %arg5[%c3_676, %c1408_677] : memref<16x2048xf32, #tpu.memory_space<vmem>>, vector<1x64xf32>
    tpu.vector_store %arg5[%c3_676, %c1408_677], %736 {strides = array<i32>} : memref<16x2048xf32, #tpu.memory_space<vmem>>, vector<1x64xf32>,
    %738 = vector.extract_strided_slice %729 {offsets = [0, 256], sizes = [1, 64], strides = [1, 1]} : vector<1x1024xf32> to vector<1x64xf32>
    %c4_678 = arith.constant 4 : index
    %c1408_679 = arith.constant 1408 : index
    %739 = vector.load %arg5[%c4_678, %c1408_679] : memref<16x2048xf32, #tpu.memory_space<vmem>>, vector<1x64xf32>
    tpu.vector_store %arg5[%c4_678, %c1408_679], %738 {strides = array<i32>} : memref<16x2048xf32, #tpu.memory_space<vmem>>, vector<1x64xf32>,
    %740 = vector.extract_strided_slice %729 {offsets = [0, 320], sizes = [1, 64], strides = [1, 1]} : vector<1x1024xf32> to vector<1x64xf32>
    %c5_680 = arith.constant 5 : index
    %c1408_681 = arith.constant 1408 : index
    %741 = vector.load %arg5[%c5_680, %c1408_681] : memref<16x2048xf32, #tpu.memory_space<vmem>>, vector<1x64xf32>
    tpu.vector_store %arg5[%c5_680, %c1408_681], %740 {strides = array<i32>} : memref<16x2048xf32, #tpu.memory_space<vmem>>, vector<1x64xf32>,
    %742 = vector.extract_strided_slice %729 {offsets = [0, 384], sizes = [1, 64], strides = [1, 1]} : vector<1x1024xf32> to vector<1x64xf32>
    %c6_682 = arith.constant 6 : index
    %c1408_683 = arith.constant 1408 : index
    %743 = vector.load %arg5[%c6_682, %c1408_683] : memref<16x2048xf32, #tpu.memory_space<vmem>>, vector<1x64xf32>
    tpu.vector_store %arg5[%c6_682, %c1408_683], %742 {strides = array<i32>} : memref<16x2048xf32, #tpu.memory_space<vmem>>, vector<1x64xf32>,
    %744 = vector.extract_strided_slice %729 {offsets = [0, 448], sizes = [1, 64], strides = [1, 1]} : vector<1x1024xf32> to vector<1x64xf32>
    %c7_684 = arith.constant 7 : index
    %c1408_685 = arith.constant 1408 : index
    %745 = vector.load %arg5[%c7_684, %c1408_685] : memref<16x2048xf32, #tpu.memory_space<vmem>>, vector<1x64xf32>
    tpu.vector_store %arg5[%c7_684, %c1408_685], %744 {strides = array<i32>} : memref<16x2048xf32, #tpu.memory_space<vmem>>, vector<1x64xf32>,
    %746 = vector.extract_strided_slice %729 {offsets = [0, 512], sizes = [1, 64], strides = [1, 1]} : vector<1x1024xf32> to vector<1x64xf32>
    %c8_686 = arith.constant 8 : index
    %c1408_687 = arith.constant 1408 : index
    %747 = vector.load %arg5[%c8_686, %c1408_687] : memref<16x2048xf32, #tpu.memory_space<vmem>>, vector<1x64xf32>
    tpu.vector_store %arg5[%c8_686, %c1408_687], %746 {strides = array<i32>} : memref<16x2048xf32, #tpu.memory_space<vmem>>, vector<1x64xf32>,
    %748 = vector.extract_strided_slice %729 {offsets = [0, 576], sizes = [1, 64], strides = [1, 1]} : vector<1x1024xf32> to vector<1x64xf32>
    %c9_688 = arith.constant 9 : index
    %c1408_689 = arith.constant 1408 : index
    %749 = vector.load %arg5[%c9_688, %c1408_689] : memref<16x2048xf32, #tpu.memory_space<vmem>>, vector<1x64xf32>
    tpu.vector_store %arg5[%c9_688, %c1408_689], %748 {strides = array<i32>} : memref<16x2048xf32, #tpu.memory_space<vmem>>, vector<1x64xf32>,
    %750 = vector.extract_strided_slice %729 {offsets = [0, 640], sizes = [1, 64], strides = [1, 1]} : vector<1x1024xf32> to vector<1x64xf32>
    %c10_690 = arith.constant 10 : index
    %c1408_691 = arith.constant 1408 : index
    %751 = vector.load %arg5[%c10_690, %c1408_691] : memref<16x2048xf32, #tpu.memory_space<vmem>>, vector<1x64xf32>
    tpu.vector_store %arg5[%c10_690, %c1408_691], %750 {strides = array<i32>} : memref<16x2048xf32, #tpu.memory_space<vmem>>, vector<1x64xf32>,
    %752 = vector.extract_strided_slice %729 {offsets = [0, 704], sizes = [1, 64], strides = [1, 1]} : vector<1x1024xf32> to vector<1x64xf32>
    %c11_692 = arith.constant 11 : index
    %c1408_693 = arith.constant 1408 : index
    %753 = vector.load %arg5[%c11_692, %c1408_693] : memref<16x2048xf32, #tpu.memory_space<vmem>>, vector<1x64xf32>
    tpu.vector_store %arg5[%c11_692, %c1408_693], %752 {strides = array<i32>} : memref<16x2048xf32, #tpu.memory_space<vmem>>, vector<1x64xf32>,
    %754 = vector.extract_strided_slice %729 {offsets = [0, 768], sizes = [1, 64], strides = [1, 1]} : vector<1x1024xf32> to vector<1x64xf32>
    %c12_694 = arith.constant 12 : index
    %c1408_695 = arith.constant 1408 : index
    %755 = vector.load %arg5[%c12_694, %c1408_695] : memref<16x2048xf32, #tpu.memory_space<vmem>>, vector<1x64xf32>
    tpu.vector_store %arg5[%c12_694, %c1408_695], %754 {strides = array<i32>} : memref<16x2048xf32, #tpu.memory_space<vmem>>, vector<1x64xf32>,
    %756 = vector.extract_strided_slice %729 {offsets = [0, 832], sizes = [1, 64], strides = [1, 1]} : vector<1x1024xf32> to vector<1x64xf32>
    %c13_696 = arith.constant 13 : index
    %c1408_697 = arith.constant 1408 : index
    %757 = vector.load %arg5[%c13_696, %c1408_697] : memref<16x2048xf32, #tpu.memory_space<vmem>>, vector<1x64xf32>
    tpu.vector_store %arg5[%c13_696, %c1408_697], %756 {strides = array<i32>} : memref<16x2048xf32, #tpu.memory_space<vmem>>, vector<1x64xf32>,
    %758 = vector.extract_strided_slice %729 {offsets = [0, 896], sizes = [1, 64], strides = [1, 1]} : vector<1x1024xf32> to vector<1x64xf32>
    %c14_698 = arith.constant 14 : index
    %c1408_699 = arith.constant 1408 : index
    %759 = vector.load %arg5[%c14_698, %c1408_699] : memref<16x2048xf32, #tpu.memory_space<vmem>>, vector<1x64xf32>
    tpu.vector_store %arg5[%c14_698, %c1408_699], %758 {strides = array<i32>} : memref<16x2048xf32, #tpu.memory_space<vmem>>, vector<1x64xf32>,
    %760 = vector.extract_strided_slice %729 {offsets = [0, 960], sizes = [1, 64], strides = [1, 1]} : vector<1x1024xf32> to vector<1x64xf32>
    %c15_700 = arith.constant 15 : index
    %c1408_701 = arith.constant 1408 : index
    %761 = vector.load %arg5[%c15_700, %c1408_701] : memref<16x2048xf32, #tpu.memory_space<vmem>>, vector<1x64xf32>
    tpu.vector_store %arg5[%c15_700, %c1408_701], %760 {strides = array<i32>} : memref<16x2048xf32, #tpu.memory_space<vmem>>, vector<1x64xf32>,
    %762 = vector.extract_strided_slice %2 {offsets = [23, 0], sizes = [1, 1024], strides = [1, 1]} : vector<32x1024xf32> to vector<1x1024xf32>
    %763 = vector.extract_strided_slice %762 {offsets = [0, 0], sizes = [1, 64], strides = [1, 1]} : vector<1x1024xf32> to vector<1x64xf32>
    %c0_702 = arith.constant 0 : index
    %c1472 = arith.constant 1472 : index
    %764 = vector.load %arg5[%c0_702, %c1472] : memref<16x2048xf32, #tpu.memory_space<vmem>>, vector<1x64xf32>
    tpu.vector_store %arg5[%c0_702, %c1472], %763 {strides = array<i32>} : memref<16x2048xf32, #tpu.memory_space<vmem>>, vector<1x64xf32>,
    %765 = vector.extract_strided_slice %762 {offsets = [0, 64], sizes = [1, 64], strides = [1, 1]} : vector<1x1024xf32> to vector<1x64xf32>
    %c1_703 = arith.constant 1 : index
    %c1472_704 = arith.constant 1472 : index
    %766 = vector.load %arg5[%c1_703, %c1472_704] : memref<16x2048xf32, #tpu.memory_space<vmem>>, vector<1x64xf32>
    tpu.vector_store %arg5[%c1_703, %c1472_704], %765 {strides = array<i32>} : memref<16x2048xf32, #tpu.memory_space<vmem>>, vector<1x64xf32>,
    %767 = vector.extract_strided_slice %762 {offsets = [0, 128], sizes = [1, 64], strides = [1, 1]} : vector<1x1024xf32> to vector<1x64xf32>
    %c2_705 = arith.constant 2 : index
    %c1472_706 = arith.constant 1472 : index
    %768 = vector.load %arg5[%c2_705, %c1472_706] : memref<16x2048xf32, #tpu.memory_space<vmem>>, vector<1x64xf32>
    tpu.vector_store %arg5[%c2_705, %c1472_706], %767 {strides = array<i32>} : memref<16x2048xf32, #tpu.memory_space<vmem>>, vector<1x64xf32>,
    %769 = vector.extract_strided_slice %762 {offsets = [0, 192], sizes = [1, 64], strides = [1, 1]} : vector<1x1024xf32> to vector<1x64xf32>
    %c3_707 = arith.constant 3 : index
    %c1472_708 = arith.constant 1472 : index
    %770 = vector.load %arg5[%c3_707, %c1472_708] : memref<16x2048xf32, #tpu.memory_space<vmem>>, vector<1x64xf32>
    tpu.vector_store %arg5[%c3_707, %c1472_708], %769 {strides = array<i32>} : memref<16x2048xf32, #tpu.memory_space<vmem>>, vector<1x64xf32>,
    %771 = vector.extract_strided_slice %762 {offsets = [0, 256], sizes = [1, 64], strides = [1, 1]} : vector<1x1024xf32> to vector<1x64xf32>
    %c4_709 = arith.constant 4 : index
    %c1472_710 = arith.constant 1472 : index
    %772 = vector.load %arg5[%c4_709, %c1472_710] : memref<16x2048xf32, #tpu.memory_space<vmem>>, vector<1x64xf32>
    tpu.vector_store %arg5[%c4_709, %c1472_710], %771 {strides = array<i32>} : memref<16x2048xf32, #tpu.memory_space<vmem>>, vector<1x64xf32>,
    %773 = vector.extract_strided_slice %762 {offsets = [0, 320], sizes = [1, 64], strides = [1, 1]} : vector<1x1024xf32> to vector<1x64xf32>
    %c5_711 = arith.constant 5 : index
    %c1472_712 = arith.constant 1472 : index
    %774 = vector.load %arg5[%c5_711, %c1472_712] : memref<16x2048xf32, #tpu.memory_space<vmem>>, vector<1x64xf32>
    tpu.vector_store %arg5[%c5_711, %c1472_712], %773 {strides = array<i32>} : memref<16x2048xf32, #tpu.memory_space<vmem>>, vector<1x64xf32>,
    %775 = vector.extract_strided_slice %762 {offsets = [0, 384], sizes = [1, 64], strides = [1, 1]} : vector<1x1024xf32> to vector<1x64xf32>
    %c6_713 = arith.constant 6 : index
    %c1472_714 = arith.constant 1472 : index
    %776 = vector.load %arg5[%c6_713, %c1472_714] : memref<16x2048xf32, #tpu.memory_space<vmem>>, vector<1x64xf32>
    tpu.vector_store %arg5[%c6_713, %c1472_714], %775 {strides = array<i32>} : memref<16x2048xf32, #tpu.memory_space<vmem>>, vector<1x64xf32>,
    %777 = vector.extract_strided_slice %762 {offsets = [0, 448], sizes = [1, 64], strides = [1, 1]} : vector<1x1024xf32> to vector<1x64xf32>
    %c7_715 = arith.constant 7 : index
    %c1472_716 = arith.constant 1472 : index
    %778 = vector.load %arg5[%c7_715, %c1472_716] : memref<16x2048xf32, #tpu.memory_space<vmem>>, vector<1x64xf32>
    tpu.vector_store %arg5[%c7_715, %c1472_716], %777 {strides = array<i32>} : memref<16x2048xf32, #tpu.memory_space<vmem>>, vector<1x64xf32>,
    %779 = vector.extract_strided_slice %762 {offsets = [0, 512], sizes = [1, 64], strides = [1, 1]} : vector<1x1024xf32> to vector<1x64xf32>
    %c8_717 = arith.constant 8 : index
    %c1472_718 = arith.constant 1472 : index
    %780 = vector.load %arg5[%c8_717, %c1472_718] : memref<16x2048xf32, #tpu.memory_space<vmem>>, vector<1x64xf32>
    tpu.vector_store %arg5[%c8_717, %c1472_718], %779 {strides = array<i32>} : memref<16x2048xf32, #tpu.memory_space<vmem>>, vector<1x64xf32>,
    %781 = vector.extract_strided_slice %762 {offsets = [0, 576], sizes = [1, 64], strides = [1, 1]} : vector<1x1024xf32> to vector<1x64xf32>
    %c9_719 = arith.constant 9 : index
    %c1472_720 = arith.constant 1472 : index
    %782 = vector.load %arg5[%c9_719, %c1472_720] : memref<16x2048xf32, #tpu.memory_space<vmem>>, vector<1x64xf32>
    tpu.vector_store %arg5[%c9_719, %c1472_720], %781 {strides = array<i32>} : memref<16x2048xf32, #tpu.memory_space<vmem>>, vector<1x64xf32>,
    %783 = vector.extract_strided_slice %762 {offsets = [0, 640], sizes = [1, 64], strides = [1, 1]} : vector<1x1024xf32> to vector<1x64xf32>
    %c10_721 = arith.constant 10 : index
    %c1472_722 = arith.constant 1472 : index
    %784 = vector.load %arg5[%c10_721, %c1472_722] : memref<16x2048xf32, #tpu.memory_space<vmem>>, vector<1x64xf32>
    tpu.vector_store %arg5[%c10_721, %c1472_722], %783 {strides = array<i32>} : memref<16x2048xf32, #tpu.memory_space<vmem>>, vector<1x64xf32>,
    %785 = vector.extract_strided_slice %762 {offsets = [0, 704], sizes = [1, 64], strides = [1, 1]} : vector<1x1024xf32> to vector<1x64xf32>
    %c11_723 = arith.constant 11 : index
    %c1472_724 = arith.constant 1472 : index
    %786 = vector.load %arg5[%c11_723, %c1472_724] : memref<16x2048xf32, #tpu.memory_space<vmem>>, vector<1x64xf32>
    tpu.vector_store %arg5[%c11_723, %c1472_724], %785 {strides = array<i32>} : memref<16x2048xf32, #tpu.memory_space<vmem>>, vector<1x64xf32>,
    %787 = vector.extract_strided_slice %762 {offsets = [0, 768], sizes = [1, 64], strides = [1, 1]} : vector<1x1024xf32> to vector<1x64xf32>
    %c12_725 = arith.constant 12 : index
    %c1472_726 = arith.constant 1472 : index
    %788 = vector.load %arg5[%c12_725, %c1472_726] : memref<16x2048xf32, #tpu.memory_space<vmem>>, vector<1x64xf32>
    tpu.vector_store %arg5[%c12_725, %c1472_726], %787 {strides = array<i32>} : memref<16x2048xf32, #tpu.memory_space<vmem>>, vector<1x64xf32>,
    %789 = vector.extract_strided_slice %762 {offsets = [0, 832], sizes = [1, 64], strides = [1, 1]} : vector<1x1024xf32> to vector<1x64xf32>
    %c13_727 = arith.constant 13 : index
    %c1472_728 = arith.constant 1472 : index
    %790 = vector.load %arg5[%c13_727, %c1472_728] : memref<16x2048xf32, #tpu.memory_space<vmem>>, vector<1x64xf32>
    tpu.vector_store %arg5[%c13_727, %c1472_728], %789 {strides = array<i32>} : memref<16x2048xf32, #tpu.memory_space<vmem>>, vector<1x64xf32>,
    %791 = vector.extract_strided_slice %762 {offsets = [0, 896], sizes = [1, 64], strides = [1, 1]} : vector<1x1024xf32> to vector<1x64xf32>
    %c14_729 = arith.constant 14 : index
    %c1472_730 = arith.constant 1472 : index
    %792 = vector.load %arg5[%c14_729, %c1472_730] : memref<16x2048xf32, #tpu.memory_space<vmem>>, vector<1x64xf32>
    tpu.vector_store %arg5[%c14_729, %c1472_730], %791 {strides = array<i32>} : memref<16x2048xf32, #tpu.memory_space<vmem>>, vector<1x64xf32>,
    %793 = vector.extract_strided_slice %762 {offsets = [0, 960], sizes = [1, 64], strides = [1, 1]} : vector<1x1024xf32> to vector<1x64xf32>
    %c15_731 = arith.constant 15 : index
    %c1472_732 = arith.constant 1472 : index
    %794 = vector.load %arg5[%c15_731, %c1472_732] : memref<16x2048xf32, #tpu.memory_space<vmem>>, vector<1x64xf32>
    tpu.vector_store %arg5[%c15_731, %c1472_732], %793 {strides = array<i32>} : memref<16x2048xf32, #tpu.memory_space<vmem>>, vector<1x64xf32>,
    %795 = vector.extract_strided_slice %2 {offsets = [24, 0], sizes = [1, 1024], strides = [1, 1]} : vector<32x1024xf32> to vector<1x1024xf32>
    %796 = vector.extract_strided_slice %795 {offsets = [0, 0], sizes = [1, 64], strides = [1, 1]} : vector<1x1024xf32> to vector<1x64xf32>
    %c0_733 = arith.constant 0 : index
    %c1536 = arith.constant 1536 : index
    %797 = vector.load %arg5[%c0_733, %c1536] : memref<16x2048xf32, #tpu.memory_space<vmem>>, vector<1x64xf32>
    tpu.vector_store %arg5[%c0_733, %c1536], %796 {strides = array<i32>} : memref<16x2048xf32, #tpu.memory_space<vmem>>, vector<1x64xf32>,
    %798 = vector.extract_strided_slice %795 {offsets = [0, 64], sizes = [1, 64], strides = [1, 1]} : vector<1x1024xf32> to vector<1x64xf32>
    %c1_734 = arith.constant 1 : index
    %c1536_735 = arith.constant 1536 : index
    %799 = vector.load %arg5[%c1_734, %c1536_735] : memref<16x2048xf32, #tpu.memory_space<vmem>>, vector<1x64xf32>
    tpu.vector_store %arg5[%c1_734, %c1536_735], %798 {strides = array<i32>} : memref<16x2048xf32, #tpu.memory_space<vmem>>, vector<1x64xf32>,
    %800 = vector.extract_strided_slice %795 {offsets = [0, 128], sizes = [1, 64], strides = [1, 1]} : vector<1x1024xf32> to vector<1x64xf32>
    %c2_736 = arith.constant 2 : index
    %c1536_737 = arith.constant 1536 : index
    %801 = vector.load %arg5[%c2_736, %c1536_737] : memref<16x2048xf32, #tpu.memory_space<vmem>>, vector<1x64xf32>
    tpu.vector_store %arg5[%c2_736, %c1536_737], %800 {strides = array<i32>} : memref<16x2048xf32, #tpu.memory_space<vmem>>, vector<1x64xf32>,
    %802 = vector.extract_strided_slice %795 {offsets = [0, 192], sizes = [1, 64], strides = [1, 1]} : vector<1x1024xf32> to vector<1x64xf32>
    %c3_738 = arith.constant 3 : index
    %c1536_739 = arith.constant 1536 : index
    %803 = vector.load %arg5[%c3_738, %c1536_739] : memref<16x2048xf32, #tpu.memory_space<vmem>>, vector<1x64xf32>
    tpu.vector_store %arg5[%c3_738, %c1536_739], %802 {strides = array<i32>} : memref<16x2048xf32, #tpu.memory_space<vmem>>, vector<1x64xf32>,
    %804 = vector.extract_strided_slice %795 {offsets = [0, 256], sizes = [1, 64], strides = [1, 1]} : vector<1x1024xf32> to vector<1x64xf32>
    %c4_740 = arith.constant 4 : index
    %c1536_741 = arith.constant 1536 : index
    %805 = vector.load %arg5[%c4_740, %c1536_741] : memref<16x2048xf32, #tpu.memory_space<vmem>>, vector<1x64xf32>
    tpu.vector_store %arg5[%c4_740, %c1536_741], %804 {strides = array<i32>} : memref<16x2048xf32, #tpu.memory_space<vmem>>, vector<1x64xf32>,
    %806 = vector.extract_strided_slice %795 {offsets = [0, 320], sizes = [1, 64], strides = [1, 1]} : vector<1x1024xf32> to vector<1x64xf32>
    %c5_742 = arith.constant 5 : index
    %c1536_743 = arith.constant 1536 : index
    %807 = vector.load %arg5[%c5_742, %c1536_743] : memref<16x2048xf32, #tpu.memory_space<vmem>>, vector<1x64xf32>
    tpu.vector_store %arg5[%c5_742, %c1536_743], %806 {strides = array<i32>} : memref<16x2048xf32, #tpu.memory_space<vmem>>, vector<1x64xf32>,
    %808 = vector.extract_strided_slice %795 {offsets = [0, 384], sizes = [1, 64], strides = [1, 1]} : vector<1x1024xf32> to vector<1x64xf32>
    %c6_744 = arith.constant 6 : index
    %c1536_745 = arith.constant 1536 : index
    %809 = vector.load %arg5[%c6_744, %c1536_745] : memref<16x2048xf32, #tpu.memory_space<vmem>>, vector<1x64xf32>
    tpu.vector_store %arg5[%c6_744, %c1536_745], %808 {strides = array<i32>} : memref<16x2048xf32, #tpu.memory_space<vmem>>, vector<1x64xf32>,
    %810 = vector.extract_strided_slice %795 {offsets = [0, 448], sizes = [1, 64], strides = [1, 1]} : vector<1x1024xf32> to vector<1x64xf32>
    %c7_746 = arith.constant 7 : index
    %c1536_747 = arith.constant 1536 : index
    %811 = vector.load %arg5[%c7_746, %c1536_747] : memref<16x2048xf32, #tpu.memory_space<vmem>>, vector<1x64xf32>
    tpu.vector_store %arg5[%c7_746, %c1536_747], %810 {strides = array<i32>} : memref<16x2048xf32, #tpu.memory_space<vmem>>, vector<1x64xf32>,
    %812 = vector.extract_strided_slice %795 {offsets = [0, 512], sizes = [1, 64], strides = [1, 1]} : vector<1x1024xf32> to vector<1x64xf32>
    %c8_748 = arith.constant 8 : index
    %c1536_749 = arith.constant 1536 : index
    %813 = vector.load %arg5[%c8_748, %c1536_749] : memref<16x2048xf32, #tpu.memory_space<vmem>>, vector<1x64xf32>
    tpu.vector_store %arg5[%c8_748, %c1536_749], %812 {strides = array<i32>} : memref<16x2048xf32, #tpu.memory_space<vmem>>, vector<1x64xf32>,
    %814 = vector.extract_strided_slice %795 {offsets = [0, 576], sizes = [1, 64], strides = [1, 1]} : vector<1x1024xf32> to vector<1x64xf32>
    %c9_750 = arith.constant 9 : index
    %c1536_751 = arith.constant 1536 : index
    %815 = vector.load %arg5[%c9_750, %c1536_751] : memref<16x2048xf32, #tpu.memory_space<vmem>>, vector<1x64xf32>
    tpu.vector_store %arg5[%c9_750, %c1536_751], %814 {strides = array<i32>} : memref<16x2048xf32, #tpu.memory_space<vmem>>, vector<1x64xf32>,
    %816 = vector.extract_strided_slice %795 {offsets = [0, 640], sizes = [1, 64], strides = [1, 1]} : vector<1x1024xf32> to vector<1x64xf32>
    %c10_752 = arith.constant 10 : index
    %c1536_753 = arith.constant 1536 : index
    %817 = vector.load %arg5[%c10_752, %c1536_753] : memref<16x2048xf32, #tpu.memory_space<vmem>>, vector<1x64xf32>
    tpu.vector_store %arg5[%c10_752, %c1536_753], %816 {strides = array<i32>} : memref<16x2048xf32, #tpu.memory_space<vmem>>, vector<1x64xf32>,
    %818 = vector.extract_strided_slice %795 {offsets = [0, 704], sizes = [1, 64], strides = [1, 1]} : vector<1x1024xf32> to vector<1x64xf32>
    %c11_754 = arith.constant 11 : index
    %c1536_755 = arith.constant 1536 : index
    %819 = vector.load %arg5[%c11_754, %c1536_755] : memref<16x2048xf32, #tpu.memory_space<vmem>>, vector<1x64xf32>
    tpu.vector_store %arg5[%c11_754, %c1536_755], %818 {strides = array<i32>} : memref<16x2048xf32, #tpu.memory_space<vmem>>, vector<1x64xf32>,
    %820 = vector.extract_strided_slice %795 {offsets = [0, 768], sizes = [1, 64], strides = [1, 1]} : vector<1x1024xf32> to vector<1x64xf32>
    %c12_756 = arith.constant 12 : index
    %c1536_757 = arith.constant 1536 : index
    %821 = vector.load %arg5[%c12_756, %c1536_757] : memref<16x2048xf32, #tpu.memory_space<vmem>>, vector<1x64xf32>
    tpu.vector_store %arg5[%c12_756, %c1536_757], %820 {strides = array<i32>} : memref<16x2048xf32, #tpu.memory_space<vmem>>, vector<1x64xf32>,
    %822 = vector.extract_strided_slice %795 {offsets = [0, 832], sizes = [1, 64], strides = [1, 1]} : vector<1x1024xf32> to vector<1x64xf32>
    %c13_758 = arith.constant 13 : index
    %c1536_759 = arith.constant 1536 : index
    %823 = vector.load %arg5[%c13_758, %c1536_759] : memref<16x2048xf32, #tpu.memory_space<vmem>>, vector<1x64xf32>
    tpu.vector_store %arg5[%c13_758, %c1536_759], %822 {strides = array<i32>} : memref<16x2048xf32, #tpu.memory_space<vmem>>, vector<1x64xf32>,
    %824 = vector.extract_strided_slice %795 {offsets = [0, 896], sizes = [1, 64], strides = [1, 1]} : vector<1x1024xf32> to vector<1x64xf32>
    %c14_760 = arith.constant 14 : index
    %c1536_761 = arith.constant 1536 : index
    %825 = vector.load %arg5[%c14_760, %c1536_761] : memref<16x2048xf32, #tpu.memory_space<vmem>>, vector<1x64xf32>
    tpu.vector_store %arg5[%c14_760, %c1536_761], %824 {strides = array<i32>} : memref<16x2048xf32, #tpu.memory_space<vmem>>, vector<1x64xf32>,
    %826 = vector.extract_strided_slice %795 {offsets = [0, 960], sizes = [1, 64], strides = [1, 1]} : vector<1x1024xf32> to vector<1x64xf32>
    %c15_762 = arith.constant 15 : index
    %c1536_763 = arith.constant 1536 : index
    %827 = vector.load %arg5[%c15_762, %c1536_763] : memref<16x2048xf32, #tpu.memory_space<vmem>>, vector<1x64xf32>
    tpu.vector_store %arg5[%c15_762, %c1536_763], %826 {strides = array<i32>} : memref<16x2048xf32, #tpu.memory_space<vmem>>, vector<1x64xf32>,
    %828 = vector.extract_strided_slice %2 {offsets = [25, 0], sizes = [1, 1024], strides = [1, 1]} : vector<32x1024xf32> to vector<1x1024xf32>
    %829 = vector.extract_strided_slice %828 {offsets = [0, 0], sizes = [1, 64], strides = [1, 1]} : vector<1x1024xf32> to vector<1x64xf32>
    %c0_764 = arith.constant 0 : index
    %c1600 = arith.constant 1600 : index
    %830 = vector.load %arg5[%c0_764, %c1600] : memref<16x2048xf32, #tpu.memory_space<vmem>>, vector<1x64xf32>
    tpu.vector_store %arg5[%c0_764, %c1600], %829 {strides = array<i32>} : memref<16x2048xf32, #tpu.memory_space<vmem>>, vector<1x64xf32>,
    %831 = vector.extract_strided_slice %828 {offsets = [0, 64], sizes = [1, 64], strides = [1, 1]} : vector<1x1024xf32> to vector<1x64xf32>
    %c1_765 = arith.constant 1 : index
    %c1600_766 = arith.constant 1600 : index
    %832 = vector.load %arg5[%c1_765, %c1600_766] : memref<16x2048xf32, #tpu.memory_space<vmem>>, vector<1x64xf32>
    tpu.vector_store %arg5[%c1_765, %c1600_766], %831 {strides = array<i32>} : memref<16x2048xf32, #tpu.memory_space<vmem>>, vector<1x64xf32>,
    %833 = vector.extract_strided_slice %828 {offsets = [0, 128], sizes = [1, 64], strides = [1, 1]} : vector<1x1024xf32> to vector<1x64xf32>
    %c2_767 = arith.constant 2 : index
    %c1600_768 = arith.constant 1600 : index
    %834 = vector.load %arg5[%c2_767, %c1600_768] : memref<16x2048xf32, #tpu.memory_space<vmem>>, vector<1x64xf32>
    tpu.vector_store %arg5[%c2_767, %c1600_768], %833 {strides = array<i32>} : memref<16x2048xf32, #tpu.memory_space<vmem>>, vector<1x64xf32>,
    %835 = vector.extract_strided_slice %828 {offsets = [0, 192], sizes = [1, 64], strides = [1, 1]} : vector<1x1024xf32> to vector<1x64xf32>
    %c3_769 = arith.constant 3 : index
    %c1600_770 = arith.constant 1600 : index
    %836 = vector.load %arg5[%c3_769, %c1600_770] : memref<16x2048xf32, #tpu.memory_space<vmem>>, vector<1x64xf32>
    tpu.vector_store %arg5[%c3_769, %c1600_770], %835 {strides = array<i32>} : memref<16x2048xf32, #tpu.memory_space<vmem>>, vector<1x64xf32>,
    %837 = vector.extract_strided_slice %828 {offsets = [0, 256], sizes = [1, 64], strides = [1, 1]} : vector<1x1024xf32> to vector<1x64xf32>
    %c4_771 = arith.constant 4 : index
    %c1600_772 = arith.constant 1600 : index
    %838 = vector.load %arg5[%c4_771, %c1600_772] : memref<16x2048xf32, #tpu.memory_space<vmem>>, vector<1x64xf32>
    tpu.vector_store %arg5[%c4_771, %c1600_772], %837 {strides = array<i32>} : memref<16x2048xf32, #tpu.memory_space<vmem>>, vector<1x64xf32>,
    %839 = vector.extract_strided_slice %828 {offsets = [0, 320], sizes = [1, 64], strides = [1, 1]} : vector<1x1024xf32> to vector<1x64xf32>
    %c5_773 = arith.constant 5 : index
    %c1600_774 = arith.constant 1600 : index
    %840 = vector.load %arg5[%c5_773, %c1600_774] : memref<16x2048xf32, #tpu.memory_space<vmem>>, vector<1x64xf32>
    tpu.vector_store %arg5[%c5_773, %c1600_774], %839 {strides = array<i32>} : memref<16x2048xf32, #tpu.memory_space<vmem>>, vector<1x64xf32>,
    %841 = vector.extract_strided_slice %828 {offsets = [0, 384], sizes = [1, 64], strides = [1, 1]} : vector<1x1024xf32> to vector<1x64xf32>
    %c6_775 = arith.constant 6 : index
    %c1600_776 = arith.constant 1600 : index
    %842 = vector.load %arg5[%c6_775, %c1600_776] : memref<16x2048xf32, #tpu.memory_space<vmem>>, vector<1x64xf32>
    tpu.vector_store %arg5[%c6_775, %c1600_776], %841 {strides = array<i32>} : memref<16x2048xf32, #tpu.memory_space<vmem>>, vector<1x64xf32>,
    %843 = vector.extract_strided_slice %828 {offsets = [0, 448], sizes = [1, 64], strides = [1, 1]} : vector<1x1024xf32> to vector<1x64xf32>
    %c7_777 = arith.constant 7 : index
    %c1600_778 = arith.constant 1600 : index
    %844 = vector.load %arg5[%c7_777, %c1600_778] : memref<16x2048xf32, #tpu.memory_space<vmem>>, vector<1x64xf32>
    tpu.vector_store %arg5[%c7_777, %c1600_778], %843 {strides = array<i32>} : memref<16x2048xf32, #tpu.memory_space<vmem>>, vector<1x64xf32>,
    %845 = vector.extract_strided_slice %828 {offsets = [0, 512], sizes = [1, 64], strides = [1, 1]} : vector<1x1024xf32> to vector<1x64xf32>
    %c8_779 = arith.constant 8 : index
    %c1600_780 = arith.constant 1600 : index
    %846 = vector.load %arg5[%c8_779, %c1600_780] : memref<16x2048xf32, #tpu.memory_space<vmem>>, vector<1x64xf32>
    tpu.vector_store %arg5[%c8_779, %c1600_780], %845 {strides = array<i32>} : memref<16x2048xf32, #tpu.memory_space<vmem>>, vector<1x64xf32>,
    %847 = vector.extract_strided_slice %828 {offsets = [0, 576], sizes = [1, 64], strides = [1, 1]} : vector<1x1024xf32> to vector<1x64xf32>
    %c9_781 = arith.constant 9 : index
    %c1600_782 = arith.constant 1600 : index
    %848 = vector.load %arg5[%c9_781, %c1600_782] : memref<16x2048xf32, #tpu.memory_space<vmem>>, vector<1x64xf32>
    tpu.vector_store %arg5[%c9_781, %c1600_782], %847 {strides = array<i32>} : memref<16x2048xf32, #tpu.memory_space<vmem>>, vector<1x64xf32>,
    %849 = vector.extract_strided_slice %828 {offsets = [0, 640], sizes = [1, 64], strides = [1, 1]} : vector<1x1024xf32> to vector<1x64xf32>
    %c10_783 = arith.constant 10 : index
    %c1600_784 = arith.constant 1600 : index
    %850 = vector.load %arg5[%c10_783, %c1600_784] : memref<16x2048xf32, #tpu.memory_space<vmem>>, vector<1x64xf32>
    tpu.vector_store %arg5[%c10_783, %c1600_784], %849 {strides = array<i32>} : memref<16x2048xf32, #tpu.memory_space<vmem>>, vector<1x64xf32>,
    %851 = vector.extract_strided_slice %828 {offsets = [0, 704], sizes = [1, 64], strides = [1, 1]} : vector<1x1024xf32> to vector<1x64xf32>
    %c11_785 = arith.constant 11 : index
    %c1600_786 = arith.constant 1600 : index
    %852 = vector.load %arg5[%c11_785, %c1600_786] : memref<16x2048xf32, #tpu.memory_space<vmem>>, vector<1x64xf32>
    tpu.vector_store %arg5[%c11_785, %c1600_786], %851 {strides = array<i32>} : memref<16x2048xf32, #tpu.memory_space<vmem>>, vector<1x64xf32>,
    %853 = vector.extract_strided_slice %828 {offsets = [0, 768], sizes = [1, 64], strides = [1, 1]} : vector<1x1024xf32> to vector<1x64xf32>
    %c12_787 = arith.constant 12 : index
    %c1600_788 = arith.constant 1600 : index
    %854 = vector.load %arg5[%c12_787, %c1600_788] : memref<16x2048xf32, #tpu.memory_space<vmem>>, vector<1x64xf32>
    tpu.vector_store %arg5[%c12_787, %c1600_788], %853 {strides = array<i32>} : memref<16x2048xf32, #tpu.memory_space<vmem>>, vector<1x64xf32>,
    %855 = vector.extract_strided_slice %828 {offsets = [0, 832], sizes = [1, 64], strides = [1, 1]} : vector<1x1024xf32> to vector<1x64xf32>
    %c13_789 = arith.constant 13 : index
    %c1600_790 = arith.constant 1600 : index
    %856 = vector.load %arg5[%c13_789, %c1600_790] : memref<16x2048xf32, #tpu.memory_space<vmem>>, vector<1x64xf32>
    tpu.vector_store %arg5[%c13_789, %c1600_790], %855 {strides = array<i32>} : memref<16x2048xf32, #tpu.memory_space<vmem>>, vector<1x64xf32>,
    %857 = vector.extract_strided_slice %828 {offsets = [0, 896], sizes = [1, 64], strides = [1, 1]} : vector<1x1024xf32> to vector<1x64xf32>
    %c14_791 = arith.constant 14 : index
    %c1600_792 = arith.constant 1600 : index
    %858 = vector.load %arg5[%c14_791, %c1600_792] : memref<16x2048xf32, #tpu.memory_space<vmem>>, vector<1x64xf32>
    tpu.vector_store %arg5[%c14_791, %c1600_792], %857 {strides = array<i32>} : memref<16x2048xf32, #tpu.memory_space<vmem>>, vector<1x64xf32>,
    %859 = vector.extract_strided_slice %828 {offsets = [0, 960], sizes = [1, 64], strides = [1, 1]} : vector<1x1024xf32> to vector<1x64xf32>
    %c15_793 = arith.constant 15 : index
    %c1600_794 = arith.constant 1600 : index
    %860 = vector.load %arg5[%c15_793, %c1600_794] : memref<16x2048xf32, #tpu.memory_space<vmem>>, vector<1x64xf32>
    tpu.vector_store %arg5[%c15_793, %c1600_794], %859 {strides = array<i32>} : memref<16x2048xf32, #tpu.memory_space<vmem>>, vector<1x64xf32>,
    %861 = vector.extract_strided_slice %2 {offsets = [26, 0], sizes = [1, 1024], strides = [1, 1]} : vector<32x1024xf32> to vector<1x1024xf32>
    %862 = vector.extract_strided_slice %861 {offsets = [0, 0], sizes = [1, 64], strides = [1, 1]} : vector<1x1024xf32> to vector<1x64xf32>
    %c0_795 = arith.constant 0 : index
    %c1664 = arith.constant 1664 : index
    %863 = vector.load %arg5[%c0_795, %c1664] : memref<16x2048xf32, #tpu.memory_space<vmem>>, vector<1x64xf32>
    tpu.vector_store %arg5[%c0_795, %c1664], %862 {strides = array<i32>} : memref<16x2048xf32, #tpu.memory_space<vmem>>, vector<1x64xf32>,
    %864 = vector.extract_strided_slice %861 {offsets = [0, 64], sizes = [1, 64], strides = [1, 1]} : vector<1x1024xf32> to vector<1x64xf32>
    %c1_796 = arith.constant 1 : index
    %c1664_797 = arith.constant 1664 : index
    %865 = vector.load %arg5[%c1_796, %c1664_797] : memref<16x2048xf32, #tpu.memory_space<vmem>>, vector<1x64xf32>
    tpu.vector_store %arg5[%c1_796, %c1664_797], %864 {strides = array<i32>} : memref<16x2048xf32, #tpu.memory_space<vmem>>, vector<1x64xf32>,
    %866 = vector.extract_strided_slice %861 {offsets = [0, 128], sizes = [1, 64], strides = [1, 1]} : vector<1x1024xf32> to vector<1x64xf32>
    %c2_798 = arith.constant 2 : index
    %c1664_799 = arith.constant 1664 : index
    %867 = vector.load %arg5[%c2_798, %c1664_799] : memref<16x2048xf32, #tpu.memory_space<vmem>>, vector<1x64xf32>
    tpu.vector_store %arg5[%c2_798, %c1664_799], %866 {strides = array<i32>} : memref<16x2048xf32, #tpu.memory_space<vmem>>, vector<1x64xf32>,
    %868 = vector.extract_strided_slice %861 {offsets = [0, 192], sizes = [1, 64], strides = [1, 1]} : vector<1x1024xf32> to vector<1x64xf32>
    %c3_800 = arith.constant 3 : index
    %c1664_801 = arith.constant 1664 : index
    %869 = vector.load %arg5[%c3_800, %c1664_801] : memref<16x2048xf32, #tpu.memory_space<vmem>>, vector<1x64xf32>
    tpu.vector_store %arg5[%c3_800, %c1664_801], %868 {strides = array<i32>} : memref<16x2048xf32, #tpu.memory_space<vmem>>, vector<1x64xf32>,
    %870 = vector.extract_strided_slice %861 {offsets = [0, 256], sizes = [1, 64], strides = [1, 1]} : vector<1x1024xf32> to vector<1x64xf32>
    %c4_802 = arith.constant 4 : index
    %c1664_803 = arith.constant 1664 : index
    %871 = vector.load %arg5[%c4_802, %c1664_803] : memref<16x2048xf32, #tpu.memory_space<vmem>>, vector<1x64xf32>
    tpu.vector_store %arg5[%c4_802, %c1664_803], %870 {strides = array<i32>} : memref<16x2048xf32, #tpu.memory_space<vmem>>, vector<1x64xf32>,
    %872 = vector.extract_strided_slice %861 {offsets = [0, 320], sizes = [1, 64], strides = [1, 1]} : vector<1x1024xf32> to vector<1x64xf32>
    %c5_804 = arith.constant 5 : index
    %c1664_805 = arith.constant 1664 : index
    %873 = vector.load %arg5[%c5_804, %c1664_805] : memref<16x2048xf32, #tpu.memory_space<vmem>>, vector<1x64xf32>
    tpu.vector_store %arg5[%c5_804, %c1664_805], %872 {strides = array<i32>} : memref<16x2048xf32, #tpu.memory_space<vmem>>, vector<1x64xf32>,
    %874 = vector.extract_strided_slice %861 {offsets = [0, 384], sizes = [1, 64], strides = [1, 1]} : vector<1x1024xf32> to vector<1x64xf32>
    %c6_806 = arith.constant 6 : index
    %c1664_807 = arith.constant 1664 : index
    %875 = vector.load %arg5[%c6_806, %c1664_807] : memref<16x2048xf32, #tpu.memory_space<vmem>>, vector<1x64xf32>
    tpu.vector_store %arg5[%c6_806, %c1664_807], %874 {strides = array<i32>} : memref<16x2048xf32, #tpu.memory_space<vmem>>, vector<1x64xf32>,
    %876 = vector.extract_strided_slice %861 {offsets = [0, 448], sizes = [1, 64], strides = [1, 1]} : vector<1x1024xf32> to vector<1x64xf32>
    %c7_808 = arith.constant 7 : index
    %c1664_809 = arith.constant 1664 : index
    %877 = vector.load %arg5[%c7_808, %c1664_809] : memref<16x2048xf32, #tpu.memory_space<vmem>>, vector<1x64xf32>
    tpu.vector_store %arg5[%c7_808, %c1664_809], %876 {strides = array<i32>} : memref<16x2048xf32, #tpu.memory_space<vmem>>, vector<1x64xf32>,
    %878 = vector.extract_strided_slice %861 {offsets = [0, 512], sizes = [1, 64], strides = [1, 1]} : vector<1x1024xf32> to vector<1x64xf32>
    %c8_810 = arith.constant 8 : index
    %c1664_811 = arith.constant 1664 : index
    %879 = vector.load %arg5[%c8_810, %c1664_811] : memref<16x2048xf32, #tpu.memory_space<vmem>>, vector<1x64xf32>
    tpu.vector_store %arg5[%c8_810, %c1664_811], %878 {strides = array<i32>} : memref<16x2048xf32, #tpu.memory_space<vmem>>, vector<1x64xf32>,
    %880 = vector.extract_strided_slice %861 {offsets = [0, 576], sizes = [1, 64], strides = [1, 1]} : vector<1x1024xf32> to vector<1x64xf32>
    %c9_812 = arith.constant 9 : index
    %c1664_813 = arith.constant 1664 : index
    %881 = vector.load %arg5[%c9_812, %c1664_813] : memref<16x2048xf32, #tpu.memory_space<vmem>>, vector<1x64xf32>
    tpu.vector_store %arg5[%c9_812, %c1664_813], %880 {strides = array<i32>} : memref<16x2048xf32, #tpu.memory_space<vmem>>, vector<1x64xf32>,
    %882 = vector.extract_strided_slice %861 {offsets = [0, 640], sizes = [1, 64], strides = [1, 1]} : vector<1x1024xf32> to vector<1x64xf32>
    %c10_814 = arith.constant 10 : index
    %c1664_815 = arith.constant 1664 : index
    %883 = vector.load %arg5[%c10_814, %c1664_815] : memref<16x2048xf32, #tpu.memory_space<vmem>>, vector<1x64xf32>
    tpu.vector_store %arg5[%c10_814, %c1664_815], %882 {strides = array<i32>} : memref<16x2048xf32, #tpu.memory_space<vmem>>, vector<1x64xf32>,
    %884 = vector.extract_strided_slice %861 {offsets = [0, 704], sizes = [1, 64], strides = [1, 1]} : vector<1x1024xf32> to vector<1x64xf32>
    %c11_816 = arith.constant 11 : index
    %c1664_817 = arith.constant 1664 : index
    %885 = vector.load %arg5[%c11_816, %c1664_817] : memref<16x2048xf32, #tpu.memory_space<vmem>>, vector<1x64xf32>
    tpu.vector_store %arg5[%c11_816, %c1664_817], %884 {strides = array<i32>} : memref<16x2048xf32, #tpu.memory_space<vmem>>, vector<1x64xf32>,
    %886 = vector.extract_strided_slice %861 {offsets = [0, 768], sizes = [1, 64], strides = [1, 1]} : vector<1x1024xf32> to vector<1x64xf32>
    %c12_818 = arith.constant 12 : index
    %c1664_819 = arith.constant 1664 : index
    %887 = vector.load %arg5[%c12_818, %c1664_819] : memref<16x2048xf32, #tpu.memory_space<vmem>>, vector<1x64xf32>
    tpu.vector_store %arg5[%c12_818, %c1664_819], %886 {strides = array<i32>} : memref<16x2048xf32, #tpu.memory_space<vmem>>, vector<1x64xf32>,
    %888 = vector.extract_strided_slice %861 {offsets = [0, 832], sizes = [1, 64], strides = [1, 1]} : vector<1x1024xf32> to vector<1x64xf32>
    %c13_820 = arith.constant 13 : index
    %c1664_821 = arith.constant 1664 : index
    %889 = vector.load %arg5[%c13_820, %c1664_821] : memref<16x2048xf32, #tpu.memory_space<vmem>>, vector<1x64xf32>
    tpu.vector_store %arg5[%c13_820, %c1664_821], %888 {strides = array<i32>} : memref<16x2048xf32, #tpu.memory_space<vmem>>, vector<1x64xf32>,
    %890 = vector.extract_strided_slice %861 {offsets = [0, 896], sizes = [1, 64], strides = [1, 1]} : vector<1x1024xf32> to vector<1x64xf32>
    %c14_822 = arith.constant 14 : index
    %c1664_823 = arith.constant 1664 : index
    %891 = vector.load %arg5[%c14_822, %c1664_823] : memref<16x2048xf32, #tpu.memory_space<vmem>>, vector<1x64xf32>
    tpu.vector_store %arg5[%c14_822, %c1664_823], %890 {strides = array<i32>} : memref<16x2048xf32, #tpu.memory_space<vmem>>, vector<1x64xf32>,
    %892 = vector.extract_strided_slice %861 {offsets = [0, 960], sizes = [1, 64], strides = [1, 1]} : vector<1x1024xf32> to vector<1x64xf32>
    %c15_824 = arith.constant 15 : index
    %c1664_825 = arith.constant 1664 : index
    %893 = vector.load %arg5[%c15_824, %c1664_825] : memref<16x2048xf32, #tpu.memory_space<vmem>>, vector<1x64xf32>
    tpu.vector_store %arg5[%c15_824, %c1664_825], %892 {strides = array<i32>} : memref<16x2048xf32, #tpu.memory_space<vmem>>, vector<1x64xf32>,
    %894 = vector.extract_strided_slice %2 {offsets = [27, 0], sizes = [1, 1024], strides = [1, 1]} : vector<32x1024xf32> to vector<1x1024xf32>
    %895 = vector.extract_strided_slice %894 {offsets = [0, 0], sizes = [1, 64], strides = [1, 1]} : vector<1x1024xf32> to vector<1x64xf32>
    %c0_826 = arith.constant 0 : index
    %c1728 = arith.constant 1728 : index
    %896 = vector.load %arg5[%c0_826, %c1728] : memref<16x2048xf32, #tpu.memory_space<vmem>>, vector<1x64xf32>
    tpu.vector_store %arg5[%c0_826, %c1728], %895 {strides = array<i32>} : memref<16x2048xf32, #tpu.memory_space<vmem>>, vector<1x64xf32>,
    %897 = vector.extract_strided_slice %894 {offsets = [0, 64], sizes = [1, 64], strides = [1, 1]} : vector<1x1024xf32> to vector<1x64xf32>
    %c1_827 = arith.constant 1 : index
    %c1728_828 = arith.constant 1728 : index
    %898 = vector.load %arg5[%c1_827, %c1728_828] : memref<16x2048xf32, #tpu.memory_space<vmem>>, vector<1x64xf32>
    tpu.vector_store %arg5[%c1_827, %c1728_828], %897 {strides = array<i32>} : memref<16x2048xf32, #tpu.memory_space<vmem>>, vector<1x64xf32>,
    %899 = vector.extract_strided_slice %894 {offsets = [0, 128], sizes = [1, 64], strides = [1, 1]} : vector<1x1024xf32> to vector<1x64xf32>
    %c2_829 = arith.constant 2 : index
    %c1728_830 = arith.constant 1728 : index
    %900 = vector.load %arg5[%c2_829, %c1728_830] : memref<16x2048xf32, #tpu.memory_space<vmem>>, vector<1x64xf32>
    tpu.vector_store %arg5[%c2_829, %c1728_830], %899 {strides = array<i32>} : memref<16x2048xf32, #tpu.memory_space<vmem>>, vector<1x64xf32>,
    %901 = vector.extract_strided_slice %894 {offsets = [0, 192], sizes = [1, 64], strides = [1, 1]} : vector<1x1024xf32> to vector<1x64xf32>
    %c3_831 = arith.constant 3 : index
    %c1728_832 = arith.constant 1728 : index
    %902 = vector.load %arg5[%c3_831, %c1728_832] : memref<16x2048xf32, #tpu.memory_space<vmem>>, vector<1x64xf32>
    tpu.vector_store %arg5[%c3_831, %c1728_832], %901 {strides = array<i32>} : memref<16x2048xf32, #tpu.memory_space<vmem>>, vector<1x64xf32>,
    %903 = vector.extract_strided_slice %894 {offsets = [0, 256], sizes = [1, 64], strides = [1, 1]} : vector<1x1024xf32> to vector<1x64xf32>
    %c4_833 = arith.constant 4 : index
    %c1728_834 = arith.constant 1728 : index
    %904 = vector.load %arg5[%c4_833, %c1728_834] : memref<16x2048xf32, #tpu.memory_space<vmem>>, vector<1x64xf32>
    tpu.vector_store %arg5[%c4_833, %c1728_834], %903 {strides = array<i32>} : memref<16x2048xf32, #tpu.memory_space<vmem>>, vector<1x64xf32>,
    %905 = vector.extract_strided_slice %894 {offsets = [0, 320], sizes = [1, 64], strides = [1, 1]} : vector<1x1024xf32> to vector<1x64xf32>
    %c5_835 = arith.constant 5 : index
    %c1728_836 = arith.constant 1728 : index
    %906 = vector.load %arg5[%c5_835, %c1728_836] : memref<16x2048xf32, #tpu.memory_space<vmem>>, vector<1x64xf32>
    tpu.vector_store %arg5[%c5_835, %c1728_836], %905 {strides = array<i32>} : memref<16x2048xf32, #tpu.memory_space<vmem>>, vector<1x64xf32>,
    %907 = vector.extract_strided_slice %894 {offsets = [0, 384], sizes = [1, 64], strides = [1, 1]} : vector<1x1024xf32> to vector<1x64xf32>
    %c6_837 = arith.constant 6 : index
    %c1728_838 = arith.constant 1728 : index
    %908 = vector.load %arg5[%c6_837, %c1728_838] : memref<16x2048xf32, #tpu.memory_space<vmem>>, vector<1x64xf32>
    tpu.vector_store %arg5[%c6_837, %c1728_838], %907 {strides = array<i32>} : memref<16x2048xf32, #tpu.memory_space<vmem>>, vector<1x64xf32>,
    %909 = vector.extract_strided_slice %894 {offsets = [0, 448], sizes = [1, 64], strides = [1, 1]} : vector<1x1024xf32> to vector<1x64xf32>
    %c7_839 = arith.constant 7 : index
    %c1728_840 = arith.constant 1728 : index
    %910 = vector.load %arg5[%c7_839, %c1728_840] : memref<16x2048xf32, #tpu.memory_space<vmem>>, vector<1x64xf32>
    tpu.vector_store %arg5[%c7_839, %c1728_840], %909 {strides = array<i32>} : memref<16x2048xf32, #tpu.memory_space<vmem>>, vector<1x64xf32>,
    %911 = vector.extract_strided_slice %894 {offsets = [0, 512], sizes = [1, 64], strides = [1, 1]} : vector<1x1024xf32> to vector<1x64xf32>
    %c8_841 = arith.constant 8 : index
    %c1728_842 = arith.constant 1728 : index
    %912 = vector.load %arg5[%c8_841, %c1728_842] : memref<16x2048xf32, #tpu.memory_space<vmem>>, vector<1x64xf32>
    tpu.vector_store %arg5[%c8_841, %c1728_842], %911 {strides = array<i32>} : memref<16x2048xf32, #tpu.memory_space<vmem>>, vector<1x64xf32>,
    %913 = vector.extract_strided_slice %894 {offsets = [0, 576], sizes = [1, 64], strides = [1, 1]} : vector<1x1024xf32> to vector<1x64xf32>
    %c9_843 = arith.constant 9 : index
    %c1728_844 = arith.constant 1728 : index
    %914 = vector.load %arg5[%c9_843, %c1728_844] : memref<16x2048xf32, #tpu.memory_space<vmem>>, vector<1x64xf32>
    tpu.vector_store %arg5[%c9_843, %c1728_844], %913 {strides = array<i32>} : memref<16x2048xf32, #tpu.memory_space<vmem>>, vector<1x64xf32>,
    %915 = vector.extract_strided_slice %894 {offsets = [0, 640], sizes = [1, 64], strides = [1, 1]} : vector<1x1024xf32> to vector<1x64xf32>
    %c10_845 = arith.constant 10 : index
    %c1728_846 = arith.constant 1728 : index
    %916 = vector.load %arg5[%c10_845, %c1728_846] : memref<16x2048xf32, #tpu.memory_space<vmem>>, vector<1x64xf32>
    tpu.vector_store %arg5[%c10_845, %c1728_846], %915 {strides = array<i32>} : memref<16x2048xf32, #tpu.memory_space<vmem>>, vector<1x64xf32>,
    %917 = vector.extract_strided_slice %894 {offsets = [0, 704], sizes = [1, 64], strides = [1, 1]} : vector<1x1024xf32> to vector<1x64xf32>
    %c11_847 = arith.constant 11 : index
    %c1728_848 = arith.constant 1728 : index
    %918 = vector.load %arg5[%c11_847, %c1728_848] : memref<16x2048xf32, #tpu.memory_space<vmem>>, vector<1x64xf32>
    tpu.vector_store %arg5[%c11_847, %c1728_848], %917 {strides = array<i32>} : memref<16x2048xf32, #tpu.memory_space<vmem>>, vector<1x64xf32>,
    %919 = vector.extract_strided_slice %894 {offsets = [0, 768], sizes = [1, 64], strides = [1, 1]} : vector<1x1024xf32> to vector<1x64xf32>
    %c12_849 = arith.constant 12 : index
    %c1728_850 = arith.constant 1728 : index
    %920 = vector.load %arg5[%c12_849, %c1728_850] : memref<16x2048xf32, #tpu.memory_space<vmem>>, vector<1x64xf32>
    tpu.vector_store %arg5[%c12_849, %c1728_850], %919 {strides = array<i32>} : memref<16x2048xf32, #tpu.memory_space<vmem>>, vector<1x64xf32>,
    %921 = vector.extract_strided_slice %894 {offsets = [0, 832], sizes = [1, 64], strides = [1, 1]} : vector<1x1024xf32> to vector<1x64xf32>
    %c13_851 = arith.constant 13 : index
    %c1728_852 = arith.constant 1728 : index
    %922 = vector.load %arg5[%c13_851, %c1728_852] : memref<16x2048xf32, #tpu.memory_space<vmem>>, vector<1x64xf32>
    tpu.vector_store %arg5[%c13_851, %c1728_852], %921 {strides = array<i32>} : memref<16x2048xf32, #tpu.memory_space<vmem>>, vector<1x64xf32>,
    %923 = vector.extract_strided_slice %894 {offsets = [0, 896], sizes = [1, 64], strides = [1, 1]} : vector<1x1024xf32> to vector<1x64xf32>
    %c14_853 = arith.constant 14 : index
    %c1728_854 = arith.constant 1728 : index
    %924 = vector.load %arg5[%c14_853, %c1728_854] : memref<16x2048xf32, #tpu.memory_space<vmem>>, vector<1x64xf32>
    tpu.vector_store %arg5[%c14_853, %c1728_854], %923 {strides = array<i32>} : memref<16x2048xf32, #tpu.memory_space<vmem>>, vector<1x64xf32>,
    %925 = vector.extract_strided_slice %894 {offsets = [0, 960], sizes = [1, 64], strides = [1, 1]} : vector<1x1024xf32> to vector<1x64xf32>
    %c15_855 = arith.constant 15 : index
    %c1728_856 = arith.constant 1728 : index
    %926 = vector.load %arg5[%c15_855, %c1728_856] : memref<16x2048xf32, #tpu.memory_space<vmem>>, vector<1x64xf32>
    tpu.vector_store %arg5[%c15_855, %c1728_856], %925 {strides = array<i32>} : memref<16x2048xf32, #tpu.memory_space<vmem>>, vector<1x64xf32>,
    %927 = vector.extract_strided_slice %2 {offsets = [28, 0], sizes = [1, 1024], strides = [1, 1]} : vector<32x1024xf32> to vector<1x1024xf32>
    %928 = vector.extract_strided_slice %927 {offsets = [0, 0], sizes = [1, 64], strides = [1, 1]} : vector<1x1024xf32> to vector<1x64xf32>
    %c0_857 = arith.constant 0 : index
    %c1792 = arith.constant 1792 : index
    %929 = vector.load %arg5[%c0_857, %c1792] : memref<16x2048xf32, #tpu.memory_space<vmem>>, vector<1x64xf32>
    tpu.vector_store %arg5[%c0_857, %c1792], %928 {strides = array<i32>} : memref<16x2048xf32, #tpu.memory_space<vmem>>, vector<1x64xf32>,
    %930 = vector.extract_strided_slice %927 {offsets = [0, 64], sizes = [1, 64], strides = [1, 1]} : vector<1x1024xf32> to vector<1x64xf32>
    %c1_858 = arith.constant 1 : index
    %c1792_859 = arith.constant 1792 : index
    %931 = vector.load %arg5[%c1_858, %c1792_859] : memref<16x2048xf32, #tpu.memory_space<vmem>>, vector<1x64xf32>
    tpu.vector_store %arg5[%c1_858, %c1792_859], %930 {strides = array<i32>} : memref<16x2048xf32, #tpu.memory_space<vmem>>, vector<1x64xf32>,
    %932 = vector.extract_strided_slice %927 {offsets = [0, 128], sizes = [1, 64], strides = [1, 1]} : vector<1x1024xf32> to vector<1x64xf32>
    %c2_860 = arith.constant 2 : index
    %c1792_861 = arith.constant 1792 : index
    %933 = vector.load %arg5[%c2_860, %c1792_861] : memref<16x2048xf32, #tpu.memory_space<vmem>>, vector<1x64xf32>
    tpu.vector_store %arg5[%c2_860, %c1792_861], %932 {strides = array<i32>} : memref<16x2048xf32, #tpu.memory_space<vmem>>, vector<1x64xf32>,
    %934 = vector.extract_strided_slice %927 {offsets = [0, 192], sizes = [1, 64], strides = [1, 1]} : vector<1x1024xf32> to vector<1x64xf32>
    %c3_862 = arith.constant 3 : index
    %c1792_863 = arith.constant 1792 : index
    %935 = vector.load %arg5[%c3_862, %c1792_863] : memref<16x2048xf32, #tpu.memory_space<vmem>>, vector<1x64xf32>
    tpu.vector_store %arg5[%c3_862, %c1792_863], %934 {strides = array<i32>} : memref<16x2048xf32, #tpu.memory_space<vmem>>, vector<1x64xf32>,
    %936 = vector.extract_strided_slice %927 {offsets = [0, 256], sizes = [1, 64], strides = [1, 1]} : vector<1x1024xf32> to vector<1x64xf32>
    %c4_864 = arith.constant 4 : index
    %c1792_865 = arith.constant 1792 : index
    %937 = vector.load %arg5[%c4_864, %c1792_865] : memref<16x2048xf32, #tpu.memory_space<vmem>>, vector<1x64xf32>
    tpu.vector_store %arg5[%c4_864, %c1792_865], %936 {strides = array<i32>} : memref<16x2048xf32, #tpu.memory_space<vmem>>, vector<1x64xf32>,
    %938 = vector.extract_strided_slice %927 {offsets = [0, 320], sizes = [1, 64], strides = [1, 1]} : vector<1x1024xf32> to vector<1x64xf32>
    %c5_866 = arith.constant 5 : index
    %c1792_867 = arith.constant 1792 : index
    %939 = vector.load %arg5[%c5_866, %c1792_867] : memref<16x2048xf32, #tpu.memory_space<vmem>>, vector<1x64xf32>
    tpu.vector_store %arg5[%c5_866, %c1792_867], %938 {strides = array<i32>} : memref<16x2048xf32, #tpu.memory_space<vmem>>, vector<1x64xf32>,
    %940 = vector.extract_strided_slice %927 {offsets = [0, 384], sizes = [1, 64], strides = [1, 1]} : vector<1x1024xf32> to vector<1x64xf32>
    %c6_868 = arith.constant 6 : index
    %c1792_869 = arith.constant 1792 : index
    %941 = vector.load %arg5[%c6_868, %c1792_869] : memref<16x2048xf32, #tpu.memory_space<vmem>>, vector<1x64xf32>
    tpu.vector_store %arg5[%c6_868, %c1792_869], %940 {strides = array<i32>} : memref<16x2048xf32, #tpu.memory_space<vmem>>, vector<1x64xf32>,
    %942 = vector.extract_strided_slice %927 {offsets = [0, 448], sizes = [1, 64], strides = [1, 1]} : vector<1x1024xf32> to vector<1x64xf32>
    %c7_870 = arith.constant 7 : index
    %c1792_871 = arith.constant 1792 : index
    %943 = vector.load %arg5[%c7_870, %c1792_871] : memref<16x2048xf32, #tpu.memory_space<vmem>>, vector<1x64xf32>
    tpu.vector_store %arg5[%c7_870, %c1792_871], %942 {strides = array<i32>} : memref<16x2048xf32, #tpu.memory_space<vmem>>, vector<1x64xf32>,
    %944 = vector.extract_strided_slice %927 {offsets = [0, 512], sizes = [1, 64], strides = [1, 1]} : vector<1x1024xf32> to vector<1x64xf32>
    %c8_872 = arith.constant 8 : index
    %c1792_873 = arith.constant 1792 : index
    %945 = vector.load %arg5[%c8_872, %c1792_873] : memref<16x2048xf32, #tpu.memory_space<vmem>>, vector<1x64xf32>
    tpu.vector_store %arg5[%c8_872, %c1792_873], %944 {strides = array<i32>} : memref<16x2048xf32, #tpu.memory_space<vmem>>, vector<1x64xf32>,
    %946 = vector.extract_strided_slice %927 {offsets = [0, 576], sizes = [1, 64], strides = [1, 1]} : vector<1x1024xf32> to vector<1x64xf32>
    %c9_874 = arith.constant 9 : index
    %c1792_875 = arith.constant 1792 : index
    %947 = vector.load %arg5[%c9_874, %c1792_875] : memref<16x2048xf32, #tpu.memory_space<vmem>>, vector<1x64xf32>
    tpu.vector_store %arg5[%c9_874, %c1792_875], %946 {strides = array<i32>} : memref<16x2048xf32, #tpu.memory_space<vmem>>, vector<1x64xf32>,
    %948 = vector.extract_strided_slice %927 {offsets = [0, 640], sizes = [1, 64], strides = [1, 1]} : vector<1x1024xf32> to vector<1x64xf32>
    %c10_876 = arith.constant 10 : index
    %c1792_877 = arith.constant 1792 : index
    %949 = vector.load %arg5[%c10_876, %c1792_877] : memref<16x2048xf32, #tpu.memory_space<vmem>>, vector<1x64xf32>
    tpu.vector_store %arg5[%c10_876, %c1792_877], %948 {strides = array<i32>} : memref<16x2048xf32, #tpu.memory_space<vmem>>, vector<1x64xf32>,
    %950 = vector.extract_strided_slice %927 {offsets = [0, 704], sizes = [1, 64], strides = [1, 1]} : vector<1x1024xf32> to vector<1x64xf32>
    %c11_878 = arith.constant 11 : index
    %c1792_879 = arith.constant 1792 : index
    %951 = vector.load %arg5[%c11_878, %c1792_879] : memref<16x2048xf32, #tpu.memory_space<vmem>>, vector<1x64xf32>
    tpu.vector_store %arg5[%c11_878, %c1792_879], %950 {strides = array<i32>} : memref<16x2048xf32, #tpu.memory_space<vmem>>, vector<1x64xf32>,
    %952 = vector.extract_strided_slice %927 {offsets = [0, 768], sizes = [1, 64], strides = [1, 1]} : vector<1x1024xf32> to vector<1x64xf32>
    %c12_880 = arith.constant 12 : index
    %c1792_881 = arith.constant 1792 : index
    %953 = vector.load %arg5[%c12_880, %c1792_881] : memref<16x2048xf32, #tpu.memory_space<vmem>>, vector<1x64xf32>
    tpu.vector_store %arg5[%c12_880, %c1792_881], %952 {strides = array<i32>} : memref<16x2048xf32, #tpu.memory_space<vmem>>, vector<1x64xf32>,
    %954 = vector.extract_strided_slice %927 {offsets = [0, 832], sizes = [1, 64], strides = [1, 1]} : vector<1x1024xf32> to vector<1x64xf32>
    %c13_882 = arith.constant 13 : index
    %c1792_883 = arith.constant 1792 : index
    %955 = vector.load %arg5[%c13_882, %c1792_883] : memref<16x2048xf32, #tpu.memory_space<vmem>>, vector<1x64xf32>
    tpu.vector_store %arg5[%c13_882, %c1792_883], %954 {strides = array<i32>} : memref<16x2048xf32, #tpu.memory_space<vmem>>, vector<1x64xf32>,
    %956 = vector.extract_strided_slice %927 {offsets = [0, 896], sizes = [1, 64], strides = [1, 1]} : vector<1x1024xf32> to vector<1x64xf32>
    %c14_884 = arith.constant 14 : index
    %c1792_885 = arith.constant 1792 : index
    %957 = vector.load %arg5[%c14_884, %c1792_885] : memref<16x2048xf32, #tpu.memory_space<vmem>>, vector<1x64xf32>
    tpu.vector_store %arg5[%c14_884, %c1792_885], %956 {strides = array<i32>} : memref<16x2048xf32, #tpu.memory_space<vmem>>, vector<1x64xf32>,
    %958 = vector.extract_strided_slice %927 {offsets = [0, 960], sizes = [1, 64], strides = [1, 1]} : vector<1x1024xf32> to vector<1x64xf32>
    %c15_886 = arith.constant 15 : index
    %c1792_887 = arith.constant 1792 : index
    %959 = vector.load %arg5[%c15_886, %c1792_887] : memref<16x2048xf32, #tpu.memory_space<vmem>>, vector<1x64xf32>
    tpu.vector_store %arg5[%c15_886, %c1792_887], %958 {strides = array<i32>} : memref<16x2048xf32, #tpu.memory_space<vmem>>, vector<1x64xf32>,
    %960 = vector.extract_strided_slice %2 {offsets = [29, 0], sizes = [1, 1024], strides = [1, 1]} : vector<32x1024xf32> to vector<1x1024xf32>
    %961 = vector.extract_strided_slice %960 {offsets = [0, 0], sizes = [1, 64], strides = [1, 1]} : vector<1x1024xf32> to vector<1x64xf32>
    %c0_888 = arith.constant 0 : index
    %c1856 = arith.constant 1856 : index
    %962 = vector.load %arg5[%c0_888, %c1856] : memref<16x2048xf32, #tpu.memory_space<vmem>>, vector<1x64xf32>
    tpu.vector_store %arg5[%c0_888, %c1856], %961 {strides = array<i32>} : memref<16x2048xf32, #tpu.memory_space<vmem>>, vector<1x64xf32>,
    %963 = vector.extract_strided_slice %960 {offsets = [0, 64], sizes = [1, 64], strides = [1, 1]} : vector<1x1024xf32> to vector<1x64xf32>
    %c1_889 = arith.constant 1 : index
    %c1856_890 = arith.constant 1856 : index
    %964 = vector.load %arg5[%c1_889, %c1856_890] : memref<16x2048xf32, #tpu.memory_space<vmem>>, vector<1x64xf32>
    tpu.vector_store %arg5[%c1_889, %c1856_890], %963 {strides = array<i32>} : memref<16x2048xf32, #tpu.memory_space<vmem>>, vector<1x64xf32>,
    %965 = vector.extract_strided_slice %960 {offsets = [0, 128], sizes = [1, 64], strides = [1, 1]} : vector<1x1024xf32> to vector<1x64xf32>
    %c2_891 = arith.constant 2 : index
    %c1856_892 = arith.constant 1856 : index
    %966 = vector.load %arg5[%c2_891, %c1856_892] : memref<16x2048xf32, #tpu.memory_space<vmem>>, vector<1x64xf32>
    tpu.vector_store %arg5[%c2_891, %c1856_892], %965 {strides = array<i32>} : memref<16x2048xf32, #tpu.memory_space<vmem>>, vector<1x64xf32>,
    %967 = vector.extract_strided_slice %960 {offsets = [0, 192], sizes = [1, 64], strides = [1, 1]} : vector<1x1024xf32> to vector<1x64xf32>
    %c3_893 = arith.constant 3 : index
    %c1856_894 = arith.constant 1856 : index
    %968 = vector.load %arg5[%c3_893, %c1856_894] : memref<16x2048xf32, #tpu.memory_space<vmem>>, vector<1x64xf32>
    tpu.vector_store %arg5[%c3_893, %c1856_894], %967 {strides = array<i32>} : memref<16x2048xf32, #tpu.memory_space<vmem>>, vector<1x64xf32>,
    %969 = vector.extract_strided_slice %960 {offsets = [0, 256], sizes = [1, 64], strides = [1, 1]} : vector<1x1024xf32> to vector<1x64xf32>
    %c4_895 = arith.constant 4 : index
    %c1856_896 = arith.constant 1856 : index
    %970 = vector.load %arg5[%c4_895, %c1856_896] : memref<16x2048xf32, #tpu.memory_space<vmem>>, vector<1x64xf32>
    tpu.vector_store %arg5[%c4_895, %c1856_896], %969 {strides = array<i32>} : memref<16x2048xf32, #tpu.memory_space<vmem>>, vector<1x64xf32>,
    %971 = vector.extract_strided_slice %960 {offsets = [0, 320], sizes = [1, 64], strides = [1, 1]} : vector<1x1024xf32> to vector<1x64xf32>
    %c5_897 = arith.constant 5 : index
    %c1856_898 = arith.constant 1856 : index
    %972 = vector.load %arg5[%c5_897, %c1856_898] : memref<16x2048xf32, #tpu.memory_space<vmem>>, vector<1x64xf32>
    tpu.vector_store %arg5[%c5_897, %c1856_898], %971 {strides = array<i32>} : memref<16x2048xf32, #tpu.memory_space<vmem>>, vector<1x64xf32>,
    %973 = vector.extract_strided_slice %960 {offsets = [0, 384], sizes = [1, 64], strides = [1, 1]} : vector<1x1024xf32> to vector<1x64xf32>
    %c6_899 = arith.constant 6 : index
    %c1856_900 = arith.constant 1856 : index
    %974 = vector.load %arg5[%c6_899, %c1856_900] : memref<16x2048xf32, #tpu.memory_space<vmem>>, vector<1x64xf32>
    tpu.vector_store %arg5[%c6_899, %c1856_900], %973 {strides = array<i32>} : memref<16x2048xf32, #tpu.memory_space<vmem>>, vector<1x64xf32>,
    %975 = vector.extract_strided_slice %960 {offsets = [0, 448], sizes = [1, 64], strides = [1, 1]} : vector<1x1024xf32> to vector<1x64xf32>
    %c7_901 = arith.constant 7 : index
    %c1856_902 = arith.constant 1856 : index
    %976 = vector.load %arg5[%c7_901, %c1856_902] : memref<16x2048xf32, #tpu.memory_space<vmem>>, vector<1x64xf32>
    tpu.vector_store %arg5[%c7_901, %c1856_902], %975 {strides = array<i32>} : memref<16x2048xf32, #tpu.memory_space<vmem>>, vector<1x64xf32>,
    %977 = vector.extract_strided_slice %960 {offsets = [0, 512], sizes = [1, 64], strides = [1, 1]} : vector<1x1024xf32> to vector<1x64xf32>
    %c8_903 = arith.constant 8 : index
    %c1856_904 = arith.constant 1856 : index
    %978 = vector.load %arg5[%c8_903, %c1856_904] : memref<16x2048xf32, #tpu.memory_space<vmem>>, vector<1x64xf32>
    tpu.vector_store %arg5[%c8_903, %c1856_904], %977 {strides = array<i32>} : memref<16x2048xf32, #tpu.memory_space<vmem>>, vector<1x64xf32>,
    %979 = vector.extract_strided_slice %960 {offsets = [0, 576], sizes = [1, 64], strides = [1, 1]} : vector<1x1024xf32> to vector<1x64xf32>
    %c9_905 = arith.constant 9 : index
    %c1856_906 = arith.constant 1856 : index
    %980 = vector.load %arg5[%c9_905, %c1856_906] : memref<16x2048xf32, #tpu.memory_space<vmem>>, vector<1x64xf32>
    tpu.vector_store %arg5[%c9_905, %c1856_906], %979 {strides = array<i32>} : memref<16x2048xf32, #tpu.memory_space<vmem>>, vector<1x64xf32>,
    %981 = vector.extract_strided_slice %960 {offsets = [0, 640], sizes = [1, 64], strides = [1, 1]} : vector<1x1024xf32> to vector<1x64xf32>
    %c10_907 = arith.constant 10 : index
    %c1856_908 = arith.constant 1856 : index
    %982 = vector.load %arg5[%c10_907, %c1856_908] : memref<16x2048xf32, #tpu.memory_space<vmem>>, vector<1x64xf32>
    tpu.vector_store %arg5[%c10_907, %c1856_908], %981 {strides = array<i32>} : memref<16x2048xf32, #tpu.memory_space<vmem>>, vector<1x64xf32>,
    %983 = vector.extract_strided_slice %960 {offsets = [0, 704], sizes = [1, 64], strides = [1, 1]} : vector<1x1024xf32> to vector<1x64xf32>
    %c11_909 = arith.constant 11 : index
    %c1856_910 = arith.constant 1856 : index
    %984 = vector.load %arg5[%c11_909, %c1856_910] : memref<16x2048xf32, #tpu.memory_space<vmem>>, vector<1x64xf32>
    tpu.vector_store %arg5[%c11_909, %c1856_910], %983 {strides = array<i32>} : memref<16x2048xf32, #tpu.memory_space<vmem>>, vector<1x64xf32>,
    %985 = vector.extract_strided_slice %960 {offsets = [0, 768], sizes = [1, 64], strides = [1, 1]} : vector<1x1024xf32> to vector<1x64xf32>
    %c12_911 = arith.constant 12 : index
    %c1856_912 = arith.constant 1856 : index
    %986 = vector.load %arg5[%c12_911, %c1856_912] : memref<16x2048xf32, #tpu.memory_space<vmem>>, vector<1x64xf32>
    tpu.vector_store %arg5[%c12_911, %c1856_912], %985 {strides = array<i32>} : memref<16x2048xf32, #tpu.memory_space<vmem>>, vector<1x64xf32>,
    %987 = vector.extract_strided_slice %960 {offsets = [0, 832], sizes = [1, 64], strides = [1, 1]} : vector<1x1024xf32> to vector<1x64xf32>
    %c13_913 = arith.constant 13 : index
    %c1856_914 = arith.constant 1856 : index
    %988 = vector.load %arg5[%c13_913, %c1856_914] : memref<16x2048xf32, #tpu.memory_space<vmem>>, vector<1x64xf32>
    tpu.vector_store %arg5[%c13_913, %c1856_914], %987 {strides = array<i32>} : memref<16x2048xf32, #tpu.memory_space<vmem>>, vector<1x64xf32>,
    %989 = vector.extract_strided_slice %960 {offsets = [0, 896], sizes = [1, 64], strides = [1, 1]} : vector<1x1024xf32> to vector<1x64xf32>
    %c14_915 = arith.constant 14 : index
    %c1856_916 = arith.constant 1856 : index
    %990 = vector.load %arg5[%c14_915, %c1856_916] : memref<16x2048xf32, #tpu.memory_space<vmem>>, vector<1x64xf32>
    tpu.vector_store %arg5[%c14_915, %c1856_916], %989 {strides = array<i32>} : memref<16x2048xf32, #tpu.memory_space<vmem>>, vector<1x64xf32>,
    %991 = vector.extract_strided_slice %960 {offsets = [0, 960], sizes = [1, 64], strides = [1, 1]} : vector<1x1024xf32> to vector<1x64xf32>
    %c15_917 = arith.constant 15 : index
    %c1856_918 = arith.constant 1856 : index
    %992 = vector.load %arg5[%c15_917, %c1856_918] : memref<16x2048xf32, #tpu.memory_space<vmem>>, vector<1x64xf32>
    tpu.vector_store %arg5[%c15_917, %c1856_918], %991 {strides = array<i32>} : memref<16x2048xf32, #tpu.memory_space<vmem>>, vector<1x64xf32>,
    %993 = vector.extract_strided_slice %2 {offsets = [30, 0], sizes = [1, 1024], strides = [1, 1]} : vector<32x1024xf32> to vector<1x1024xf32>
    %994 = vector.extract_strided_slice %993 {offsets = [0, 0], sizes = [1, 64], strides = [1, 1]} : vector<1x1024xf32> to vector<1x64xf32>
    %c0_919 = arith.constant 0 : index
    %c1920 = arith.constant 1920 : index
    %995 = vector.load %arg5[%c0_919, %c1920] : memref<16x2048xf32, #tpu.memory_space<vmem>>, vector<1x64xf32>
    tpu.vector_store %arg5[%c0_919, %c1920], %994 {strides = array<i32>} : memref<16x2048xf32, #tpu.memory_space<vmem>>, vector<1x64xf32>,
    %996 = vector.extract_strided_slice %993 {offsets = [0, 64], sizes = [1, 64], strides = [1, 1]} : vector<1x1024xf32> to vector<1x64xf32>
    %c1_920 = arith.constant 1 : index
    %c1920_921 = arith.constant 1920 : index
    %997 = vector.load %arg5[%c1_920, %c1920_921] : memref<16x2048xf32, #tpu.memory_space<vmem>>, vector<1x64xf32>
    tpu.vector_store %arg5[%c1_920, %c1920_921], %996 {strides = array<i32>} : memref<16x2048xf32, #tpu.memory_space<vmem>>, vector<1x64xf32>,
    %998 = vector.extract_strided_slice %993 {offsets = [0, 128], sizes = [1, 64], strides = [1, 1]} : vector<1x1024xf32> to vector<1x64xf32>
    %c2_922 = arith.constant 2 : index
    %c1920_923 = arith.constant 1920 : index
    %999 = vector.load %arg5[%c2_922, %c1920_923] : memref<16x2048xf32, #tpu.memory_space<vmem>>, vector<1x64xf32>
    tpu.vector_store %arg5[%c2_922, %c1920_923], %998 {strides = array<i32>} : memref<16x2048xf32, #tpu.memory_space<vmem>>, vector<1x64xf32>,
    %1000 = vector.extract_strided_slice %993 {offsets = [0, 192], sizes = [1, 64], strides = [1, 1]} : vector<1x1024xf32> to vector<1x64xf32>
    %c3_924 = arith.constant 3 : index
    %c1920_925 = arith.constant 1920 : index
    %1001 = vector.load %arg5[%c3_924, %c1920_925] : memref<16x2048xf32, #tpu.memory_space<vmem>>, vector<1x64xf32>
    tpu.vector_store %arg5[%c3_924, %c1920_925], %1000 {strides = array<i32>} : memref<16x2048xf32, #tpu.memory_space<vmem>>, vector<1x64xf32>,
    %1002 = vector.extract_strided_slice %993 {offsets = [0, 256], sizes = [1, 64], strides = [1, 1]} : vector<1x1024xf32> to vector<1x64xf32>
    %c4_926 = arith.constant 4 : index
    %c1920_927 = arith.constant 1920 : index
    %1003 = vector.load %arg5[%c4_926, %c1920_927] : memref<16x2048xf32, #tpu.memory_space<vmem>>, vector<1x64xf32>
    tpu.vector_store %arg5[%c4_926, %c1920_927], %1002 {strides = array<i32>} : memref<16x2048xf32, #tpu.memory_space<vmem>>, vector<1x64xf32>,
    %1004 = vector.extract_strided_slice %993 {offsets = [0, 320], sizes = [1, 64], strides = [1, 1]} : vector<1x1024xf32> to vector<1x64xf32>
    %c5_928 = arith.constant 5 : index
    %c1920_929 = arith.constant 1920 : index
    %1005 = vector.load %arg5[%c5_928, %c1920_929] : memref<16x2048xf32, #tpu.memory_space<vmem>>, vector<1x64xf32>
    tpu.vector_store %arg5[%c5_928, %c1920_929], %1004 {strides = array<i32>} : memref<16x2048xf32, #tpu.memory_space<vmem>>, vector<1x64xf32>,
    %1006 = vector.extract_strided_slice %993 {offsets = [0, 384], sizes = [1, 64], strides = [1, 1]} : vector<1x1024xf32> to vector<1x64xf32>
    %c6_930 = arith.constant 6 : index
    %c1920_931 = arith.constant 1920 : index
    %1007 = vector.load %arg5[%c6_930, %c1920_931] : memref<16x2048xf32, #tpu.memory_space<vmem>>, vector<1x64xf32>
    tpu.vector_store %arg5[%c6_930, %c1920_931], %1006 {strides = array<i32>} : memref<16x2048xf32, #tpu.memory_space<vmem>>, vector<1x64xf32>,
    %1008 = vector.extract_strided_slice %993 {offsets = [0, 448], sizes = [1, 64], strides = [1, 1]} : vector<1x1024xf32> to vector<1x64xf32>
    %c7_932 = arith.constant 7 : index
    %c1920_933 = arith.constant 1920 : index
    %1009 = vector.load %arg5[%c7_932, %c1920_933] : memref<16x2048xf32, #tpu.memory_space<vmem>>, vector<1x64xf32>
    tpu.vector_store %arg5[%c7_932, %c1920_933], %1008 {strides = array<i32>} : memref<16x2048xf32, #tpu.memory_space<vmem>>, vector<1x64xf32>,
    %1010 = vector.extract_strided_slice %993 {offsets = [0, 512], sizes = [1, 64], strides = [1, 1]} : vector<1x1024xf32> to vector<1x64xf32>
    %c8_934 = arith.constant 8 : index
    %c1920_935 = arith.constant 1920 : index
    %1011 = vector.load %arg5[%c8_934, %c1920_935] : memref<16x2048xf32, #tpu.memory_space<vmem>>, vector<1x64xf32>
    tpu.vector_store %arg5[%c8_934, %c1920_935], %1010 {strides = array<i32>} : memref<16x2048xf32, #tpu.memory_space<vmem>>, vector<1x64xf32>,
    %1012 = vector.extract_strided_slice %993 {offsets = [0, 576], sizes = [1, 64], strides = [1, 1]} : vector<1x1024xf32> to vector<1x64xf32>
    %c9_936 = arith.constant 9 : index
    %c1920_937 = arith.constant 1920 : index
    %1013 = vector.load %arg5[%c9_936, %c1920_937] : memref<16x2048xf32, #tpu.memory_space<vmem>>, vector<1x64xf32>
    tpu.vector_store %arg5[%c9_936, %c1920_937], %1012 {strides = array<i32>} : memref<16x2048xf32, #tpu.memory_space<vmem>>, vector<1x64xf32>,
    %1014 = vector.extract_strided_slice %993 {offsets = [0, 640], sizes = [1, 64], strides = [1, 1]} : vector<1x1024xf32> to vector<1x64xf32>
    %c10_938 = arith.constant 10 : index
    %c1920_939 = arith.constant 1920 : index
    %1015 = vector.load %arg5[%c10_938, %c1920_939] : memref<16x2048xf32, #tpu.memory_space<vmem>>, vector<1x64xf32>
    tpu.vector_store %arg5[%c10_938, %c1920_939], %1014 {strides = array<i32>} : memref<16x2048xf32, #tpu.memory_space<vmem>>, vector<1x64xf32>,
    %1016 = vector.extract_strided_slice %993 {offsets = [0, 704], sizes = [1, 64], strides = [1, 1]} : vector<1x1024xf32> to vector<1x64xf32>
    %c11_940 = arith.constant 11 : index
    %c1920_941 = arith.constant 1920 : index
    %1017 = vector.load %arg5[%c11_940, %c1920_941] : memref<16x2048xf32, #tpu.memory_space<vmem>>, vector<1x64xf32>
    tpu.vector_store %arg5[%c11_940, %c1920_941], %1016 {strides = array<i32>} : memref<16x2048xf32, #tpu.memory_space<vmem>>, vector<1x64xf32>,
    %1018 = vector.extract_strided_slice %993 {offsets = [0, 768], sizes = [1, 64], strides = [1, 1]} : vector<1x1024xf32> to vector<1x64xf32>
    %c12_942 = arith.constant 12 : index
    %c1920_943 = arith.constant 1920 : index
    %1019 = vector.load %arg5[%c12_942, %c1920_943] : memref<16x2048xf32, #tpu.memory_space<vmem>>, vector<1x64xf32>
    tpu.vector_store %arg5[%c12_942, %c1920_943], %1018 {strides = array<i32>} : memref<16x2048xf32, #tpu.memory_space<vmem>>, vector<1x64xf32>,
    %1020 = vector.extract_strided_slice %993 {offsets = [0, 832], sizes = [1, 64], strides = [1, 1]} : vector<1x1024xf32> to vector<1x64xf32>
    %c13_944 = arith.constant 13 : index
    %c1920_945 = arith.constant 1920 : index
    %1021 = vector.load %arg5[%c13_944, %c1920_945] : memref<16x2048xf32, #tpu.memory_space<vmem>>, vector<1x64xf32>
    tpu.vector_store %arg5[%c13_944, %c1920_945], %1020 {strides = array<i32>} : memref<16x2048xf32, #tpu.memory_space<vmem>>, vector<1x64xf32>,
    %1022 = vector.extract_strided_slice %993 {offsets = [0, 896], sizes = [1, 64], strides = [1, 1]} : vector<1x1024xf32> to vector<1x64xf32>
    %c14_946 = arith.constant 14 : index
    %c1920_947 = arith.constant 1920 : index
    %1023 = vector.load %arg5[%c14_946, %c1920_947] : memref<16x2048xf32, #tpu.memory_space<vmem>>, vector<1x64xf32>
    tpu.vector_store %arg5[%c14_946, %c1920_947], %1022 {strides = array<i32>} : memref<16x2048xf32, #tpu.memory_space<vmem>>, vector<1x64xf32>,
    %1024 = vector.extract_strided_slice %993 {offsets = [0, 960], sizes = [1, 64], strides = [1, 1]} : vector<1x1024xf32> to vector<1x64xf32>
    %c15_948 = arith.constant 15 : index
    %c1920_949 = arith.constant 1920 : index
    %1025 = vector.load %arg5[%c15_948, %c1920_949] : memref<16x2048xf32, #tpu.memory_space<vmem>>, vector<1x64xf32>
    tpu.vector_store %arg5[%c15_948, %c1920_949], %1024 {strides = array<i32>} : memref<16x2048xf32, #tpu.memory_space<vmem>>, vector<1x64xf32>,
    %1026 = vector.extract_strided_slice %2 {offsets = [31, 0], sizes = [1, 1024], strides = [1, 1]} : vector<32x1024xf32> to vector<1x1024xf32>
    %1027 = vector.extract_strided_slice %1026 {offsets = [0, 0], sizes = [1, 64], strides = [1, 1]} : vector<1x1024xf32> to vector<1x64xf32>
    %c0_950 = arith.constant 0 : index
    %c1984 = arith.constant 1984 : index
    %1028 = vector.load %arg5[%c0_950, %c1984] : memref<16x2048xf32, #tpu.memory_space<vmem>>, vector<1x64xf32>
    tpu.vector_store %arg5[%c0_950, %c1984], %1027 {strides = array<i32>} : memref<16x2048xf32, #tpu.memory_space<vmem>>, vector<1x64xf32>,
    %1029 = vector.extract_strided_slice %1026 {offsets = [0, 64], sizes = [1, 64], strides = [1, 1]} : vector<1x1024xf32> to vector<1x64xf32>
    %c1_951 = arith.constant 1 : index
    %c1984_952 = arith.constant 1984 : index
    %1030 = vector.load %arg5[%c1_951, %c1984_952] : memref<16x2048xf32, #tpu.memory_space<vmem>>, vector<1x64xf32>
    tpu.vector_store %arg5[%c1_951, %c1984_952], %1029 {strides = array<i32>} : memref<16x2048xf32, #tpu.memory_space<vmem>>, vector<1x64xf32>,
    %1031 = vector.extract_strided_slice %1026 {offsets = [0, 128], sizes = [1, 64], strides = [1, 1]} : vector<1x1024xf32> to vector<1x64xf32>
    %c2_953 = arith.constant 2 : index
    %c1984_954 = arith.constant 1984 : index
    %1032 = vector.load %arg5[%c2_953, %c1984_954] : memref<16x2048xf32, #tpu.memory_space<vmem>>, vector<1x64xf32>
    tpu.vector_store %arg5[%c2_953, %c1984_954], %1031 {strides = array<i32>} : memref<16x2048xf32, #tpu.memory_space<vmem>>, vector<1x64xf32>,
    %1033 = vector.extract_strided_slice %1026 {offsets = [0, 192], sizes = [1, 64], strides = [1, 1]} : vector<1x1024xf32> to vector<1x64xf32>
    %c3_955 = arith.constant 3 : index
    %c1984_956 = arith.constant 1984 : index
    %1034 = vector.load %arg5[%c3_955, %c1984_956] : memref<16x2048xf32, #tpu.memory_space<vmem>>, vector<1x64xf32>
    tpu.vector_store %arg5[%c3_955, %c1984_956], %1033 {strides = array<i32>} : memref<16x2048xf32, #tpu.memory_space<vmem>>, vector<1x64xf32>,
    %1035 = vector.extract_strided_slice %1026 {offsets = [0, 256], sizes = [1, 64], strides = [1, 1]} : vector<1x1024xf32> to vector<1x64xf32>
    %c4_957 = arith.constant 4 : index
    %c1984_958 = arith.constant 1984 : index
    %1036 = vector.load %arg5[%c4_957, %c1984_958] : memref<16x2048xf32, #tpu.memory_space<vmem>>, vector<1x64xf32>
    tpu.vector_store %arg5[%c4_957, %c1984_958], %1035 {strides = array<i32>} : memref<16x2048xf32, #tpu.memory_space<vmem>>, vector<1x64xf32>,
    %1037 = vector.extract_strided_slice %1026 {offsets = [0, 320], sizes = [1, 64], strides = [1, 1]} : vector<1x1024xf32> to vector<1x64xf32>
    %c5_959 = arith.constant 5 : index
    %c1984_960 = arith.constant 1984 : index
    %1038 = vector.load %arg5[%c5_959, %c1984_960] : memref<16x2048xf32, #tpu.memory_space<vmem>>, vector<1x64xf32>
    tpu.vector_store %arg5[%c5_959, %c1984_960], %1037 {strides = array<i32>} : memref<16x2048xf32, #tpu.memory_space<vmem>>, vector<1x64xf32>,
    %1039 = vector.extract_strided_slice %1026 {offsets = [0, 384], sizes = [1, 64], strides = [1, 1]} : vector<1x1024xf32> to vector<1x64xf32>
    %c6_961 = arith.constant 6 : index
    %c1984_962 = arith.constant 1984 : index
    %1040 = vector.load %arg5[%c6_961, %c1984_962] : memref<16x2048xf32, #tpu.memory_space<vmem>>, vector<1x64xf32>
    tpu.vector_store %arg5[%c6_961, %c1984_962], %1039 {strides = array<i32>} : memref<16x2048xf32, #tpu.memory_space<vmem>>, vector<1x64xf32>,
    %1041 = vector.extract_strided_slice %1026 {offsets = [0, 448], sizes = [1, 64], strides = [1, 1]} : vector<1x1024xf32> to vector<1x64xf32>
    %c7_963 = arith.constant 7 : index
    %c1984_964 = arith.constant 1984 : index
    %1042 = vector.load %arg5[%c7_963, %c1984_964] : memref<16x2048xf32, #tpu.memory_space<vmem>>, vector<1x64xf32>
    tpu.vector_store %arg5[%c7_963, %c1984_964], %1041 {strides = array<i32>} : memref<16x2048xf32, #tpu.memory_space<vmem>>, vector<1x64xf32>,
    %1043 = vector.extract_strided_slice %1026 {offsets = [0, 512], sizes = [1, 64], strides = [1, 1]} : vector<1x1024xf32> to vector<1x64xf32>
    %c8_965 = arith.constant 8 : index
    %c1984_966 = arith.constant 1984 : index
    %1044 = vector.load %arg5[%c8_965, %c1984_966] : memref<16x2048xf32, #tpu.memory_space<vmem>>, vector<1x64xf32>
    tpu.vector_store %arg5[%c8_965, %c1984_966], %1043 {strides = array<i32>} : memref<16x2048xf32, #tpu.memory_space<vmem>>, vector<1x64xf32>,
    %1045 = vector.extract_strided_slice %1026 {offsets = [0, 576], sizes = [1, 64], strides = [1, 1]} : vector<1x1024xf32> to vector<1x64xf32>
    %c9_967 = arith.constant 9 : index
    %c1984_968 = arith.constant 1984 : index
    %1046 = vector.load %arg5[%c9_967, %c1984_968] : memref<16x2048xf32, #tpu.memory_space<vmem>>, vector<1x64xf32>
    tpu.vector_store %arg5[%c9_967, %c1984_968], %1045 {strides = array<i32>} : memref<16x2048xf32, #tpu.memory_space<vmem>>, vector<1x64xf32>,
    %1047 = vector.extract_strided_slice %1026 {offsets = [0, 640], sizes = [1, 64], strides = [1, 1]} : vector<1x1024xf32> to vector<1x64xf32>
    %c10_969 = arith.constant 10 : index
    %c1984_970 = arith.constant 1984 : index
    %1048 = vector.load %arg5[%c10_969, %c1984_970] : memref<16x2048xf32, #tpu.memory_space<vmem>>, vector<1x64xf32>
    tpu.vector_store %arg5[%c10_969, %c1984_970], %1047 {strides = array<i32>} : memref<16x2048xf32, #tpu.memory_space<vmem>>, vector<1x64xf32>,
    %1049 = vector.extract_strided_slice %1026 {offsets = [0, 704], sizes = [1, 64], strides = [1, 1]} : vector<1x1024xf32> to vector<1x64xf32>
    %c11_971 = arith.constant 11 : index
    %c1984_972 = arith.constant 1984 : index
    %1050 = vector.load %arg5[%c11_971, %c1984_972] : memref<16x2048xf32, #tpu.memory_space<vmem>>, vector<1x64xf32>
    tpu.vector_store %arg5[%c11_971, %c1984_972], %1049 {strides = array<i32>} : memref<16x2048xf32, #tpu.memory_space<vmem>>, vector<1x64xf32>,
    %1051 = vector.extract_strided_slice %1026 {offsets = [0, 768], sizes = [1, 64], strides = [1, 1]} : vector<1x1024xf32> to vector<1x64xf32>
    %c12_973 = arith.constant 12 : index
    %c1984_974 = arith.constant 1984 : index
    %1052 = vector.load %arg5[%c12_973, %c1984_974] : memref<16x2048xf32, #tpu.memory_space<vmem>>, vector<1x64xf32>
    tpu.vector_store %arg5[%c12_973, %c1984_974], %1051 {strides = array<i32>} : memref<16x2048xf32, #tpu.memory_space<vmem>>, vector<1x64xf32>,
    %1053 = vector.extract_strided_slice %1026 {offsets = [0, 832], sizes = [1, 64], strides = [1, 1]} : vector<1x1024xf32> to vector<1x64xf32>
    %c13_975 = arith.constant 13 : index
    %c1984_976 = arith.constant 1984 : index
    %1054 = vector.load %arg5[%c13_975, %c1984_976] : memref<16x2048xf32, #tpu.memory_space<vmem>>, vector<1x64xf32>
    tpu.vector_store %arg5[%c13_975, %c1984_976], %1053 {strides = array<i32>} : memref<16x2048xf32, #tpu.memory_space<vmem>>, vector<1x64xf32>,
    %1055 = vector.extract_strided_slice %1026 {offsets = [0, 896], sizes = [1, 64], strides = [1, 1]} : vector<1x1024xf32> to vector<1x64xf32>
    %c14_977 = arith.constant 14 : index
    %c1984_978 = arith.constant 1984 : index
    %1056 = vector.load %arg5[%c14_977, %c1984_978] : memref<16x2048xf32, #tpu.memory_space<vmem>>, vector<1x64xf32>
    tpu.vector_store %arg5[%c14_977, %c1984_978], %1055 {strides = array<i32>} : memref<16x2048xf32, #tpu.memory_space<vmem>>, vector<1x64xf32>,
    %1057 = vector.extract_strided_slice %1026 {offsets = [0, 960], sizes = [1, 64], strides = [1, 1]} : vector<1x1024xf32> to vector<1x64xf32>
    %c15_979 = arith.constant 15 : index
    %c1984_980 = arith.constant 1984 : index
    %1058 = vector.load %arg5[%c15_979, %c1984_980] : memref<16x2048xf32, #tpu.memory_space<vmem>>, vector<1x64xf32>
    tpu.vector_store %arg5[%c15_979, %c1984_980], %1057 {strides = array<i32>} : memref<16x2048xf32, #tpu.memory_space<vmem>>, vector<1x64xf32>,
    %1059 = tpu.iota {dimensions = array<i32: 1>} : vector<1x2048xi32>
    %c64_i32 = arith.constant 64 : i32
    %c0_i32 = arith.constant 0 : i32
    %1060 = arith.cmpi eq, %c64_i32, %c0_i32 : i32
    %c1_i32 = arith.constant 1 : i32
    %1061 = arith.select %1060, %c1_i32, %c64_i32 : i32
    %1062 = vector.broadcast %1061 : i32 to vector<1x2048xi32>
    %1063 = arith.remsi %1059, %1062 : vector<1x2048xi32>
    %c0_i32_981 = arith.constant 0 : i32
    %1064 = vector.broadcast %c0_i32_981 : i32 to vector<1x2048xi32>
    %1065 = arith.cmpi ne, %1063, %1064 : vector<1x2048xi32>
    %c0_i32_982 = arith.constant 0 : i32
    %1066 = vector.broadcast %c0_i32_982 : i32 to vector<1x2048xi32>
    %1067 = arith.cmpi slt, %1063, %1066 : vector<1x2048xi32>
    %c0_i32_983 = arith.constant 0 : i32
    %1068 = arith.cmpi slt, %1061, %c0_i32_983 : i32
    %1069 = vector.broadcast %1068 : i1 to vector<1x2048xi1>
    %1070 = vector.broadcast %1069 : vector<1x2048xi1> to vector<1x2048xi1>
    %1071 = arith.xori %1067, %1070 : vector<1x2048xi1>
    %1072 = arith.andi %1071, %1065 : vector<1x2048xi1>
    %1073 = vector.broadcast %1061 : i32 to vector<1x2048xi32>
    %1074 = arith.addi %1063, %1073 : vector<1x2048xi32>
    %1075 = arith.select %1072, %1074, %1063 : vector<1x2048xi1>, vector<1x2048xi32>
    %c7_i32 = arith.constant 7 : i32
    %c0_i32_984 = arith.constant 0 : i32
    %1076 = arith.cmpi eq, %c7_i32, %c0_i32_984 : i32
    %c1_i32_985 = arith.constant 1 : i32
    %1077 = arith.select %1076, %c1_i32_985, %c7_i32 : i32
    %1078 = vector.broadcast %1077 : i32 to vector<1x2048xi32>
    %1079 = arith.remsi %1075, %1078 : vector<1x2048xi32>
    %c0_i32_986 = arith.constant 0 : i32
    %1080 = vector.broadcast %c0_i32_986 : i32 to vector<1x2048xi32>
    %1081 = arith.cmpi ne, %1079, %1080 : vector<1x2048xi32>
    %c0_i32_987 = arith.constant 0 : i32
    %1082 = vector.broadcast %c0_i32_987 : i32 to vector<1x2048xi32>
    %1083 = arith.cmpi slt, %1079, %1082 : vector<1x2048xi32>
    %c0_i32_988 = arith.constant 0 : i32
    %1084 = arith.cmpi slt, %1077, %c0_i32_988 : i32
    %1085 = vector.broadcast %1084 : i1 to vector<1x2048xi1>
    %1086 = vector.broadcast %1085 : vector<1x2048xi1> to vector<1x2048xi1>
    %1087 = arith.xori %1083, %1086 : vector<1x2048xi1>
    %1088 = arith.andi %1087, %1081 : vector<1x2048xi1>
    %1089 = vector.broadcast %1077 : i32 to vector<1x2048xi32>
    %1090 = arith.addi %1079, %1089 : vector<1x2048xi32>
    %1091 = arith.select %1088, %1090, %1079 : vector<1x2048xi1>, vector<1x2048xi32>
    %c49_i32 = arith.constant 49 : i32
    %1092 = vector.broadcast %c49_i32 : i32 to vector<1x2048xi32>
    %1093 = arith.cmpi slt, %1075, %1092 : vector<1x2048xi32>
    %c0_989 = arith.constant 0 : index
    %c0_990 = arith.constant 0 : index
    %1094 = vector.load %arg5[%c0_989, %c0_990] : memref<16x2048xf32, #tpu.memory_space<vmem>>, vector<16x2048xf32>
    %c2_i32 = arith.constant 2 : i32
    %1095 = vector.broadcast %c2_i32 : i32 to vector<1x2048xi32>
    %1096 = arith.cmpi sge, %1091, %1095 : vector<1x2048xi32>
    %1097 = arith.andi %1093, %1096 : vector<1x2048xi1>
    %c6_i32 = arith.constant 6 : i32
    %1098 = vector.broadcast %c6_i32 : i32 to vector<1x2048xi32>
    %1099 = arith.cmpi sle, %1091, %1098 : vector<1x2048xi32>
    %1100 = arith.andi %1097, %1099 : vector<1x2048xi1>
    %c2_i32_991 = arith.constant 2 : i32
    %1101 = tpu.dynamic_rotate %1094 by %c2_i32_991 dim 1 : vector<16x2048xf32>, i32 -> vector<16x2048xf32>
    %cst_992 = arith.constant 0.000000e+00 : f32
    %1102 = vector.shape_cast %1100 : vector<1x2048xi1> to vector<1x2048xi1>
    %1103 = vector.broadcast %1102 : vector<1x2048xi1> to vector<16x2048xi1>
    %1104 = vector.broadcast %cst_992 : f32 to vector<16x2048xf32>
    %1105 = arith.select %1103, %1101, %1104 : vector<16x2048xi1>, vector<16x2048xf32>
    %c0_993 = arith.constant 0 : index
    %c0_994 = arith.constant 0 : index
    %1106 = vector.load %arg6[%c0_993, %c0_994] : memref<144x2048xf32, #tpu.memory_space<vmem>>, vector<16x2048xf32>
    tpu.vector_store %arg6[%c0_993, %c0_994], %1105 {strides = array<i32>} : memref<144x2048xf32, #tpu.memory_space<vmem>>, vector<16x2048xf32>,
    %c1_i32_995 = arith.constant 1 : i32
    %1107 = vector.broadcast %c1_i32_995 : i32 to vector<1x2048xi32>
    %1108 = arith.cmpi sge, %1091, %1107 : vector<1x2048xi32>
    %1109 = arith.andi %1093, %1108 : vector<1x2048xi1>
    %c6_i32_996 = arith.constant 6 : i32
    %1110 = vector.broadcast %c6_i32_996 : i32 to vector<1x2048xi32>
    %1111 = arith.cmpi sle, %1091, %1110 : vector<1x2048xi32>
    %1112 = arith.andi %1109, %1111 : vector<1x2048xi1>
    %c1_i32_997 = arith.constant 1 : i32
    %1113 = tpu.dynamic_rotate %1094 by %c1_i32_997 dim 1 : vector<16x2048xf32>, i32 -> vector<16x2048xf32>
    %cst_998 = arith.constant 0.000000e+00 : f32
    %1114 = vector.shape_cast %1112 : vector<1x2048xi1> to vector<1x2048xi1>
    %1115 = vector.broadcast %1114 : vector<1x2048xi1> to vector<16x2048xi1>
    %1116 = vector.broadcast %cst_998 : f32 to vector<16x2048xf32>
    %1117 = arith.select %1115, %1113, %1116 : vector<16x2048xi1>, vector<16x2048xf32>
    %c16 = arith.constant 16 : index
    %c0_999 = arith.constant 0 : index
    %1118 = vector.load %arg6[%c16, %c0_999] : memref<144x2048xf32, #tpu.memory_space<vmem>>, vector<16x2048xf32>
    tpu.vector_store %arg6[%c16, %c0_999], %1117 {strides = array<i32>} : memref<144x2048xf32, #tpu.memory_space<vmem>>, vector<16x2048xf32>,
    %c0_i32_1000 = arith.constant 0 : i32
    %1119 = vector.broadcast %c0_i32_1000 : i32 to vector<1x2048xi32>
    %1120 = arith.cmpi sge, %1091, %1119 : vector<1x2048xi32>
    %1121 = arith.andi %1093, %1120 : vector<1x2048xi1>
    %c5_i32 = arith.constant 5 : i32
    %1122 = vector.broadcast %c5_i32 : i32 to vector<1x2048xi32>
    %1123 = arith.cmpi sle, %1091, %1122 : vector<1x2048xi32>
    %1124 = arith.andi %1121, %1123 : vector<1x2048xi1>
    %cst_1001 = arith.constant 0.000000e+00 : f32
    %1125 = vector.shape_cast %1124 : vector<1x2048xi1> to vector<1x2048xi1>
    %1126 = vector.broadcast %1125 : vector<1x2048xi1> to vector<16x2048xi1>
    %1127 = vector.broadcast %cst_1001 : f32 to vector<16x2048xf32>
    %1128 = arith.select %1126, %1094, %1127 : vector<16x2048xi1>, vector<16x2048xf32>
    %c32 = arith.constant 32 : index
    %c0_1002 = arith.constant 0 : index
    %1129 = vector.load %arg6[%c32, %c0_1002] : memref<144x2048xf32, #tpu.memory_space<vmem>>, vector<16x2048xf32>
    tpu.vector_store %arg6[%c32, %c0_1002], %1128 {strides = array<i32>} : memref<144x2048xf32, #tpu.memory_space<vmem>>, vector<16x2048xf32>,
    %c1_i32_1003 = arith.constant 1 : i32
    %1130 = vector.broadcast %c1_i32_1003 : i32 to vector<1x2048xi32>
    %1131 = arith.cmpi sge, %1091, %1130 : vector<1x2048xi32>
    %1132 = arith.andi %1093, %1131 : vector<1x2048xi1>
    %c6_i32_1004 = arith.constant 6 : i32
    %1133 = vector.broadcast %c6_i32_1004 : i32 to vector<1x2048xi32>
    %1134 = arith.cmpi sle, %1091, %1133 : vector<1x2048xi32>
    %1135 = arith.andi %1132, %1134 : vector<1x2048xi1>
    %c1_i32_1005 = arith.constant 1 : i32
    %1136 = tpu.dynamic_rotate %1094 by %c1_i32_1005 dim 1 : vector<16x2048xf32>, i32 -> vector<16x2048xf32>
    %cst_1006 = arith.constant 0.000000e+00 : f32
    %1137 = vector.shape_cast %1135 : vector<1x2048xi1> to vector<1x2048xi1>
    %1138 = vector.broadcast %1137 : vector<1x2048xi1> to vector<16x2048xi1>
    %1139 = vector.broadcast %cst_1006 : f32 to vector<16x2048xf32>
    %1140 = arith.select %1138, %1136, %1139 : vector<16x2048xi1>, vector<16x2048xf32>
    %c48 = arith.constant 48 : index
    %c0_1007 = arith.constant 0 : index
    %1141 = vector.load %arg6[%c48, %c0_1007] : memref<144x2048xf32, #tpu.memory_space<vmem>>, vector<16x2048xf32>
    tpu.vector_store %arg6[%c48, %c0_1007], %1140 {strides = array<i32>} : memref<144x2048xf32, #tpu.memory_space<vmem>>, vector<16x2048xf32>,
    %c0_i32_1008 = arith.constant 0 : i32
    %1142 = vector.broadcast %c0_i32_1008 : i32 to vector<1x2048xi32>
    %1143 = arith.cmpi sge, %1091, %1142 : vector<1x2048xi32>
    %1144 = arith.andi %1093, %1143 : vector<1x2048xi1>
    %c6_i32_1009 = arith.constant 6 : i32
    %1145 = vector.broadcast %c6_i32_1009 : i32 to vector<1x2048xi32>
    %1146 = arith.cmpi sle, %1091, %1145 : vector<1x2048xi32>
    %1147 = arith.andi %1144, %1146 : vector<1x2048xi1>
    %cst_1010 = arith.constant 0.000000e+00 : f32
    %1148 = vector.shape_cast %1147 : vector<1x2048xi1> to vector<1x2048xi1>
    %1149 = vector.broadcast %1148 : vector<1x2048xi1> to vector<16x2048xi1>
    %1150 = vector.broadcast %cst_1010 : f32 to vector<16x2048xf32>
    %1151 = arith.select %1149, %1094, %1150 : vector<16x2048xi1>, vector<16x2048xf32>
    %c64_1011 = arith.constant 64 : index
    %c0_1012 = arith.constant 0 : index
    %1152 = vector.load %arg6[%c64_1011, %c0_1012] : memref<144x2048xf32, #tpu.memory_space<vmem>>, vector<16x2048xf32>
    tpu.vector_store %arg6[%c64_1011, %c0_1012], %1151 {strides = array<i32>} : memref<144x2048xf32, #tpu.memory_space<vmem>>, vector<16x2048xf32>,
    %c0_i32_1013 = arith.constant 0 : i32
    %1153 = vector.broadcast %c0_i32_1013 : i32 to vector<1x2048xi32>
    %1154 = arith.cmpi sge, %1091, %1153 : vector<1x2048xi32>
    %1155 = arith.andi %1093, %1154 : vector<1x2048xi1>
    %c5_i32_1014 = arith.constant 5 : i32
    %1156 = vector.broadcast %c5_i32_1014 : i32 to vector<1x2048xi32>
    %1157 = arith.cmpi sle, %1091, %1156 : vector<1x2048xi32>
    %1158 = arith.andi %1155, %1157 : vector<1x2048xi1>
    %c2047_i32 = arith.constant 2047 : i32
    %1159 = tpu.dynamic_rotate %1094 by %c2047_i32 dim 1 : vector<16x2048xf32>, i32 -> vector<16x2048xf32>
    %cst_1015 = arith.constant 0.000000e+00 : f32
    %1160 = vector.shape_cast %1158 : vector<1x2048xi1> to vector<1x2048xi1>
    %1161 = vector.broadcast %1160 : vector<1x2048xi1> to vector<16x2048xi1>
    %1162 = vector.broadcast %cst_1015 : f32 to vector<16x2048xf32>
    %1163 = arith.select %1161, %1159, %1162 : vector<16x2048xi1>, vector<16x2048xf32>
    %c80 = arith.constant 80 : index
    %c0_1016 = arith.constant 0 : index
    %1164 = vector.load %arg6[%c80, %c0_1016] : memref<144x2048xf32, #tpu.memory_space<vmem>>, vector<16x2048xf32>
    tpu.vector_store %arg6[%c80, %c0_1016], %1163 {strides = array<i32>} : memref<144x2048xf32, #tpu.memory_space<vmem>>, vector<16x2048xf32>,
    %c1_i32_1017 = arith.constant 1 : i32
    %1165 = vector.broadcast %c1_i32_1017 : i32 to vector<1x2048xi32>
    %1166 = arith.cmpi sge, %1091, %1165 : vector<1x2048xi32>
    %1167 = arith.andi %1093, %1166 : vector<1x2048xi1>
    %c6_i32_1018 = arith.constant 6 : i32
    %1168 = vector.broadcast %c6_i32_1018 : i32 to vector<1x2048xi32>
    %1169 = arith.cmpi sle, %1091, %1168 : vector<1x2048xi32>
    %1170 = arith.andi %1167, %1169 : vector<1x2048xi1>
    %cst_1019 = arith.constant 0.000000e+00 : f32
    %1171 = vector.shape_cast %1170 : vector<1x2048xi1> to vector<1x2048xi1>
    %1172 = vector.broadcast %1171 : vector<1x2048xi1> to vector<16x2048xi1>
    %1173 = vector.broadcast %cst_1019 : f32 to vector<16x2048xf32>
    %1174 = arith.select %1172, %1094, %1173 : vector<16x2048xi1>, vector<16x2048xf32>
    %c96 = arith.constant 96 : index
    %c0_1020 = arith.constant 0 : index
    %1175 = vector.load %arg6[%c96, %c0_1020] : memref<144x2048xf32, #tpu.memory_space<vmem>>, vector<16x2048xf32>
    tpu.vector_store %arg6[%c96, %c0_1020], %1174 {strides = array<i32>} : memref<144x2048xf32, #tpu.memory_space<vmem>>, vector<16x2048xf32>,
    %c0_i32_1021 = arith.constant 0 : i32
    %1176 = vector.broadcast %c0_i32_1021 : i32 to vector<1x2048xi32>
    %1177 = arith.cmpi sge, %1091, %1176 : vector<1x2048xi32>
    %1178 = arith.andi %1093, %1177 : vector<1x2048xi1>
    %c5_i32_1022 = arith.constant 5 : i32
    %1179 = vector.broadcast %c5_i32_1022 : i32 to vector<1x2048xi32>
    %1180 = arith.cmpi sle, %1091, %1179 : vector<1x2048xi32>
    %1181 = arith.andi %1178, %1180 : vector<1x2048xi1>
    %c2047_i32_1023 = arith.constant 2047 : i32
    %1182 = tpu.dynamic_rotate %1094 by %c2047_i32_1023 dim 1 : vector<16x2048xf32>, i32 -> vector<16x2048xf32>
    %cst_1024 = arith.constant 0.000000e+00 : f32
    %1183 = vector.shape_cast %1181 : vector<1x2048xi1> to vector<1x2048xi1>
    %1184 = vector.broadcast %1183 : vector<1x2048xi1> to vector<16x2048xi1>
    %1185 = vector.broadcast %cst_1024 : f32 to vector<16x2048xf32>
    %1186 = arith.select %1184, %1182, %1185 : vector<16x2048xi1>, vector<16x2048xf32>
    %c112 = arith.constant 112 : index
    %c0_1025 = arith.constant 0 : index
    %1187 = vector.load %arg6[%c112, %c0_1025] : memref<144x2048xf32, #tpu.memory_space<vmem>>, vector<16x2048xf32>
    tpu.vector_store %arg6[%c112, %c0_1025], %1186 {strides = array<i32>} : memref<144x2048xf32, #tpu.memory_space<vmem>>, vector<16x2048xf32>,
    %c0_i32_1026 = arith.constant 0 : i32
    %1188 = vector.broadcast %c0_i32_1026 : i32 to vector<1x2048xi32>
    %1189 = arith.cmpi sge, %1091, %1188 : vector<1x2048xi32>
    %1190 = arith.andi %1093, %1189 : vector<1x2048xi1>
    %c4_i32 = arith.constant 4 : i32
    %1191 = vector.broadcast %c4_i32 : i32 to vector<1x2048xi32>
    %1192 = arith.cmpi sle, %1091, %1191 : vector<1x2048xi32>
    %1193 = arith.andi %1190, %1192 : vector<1x2048xi1>
    %c2046_i32 = arith.constant 2046 : i32
    %1194 = tpu.dynamic_rotate %1094 by %c2046_i32 dim 1 : vector<16x2048xf32>, i32 -> vector<16x2048xf32>
    %cst_1027 = arith.constant 0.000000e+00 : f32
    %1195 = vector.shape_cast %1193 : vector<1x2048xi1> to vector<1x2048xi1>
    %1196 = vector.broadcast %1195 : vector<1x2048xi1> to vector<16x2048xi1>
    %1197 = vector.broadcast %cst_1027 : f32 to vector<16x2048xf32>
    %1198 = arith.select %1196, %1194, %1197 : vector<16x2048xi1>, vector<16x2048xf32>
    %c128_1028 = arith.constant 128 : index
    %c0_1029 = arith.constant 0 : index
    %1199 = vector.load %arg6[%c128_1028, %c0_1029] : memref<144x2048xf32, #tpu.memory_space<vmem>>, vector<16x2048xf32>
    tpu.vector_store %arg6[%c128_1028, %c0_1029], %1198 {strides = array<i32>} : memref<144x2048xf32, #tpu.memory_space<vmem>>, vector<16x2048xf32>,
    %c0_1030 = arith.constant 0 : index
    %c0_1031 = arith.constant 0 : index
    %1200 = vector.load %arg3[%c0_1030, %c0_1031] : memref<32x144xf32, #tpu.memory_space<vmem>>, vector<32x144xf32>
    %c0_1032 = arith.constant 0 : index
    %c0_1033 = arith.constant 0 : index
    %1201 = vector.load %arg6[%c0_1032, %c0_1033] : memref<144x2048xf32, #tpu.memory_space<vmem>>, vector<144x2048xf32>
    %cst_1034 = arith.constant dense<0.000000e+00> : vector<32x2048xf32>
    %1202 = tpu.matmul %1200, %1201, %cst_1034 {dimension_numbers = #tpu.dot_dimension_numbers<[1], [0], [0], [1], [0, 0, 1, 1], [], []>} : vector<32x144xf32>, vector<144x2048xf32>, vector<32x2048xf32> -> vector<32x2048xf32>
    %c0_1035 = arith.constant 0 : index
    %c0_1036 = arith.constant 0 : index
    %1203 = vector.load %arg4[%c0_1035, %c0_1036] : memref<32x2048xf32, #tpu.memory_space<vmem>>, vector<32x2048xf32>
    tpu.vector_store %arg4[%c0_1035, %c0_1036], %1202 {strides = array<i32>} : memref<32x2048xf32, #tpu.memory_space<vmem>>, vector<32x2048xf32>,
    return
  }
  func.func @transform_0(%arg0: i32) -> (i32, i32) {
    %c0_i32 = arith.constant 0 : i32
    %c0_i32_0 = arith.constant 0 : i32
    %c0_i32_1 = arith.constant 0 : i32
    return %c0_i32, %c0_i32_0 : i32, i32
  }
  func.func @transform_1(%arg0: i32) -> (i32, i32) {
    %c0_i32 = arith.constant 0 : i32
    %c0_i32_0 = arith.constant 0 : i32
    %c0_i32_1 = arith.constant 0 : i32
    return %c0_i32, %c0_i32_0 : i32, i32
  }
  func.func @transform_2(%arg0: i32) -> (i32, i32) {
    %c0_i32 = arith.constant 0 : i32
    %c0_i32_0 = arith.constant 0 : i32
    %c0_i32_1 = arith.constant 0 : i32
    return %c0_i32, %c0_i32_0 : i32, i32
  }
  func.func @transform_3(%arg0: i32) -> (i32, i32) {
    %c0_i32 = arith.constant 0 : i32
    %c0_i32_0 = arith.constant 0 : i32
    %c0_i32_1 = arith.constant 0 : i32
    return %c0_i32, %c0_i32_0 : i32, i32
  }
}

</mosaic_0001>

<llo_original>
// kernel: forward.1
$region0: #{forward.1}
  #allocation0 [shape = 'u32[]', space=smem, size = 0x4, offset = 0x4, fixed_abs, tag = 'smem constant byte address 0x4 - core index']
  #allocation1 [shape = 'u32[72,128]{1,0:T(1,128)}', space=vmem, size = 0x9000, scoped, tag = 'internal scratch']
  #allocation2 [shape = 'f32[16,2048]{1,0:T(8,128)}', space=vmem, size = 0x20000, scoped, tag = 'scratch operand']
  #allocation3 [shape = 'f32[144,2048]{1,0:T(8,128)}', space=vmem, size = 0x120000, scoped, tag = 'scratch operand']
  %s0 = inlined_call_operand.vmem [shape: f32[64,1024], index: 0, kind: input, shape index: {}]
  %s1 = inlined_call_operand.vmem [shape: f32[32,64], index: 1, kind: input, shape index: {}]
  %s2 = inlined_call_operand.vmem [shape: f32[32,144], index: 2, kind: input, shape index: {}]
  %s3 = inlined_call_operand.vmem [shape: f32[32,2048], index: 3, kind: output, shape index: {}]
  %s4 = sld [smem:[#allocation0]]
  $region22: #{forward.1} parent=0
    _
  %s6 = ssub.s32 1, %s4
  %s7 = scalar_select 0, %s6, %s4
  // Predicated region
  $region2: #{forward.1} parent=0 // pred_check
    _
  $region3: #{forward.1} parent=0 // pred_check_branch
    %9 = sbr.rel (0) target = $region5
  $region4: #{forward.1} parent=0 // pred_region
    _
  $region5: #{forward.1} parent=0 // pred_fallthru
    _
  // Predicated region
  $region6: #{forward.1} parent=0 // pred_check
    _
  $region7: #{forward.1} parent=0 // pred_check_branch
    %11 = sbr.rel (0) target = $region9
  $region8: #{forward.1} parent=0 // pred_region
    _
  $region9: #{forward.1} parent=0 // pred_fallthru
    _
  // Predicated region
  $region10: #{forward.1} parent=0 // pred_check
    _
  $region11: #{forward.1} parent=0 // pred_check_branch
    %13 = sbr.rel (0) target = $region13
  $region12: #{forward.1} parent=0 // pred_region
    _
  $region13: #{forward.1} parent=0 // pred_fallthru
    _
  %v14 = vld [vmem:[%s1] sm:$0xff]
  %v15 = vld [vmem:[%s1 + $0x8] sm:$0xff]
  %v16 = vld [vmem:[%s1 + $0x10] sm:$0xff]
  %v17 = vld [vmem:[%s1 + $0x18] sm:$0xff]
  %v18 = vld [vmem:[%s0] sm:$0xff]
  %v19 = vld [vmem:[%s0 + $0x8] sm:$0xff]
  %v20 = vld [vmem:[%s0 + $0x10] sm:$0xff]
  %v21 = vld [vmem:[%s0 + $0x18] sm:$0xff]
  %v22 = vld [vmem:[%s0 + $0x20] sm:$0xff]
  %v23 = vld [vmem:[%s0 + $0x28] sm:$0xff]
  %v24 = vld [vmem:[%s0 + $0x30] sm:$0xff]
  %v25 = vld [vmem:[%s0 + $0x38] sm:$0xff]
  %v26 = vld [vmem:[%s0 + $0x40] sm:$0xff]
  %v27 = vld [vmem:[%s0 + $0x48] sm:$0xff]
  %v28 = vld [vmem:[%s0 + $0x50] sm:$0xff]
  %v29 = vld [vmem:[%s0 + $0x58] sm:$0xff]
  %v30 = vld [vmem:[%s0 + $0x60] sm:$0xff]
  %v31 = vld [vmem:[%s0 + $0x68] sm:$0xff]
  %v32 = vld [vmem:[%s0 + $0x70] sm:$0xff]
  %v33 = vld [vmem:[%s0 + $0x78] sm:$0xff]
  %v34 = vld [vmem:[%s0 + $0x80] sm:$0xff]
  %v35 = vld [vmem:[%s0 + $0x88] sm:$0xff]
  %v36 = vld [vmem:[%s0 + $0x90] sm:$0xff]
  %v37 = vld [vmem:[%s0 + $0x98] sm:$0xff]
  %v38 = vld [vmem:[%s0 + $0xa0] sm:$0xff]
  %v39 = vld [vmem:[%s0 + $0xa8] sm:$0xff]
  %v40 = vld [vmem:[%s0 + $0xb0] sm:$0xff]
  %v41 = vld [vmem:[%s0 + $0xb8] sm:$0xff]
  %v42 = vld [vmem:[%s0 + $0xc0] sm:$0xff]
  %v43 = vld [vmem:[%s0 + $0xc8] sm:$0xff]
  %v44 = vld [vmem:[%s0 + $0xd0] sm:$0xff]
  %v45 = vld [vmem:[%s0 + $0xd8] sm:$0xff]
  %v46 = vld [vmem:[%s0 + $0xe0] sm:$0xff]
  %v47 = vld [vmem:[%s0 + $0xe8] sm:$0xff]
  %v48 = vld [vmem:[%s0 + $0xf0] sm:$0xff]
  %v49 = vld [vmem:[%s0 + $0xf8] sm:$0xff]
  %v50 = vld [vmem:[%s0 + $0x100] sm:$0xff]
  %v51 = vld [vmem:[%s0 + $0x108] sm:$0xff]
  %v52 = vld [vmem:[%s0 + $0x110] sm:$0xff]
  %v53 = vld [vmem:[%s0 + $0x118] sm:$0xff]
  %v54 = vld [vmem:[%s0 + $0x120] sm:$0xff]
  %v55 = vld [vmem:[%s0 + $0x128] sm:$0xff]
  %v56 = vld [vmem:[%s0 + $0x130] sm:$0xff]
  %v57 = vld [vmem:[%s0 + $0x138] sm:$0xff]
  %v58 = vld [vmem:[%s0 + $0x140] sm:$0xff]
  %v59 = vld [vmem:[%s0 + $0x148] sm:$0xff]
  %v60 = vld [vmem:[%s0 + $0x150] sm:$0xff]
  %v61 = vld [vmem:[%s0 + $0x158] sm:$0xff]
  %v62 = vld [vmem:[%s0 + $0x160] sm:$0xff]
  %v63 = vld [vmem:[%s0 + $0x168] sm:$0xff]
  %v64 = vld [vmem:[%s0 + $0x170] sm:$0xff]
  %v65 = vld [vmem:[%s0 + $0x178] sm:$0xff]
  %v66 = vld [vmem:[%s0 + $0x180] sm:$0xff]
  %v67 = vld [vmem:[%s0 + $0x188] sm:$0xff]
  %v68 = vld [vmem:[%s0 + $0x190] sm:$0xff]
  %v69 = vld [vmem:[%s0 + $0x198] sm:$0xff]
  %v70 = vld [vmem:[%s0 + $0x1a0] sm:$0xff]
  %v71 = vld [vmem:[%s0 + $0x1a8] sm:$0xff]
  %v72 = vld [vmem:[%s0 + $0x1b0] sm:$0xff]
  %v73 = vld [vmem:[%s0 + $0x1b8] sm:$0xff]
  %v74 = vld [vmem:[%s0 + $0x1c0] sm:$0xff]
  %v75 = vld [vmem:[%s0 + $0x1c8] sm:$0xff]
  %v76 = vld [vmem:[%s0 + $0x1d0] sm:$0xff]
  %v77 = vld [vmem:[%s0 + $0x1d8] sm:$0xff]
  %v78 = vld [vmem:[%s0 + $0x1e0] sm:$0xff]
  %v79 = vld [vmem:[%s0 + $0x1e8] sm:$0xff]
  %v80 = vld [vmem:[%s0 + $0x1f0] sm:$0xff]
  %v81 = vld [vmem:[%s0 + $0x1f8] sm:$0xff]
  %vm82 = vcmask 523264
  %v84 = vsel %vm82, %v14, 0
  %v87 = vsel %vm82, %v15, 0
  %v90 = vsel %vm82, %v16, 0
  %v93 = vsel %vm82, %v17, 0
  %95 = vmatpush.msra.mxu0 0.0
  %96 = vmatpush.msra.mxu0 0.0
  %97 = vmatpush.msra.mxu0 0.0
  %98 = vmatpush.msra.mxu0 0.0
  %99 = vmatpush.msra.mxu0 0.0
  %100 = vmatpush.msra.mxu0 0.0
  %101 = vmatpush.msra.mxu0 0.0
  %102 = vmatpush.msra.mxu0 0.0
  %103 = vmatpush.msra.mxu0 %v74
  %104 = vmatpush.msra.mxu0 %v66
  %105 = vmatpush.msra.mxu0 %v58
  %106 = vmatpush.msra.mxu0 %v50
  %107 = vmatpush.msra.mxu0 %v42
  %108 = vmatpush.msra.mxu0 %v34
  %109 = vmatpush.msra.mxu0 %v26
  %110 = vmatpush.msra.mxu0 %v18
  %111 = vmatmul.f32.gmra.mxu0 %v84
  %v112 = vpop.f32.mrf.mxu0
  %v113 = vadd.f32 0.0, %v112
  %114 = vmatmul.f32.gmra.mxu0 %v87
  %v115 = vpop.f32.mrf.mxu0
  %v116 = vadd.f32 0.0, %v115
  %117 = vmatmul.f32.gmra.mxu0 %v90
  %v118 = vpop.f32.mrf.mxu0
  %v119 = vadd.f32 0.0, %v118
  %120 = vmatmul.f32.gmra.mxu0 %v93
  %v121 = vpop.f32.mrf.mxu0
  %v122 = vadd.f32 0.0, %v121
  %123 = vdwg.mxu0
  %124 = vmatpush.msra.mxu0 0.0
  %125 = vmatpush.msra.mxu0 0.0
  %126 = vmatpush.msra.mxu0 0.0
  %127 = vmatpush.msra.mxu0 0.0
  %128 = vmatpush.msra.mxu0 0.0
  %129 = vmatpush.msra.mxu0 0.0
  %130 = vmatpush.msra.mxu0 0.0
  %131 = vmatpush.msra.mxu0 0.0
  %132 = vmatpush.msra.mxu0 %v75
  %133 = vmatpush.msra.mxu0 %v67
  %134 = vmatpush.msra.mxu0 %v59
  %135 = vmatpush.msra.mxu0 %v51
  %136 = vmatpush.msra.mxu0 %v43
  %137 = vmatpush.msra.mxu0 %v35
  %138 = vmatpush.msra.mxu0 %v27
  %139 = vmatpush.msra.mxu0 %v19
  %140 = vmatmul.f32.gmra.mxu0 %v84
  %v141 = vpop.f32.mrf.mxu0
  %v142 = vadd.f32 0.0, %v141
  %143 = vmatmul.f32.gmra.mxu0 %v87
  %v144 = vpop.f32.mrf.mxu0
  %v145 = vadd.f32 0.0, %v144
  %146 = vmatmul.f32.gmra.mxu0 %v90
  %v147 = vpop.f32.mrf.mxu0
  %v148 = vadd.f32 0.0, %v147
  %149 = vmatmul.f32.gmra.mxu0 %v93
  %v150 = vpop.f32.mrf.mxu0
  %v151 = vadd.f32 0.0, %v150
  %152 = vdwg.mxu0
  %153 = vmatpush.msra.mxu0 0.0
  %154 = vmatpush.msra.mxu0 0.0
  %155 = vmatpush.msra.mxu0 0.0
  %156 = vmatpush.msra.mxu0 0.0
  %157 = vmatpush.msra.mxu0 0.0
  %158 = vmatpush.msra.mxu0 0.0
  %159 = vmatpush.msra.mxu0 0.0
  %160 = vmatpush.msra.mxu0 0.0
  %161 = vmatpush.msra.mxu0 %v76
  %162 = vmatpush.msra.mxu0 %v68
  %163 = vmatpush.msra.mxu0 %v60
  %164 = vmatpush.msra.mxu0 %v52
  %165 = vmatpush.msra.mxu0 %v44
  %166 = vmatpush.msra.mxu0 %v36
  %167 = vmatpush.msra.mxu0 %v28
  %168 = vmatpush.msra.mxu0 %v20
  %169 = vmatmul.f32.gmra.mxu0 %v84
  %v170 = vpop.f32.mrf.mxu0
  %v171 = vadd.f32 0.0, %v170
  %172 = vmatmul.f32.gmra.mxu0 %v87
  %v173 = vpop.f32.mrf.mxu0
  %v174 = vadd.f32 0.0, %v173
  %175 = vmatmul.f32.gmra.mxu0 %v90
  %v176 = vpop.f32.mrf.mxu0
  %v177 = vadd.f32 0.0, %v176
  %178 = vmatmul.f32.gmra.mxu0 %v93
  %v179 = vpop.f32.mrf.mxu0
  %v180 = vadd.f32 0.0, %v179
  %181 = vdwg.mxu0
  %182 = vmatpush.msra.mxu0 0.0
  %183 = vmatpush.msra.mxu0 0.0
  %184 = vmatpush.msra.mxu0 0.0
  %185 = vmatpush.msra.mxu0 0.0
  %186 = vmatpush.msra.mxu0 0.0
  %187 = vmatpush.msra.mxu0 0.0
  %188 = vmatpush.msra.mxu0 0.0
  %189 = vmatpush.msra.mxu0 0.0
  %190 = vmatpush.msra.mxu0 %v77
  %191 = vmatpush.msra.mxu0 %v69
  %192 = vmatpush.msra.mxu0 %v61
  %193 = vmatpush.msra.mxu0 %v53
  %194 = vmatpush.msra.mxu0 %v45
  %195 = vmatpush.msra.mxu0 %v37
  %196 = vmatpush.msra.mxu0 %v29
  %197 = vmatpush.msra.mxu0 %v21
  %198 = vmatmul.f32.gmra.mxu0 %v84
  %v199 = vpop.f32.mrf.mxu0
  %v200 = vadd.f32 0.0, %v199
  %201 = vmatmul.f32.gmra.mxu0 %v87
  %v202 = vpop.f32.mrf.mxu0
  %v203 = vadd.f32 0.0, %v202
  %204 = vmatmul.f32.gmra.mxu0 %v90
  %v205 = vpop.f32.mrf.mxu0
  %v206 = vadd.f32 0.0, %v205
  %207 = vmatmul.f32.gmra.mxu0 %v93
  %v208 = vpop.f32.mrf.mxu0
  %v209 = vadd.f32 0.0, %v208
  %210 = vdwg.mxu0
  %211 = vmatpush.msra.mxu0 0.0
  %212 = vmatpush.msra.mxu0 0.0
  %213 = vmatpush.msra.mxu0 0.0
  %214 = vmatpush.msra.mxu0 0.0
  %215 = vmatpush.msra.mxu0 0.0
  %216 = vmatpush.msra.mxu0 0.0
  %217 = vmatpush.msra.mxu0 0.0
  %218 = vmatpush.msra.mxu0 0.0
  %219 = vmatpush.msra.mxu0 %v78
  %220 = vmatpush.msra.mxu0 %v70
  %221 = vmatpush.msra.mxu0 %v62
  %222 = vmatpush.msra.mxu0 %v54
  %223 = vmatpush.msra.mxu0 %v46
  %224 = vmatpush.msra.mxu0 %v38
  %225 = vmatpush.msra.mxu0 %v30
  %226 = vmatpush.msra.mxu0 %v22
  %227 = vmatmul.f32.gmra.mxu0 %v84
  %v228 = vpop.f32.mrf.mxu0
  %v229 = vadd.f32 0.0, %v228
  %230 = vmatmul.f32.gmra.mxu0 %v87
  %v231 = vpop.f32.mrf.mxu0
  %v232 = vadd.f32 0.0, %v231
  %233 = vmatmul.f32.gmra.mxu0 %v90
  %v234 = vpop.f32.mrf.mxu0
  %v235 = vadd.f32 0.0, %v234
  %236 = vmatmul.f32.gmra.mxu0 %v93
  %v237 = vpop.f32.mrf.mxu0
  %v238 = vadd.f32 0.0, %v237
  %239 = vdwg.mxu0
  %240 = vmatpush.msra.mxu0 0.0
  %241 = vmatpush.msra.mxu0 0.0
  %242 = vmatpush.msra.mxu0 0.0
  %243 = vmatpush.msra.mxu0 0.0
  %244 = vmatpush.msra.mxu0 0.0
  %245 = vmatpush.msra.mxu0 0.0
  %246 = vmatpush.msra.mxu0 0.0
  %247 = vmatpush.msra.mxu0 0.0
  %248 = vmatpush.msra.mxu0 %v79
  %249 = vmatpush.msra.mxu0 %v71
  %250 = vmatpush.msra.mxu0 %v63
  %251 = vmatpush.msra.mxu0 %v55
  %252 = vmatpush.msra.mxu0 %v47
  %253 = vmatpush.msra.mxu0 %v39
  %254 = vmatpush.msra.mxu0 %v31
  %255 = vmatpush.msra.mxu0 %v23
  %256 = vmatmul.f32.gmra.mxu0 %v84
  %v257 = vpop.f32.mrf.mxu0
  %v258 = vadd.f32 0.0, %v257
  %259 = vmatmul.f32.gmra.mxu0 %v87
  %v260 = vpop.f32.mrf.mxu0
  %v261 = vadd.f32 0.0, %v260
  %262 = vmatmul.f32.gmra.mxu0 %v90
  %v263 = vpop.f32.mrf.mxu0
  %v264 = vadd.f32 0.0, %v263
  %265 = vmatmul.f32.gmra.mxu0 %v93
  %v266 = vpop.f32.mrf.mxu0
  %v267 = vadd.f32 0.0, %v266
  %268 = vdwg.mxu0
  %269 = vmatpush.msra.mxu0 0.0
  %270 = vmatpush.msra.mxu0 0.0
  %271 = vmatpush.msra.mxu0 0.0
  %272 = vmatpush.msra.mxu0 0.0
  %273 = vmatpush.msra.mxu0 0.0
  %274 = vmatpush.msra.mxu0 0.0
  %275 = vmatpush.msra.mxu0 0.0
  %276 = vmatpush.msra.mxu0 0.0
  %277 = vmatpush.msra.mxu0 %v80
  %278 = vmatpush.msra.mxu0 %v72
  %279 = vmatpush.msra.mxu0 %v64
  %280 = vmatpush.msra.mxu0 %v56
  %281 = vmatpush.msra.mxu0 %v48
  %282 = vmatpush.msra.mxu0 %v40
  %283 = vmatpush.msra.mxu0 %v32
  %284 = vmatpush.msra.mxu0 %v24
  %285 = vmatmul.f32.gmra.mxu0 %v84
  %v286 = vpop.f32.mrf.mxu0
  %v287 = vadd.f32 0.0, %v286
  %288 = vmatmul.f32.gmra.mxu0 %v87
  %v289 = vpop.f32.mrf.mxu0
  %v290 = vadd.f32 0.0, %v289
  %291 = vmatmul.f32.gmra.mxu0 %v90
  %v292 = vpop.f32.mrf.mxu0
  %v293 = vadd.f32 0.0, %v292
  %294 = vmatmul.f32.gmra.mxu0 %v93
  %v295 = vpop.f32.mrf.mxu0
  %v296 = vadd.f32 0.0, %v295
  %297 = vdwg.mxu0
  %298 = vmatpush.msra.mxu0 0.0
  %299 = vmatpush.msra.mxu0 0.0
  %300 = vmatpush.msra.mxu0 0.0
  %301 = vmatpush.msra.mxu0 0.0
  %302 = vmatpush.msra.mxu0 0.0
  %303 = vmatpush.msra.mxu0 0.0
  %304 = vmatpush.msra.mxu0 0.0
  %305 = vmatpush.msra.mxu0 0.0
  %306 = vmatpush.msra.mxu0 %v81
  %307 = vmatpush.msra.mxu0 %v73
  %308 = vmatpush.msra.mxu0 %v65
  %309 = vmatpush.msra.mxu0 %v57
  %310 = vmatpush.msra.mxu0 %v49
  %311 = vmatpush.msra.mxu0 %v41
  %312 = vmatpush.msra.mxu0 %v33
  %313 = vmatpush.msra.mxu0 %v25
  %314 = vmatmul.f32.gmra.mxu0 %v84
  %v315 = vpop.f32.mrf.mxu0
  %v316 = vadd.f32 0.0, %v315
  %317 = vmatmul.f32.gmra.mxu0 %v87
  %v318 = vpop.f32.mrf.mxu0
  %v319 = vadd.f32 0.0, %v318
  %320 = vmatmul.f32.gmra.mxu0 %v90
  %v321 = vpop.f32.mrf.mxu0
  %v322 = vadd.f32 0.0, %v321
  %323 = vmatmul.f32.gmra.mxu0 %v93
  %v324 = vpop.f32.mrf.mxu0
  %v325 = vadd.f32 0.0, %v324
  %326 = vdwg.mxu0
  %vm327 = vcmask 516096
  %328 = vst.msk [vmem:[#allocation2] sm:$0x1] %vm327, %v113
  %330 = vrot.lane.b32.xlu0 %v113, 64
  %v331 = vpop.permute.xlu0 %330
  %333 = vst.msk [vmem:[#allocation2 + $0x1] sm:$0x1] %vm327, %v331
  %334 = vst.msk [vmem:[#allocation2 + $0x2] sm:$0x1] %vm327, %v142
  %336 = vrot.lane.b32.xlu0 %v142, 64
  %v337 = vpop.permute.xlu0 %336
  %339 = vst.msk [vmem:[#allocation2 + $0x3] sm:$0x1] %vm327, %v337
  %340 = vst.msk [vmem:[#allocation2 + $0x4] sm:$0x1] %vm327, %v171
  %342 = vrot.lane.b32.xlu0 %v171, 64
  %v343 = vpop.permute.xlu0 %342
  %345 = vst.msk [vmem:[#allocation2 + $0x5] sm:$0x1] %vm327, %v343
  %346 = vst.msk [vmem:[#allocation2 + $0x6] sm:$0x1] %vm327, %v200
  %348 = vrot.lane.b32.xlu0 %v200, 64
  %v349 = vpop.permute.xlu0 %348
  %351 = vst.msk [vmem:[#allocation2 + $0x7] sm:$0x1] %vm327, %v349
  %352 = vst.msk [vmem:[#allocation2 + $0x80] sm:$0x1] %vm327, %v229
  %354 = vrot.lane.b32.xlu0 %v229, 64
  %v355 = vpop.permute.xlu0 %354
  %357 = vst.msk [vmem:[#allocation2 + $0x81] sm:$0x1] %vm327, %v355
  %358 = vst.msk [vmem:[#allocation2 + $0x82] sm:$0x1] %vm327, %v258
  %360 = vrot.lane.b32.xlu0 %v258, 64
  %v361 = vpop.permute.xlu0 %360
  %363 = vst.msk [vmem:[#allocation2 + $0x83] sm:$0x1] %vm327, %v361
  %364 = vst.msk [vmem:[#allocation2 + $0x84] sm:$0x1] %vm327, %v287
  %366 = vrot.lane.b32.xlu0 %v287, 64
  %v367 = vpop.permute.xlu0 %366
  %369 = vst.msk [vmem:[#allocation2 + $0x85] sm:$0x1] %vm327, %v367
  %370 = vst.msk [vmem:[#allocation2 + $0x86] sm:$0x1] %vm327, %v316
  %372 = vrot.lane.b32.xlu0 %v316, 64
  %v373 = vpop.permute.xlu0 %372
  %375 = vst.msk [vmem:[#allocation2 + $0x87] sm:$0x1] %vm327, %v373
  %v376 = vrot.slane %v113, 1
  %377 = vrot.lane.b32.xlu0 %v376, 64
  %v378 = vpop.permute.xlu0 %377
  %vm380 = vcmask 1040896
  %381 = vst.msk [vmem:[#allocation2] sm:$0x1] %vm380, %v378
  %383 = vst.msk [vmem:[#allocation2 + $0x1] sm:$0x1] %vm380, %v376
  %v384 = vrot.slane %v142, 1
  %385 = vrot.lane.b32.xlu0 %v384, 64
  %v386 = vpop.permute.xlu0 %385
  %388 = vst.msk [vmem:[#allocation2 + $0x2] sm:$0x1] %vm380, %v386
  %390 = vst.msk [vmem:[#allocation2 + $0x3] sm:$0x1] %vm380, %v384
  %v391 = vrot.slane %v171, 1
  %392 = vrot.lane.b32.xlu0 %v391, 64
  %v393 = vpop.permute.xlu0 %392
  %395 = vst.msk [vmem:[#allocation2 + $0x4] sm:$0x1] %vm380, %v393
  %397 = vst.msk [vmem:[#allocation2 + $0x5] sm:$0x1] %vm380, %v391
  %v398 = vrot.slane %v200, 1
  %399 = vrot.lane.b32.xlu0 %v398, 64
  %v400 = vpop.permute.xlu0 %399
  %402 = vst.msk [vmem:[#allocation2 + $0x6] sm:$0x1] %vm380, %v400
  %404 = vst.msk [vmem:[#allocation2 + $0x7] sm:$0x1] %vm380, %v398
  %v405 = vrot.slane %v229, 1
  %406 = vrot.lane.b32.xlu0 %v405, 64
  %v407 = vpop.permute.xlu0 %406
  %409 = vst.msk [vmem:[#allocation2 + $0x80] sm:$0x1] %vm380, %v407
  %411 = vst.msk [vmem:[#allocation2 + $0x81] sm:$0x1] %vm380, %v405
  %v412 = vrot.slane %v258, 1
  %413 = vrot.lane.b32.xlu0 %v412, 64
  %v414 = vpop.permute.xlu0 %413
  %416 = vst.msk [vmem:[#allocation2 + $0x82] sm:$0x1] %vm380, %v414
  %418 = vst.msk [vmem:[#allocation2 + $0x83] sm:$0x1] %vm380, %v412
  %v419 = vrot.slane %v287, 1
  %420 = vrot.lane.b32.xlu0 %v419, 64
  %v421 = vpop.permute.xlu0 %420
  %423 = vst.msk [vmem:[#allocation2 + $0x84] sm:$0x1] %vm380, %v421
  %425 = vst.msk [vmem:[#allocation2 + $0x85] sm:$0x1] %vm380, %v419
  %v426 = vrot.slane %v316, 1
  %427 = vrot.lane.b32.xlu0 %v426, 64
  %v428 = vpop.permute.xlu0 %427
  %430 = vst.msk [vmem:[#allocation2 + $0x86] sm:$0x1] %vm380, %v428
  %432 = vst.msk [vmem:[#allocation2 + $0x87] sm:$0x1] %vm380, %v426
  %v433 = vrot.slane %v113, 2
  %435 = vst.msk [vmem:[#allocation2 + $0x8] sm:$0x1] %vm327, %v433
  %436 = vrot.lane.b32.xlu0 %v433, 64
  %v437 = vpop.permute.xlu0 %436
  %439 = vst.msk [vmem:[#allocation2 + $0x9] sm:$0x1] %vm327, %v437
  %v440 = vrot.slane %v142, 2
  %442 = vst.msk [vmem:[#allocation2 + $0xa] sm:$0x1] %vm327, %v440
  %443 = vrot.lane.b32.xlu0 %v440, 64
  %v444 = vpop.permute.xlu0 %443
  %446 = vst.msk [vmem:[#allocation2 + $0xb] sm:$0x1] %vm327, %v444
  %v447 = vrot.slane %v171, 2
  %449 = vst.msk [vmem:[#allocation2 + $0xc] sm:$0x1] %vm327, %v447
  %450 = vrot.lane.b32.xlu0 %v447, 64
  %v451 = vpop.permute.xlu0 %450
  %453 = vst.msk [vmem:[#allocation2 + $0xd] sm:$0x1] %vm327, %v451
  %v454 = vrot.slane %v200, 2
  %456 = vst.msk [vmem:[#allocation2 + $0xe] sm:$0x1] %vm327, %v454
  %457 = vrot.lane.b32.xlu0 %v454, 64
  %v458 = vpop.permute.xlu0 %457
  %460 = vst.msk [vmem:[#allocation2 + $0xf] sm:$0x1] %vm327, %v458
  %v461 = vrot.slane %v229, 2
  %463 = vst.msk [vmem:[#allocation2 + $0x88] sm:$0x1] %vm327, %v461
  %464 = vrot.lane.b32.xlu0 %v461, 64
  %v465 = vpop.permute.xlu0 %464
  %467 = vst.msk [vmem:[#allocation2 + $0x89] sm:$0x1] %vm327, %v465
  %v468 = vrot.slane %v258, 2
  %470 = vst.msk [vmem:[#allocation2 + $0x8a] sm:$0x1] %vm327, %v468
  %471 = vrot.lane.b32.xlu0 %v468, 64
  %v472 = vpop.permute.xlu0 %471
  %474 = vst.msk [vmem:[#allocation2 + $0x8b] sm:$0x1] %vm327, %v472
  %v475 = vrot.slane %v287, 2
  %477 = vst.msk [vmem:[#allocation2 + $0x8c] sm:$0x1] %vm327, %v475
  %478 = vrot.lane.b32.xlu0 %v475, 64
  %v479 = vpop.permute.xlu0 %478
  %481 = vst.msk [vmem:[#allocation2 + $0x8d] sm:$0x1] %vm327, %v479
  %v482 = vrot.slane %v316, 2
  %484 = vst.msk [vmem:[#allocation2 + $0x8e] sm:$0x1] %vm327, %v482
  %485 = vrot.lane.b32.xlu0 %v482, 64
  %v486 = vpop.permute.xlu0 %485
  %488 = vst.msk [vmem:[#allocation2 + $0x8f] sm:$0x1] %vm327, %v486
  %v489 = vrot.slane %v113, 3
  %490 = vrot.lane.b32.xlu0 %v489, 64
  %v491 = vpop.permute.xlu0 %490
  %493 = vst.msk [vmem:[#allocation2 + $0x8] sm:$0x1] %vm380, %v491
  %495 = vst.msk [vmem:[#allocation2 + $0x9] sm:$0x1] %vm380, %v489
  %v496 = vrot.slane %v142, 3
  %497 = vrot.lane.b32.xlu0 %v496, 64
  %v498 = vpop.permute.xlu0 %497
  %500 = vst.msk [vmem:[#allocation2 + $0xa] sm:$0x1] %vm380, %v498
  %502 = vst.msk [vmem:[#allocation2 + $0xb] sm:$0x1] %vm380, %v496
  %v503 = vrot.slane %v171, 3
  %504 = vrot.lane.b32.xlu0 %v503, 64
  %v505 = vpop.permute.xlu0 %504
  %507 = vst.msk [vmem:[#allocation2 + $0xc] sm:$0x1] %vm380, %v505
  %509 = vst.msk [vmem:[#allocation2 + $0xd] sm:$0x1] %vm380, %v503
  %v510 = vrot.slane %v200, 3
  %511 = vrot.lane.b32.xlu0 %v510, 64
  %v512 = vpop.permute.xlu0 %511
  %514 = vst.msk [vmem:[#allocation2 + $0xe] sm:$0x1] %vm380, %v512
  %516 = vst.msk [vmem:[#allocation2 + $0xf] sm:$0x1] %vm380, %v510
  %v517 = vrot.slane %v229, 3
  %518 = vrot.lane.b32.xlu0 %v517, 64
  %v519 = vpop.permute.xlu0 %518
  %521 = vst.msk [vmem:[#allocation2 + $0x88] sm:$0x1] %vm380, %v519
  %523 = vst.msk [vmem:[#allocation2 + $0x89] sm:$0x1] %vm380, %v517
  %v524 = vrot.slane %v258, 3
  %525 = vrot.lane.b32.xlu0 %v524, 64
  %v526 = vpop.permute.xlu0 %525
  %528 = vst.msk [vmem:[#allocation2 + $0x8a] sm:$0x1] %vm380, %v526
  %530 = vst.msk [vmem:[#allocation2 + $0x8b] sm:$0x1] %vm380, %v524
  %v531 = vrot.slane %v287, 3
  %532 = vrot.lane.b32.xlu0 %v531, 64
  %v533 = vpop.permute.xlu0 %532
  %535 = vst.msk [vmem:[#allocation2 + $0x8c] sm:$0x1] %vm380, %v533
  %537 = vst.msk [vmem:[#allocation2 + $0x8d] sm:$0x1] %vm380, %v531
  %v538 = vrot.slane %v316, 3
  %539 = vrot.lane.b32.xlu0 %v538, 64
  %v540 = vpop.permute.xlu0 %539
  %542 = vst.msk [vmem:[#allocation2 + $0x8e] sm:$0x1] %vm380, %v540
  %544 = vst.msk [vmem:[#allocation2 + $0x8f] sm:$0x1] %vm380, %v538
  %v545 = vrot.slane %v113, 4
  %547 = vst.msk [vmem:[#allocation2 + $0x10] sm:$0x1] %vm327, %v545
  %548 = vrot.lane.b32.xlu0 %v545, 64
  %v549 = vpop.permute.xlu0 %548
  %551 = vst.msk [vmem:[#allocation2 + $0x11] sm:$0x1] %vm327, %v549
  %v552 = vrot.slane %v142, 4
  %554 = vst.msk [vmem:[#allocation2 + $0x12] sm:$0x1] %vm327, %v552
  %555 = vrot.lane.b32.xlu0 %v552, 64
  %v556 = vpop.permute.xlu0 %555
  %558 = vst.msk [vmem:[#allocation2 + $0x13] sm:$0x1] %vm327, %v556
  %v559 = vrot.slane %v171, 4
  %561 = vst.msk [vmem:[#allocation2 + $0x14] sm:$0x1] %vm327, %v559
  %562 = vrot.lane.b32.xlu0 %v559, 64
  %v563 = vpop.permute.xlu0 %562
  %565 = vst.msk [vmem:[#allocation2 + $0x15] sm:$0x1] %vm327, %v563
  %v566 = vrot.slane %v200, 4
  %568 = vst.msk [vmem:[#allocation2 + $0x16] sm:$0x1] %vm327, %v566
  %569 = vrot.lane.b32.xlu0 %v566, 64
  %v570 = vpop.permute.xlu0 %569
  %572 = vst.msk [vmem:[#allocation2 + $0x17] sm:$0x1] %vm327, %v570
  %v573 = vrot.slane %v229, 4
  %575 = vst.msk [vmem:[#allocation2 + $0x90] sm:$0x1] %vm327, %v573
  %576 = vrot.lane.b32.xlu0 %v573, 64
  %v577 = vpop.permute.xlu0 %576
  %579 = vst.msk [vmem:[#allocation2 + $0x91] sm:$0x1] %vm327, %v577
  %v580 = vrot.slane %v258, 4
  %582 = vst.msk [vmem:[#allocation2 + $0x92] sm:$0x1] %vm327, %v580
  %583 = vrot.lane.b32.xlu0 %v580, 64
  %v584 = vpop.permute.xlu0 %583
  %586 = vst.msk [vmem:[#allocation2 + $0x93] sm:$0x1] %vm327, %v584
  %v587 = vrot.slane %v287, 4
  %589 = vst.msk [vmem:[#allocation2 + $0x94] sm:$0x1] %vm327, %v587
  %590 = vrot.lane.b32.xlu0 %v587, 64
  %v591 = vpop.permute.xlu0 %590
  %593 = vst.msk [vmem:[#allocation2 + $0x95] sm:$0x1] %vm327, %v591
  %v594 = vrot.slane %v316, 4
  %596 = vst.msk [vmem:[#allocation2 + $0x96] sm:$0x1] %vm327, %v594
  %597 = vrot.lane.b32.xlu0 %v594, 64
  %v598 = vpop.permute.xlu0 %597
  %600 = vst.msk [vmem:[#allocation2 + $0x97] sm:$0x1] %vm327, %v598
  %v601 = vrot.slane %v113, 5
  %602 = vrot.lane.b32.xlu0 %v601, 64
  %v603 = vpop.permute.xlu0 %602
  %605 = vst.msk [vmem:[#allocation2 + $0x10] sm:$0x1] %vm380, %v603
  %607 = vst.msk [vmem:[#allocation2 + $0x11] sm:$0x1] %vm380, %v601
  %v608 = vrot.slane %v142, 5
  %609 = vrot.lane.b32.xlu0 %v608, 64
  %v610 = vpop.permute.xlu0 %609
  %612 = vst.msk [vmem:[#allocation2 + $0x12] sm:$0x1] %vm380, %v610
  %614 = vst.msk [vmem:[#allocation2 + $0x13] sm:$0x1] %vm380, %v608
  %v615 = vrot.slane %v171, 5
  %616 = vrot.lane.b32.xlu0 %v615, 64
  %v617 = vpop.permute.xlu0 %616
  %619 = vst.msk [vmem:[#allocation2 + $0x14] sm:$0x1] %vm380, %v617
  %621 = vst.msk [vmem:[#allocation2 + $0x15] sm:$0x1] %vm380, %v615
  %v622 = vrot.slane %v200, 5
  %623 = vrot.lane.b32.xlu0 %v622, 64
  %v624 = vpop.permute.xlu0 %623
  %626 = vst.msk [vmem:[#allocation2 + $0x16] sm:$0x1] %vm380, %v624
  %628 = vst.msk [vmem:[#allocation2 + $0x17] sm:$0x1] %vm380, %v622
  %v629 = vrot.slane %v229, 5
  %630 = vrot.lane.b32.xlu0 %v629, 64
  %v631 = vpop.permute.xlu0 %630
  %633 = vst.msk [vmem:[#allocation2 + $0x90] sm:$0x1] %vm380, %v631
  %635 = vst.msk [vmem:[#allocation2 + $0x91] sm:$0x1] %vm380, %v629
  %v636 = vrot.slane %v258, 5
  %637 = vrot.lane.b32.xlu0 %v636, 64
  %v638 = vpop.permute.xlu0 %637
  %640 = vst.msk [vmem:[#allocation2 + $0x92] sm:$0x1] %vm380, %v638
  %642 = vst.msk [vmem:[#allocation2 + $0x93] sm:$0x1] %vm380, %v636
  %v643 = vrot.slane %v287, 5
  %644 = vrot.lane.b32.xlu0 %v643, 64
  %v645 = vpop.permute.xlu0 %644
  %647 = vst.msk [vmem:[#allocation2 + $0x94] sm:$0x1] %vm380, %v645
  %649 = vst.msk [vmem:[#allocation2 + $0x95] sm:$0x1] %vm380, %v643
  %v650 = vrot.slane %v316, 5
  %651 = vrot.lane.b32.xlu0 %v650, 64
  %v652 = vpop.permute.xlu0 %651
  %654 = vst.msk [vmem:[#allocation2 + $0x96] sm:$0x1] %vm380, %v652
  %656 = vst.msk [vmem:[#allocation2 + $0x97] sm:$0x1] %vm380, %v650
  %v657 = vrot.slane %v113, 6
  %659 = vst.msk [vmem:[#allocation2 + $0x18] sm:$0x1] %vm327, %v657
  %660 = vrot.lane.b32.xlu0 %v657, 64
  %v661 = vpop.permute.xlu0 %660
  %663 = vst.msk [vmem:[#allocation2 + $0x19] sm:$0x1] %vm327, %v661
  %v664 = vrot.slane %v142, 6
  %666 = vst.msk [vmem:[#allocation2 + $0x1a] sm:$0x1] %vm327, %v664
  %667 = vrot.lane.b32.xlu0 %v664, 64
  %v668 = vpop.permute.xlu0 %667
  %670 = vst.msk [vmem:[#allocation2 + $0x1b] sm:$0x1] %vm327, %v668
  %v671 = vrot.slane %v171, 6
  %673 = vst.msk [vmem:[#allocation2 + $0x1c] sm:$0x1] %vm327, %v671
  %674 = vrot.lane.b32.xlu0 %v671, 64
  %v675 = vpop.permute.xlu0 %674
  %677 = vst.msk [vmem:[#allocation2 + $0x1d] sm:$0x1] %vm327, %v675
  %v678 = vrot.slane %v200, 6
  %680 = vst.msk [vmem:[#allocation2 + $0x1e] sm:$0x1] %vm327, %v678
  %681 = vrot.lane.b32.xlu0 %v678, 64
  %v682 = vpop.permute.xlu0 %681
  %684 = vst.msk [vmem:[#allocation2 + $0x1f] sm:$0x1] %vm327, %v682
  %v685 = vrot.slane %v229, 6
  %687 = vst.msk [vmem:[#allocation2 + $0x98] sm:$0x1] %vm327, %v685
  %688 = vrot.lane.b32.xlu0 %v685, 64
  %v689 = vpop.permute.xlu0 %688
  %691 = vst.msk [vmem:[#allocation2 + $0x99] sm:$0x1] %vm327, %v689
  %v692 = vrot.slane %v258, 6
  %694 = vst.msk [vmem:[#allocation2 + $0x9a] sm:$0x1] %vm327, %v692
  %695 = vrot.lane.b32.xlu0 %v692, 64
  %v696 = vpop.permute.xlu0 %695
  %698 = vst.msk [vmem:[#allocation2 + $0x9b] sm:$0x1] %vm327, %v696
  %v699 = vrot.slane %v287, 6
  %701 = vst.msk [vmem:[#allocation2 + $0x9c] sm:$0x1] %vm327, %v699
  %702 = vrot.lane.b32.xlu0 %v699, 64
  %v703 = vpop.permute.xlu0 %702
  %705 = vst.msk [vmem:[#allocation2 + $0x9d] sm:$0x1] %vm327, %v703
  %v706 = vrot.slane %v316, 6
  %708 = vst.msk [vmem:[#allocation2 + $0x9e] sm:$0x1] %vm327, %v706
  %709 = vrot.lane.b32.xlu0 %v706, 64
  %v710 = vpop.permute.xlu0 %709
  %712 = vst.msk [vmem:[#allocation2 + $0x9f] sm:$0x1] %vm327, %v710
  %v713 = vrot.slane %v113, 7
  %714 = vrot.lane.b32.xlu0 %v713, 64
  %v715 = vpop.permute.xlu0 %714
  %717 = vst.msk [vmem:[#allocation2 + $0x18] sm:$0x1] %vm380, %v715
  %719 = vst.msk [vmem:[#allocation2 + $0x19] sm:$0x1] %vm380, %v713
  %v720 = vrot.slane %v142, 7
  %721 = vrot.lane.b32.xlu0 %v720, 64
  %v722 = vpop.permute.xlu0 %721
  %724 = vst.msk [vmem:[#allocation2 + $0x1a] sm:$0x1] %vm380, %v722
  %726 = vst.msk [vmem:[#allocation2 + $0x1b] sm:$0x1] %vm380, %v720
  %v727 = vrot.slane %v171, 7
  %728 = vrot.lane.b32.xlu0 %v727, 64
  %v729 = vpop.permute.xlu0 %728
  %731 = vst.msk [vmem:[#allocation2 + $0x1c] sm:$0x1] %vm380, %v729
  %733 = vst.msk [vmem:[#allocation2 + $0x1d] sm:$0x1] %vm380, %v727
  %v734 = vrot.slane %v200, 7
  %735 = vrot.lane.b32.xlu0 %v734, 64
  %v736 = vpop.permute.xlu0 %735
  %738 = vst.msk [vmem:[#allocation2 + $0x1e] sm:$0x1] %vm380, %v736
  %740 = vst.msk [vmem:[#allocation2 + $0x1f] sm:$0x1] %vm380, %v734
  %v741 = vrot.slane %v229, 7
  %742 = vrot.lane.b32.xlu0 %v741, 64
  %v743 = vpop.permute.xlu0 %742
  %745 = vst.msk [vmem:[#allocation2 + $0x98] sm:$0x1] %vm380, %v743
  %747 = vst.msk [vmem:[#allocation2 + $0x99] sm:$0x1] %vm380, %v741
  %v748 = vrot.slane %v258, 7
  %749 = vrot.lane.b32.xlu0 %v748, 64
  %v750 = vpop.permute.xlu0 %749
  %752 = vst.msk [vmem:[#allocation2 + $0x9a] sm:$0x1] %vm380, %v750
  %754 = vst.msk [vmem:[#allocation2 + $0x9b] sm:$0x1] %vm380, %v748
  %v755 = vrot.slane %v287, 7
  %756 = vrot.lane.b32.xlu0 %v755, 64
  %v757 = vpop.permute.xlu0 %756
  %759 = vst.msk [vmem:[#allocation2 + $0x9c] sm:$0x1] %vm380, %v757
  %761 = vst.msk [vmem:[#allocation2 + $0x9d] sm:$0x1] %vm380, %v755
  %v762 = vrot.slane %v316, 7
  %763 = vrot.lane.b32.xlu0 %v762, 64
  %v764 = vpop.permute.xlu0 %763
  %766 = vst.msk [vmem:[#allocation2 + $0x9e] sm:$0x1] %vm380, %v764
  %768 = vst.msk [vmem:[#allocation2 + $0x9f] sm:$0x1] %vm380, %v762
  %769 = vst.msk [vmem:[#allocation2 + $0x20] sm:$0x1] %vm327, %v116
  %771 = vrot.lane.b32.xlu0 %v116, 64
  %v772 = vpop.permute.xlu0 %771
  %774 = vst.msk [vmem:[#allocation2 + $0x21] sm:$0x1] %vm327, %v772
  %775 = vst.msk [vmem:[#allocation2 + $0x22] sm:$0x1] %vm327, %v145
  %777 = vrot.lane.b32.xlu0 %v145, 64
  %v778 = vpop.permute.xlu0 %777
  %780 = vst.msk [vmem:[#allocation2 + $0x23] sm:$0x1] %vm327, %v778
  %781 = vst.msk [vmem:[#allocation2 + $0x24] sm:$0x1] %vm327, %v174
  %783 = vrot.lane.b32.xlu0 %v174, 64
  %v784 = vpop.permute.xlu0 %783
  %786 = vst.msk [vmem:[#allocation2 + $0x25] sm:$0x1] %vm327, %v784
  %787 = vst.msk [vmem:[#allocation2 + $0x26] sm:$0x1] %vm327, %v203
  %789 = vrot.lane.b32.xlu0 %v203, 64
  %v790 = vpop.permute.xlu0 %789
  %792 = vst.msk [vmem:[#allocation2 + $0x27] sm:$0x1] %vm327, %v790
  %793 = vst.msk [vmem:[#allocation2 + $0xa0] sm:$0x1] %vm327, %v232
  %795 = vrot.lane.b32.xlu0 %v232, 64
  %v796 = vpop.permute.xlu0 %795
  %798 = vst.msk [vmem:[#allocation2 + $0xa1] sm:$0x1] %vm327, %v796
  %799 = vst.msk [vmem:[#allocation2 + $0xa2] sm:$0x1] %vm327, %v261
  %801 = vrot.lane.b32.xlu0 %v261, 64
  %v802 = vpop.permute.xlu0 %801
  %804 = vst.msk [vmem:[#allocation2 + $0xa3] sm:$0x1] %vm327, %v802
  %805 = vst.msk [vmem:[#allocation2 + $0xa4] sm:$0x1] %vm327, %v290
  %807 = vrot.lane.b32.xlu0 %v290, 64
  %v808 = vpop.permute.xlu0 %807
  %810 = vst.msk [vmem:[#allocation2 + $0xa5] sm:$0x1] %vm327, %v808
  %811 = vst.msk [vmem:[#allocation2 + $0xa6] sm:$0x1] %vm327, %v319
  %813 = vrot.lane.b32.xlu0 %v319, 64
  %v814 = vpop.permute.xlu0 %813
  %816 = vst.msk [vmem:[#allocation2 + $0xa7] sm:$0x1] %vm327, %v814
  %v817 = vrot.slane %v116, 1
  %818 = vrot.lane.b32.xlu0 %v817, 64
  %v819 = vpop.permute.xlu0 %818
  %821 = vst.msk [vmem:[#allocation2 + $0x20] sm:$0x1] %vm380, %v819
  %823 = vst.msk [vmem:[#allocation2 + $0x21] sm:$0x1] %vm380, %v817
  %v824 = vrot.slane %v145, 1
  %825 = vrot.lane.b32.xlu0 %v824, 64
  %v826 = vpop.permute.xlu0 %825
  %828 = vst.msk [vmem:[#allocation2 + $0x22] sm:$0x1] %vm380, %v826
  %830 = vst.msk [vmem:[#allocation2 + $0x23] sm:$0x1] %vm380, %v824
  %v831 = vrot.slane %v174, 1
  %832 = vrot.lane.b32.xlu0 %v831, 64
  %v833 = vpop.permute.xlu0 %832
  %835 = vst.msk [vmem:[#allocation2 + $0x24] sm:$0x1] %vm380, %v833
  %837 = vst.msk [vmem:[#allocation2 + $0x25] sm:$0x1] %vm380, %v831
  %v838 = vrot.slane %v203, 1
  %839 = vrot.lane.b32.xlu0 %v838, 64
  %v840 = vpop.permute.xlu0 %839
  %842 = vst.msk [vmem:[#allocation2 + $0x26] sm:$0x1] %vm380, %v840
  %844 = vst.msk [vmem:[#allocation2 + $0x27] sm:$0x1] %vm380, %v838
  %v845 = vrot.slane %v232, 1
  %846 = vrot.lane.b32.xlu0 %v845, 64
  %v847 = vpop.permute.xlu0 %846
  %849 = vst.msk [vmem:[#allocation2 + $0xa0] sm:$0x1] %vm380, %v847
  %851 = vst.msk [vmem:[#allocation2 + $0xa1] sm:$0x1] %vm380, %v845
  %v852 = vrot.slane %v261, 1
  %853 = vrot.lane.b32.xlu0 %v852, 64
  %v854 = vpop.permute.xlu0 %853
  %856 = vst.msk [vmem:[#allocation2 + $0xa2] sm:$0x1] %vm380, %v854
  %858 = vst.msk [vmem:[#allocation2 + $0xa3] sm:$0x1] %vm380, %v852
  %v859 = vrot.slane %v290, 1
  %860 = vrot.lane.b32.xlu0 %v859, 64
  %v861 = vpop.permute.xlu0 %860
  %863 = vst.msk [vmem:[#allocation2 + $0xa4] sm:$0x1] %vm380, %v861
  %865 = vst.msk [vmem:[#allocation2 + $0xa5] sm:$0x1] %vm380, %v859
  %v866 = vrot.slane %v319, 1
  %867 = vrot.lane.b32.xlu0 %v866, 64
  %v868 = vpop.permute.xlu0 %867
  %870 = vst.msk [vmem:[#allocation2 + $0xa6] sm:$0x1] %vm380, %v868
  %872 = vst.msk [vmem:[#allocation2 + $0xa7] sm:$0x1] %vm380, %v866
  %v873 = vrot.slane %v116, 2
  %875 = vst.msk [vmem:[#allocation2 + $0x28] sm:$0x1] %vm327, %v873
  %876 = vrot.lane.b32.xlu0 %v873, 64
  %v877 = vpop.permute.xlu0 %876
  %879 = vst.msk [vmem:[#allocation2 + $0x29] sm:$0x1] %vm327, %v877
  %v880 = vrot.slane %v145, 2
  %882 = vst.msk [vmem:[#allocation2 + $0x2a] sm:$0x1] %vm327, %v880
  %883 = vrot.lane.b32.xlu0 %v880, 64
  %v884 = vpop.permute.xlu0 %883
  %886 = vst.msk [vmem:[#allocation2 + $0x2b] sm:$0x1] %vm327, %v884
  %v887 = vrot.slane %v174, 2
  %889 = vst.msk [vmem:[#allocation2 + $0x2c] sm:$0x1] %vm327, %v887
  %890 = vrot.lane.b32.xlu0 %v887, 64
  %v891 = vpop.permute.xlu0 %890
  %893 = vst.msk [vmem:[#allocation2 + $0x2d] sm:$0x1] %vm327, %v891
  %v894 = vrot.slane %v203, 2
  %896 = vst.msk [vmem:[#allocation2 + $0x2e] sm:$0x1] %vm327, %v894
  %897 = vrot.lane.b32.xlu0 %v894, 64
  %v898 = vpop.permute.xlu0 %897
  %900 = vst.msk [vmem:[#allocation2 + $0x2f] sm:$0x1] %vm327, %v898
  %v901 = vrot.slane %v232, 2
  %903 = vst.msk [vmem:[#allocation2 + $0xa8] sm:$0x1] %vm327, %v901
  %904 = vrot.lane.b32.xlu0 %v901, 64
  %v905 = vpop.permute.xlu0 %904
  %907 = vst.msk [vmem:[#allocation2 + $0xa9] sm:$0x1] %vm327, %v905
  %v908 = vrot.slane %v261, 2
  %910 = vst.msk [vmem:[#allocation2 + $0xaa] sm:$0x1] %vm327, %v908
  %911 = vrot.lane.b32.xlu0 %v908, 64
  %v912 = vpop.permute.xlu0 %911
  %914 = vst.msk [vmem:[#allocation2 + $0xab] sm:$0x1] %vm327, %v912
  %v915 = vrot.slane %v290, 2
  %917 = vst.msk [vmem:[#allocation2 + $0xac] sm:$0x1] %vm327, %v915
  %918 = vrot.lane.b32.xlu0 %v915, 64
  %v919 = vpop.permute.xlu0 %918
  %921 = vst.msk [vmem:[#allocation2 + $0xad] sm:$0x1] %vm327, %v919
  %v922 = vrot.slane %v319, 2
  %924 = vst.msk [vmem:[#allocation2 + $0xae] sm:$0x1] %vm327, %v922
  %925 = vrot.lane.b32.xlu0 %v922, 64
  %v926 = vpop.permute.xlu0 %925
  %928 = vst.msk [vmem:[#allocation2 + $0xaf] sm:$0x1] %vm327, %v926
  %v929 = vrot.slane %v116, 3
  %930 = vrot.lane.b32.xlu0 %v929, 64
  %v931 = vpop.permute.xlu0 %930
  %933 = vst.msk [vmem:[#allocation2 + $0x28] sm:$0x1] %vm380, %v931
  %935 = vst.msk [vmem:[#allocation2 + $0x29] sm:$0x1] %vm380, %v929
  %v936 = vrot.slane %v145, 3
  %937 = vrot.lane.b32.xlu0 %v936, 64
  %v938 = vpop.permute.xlu0 %937
  %940 = vst.msk [vmem:[#allocation2 + $0x2a] sm:$0x1] %vm380, %v938
  %942 = vst.msk [vmem:[#allocation2 + $0x2b] sm:$0x1] %vm380, %v936
  %v943 = vrot.slane %v174, 3
  %944 = vrot.lane.b32.xlu0 %v943, 64
  %v945 = vpop.permute.xlu0 %944
  %947 = vst.msk [vmem:[#allocation2 + $0x2c] sm:$0x1] %vm380, %v945
  %949 = vst.msk [vmem:[#allocation2 + $0x2d] sm:$0x1] %vm380, %v943
  %v950 = vrot.slane %v203, 3
  %951 = vrot.lane.b32.xlu0 %v950, 64
  %v952 = vpop.permute.xlu0 %951
  %954 = vst.msk [vmem:[#allocation2 + $0x2e] sm:$0x1] %vm380, %v952
  %956 = vst.msk [vmem:[#allocation2 + $0x2f] sm:$0x1] %vm380, %v950
  %v957 = vrot.slane %v232, 3
  %958 = vrot.lane.b32.xlu0 %v957, 64
  %v959 = vpop.permute.xlu0 %958
  %961 = vst.msk [vmem:[#allocation2 + $0xa8] sm:$0x1] %vm380, %v959
  %963 = vst.msk [vmem:[#allocation2 + $0xa9] sm:$0x1] %vm380, %v957
  %v964 = vrot.slane %v261, 3
  %965 = vrot.lane.b32.xlu0 %v964, 64
  %v966 = vpop.permute.xlu0 %965
  %968 = vst.msk [vmem:[#allocation2 + $0xaa] sm:$0x1] %vm380, %v966
  %970 = vst.msk [vmem:[#allocation2 + $0xab] sm:$0x1] %vm380, %v964
  %v971 = vrot.slane %v290, 3
  %972 = vrot.lane.b32.xlu0 %v971, 64
  %v973 = vpop.permute.xlu0 %972
  %975 = vst.msk [vmem:[#allocation2 + $0xac] sm:$0x1] %vm380, %v973
  %977 = vst.msk [vmem:[#allocation2 + $0xad] sm:$0x1] %vm380, %v971
  %v978 = vrot.slane %v319, 3
  %979 = vrot.lane.b32.xlu0 %v978, 64
  %v980 = vpop.permute.xlu0 %979
  %982 = vst.msk [vmem:[#allocation2 + $0xae] sm:$0x1] %vm380, %v980
  %984 = vst.msk [vmem:[#allocation2 + $0xaf] sm:$0x1] %vm380, %v978
  %v985 = vrot.slane %v116, 4
  %987 = vst.msk [vmem:[#allocation2 + $0x30] sm:$0x1] %vm327, %v985
  %988 = vrot.lane.b32.xlu0 %v985, 64
  %v989 = vpop.permute.xlu0 %988
  %991 = vst.msk [vmem:[#allocation2 + $0x31] sm:$0x1] %vm327, %v989
  %v992 = vrot.slane %v145, 4
  %994 = vst.msk [vmem:[#allocation2 + $0x32] sm:$0x1] %vm327, %v992
  %995 = vrot.lane.b32.xlu0 %v992, 64
  %v996 = vpop.permute.xlu0 %995
  %998 = vst.msk [vmem:[#allocation2 + $0x33] sm:$0x1] %vm327, %v996
  %v999 = vrot.slane %v174, 4
  %1001 = vst.msk [vmem:[#allocation2 + $0x34] sm:$0x1] %vm327, %v999
  %1002 = vrot.lane.b32.xlu0 %v999, 64
  %v1003 = vpop.permute.xlu0 %1002
  %1005 = vst.msk [vmem:[#allocation2 + $0x35] sm:$0x1] %vm327, %v1003
  %v1006 = vrot.slane %v203, 4
  %1008 = vst.msk [vmem:[#allocation2 + $0x36] sm:$0x1] %vm327, %v1006
  %1009 = vrot.lane.b32.xlu0 %v1006, 64
  %v1010 = vpop.permute.xlu0 %1009
  %1012 = vst.msk [vmem:[#allocation2 + $0x37] sm:$0x1] %vm327, %v1010
  %v1013 = vrot.slane %v232, 4
  %1015 = vst.msk [vmem:[#allocation2 + $0xb0] sm:$0x1] %vm327, %v1013
  %1016 = vrot.lane.b32.xlu0 %v1013, 64
  %v1017 = vpop.permute.xlu0 %1016
  %1019 = vst.msk [vmem:[#allocation2 + $0xb1] sm:$0x1] %vm327, %v1017
  %v1020 = vrot.slane %v261, 4
  %1022 = vst.msk [vmem:[#allocation2 + $0xb2] sm:$0x1] %vm327, %v1020
  %1023 = vrot.lane.b32.xlu0 %v1020, 64
  %v1024 = vpop.permute.xlu0 %1023
  %1026 = vst.msk [vmem:[#allocation2 + $0xb3] sm:$0x1] %vm327, %v1024
  %v1027 = vrot.slane %v290, 4
  %1029 = vst.msk [vmem:[#allocation2 + $0xb4] sm:$0x1] %vm327, %v1027
  %1030 = vrot.lane.b32.xlu0 %v1027, 64
  %v1031 = vpop.permute.xlu0 %1030
  %1033 = vst.msk [vmem:[#allocation2 + $0xb5] sm:$0x1] %vm327, %v1031
  %v1034 = vrot.slane %v319, 4
  %1036 = vst.msk [vmem:[#allocation2 + $0xb6] sm:$0x1] %vm327, %v1034
  %1037 = vrot.lane.b32.xlu0 %v1034, 64
  %v1038 = vpop.permute.xlu0 %1037
  %1040 = vst.msk [vmem:[#allocation2 + $0xb7] sm:$0x1] %vm327, %v1038
  %v1041 = vrot.slane %v116, 5
  %1042 = vrot.lane.b32.xlu0 %v1041, 64
  %v1043 = vpop.permute.xlu0 %1042
  %1045 = vst.msk [vmem:[#allocation2 + $0x30] sm:$0x1] %vm380, %v1043
  %1047 = vst.msk [vmem:[#allocation2 + $0x31] sm:$0x1] %vm380, %v1041
  %v1048 = vrot.slane %v145, 5
  %1049 = vrot.lane.b32.xlu0 %v1048, 64
  %v1050 = vpop.permute.xlu0 %1049
  %1052 = vst.msk [vmem:[#allocation2 + $0x32] sm:$0x1] %vm380, %v1050
  %1054 = vst.msk [vmem:[#allocation2 + $0x33] sm:$0x1] %vm380, %v1048
  %v1055 = vrot.slane %v174, 5
  %1056 = vrot.lane.b32.xlu0 %v1055, 64
  %v1057 = vpop.permute.xlu0 %1056
  %1059 = vst.msk [vmem:[#allocation2 + $0x34] sm:$0x1] %vm380, %v1057
  %1061 = vst.msk [vmem:[#allocation2 + $0x35] sm:$0x1] %vm380, %v1055
  %v1062 = vrot.slane %v203, 5
  %1063 = vrot.lane.b32.xlu0 %v1062, 64
  %v1064 = vpop.permute.xlu0 %1063
  %1066 = vst.msk [vmem:[#allocation2 + $0x36] sm:$0x1] %vm380, %v1064
  %1068 = vst.msk [vmem:[#allocation2 + $0x37] sm:$0x1] %vm380, %v1062
  %v1069 = vrot.slane %v232, 5
  %1070 = vrot.lane.b32.xlu0 %v1069, 64
  %v1071 = vpop.permute.xlu0 %1070
  %1073 = vst.msk [vmem:[#allocation2 + $0xb0] sm:$0x1] %vm380, %v1071
  %1075 = vst.msk [vmem:[#allocation2 + $0xb1] sm:$0x1] %vm380, %v1069
  %v1076 = vrot.slane %v261, 5
  %1077 = vrot.lane.b32.xlu0 %v1076, 64
  %v1078 = vpop.permute.xlu0 %1077
  %1080 = vst.msk [vmem:[#allocation2 + $0xb2] sm:$0x1] %vm380, %v1078
  %1082 = vst.msk [vmem:[#allocation2 + $0xb3] sm:$0x1] %vm380, %v1076
  %v1083 = vrot.slane %v290, 5
  %1084 = vrot.lane.b32.xlu0 %v1083, 64
  %v1085 = vpop.permute.xlu0 %1084
  %1087 = vst.msk [vmem:[#allocation2 + $0xb4] sm:$0x1] %vm380, %v1085
  %1089 = vst.msk [vmem:[#allocation2 + $0xb5] sm:$0x1] %vm380, %v1083
  %v1090 = vrot.slane %v319, 5
  %1091 = vrot.lane.b32.xlu0 %v1090, 64
  %v1092 = vpop.permute.xlu0 %1091
  %1094 = vst.msk [vmem:[#allocation2 + $0xb6] sm:$0x1] %vm380, %v1092
  %1096 = vst.msk [vmem:[#allocation2 + $0xb7] sm:$0x1] %vm380, %v1090
  %v1097 = vrot.slane %v116, 6
  %1099 = vst.msk [vmem:[#allocation2 + $0x38] sm:$0x1] %vm327, %v1097
  %1100 = vrot.lane.b32.xlu0 %v1097, 64
  %v1101 = vpop.permute.xlu0 %1100
  %1103 = vst.msk [vmem:[#allocation2 + $0x39] sm:$0x1] %vm327, %v1101
  %v1104 = vrot.slane %v145, 6
  %1106 = vst.msk [vmem:[#allocation2 + $0x3a] sm:$0x1] %vm327, %v1104
  %1107 = vrot.lane.b32.xlu0 %v1104, 64
  %v1108 = vpop.permute.xlu0 %1107
  %1110 = vst.msk [vmem:[#allocation2 + $0x3b] sm:$0x1] %vm327, %v1108
  %v1111 = vrot.slane %v174, 6
  %1113 = vst.msk [vmem:[#allocation2 + $0x3c] sm:$0x1] %vm327, %v1111
  %1114 = vrot.lane.b32.xlu0 %v1111, 64
  %v1115 = vpop.permute.xlu0 %1114
  %1117 = vst.msk [vmem:[#allocation2 + $0x3d] sm:$0x1] %vm327, %v1115
  %v1118 = vrot.slane %v203, 6
  %1120 = vst.msk [vmem:[#allocation2 + $0x3e] sm:$0x1] %vm327, %v1118
  %1121 = vrot.lane.b32.xlu0 %v1118, 64
  %v1122 = vpop.permute.xlu0 %1121
  %1124 = vst.msk [vmem:[#allocation2 + $0x3f] sm:$0x1] %vm327, %v1122
  %v1125 = vrot.slane %v232, 6
  %1127 = vst.msk [vmem:[#allocation2 + $0xb8] sm:$0x1] %vm327, %v1125
  %1128 = vrot.lane.b32.xlu0 %v1125, 64
  %v1129 = vpop.permute.xlu0 %1128
  %1131 = vst.msk [vmem:[#allocation2 + $0xb9] sm:$0x1] %vm327, %v1129
  %v1132 = vrot.slane %v261, 6
  %1134 = vst.msk [vmem:[#allocation2 + $0xba] sm:$0x1] %vm327, %v1132
  %1135 = vrot.lane.b32.xlu0 %v1132, 64
  %v1136 = vpop.permute.xlu0 %1135
  %1138 = vst.msk [vmem:[#allocation2 + $0xbb] sm:$0x1] %vm327, %v1136
  %v1139 = vrot.slane %v290, 6
  %1141 = vst.msk [vmem:[#allocation2 + $0xbc] sm:$0x1] %vm327, %v1139
  %1142 = vrot.lane.b32.xlu0 %v1139, 64
  %v1143 = vpop.permute.xlu0 %1142
  %1145 = vst.msk [vmem:[#allocation2 + $0xbd] sm:$0x1] %vm327, %v1143
  %v1146 = vrot.slane %v319, 6
  %1148 = vst.msk [vmem:[#allocation2 + $0xbe] sm:$0x1] %vm327, %v1146
  %1149 = vrot.lane.b32.xlu0 %v1146, 64
  %v1150 = vpop.permute.xlu0 %1149
  %1152 = vst.msk [vmem:[#allocation2 + $0xbf] sm:$0x1] %vm327, %v1150
  %v1153 = vrot.slane %v116, 7
  %1154 = vrot.lane.b32.xlu0 %v1153, 64
  %v1155 = vpop.permute.xlu0 %1154
  %1157 = vst.msk [vmem:[#allocation2 + $0x38] sm:$0x1] %vm380, %v1155
  %1159 = vst.msk [vmem:[#allocation2 + $0x39] sm:$0x1] %vm380, %v1153
  %v1160 = vrot.slane %v145, 7
  %1161 = vrot.lane.b32.xlu0 %v1160, 64
  %v1162 = vpop.permute.xlu0 %1161
  %1164 = vst.msk [vmem:[#allocation2 + $0x3a] sm:$0x1] %vm380, %v1162
  %1166 = vst.msk [vmem:[#allocation2 + $0x3b] sm:$0x1] %vm380, %v1160
  %v1167 = vrot.slane %v174, 7
  %1168 = vrot.lane.b32.xlu0 %v1167, 64
  %v1169 = vpop.permute.xlu0 %1168
  %1171 = vst.msk [vmem:[#allocation2 + $0x3c] sm:$0x1] %vm380, %v1169
  %1173 = vst.msk [vmem:[#allocation2 + $0x3d] sm:$0x1] %vm380, %v1167
  %v1174 = vrot.slane %v203, 7
  %1175 = vrot.lane.b32.xlu0 %v1174, 64
  %v1176 = vpop.permute.xlu0 %1175
  %1178 = vst.msk [vmem:[#allocation2 + $0x3e] sm:$0x1] %vm380, %v1176
  %1180 = vst.msk [vmem:[#allocation2 + $0x3f] sm:$0x1] %vm380, %v1174
  %v1181 = vrot.slane %v232, 7
  %1182 = vrot.lane.b32.xlu0 %v1181, 64
  %v1183 = vpop.permute.xlu0 %1182
  %1185 = vst.msk [vmem:[#allocation2 + $0xb8] sm:$0x1] %vm380, %v1183
  %1187 = vst.msk [vmem:[#allocation2 + $0xb9] sm:$0x1] %vm380, %v1181
  %v1188 = vrot.slane %v261, 7
  %1189 = vrot.lane.b32.xlu0 %v1188, 64
  %v1190 = vpop.permute.xlu0 %1189
  %1192 = vst.msk [vmem:[#allocation2 + $0xba] sm:$0x1] %vm380, %v1190
  %1194 = vst.msk [vmem:[#allocation2 + $0xbb] sm:$0x1] %vm380, %v1188
  %v1195 = vrot.slane %v290, 7
  %1196 = vrot.lane.b32.xlu0 %v1195, 64
  %v1197 = vpop.permute.xlu0 %1196
  %1199 = vst.msk [vmem:[#allocation2 + $0xbc] sm:$0x1] %vm380, %v1197
  %1201 = vst.msk [vmem:[#allocation2 + $0xbd] sm:$0x1] %vm380, %v1195
  %v1202 = vrot.slane %v319, 7
  %1203 = vrot.lane.b32.xlu0 %v1202, 64
  %v1204 = vpop.permute.xlu0 %1203
  %1206 = vst.msk [vmem:[#allocation2 + $0xbe] sm:$0x1] %vm380, %v1204
  %1208 = vst.msk [vmem:[#allocation2 + $0xbf] sm:$0x1] %vm380, %v1202
  %1209 = vst.msk [vmem:[#allocation2 + $0x40] sm:$0x1] %vm327, %v119
  %1211 = vrot.lane.b32.xlu0 %v119, 64
  %v1212 = vpop.permute.xlu0 %1211
  %1214 = vst.msk [vmem:[#allocation2 + $0x41] sm:$0x1] %vm327, %v1212
  %1215 = vst.msk [vmem:[#allocation2 + $0x42] sm:$0x1] %vm327, %v148
  %1217 = vrot.lane.b32.xlu0 %v148, 64
  %v1218 = vpop.permute.xlu0 %1217
  %1220 = vst.msk [vmem:[#allocation2 + $0x43] sm:$0x1] %vm327, %v1218
  %1221 = vst.msk [vmem:[#allocation2 + $0x44] sm:$0x1] %vm327, %v177
  %1223 = vrot.lane.b32.xlu0 %v177, 64
  %v1224 = vpop.permute.xlu0 %1223
  %1226 = vst.msk [vmem:[#allocation2 + $0x45] sm:$0x1] %vm327, %v1224
  %1227 = vst.msk [vmem:[#allocation2 + $0x46] sm:$0x1] %vm327, %v206
  %1229 = vrot.lane.b32.xlu0 %v206, 64
  %v1230 = vpop.permute.xlu0 %1229
  %1232 = vst.msk [vmem:[#allocation2 + $0x47] sm:$0x1] %vm327, %v1230
  %1233 = vst.msk [vmem:[#allocation2 + $0xc0] sm:$0x1] %vm327, %v235
  %1235 = vrot.lane.b32.xlu0 %v235, 64
  %v1236 = vpop.permute.xlu0 %1235
  %1238 = vst.msk [vmem:[#allocation2 + $0xc1] sm:$0x1] %vm327, %v1236
  %1239 = vst.msk [vmem:[#allocation2 + $0xc2] sm:$0x1] %vm327, %v264
  %1241 = vrot.lane.b32.xlu0 %v264, 64
  %v1242 = vpop.permute.xlu0 %1241
  %1244 = vst.msk [vmem:[#allocation2 + $0xc3] sm:$0x1] %vm327, %v1242
  %1245 = vst.msk [vmem:[#allocation2 + $0xc4] sm:$0x1] %vm327, %v293
  %1247 = vrot.lane.b32.xlu0 %v293, 64
  %v1248 = vpop.permute.xlu0 %1247
  %1250 = vst.msk [vmem:[#allocation2 + $0xc5] sm:$0x1] %vm327, %v1248
  %1251 = vst.msk [vmem:[#allocation2 + $0xc6] sm:$0x1] %vm327, %v322
  %1253 = vrot.lane.b32.xlu0 %v322, 64
  %v1254 = vpop.permute.xlu0 %1253
  %1256 = vst.msk [vmem:[#allocation2 + $0xc7] sm:$0x1] %vm327, %v1254
  %v1257 = vrot.slane %v119, 1
  %1258 = vrot.lane.b32.xlu0 %v1257, 64
  %v1259 = vpop.permute.xlu0 %1258
  %1261 = vst.msk [vmem:[#allocation2 + $0x40] sm:$0x1] %vm380, %v1259
  %1263 = vst.msk [vmem:[#allocation2 + $0x41] sm:$0x1] %vm380, %v1257
  %v1264 = vrot.slane %v148, 1
  %1265 = vrot.lane.b32.xlu0 %v1264, 64
  %v1266 = vpop.permute.xlu0 %1265
  %1268 = vst.msk [vmem:[#allocation2 + $0x42] sm:$0x1] %vm380, %v1266
  %1270 = vst.msk [vmem:[#allocation2 + $0x43] sm:$0x1] %vm380, %v1264
  %v1271 = vrot.slane %v177, 1
  %1272 = vrot.lane.b32.xlu0 %v1271, 64
  %v1273 = vpop.permute.xlu0 %1272
  %1275 = vst.msk [vmem:[#allocation2 + $0x44] sm:$0x1] %vm380, %v1273
  %1277 = vst.msk [vmem:[#allocation2 + $0x45] sm:$0x1] %vm380, %v1271
  %v1278 = vrot.slane %v206, 1
  %1279 = vrot.lane.b32.xlu0 %v1278, 64
  %v1280 = vpop.permute.xlu0 %1279
  %1282 = vst.msk [vmem:[#allocation2 + $0x46] sm:$0x1] %vm380, %v1280
  %1284 = vst.msk [vmem:[#allocation2 + $0x47] sm:$0x1] %vm380, %v1278
  %v1285 = vrot.slane %v235, 1
  %1286 = vrot.lane.b32.xlu0 %v1285, 64
  %v1287 = vpop.permute.xlu0 %1286
  %1289 = vst.msk [vmem:[#allocation2 + $0xc0] sm:$0x1] %vm380, %v1287
  %1291 = vst.msk [vmem:[#allocation2 + $0xc1] sm:$0x1] %vm380, %v1285
  %v1292 = vrot.slane %v264, 1
  %1293 = vrot.lane.b32.xlu0 %v1292, 64
  %v1294 = vpop.permute.xlu0 %1293
  %1296 = vst.msk [vmem:[#allocation2 + $0xc2] sm:$0x1] %vm380, %v1294
  %1298 = vst.msk [vmem:[#allocation2 + $0xc3] sm:$0x1] %vm380, %v1292
  %v1299 = vrot.slane %v293, 1
  %1300 = vrot.lane.b32.xlu0 %v1299, 64
  %v1301 = vpop.permute.xlu0 %1300
  %1303 = vst.msk [vmem:[#allocation2 + $0xc4] sm:$0x1] %vm380, %v1301
  %1305 = vst.msk [vmem:[#allocation2 + $0xc5] sm:$0x1] %vm380, %v1299
  %v1306 = vrot.slane %v322, 1
  %1307 = vrot.lane.b32.xlu0 %v1306, 64
  %v1308 = vpop.permute.xlu0 %1307
  %1310 = vst.msk [vmem:[#allocation2 + $0xc6] sm:$0x1] %vm380, %v1308
  %1312 = vst.msk [vmem:[#allocation2 + $0xc7] sm:$0x1] %vm380, %v1306
  %v1313 = vrot.slane %v119, 2
  %1315 = vst.msk [vmem:[#allocation2 + $0x48] sm:$0x1] %vm327, %v1313
  %1316 = vrot.lane.b32.xlu0 %v1313, 64
  %v1317 = vpop.permute.xlu0 %1316
  %1319 = vst.msk [vmem:[#allocation2 + $0x49] sm:$0x1] %vm327, %v1317
  %v1320 = vrot.slane %v148, 2
  %1322 = vst.msk [vmem:[#allocation2 + $0x4a] sm:$0x1] %vm327, %v1320
  %1323 = vrot.lane.b32.xlu0 %v1320, 64
  %v1324 = vpop.permute.xlu0 %1323
  %1326 = vst.msk [vmem:[#allocation2 + $0x4b] sm:$0x1] %vm327, %v1324
  %v1327 = vrot.slane %v177, 2
  %1329 = vst.msk [vmem:[#allocation2 + $0x4c] sm:$0x1] %vm327, %v1327
  %1330 = vrot.lane.b32.xlu0 %v1327, 64
  %v1331 = vpop.permute.xlu0 %1330
  %1333 = vst.msk [vmem:[#allocation2 + $0x4d] sm:$0x1] %vm327, %v1331
  %v1334 = vrot.slane %v206, 2
  %1336 = vst.msk [vmem:[#allocation2 + $0x4e] sm:$0x1] %vm327, %v1334
  %1337 = vrot.lane.b32.xlu0 %v1334, 64
  %v1338 = vpop.permute.xlu0 %1337
  %1340 = vst.msk [vmem:[#allocation2 + $0x4f] sm:$0x1] %vm327, %v1338
  %v1341 = vrot.slane %v235, 2
  %1343 = vst.msk [vmem:[#allocation2 + $0xc8] sm:$0x1] %vm327, %v1341
  %1344 = vrot.lane.b32.xlu0 %v1341, 64
  %v1345 = vpop.permute.xlu0 %1344
  %1347 = vst.msk [vmem:[#allocation2 + $0xc9] sm:$0x1] %vm327, %v1345
  %v1348 = vrot.slane %v264, 2
  %1350 = vst.msk [vmem:[#allocation2 + $0xca] sm:$0x1] %vm327, %v1348
  %1351 = vrot.lane.b32.xlu0 %v1348, 64
  %v1352 = vpop.permute.xlu0 %1351
  %1354 = vst.msk [vmem:[#allocation2 + $0xcb] sm:$0x1] %vm327, %v1352
  %v1355 = vrot.slane %v293, 2
  %1357 = vst.msk [vmem:[#allocation2 + $0xcc] sm:$0x1] %vm327, %v1355
  %1358 = vrot.lane.b32.xlu0 %v1355, 64
  %v1359 = vpop.permute.xlu0 %1358
  %1361 = vst.msk [vmem:[#allocation2 + $0xcd] sm:$0x1] %vm327, %v1359
  %v1362 = vrot.slane %v322, 2
  %1364 = vst.msk [vmem:[#allocation2 + $0xce] sm:$0x1] %vm327, %v1362
  %1365 = vrot.lane.b32.xlu0 %v1362, 64
  %v1366 = vpop.permute.xlu0 %1365
  %1368 = vst.msk [vmem:[#allocation2 + $0xcf] sm:$0x1] %vm327, %v1366
  %v1369 = vrot.slane %v119, 3
  %1370 = vrot.lane.b32.xlu0 %v1369, 64
  %v1371 = vpop.permute.xlu0 %1370
  %1373 = vst.msk [vmem:[#allocation2 + $0x48] sm:$0x1] %vm380, %v1371
  %1375 = vst.msk [vmem:[#allocation2 + $0x49] sm:$0x1] %vm380, %v1369
  %v1376 = vrot.slane %v148, 3
  %1377 = vrot.lane.b32.xlu0 %v1376, 64
  %v1378 = vpop.permute.xlu0 %1377
  %1380 = vst.msk [vmem:[#allocation2 + $0x4a] sm:$0x1] %vm380, %v1378
  %1382 = vst.msk [vmem:[#allocation2 + $0x4b] sm:$0x1] %vm380, %v1376
  %v1383 = vrot.slane %v177, 3
  %1384 = vrot.lane.b32.xlu0 %v1383, 64
  %v1385 = vpop.permute.xlu0 %1384
  %1387 = vst.msk [vmem:[#allocation2 + $0x4c] sm:$0x1] %vm380, %v1385
  %1389 = vst.msk [vmem:[#allocation2 + $0x4d] sm:$0x1] %vm380, %v1383
  %v1390 = vrot.slane %v206, 3
  %1391 = vrot.lane.b32.xlu0 %v1390, 64
  %v1392 = vpop.permute.xlu0 %1391
  %1394 = vst.msk [vmem:[#allocation2 + $0x4e] sm:$0x1] %vm380, %v1392
  %1396 = vst.msk [vmem:[#allocation2 + $0x4f] sm:$0x1] %vm380, %v1390
  %v1397 = vrot.slane %v235, 3
  %1398 = vrot.lane.b32.xlu0 %v1397, 64
  %v1399 = vpop.permute.xlu0 %1398
  %1401 = vst.msk [vmem:[#allocation2 + $0xc8] sm:$0x1] %vm380, %v1399
  %1403 = vst.msk [vmem:[#allocation2 + $0xc9] sm:$0x1] %vm380, %v1397
  %v1404 = vrot.slane %v264, 3
  %1405 = vrot.lane.b32.xlu0 %v1404, 64
  %v1406 = vpop.permute.xlu0 %1405
  %1408 = vst.msk [vmem:[#allocation2 + $0xca] sm:$0x1] %vm380, %v1406
  %1410 = vst.msk [vmem:[#allocation2 + $0xcb] sm:$0x1] %vm380, %v1404
  %v1411 = vrot.slane %v293, 3
  %1412 = vrot.lane.b32.xlu0 %v1411, 64
  %v1413 = vpop.permute.xlu0 %1412
  %1415 = vst.msk [vmem:[#allocation2 + $0xcc] sm:$0x1] %vm380, %v1413
  %1417 = vst.msk [vmem:[#allocation2 + $0xcd] sm:$0x1] %vm380, %v1411
  %v1418 = vrot.slane %v322, 3
  %1419 = vrot.lane.b32.xlu0 %v1418, 64
  %v1420 = vpop.permute.xlu0 %1419
  %1422 = vst.msk [vmem:[#allocation2 + $0xce] sm:$0x1] %vm380, %v1420
  %1424 = vst.msk [vmem:[#allocation2 + $0xcf] sm:$0x1] %vm380, %v1418
  %v1425 = vrot.slane %v119, 4
  %1427 = vst.msk [vmem:[#allocation2 + $0x50] sm:$0x1] %vm327, %v1425
  %1428 = vrot.lane.b32.xlu0 %v1425, 64
  %v1429 = vpop.permute.xlu0 %1428
  %1431 = vst.msk [vmem:[#allocation2 + $0x51] sm:$0x1] %vm327, %v1429
  %v1432 = vrot.slane %v148, 4
  %1434 = vst.msk [vmem:[#allocation2 + $0x52] sm:$0x1] %vm327, %v1432
  %1435 = vrot.lane.b32.xlu0 %v1432, 64
  %v1436 = vpop.permute.xlu0 %1435
  %1438 = vst.msk [vmem:[#allocation2 + $0x53] sm:$0x1] %vm327, %v1436
  %v1439 = vrot.slane %v177, 4
  %1441 = vst.msk [vmem:[#allocation2 + $0x54] sm:$0x1] %vm327, %v1439
  %1442 = vrot.lane.b32.xlu0 %v1439, 64
  %v1443 = vpop.permute.xlu0 %1442
  %1445 = vst.msk [vmem:[#allocation2 + $0x55] sm:$0x1] %vm327, %v1443
  %v1446 = vrot.slane %v206, 4
  %1448 = vst.msk [vmem:[#allocation2 + $0x56] sm:$0x1] %vm327, %v1446
  %1449 = vrot.lane.b32.xlu0 %v1446, 64
  %v1450 = vpop.permute.xlu0 %1449
  %1452 = vst.msk [vmem:[#allocation2 + $0x57] sm:$0x1] %vm327, %v1450
  %v1453 = vrot.slane %v235, 4
  %1455 = vst.msk [vmem:[#allocation2 + $0xd0] sm:$0x1] %vm327, %v1453
  %1456 = vrot.lane.b32.xlu0 %v1453, 64
  %v1457 = vpop.permute.xlu0 %1456
  %1459 = vst.msk [vmem:[#allocation2 + $0xd1] sm:$0x1] %vm327, %v1457
  %v1460 = vrot.slane %v264, 4
  %1462 = vst.msk [vmem:[#allocation2 + $0xd2] sm:$0x1] %vm327, %v1460
  %1463 = vrot.lane.b32.xlu0 %v1460, 64
  %v1464 = vpop.permute.xlu0 %1463
  %1466 = vst.msk [vmem:[#allocation2 + $0xd3] sm:$0x1] %vm327, %v1464
  %v1467 = vrot.slane %v293, 4
  %1469 = vst.msk [vmem:[#allocation2 + $0xd4] sm:$0x1] %vm327, %v1467
  %1470 = vrot.lane.b32.xlu0 %v1467, 64
  %v1471 = vpop.permute.xlu0 %1470
  %1473 = vst.msk [vmem:[#allocation2 + $0xd5] sm:$0x1] %vm327, %v1471
  %v1474 = vrot.slane %v322, 4
  %1476 = vst.msk [vmem:[#allocation2 + $0xd6] sm:$0x1] %vm327, %v1474
  %1477 = vrot.lane.b32.xlu0 %v1474, 64
  %v1478 = vpop.permute.xlu0 %1477
  %1480 = vst.msk [vmem:[#allocation2 + $0xd7] sm:$0x1] %vm327, %v1478
  %v1481 = vrot.slane %v119, 5
  %1482 = vrot.lane.b32.xlu0 %v1481, 64
  %v1483 = vpop.permute.xlu0 %1482
  %1485 = vst.msk [vmem:[#allocation2 + $0x50] sm:$0x1] %vm380, %v1483
  %1487 = vst.msk [vmem:[#allocation2 + $0x51] sm:$0x1] %vm380, %v1481
  %v1488 = vrot.slane %v148, 5
  %1489 = vrot.lane.b32.xlu0 %v1488, 64
  %v1490 = vpop.permute.xlu0 %1489
  %1492 = vst.msk [vmem:[#allocation2 + $0x52] sm:$0x1] %vm380, %v1490
  %1494 = vst.msk [vmem:[#allocation2 + $0x53] sm:$0x1] %vm380, %v1488
  %v1495 = vrot.slane %v177, 5
  %1496 = vrot.lane.b32.xlu0 %v1495, 64
  %v1497 = vpop.permute.xlu0 %1496
  %1499 = vst.msk [vmem:[#allocation2 + $0x54] sm:$0x1] %vm380, %v1497
  %1501 = vst.msk [vmem:[#allocation2 + $0x55] sm:$0x1] %vm380, %v1495
  %v1502 = vrot.slane %v206, 5
  %1503 = vrot.lane.b32.xlu0 %v1502, 64
  %v1504 = vpop.permute.xlu0 %1503
  %1506 = vst.msk [vmem:[#allocation2 + $0x56] sm:$0x1] %vm380, %v1504
  %1508 = vst.msk [vmem:[#allocation2 + $0x57] sm:$0x1] %vm380, %v1502
  %v1509 = vrot.slane %v235, 5
  %1510 = vrot.lane.b32.xlu0 %v1509, 64
  %v1511 = vpop.permute.xlu0 %1510
  %1513 = vst.msk [vmem:[#allocation2 + $0xd0] sm:$0x1] %vm380, %v1511
  %1515 = vst.msk [vmem:[#allocation2 + $0xd1] sm:$0x1] %vm380, %v1509
  %v1516 = vrot.slane %v264, 5
  %1517 = vrot.lane.b32.xlu0 %v1516, 64
  %v1518 = vpop.permute.xlu0 %1517
  %1520 = vst.msk [vmem:[#allocation2 + $0xd2] sm:$0x1] %vm380, %v1518
  %1522 = vst.msk [vmem:[#allocation2 + $0xd3] sm:$0x1] %vm380, %v1516
  %v1523 = vrot.slane %v293, 5
  %1524 = vrot.lane.b32.xlu0 %v1523, 64
  %v1525 = vpop.permute.xlu0 %1524
  %1527 = vst.msk [vmem:[#allocation2 + $0xd4] sm:$0x1] %vm380, %v1525
  %1529 = vst.msk [vmem:[#allocation2 + $0xd5] sm:$0x1] %vm380, %v1523
  %v1530 = vrot.slane %v322, 5
  %1531 = vrot.lane.b32.xlu0 %v1530, 64
  %v1532 = vpop.permute.xlu0 %1531
  %1534 = vst.msk [vmem:[#allocation2 + $0xd6] sm:$0x1] %vm380, %v1532
  %1536 = vst.msk [vmem:[#allocation2 + $0xd7] sm:$0x1] %vm380, %v1530
  %v1537 = vrot.slane %v119, 6
  %1539 = vst.msk [vmem:[#allocation2 + $0x58] sm:$0x1] %vm327, %v1537
  %1540 = vrot.lane.b32.xlu0 %v1537, 64
  %v1541 = vpop.permute.xlu0 %1540
  %1543 = vst.msk [vmem:[#allocation2 + $0x59] sm:$0x1] %vm327, %v1541
  %v1544 = vrot.slane %v148, 6
  %1546 = vst.msk [vmem:[#allocation2 + $0x5a] sm:$0x1] %vm327, %v1544
  %1547 = vrot.lane.b32.xlu0 %v1544, 64
  %v1548 = vpop.permute.xlu0 %1547
  %1550 = vst.msk [vmem:[#allocation2 + $0x5b] sm:$0x1] %vm327, %v1548
  %v1551 = vrot.slane %v177, 6
  %1553 = vst.msk [vmem:[#allocation2 + $0x5c] sm:$0x1] %vm327, %v1551
  %1554 = vrot.lane.b32.xlu0 %v1551, 64
  %v1555 = vpop.permute.xlu0 %1554
  %1557 = vst.msk [vmem:[#allocation2 + $0x5d] sm:$0x1] %vm327, %v1555
  %v1558 = vrot.slane %v206, 6
  %1560 = vst.msk [vmem:[#allocation2 + $0x5e] sm:$0x1] %vm327, %v1558
  %1561 = vrot.lane.b32.xlu0 %v1558, 64
  %v1562 = vpop.permute.xlu0 %1561
  %1564 = vst.msk [vmem:[#allocation2 + $0x5f] sm:$0x1] %vm327, %v1562
  %v1565 = vrot.slane %v235, 6
  %1567 = vst.msk [vmem:[#allocation2 + $0xd8] sm:$0x1] %vm327, %v1565
  %1568 = vrot.lane.b32.xlu0 %v1565, 64
  %v1569 = vpop.permute.xlu0 %1568
  %1571 = vst.msk [vmem:[#allocation2 + $0xd9] sm:$0x1] %vm327, %v1569
  %v1572 = vrot.slane %v264, 6
  %1574 = vst.msk [vmem:[#allocation2 + $0xda] sm:$0x1] %vm327, %v1572
  %1575 = vrot.lane.b32.xlu0 %v1572, 64
  %v1576 = vpop.permute.xlu0 %1575
  %1578 = vst.msk [vmem:[#allocation2 + $0xdb] sm:$0x1] %vm327, %v1576
  %v1579 = vrot.slane %v293, 6
  %1581 = vst.msk [vmem:[#allocation2 + $0xdc] sm:$0x1] %vm327, %v1579
  %1582 = vrot.lane.b32.xlu0 %v1579, 64
  %v1583 = vpop.permute.xlu0 %1582
  %1585 = vst.msk [vmem:[#allocation2 + $0xdd] sm:$0x1] %vm327, %v1583
  %v1586 = vrot.slane %v322, 6
  %1588 = vst.msk [vmem:[#allocation2 + $0xde] sm:$0x1] %vm327, %v1586
  %1589 = vrot.lane.b32.xlu0 %v1586, 64
  %v1590 = vpop.permute.xlu0 %1589
  %1592 = vst.msk [vmem:[#allocation2 + $0xdf] sm:$0x1] %vm327, %v1590
  %v1593 = vrot.slane %v119, 7
  %1594 = vrot.lane.b32.xlu0 %v1593, 64
  %v1595 = vpop.permute.xlu0 %1594
  %1597 = vst.msk [vmem:[#allocation2 + $0x58] sm:$0x1] %vm380, %v1595
  %1599 = vst.msk [vmem:[#allocation2 + $0x59] sm:$0x1] %vm380, %v1593
  %v1600 = vrot.slane %v148, 7
  %1601 = vrot.lane.b32.xlu0 %v1600, 64
  %v1602 = vpop.permute.xlu0 %1601
  %1604 = vst.msk [vmem:[#allocation2 + $0x5a] sm:$0x1] %vm380, %v1602
  %1606 = vst.msk [vmem:[#allocation2 + $0x5b] sm:$0x1] %vm380, %v1600
  %v1607 = vrot.slane %v177, 7
  %1608 = vrot.lane.b32.xlu0 %v1607, 64
  %v1609 = vpop.permute.xlu0 %1608
  %1611 = vst.msk [vmem:[#allocation2 + $0x5c] sm:$0x1] %vm380, %v1609
  %1613 = vst.msk [vmem:[#allocation2 + $0x5d] sm:$0x1] %vm380, %v1607
  %v1614 = vrot.slane %v206, 7
  %1615 = vrot.lane.b32.xlu0 %v1614, 64
  %v1616 = vpop.permute.xlu0 %1615
  %1618 = vst.msk [vmem:[#allocation2 + $0x5e] sm:$0x1] %vm380, %v1616
  %1620 = vst.msk [vmem:[#allocation2 + $0x5f] sm:$0x1] %vm380, %v1614
  %v1621 = vrot.slane %v235, 7
  %1622 = vrot.lane.b32.xlu0 %v1621, 64
  %v1623 = vpop.permute.xlu0 %1622
  %1625 = vst.msk [vmem:[#allocation2 + $0xd8] sm:$0x1] %vm380, %v1623
  %1627 = vst.msk [vmem:[#allocation2 + $0xd9] sm:$0x1] %vm380, %v1621
  %v1628 = vrot.slane %v264, 7
  %1629 = vrot.lane.b32.xlu0 %v1628, 64
  %v1630 = vpop.permute.xlu0 %1629
  %1632 = vst.msk [vmem:[#allocation2 + $0xda] sm:$0x1] %vm380, %v1630
  %1634 = vst.msk [vmem:[#allocation2 + $0xdb] sm:$0x1] %vm380, %v1628
  %v1635 = vrot.slane %v293, 7
  %1636 = vrot.lane.b32.xlu0 %v1635, 64
  %v1637 = vpop.permute.xlu0 %1636
  %1639 = vst.msk [vmem:[#allocation2 + $0xdc] sm:$0x1] %vm380, %v1637
  %1641 = vst.msk [vmem:[#allocation2 + $0xdd] sm:$0x1] %vm380, %v1635
  %v1642 = vrot.slane %v322, 7
  %1643 = vrot.lane.b32.xlu0 %v1642, 64
  %v1644 = vpop.permute.xlu0 %1643
  %1646 = vst.msk [vmem:[#allocation2 + $0xde] sm:$0x1] %vm380, %v1644
  %1648 = vst.msk [vmem:[#allocation2 + $0xdf] sm:$0x1] %vm380, %v1642
  %1649 = vst.msk [vmem:[#allocation2 + $0x60] sm:$0x1] %vm327, %v122
  %1651 = vrot.lane.b32.xlu0 %v122, 64
  %v1652 = vpop.permute.xlu0 %1651
  %1654 = vst.msk [vmem:[#allocation2 + $0x61] sm:$0x1] %vm327, %v1652
  %1655 = vst.msk [vmem:[#allocation2 + $0x62] sm:$0x1] %vm327, %v151
  %1657 = vrot.lane.b32.xlu0 %v151, 64
  %v1658 = vpop.permute.xlu0 %1657
  %1660 = vst.msk [vmem:[#allocation2 + $0x63] sm:$0x1] %vm327, %v1658
  %1661 = vst.msk [vmem:[#allocation2 + $0x64] sm:$0x1] %vm327, %v180
  %1663 = vrot.lane.b32.xlu0 %v180, 64
  %v1664 = vpop.permute.xlu0 %1663
  %1666 = vst.msk [vmem:[#allocation2 + $0x65] sm:$0x1] %vm327, %v1664
  %1667 = vst.msk [vmem:[#allocation2 + $0x66] sm:$0x1] %vm327, %v209
  %1669 = vrot.lane.b32.xlu0 %v209, 64
  %v1670 = vpop.permute.xlu0 %1669
  %1672 = vst.msk [vmem:[#allocation2 + $0x67] sm:$0x1] %vm327, %v1670
  %1673 = vst.msk [vmem:[#allocation2 + $0xe0] sm:$0x1] %vm327, %v238
  %1675 = vrot.lane.b32.xlu0 %v238, 64
  %v1676 = vpop.permute.xlu0 %1675
  %1678 = vst.msk [vmem:[#allocation2 + $0xe1] sm:$0x1] %vm327, %v1676
  %1679 = vst.msk [vmem:[#allocation2 + $0xe2] sm:$0x1] %vm327, %v267
  %1681 = vrot.lane.b32.xlu0 %v267, 64
  %v1682 = vpop.permute.xlu0 %1681
  %1684 = vst.msk [vmem:[#allocation2 + $0xe3] sm:$0x1] %vm327, %v1682
  %1685 = vst.msk [vmem:[#allocation2 + $0xe4] sm:$0x1] %vm327, %v296
  %1687 = vrot.lane.b32.xlu0 %v296, 64
  %v1688 = vpop.permute.xlu0 %1687
  %1690 = vst.msk [vmem:[#allocation2 + $0xe5] sm:$0x1] %vm327, %v1688
  %1691 = vst.msk [vmem:[#allocation2 + $0xe6] sm:$0x1] %vm327, %v325
  %1693 = vrot.lane.b32.xlu0 %v325, 64
  %v1694 = vpop.permute.xlu0 %1693
  %1696 = vst.msk [vmem:[#allocation2 + $0xe7] sm:$0x1] %vm327, %v1694
  %v1697 = vrot.slane %v122, 1
  %1698 = vrot.lane.b32.xlu0 %v1697, 64
  %v1699 = vpop.permute.xlu0 %1698
  %1701 = vst.msk [vmem:[#allocation2 + $0x60] sm:$0x1] %vm380, %v1699
  %1703 = vst.msk [vmem:[#allocation2 + $0x61] sm:$0x1] %vm380, %v1697
  %v1704 = vrot.slane %v151, 1
  %1705 = vrot.lane.b32.xlu0 %v1704, 64
  %v1706 = vpop.permute.xlu0 %1705
  %1708 = vst.msk [vmem:[#allocation2 + $0x62] sm:$0x1] %vm380, %v1706
  %1710 = vst.msk [vmem:[#allocation2 + $0x63] sm:$0x1] %vm380, %v1704
  %v1711 = vrot.slane %v180, 1
  %1712 = vrot.lane.b32.xlu0 %v1711, 64
  %v1713 = vpop.permute.xlu0 %1712
  %1715 = vst.msk [vmem:[#allocation2 + $0x64] sm:$0x1] %vm380, %v1713
  %1717 = vst.msk [vmem:[#allocation2 + $0x65] sm:$0x1] %vm380, %v1711
  %v1718 = vrot.slane %v209, 1
  %1719 = vrot.lane.b32.xlu0 %v1718, 64
  %v1720 = vpop.permute.xlu0 %1719
  %1722 = vst.msk [vmem:[#allocation2 + $0x66] sm:$0x1] %vm380, %v1720
  %1724 = vst.msk [vmem:[#allocation2 + $0x67] sm:$0x1] %vm380, %v1718
  %v1725 = vrot.slane %v238, 1
  %1726 = vrot.lane.b32.xlu0 %v1725, 64
  %v1727 = vpop.permute.xlu0 %1726
  %1729 = vst.msk [vmem:[#allocation2 + $0xe0] sm:$0x1] %vm380, %v1727
  %1731 = vst.msk [vmem:[#allocation2 + $0xe1] sm:$0x1] %vm380, %v1725
  %v1732 = vrot.slane %v267, 1
  %1733 = vrot.lane.b32.xlu0 %v1732, 64
  %v1734 = vpop.permute.xlu0 %1733
  %1736 = vst.msk [vmem:[#allocation2 + $0xe2] sm:$0x1] %vm380, %v1734
  %1738 = vst.msk [vmem:[#allocation2 + $0xe3] sm:$0x1] %vm380, %v1732
  %v1739 = vrot.slane %v296, 1
  %1740 = vrot.lane.b32.xlu0 %v1739, 64
  %v1741 = vpop.permute.xlu0 %1740
  %1743 = vst.msk [vmem:[#allocation2 + $0xe4] sm:$0x1] %vm380, %v1741
  %1745 = vst.msk [vmem:[#allocation2 + $0xe5] sm:$0x1] %vm380, %v1739
  %v1746 = vrot.slane %v325, 1
  %1747 = vrot.lane.b32.xlu0 %v1746, 64
  %v1748 = vpop.permute.xlu0 %1747
  %1750 = vst.msk [vmem:[#allocation2 + $0xe6] sm:$0x1] %vm380, %v1748
  %1752 = vst.msk [vmem:[#allocation2 + $0xe7] sm:$0x1] %vm380, %v1746
  %v1753 = vrot.slane %v122, 2
  %1755 = vst.msk [vmem:[#allocation2 + $0x68] sm:$0x1] %vm327, %v1753
  %1756 = vrot.lane.b32.xlu0 %v1753, 64
  %v1757 = vpop.permute.xlu0 %1756
  %1759 = vst.msk [vmem:[#allocation2 + $0x69] sm:$0x1] %vm327, %v1757
  %v1760 = vrot.slane %v151, 2
  %1762 = vst.msk [vmem:[#allocation2 + $0x6a] sm:$0x1] %vm327, %v1760
  %1763 = vrot.lane.b32.xlu0 %v1760, 64
  %v1764 = vpop.permute.xlu0 %1763
  %1766 = vst.msk [vmem:[#allocation2 + $0x6b] sm:$0x1] %vm327, %v1764
  %v1767 = vrot.slane %v180, 2
  %1769 = vst.msk [vmem:[#allocation2 + $0x6c] sm:$0x1] %vm327, %v1767
  %1770 = vrot.lane.b32.xlu0 %v1767, 64
  %v1771 = vpop.permute.xlu0 %1770
  %1773 = vst.msk [vmem:[#allocation2 + $0x6d] sm:$0x1] %vm327, %v1771
  %v1774 = vrot.slane %v209, 2
  %1776 = vst.msk [vmem:[#allocation2 + $0x6e] sm:$0x1] %vm327, %v1774
  %1777 = vrot.lane.b32.xlu0 %v1774, 64
  %v1778 = vpop.permute.xlu0 %1777
  %1780 = vst.msk [vmem:[#allocation2 + $0x6f] sm:$0x1] %vm327, %v1778
  %v1781 = vrot.slane %v238, 2
  %1783 = vst.msk [vmem:[#allocation2 + $0xe8] sm:$0x1] %vm327, %v1781
  %1784 = vrot.lane.b32.xlu0 %v1781, 64
  %v1785 = vpop.permute.xlu0 %1784
  %1787 = vst.msk [vmem:[#allocation2 + $0xe9] sm:$0x1] %vm327, %v1785
  %v1788 = vrot.slane %v267, 2
  %1790 = vst.msk [vmem:[#allocation2 + $0xea] sm:$0x1] %vm327, %v1788
  %1791 = vrot.lane.b32.xlu0 %v1788, 64
  %v1792 = vpop.permute.xlu0 %1791
  %1794 = vst.msk [vmem:[#allocation2 + $0xeb] sm:$0x1] %vm327, %v1792
  %v1795 = vrot.slane %v296, 2
  %1797 = vst.msk [vmem:[#allocation2 + $0xec] sm:$0x1] %vm327, %v1795
  %1798 = vrot.lane.b32.xlu0 %v1795, 64
  %v1799 = vpop.permute.xlu0 %1798
  %1801 = vst.msk [vmem:[#allocation2 + $0xed] sm:$0x1] %vm327, %v1799
  %v1802 = vrot.slane %v325, 2
  %1804 = vst.msk [vmem:[#allocation2 + $0xee] sm:$0x1] %vm327, %v1802
  %1805 = vrot.lane.b32.xlu0 %v1802, 64
  %v1806 = vpop.permute.xlu0 %1805
  %1808 = vst.msk [vmem:[#allocation2 + $0xef] sm:$0x1] %vm327, %v1806
  %v1809 = vrot.slane %v122, 3
  %1810 = vrot.lane.b32.xlu0 %v1809, 64
  %v1811 = vpop.permute.xlu0 %1810
  %1813 = vst.msk [vmem:[#allocation2 + $0x68] sm:$0x1] %vm380, %v1811
  %1815 = vst.msk [vmem:[#allocation2 + $0x69] sm:$0x1] %vm380, %v1809
  %v1816 = vrot.slane %v151, 3
  %1817 = vrot.lane.b32.xlu0 %v1816, 64
  %v1818 = vpop.permute.xlu0 %1817
  %1820 = vst.msk [vmem:[#allocation2 + $0x6a] sm:$0x1] %vm380, %v1818
  %1822 = vst.msk [vmem:[#allocation2 + $0x6b] sm:$0x1] %vm380, %v1816
  %v1823 = vrot.slane %v180, 3
  %1824 = vrot.lane.b32.xlu0 %v1823, 64
  %v1825 = vpop.permute.xlu0 %1824
  %1827 = vst.msk [vmem:[#allocation2 + $0x6c] sm:$0x1] %vm380, %v1825
  %1829 = vst.msk [vmem:[#allocation2 + $0x6d] sm:$0x1] %vm380, %v1823
  %v1830 = vrot.slane %v209, 3
  %1831 = vrot.lane.b32.xlu0 %v1830, 64
  %v1832 = vpop.permute.xlu0 %1831
  %1834 = vst.msk [vmem:[#allocation2 + $0x6e] sm:$0x1] %vm380, %v1832
  %1836 = vst.msk [vmem:[#allocation2 + $0x6f] sm:$0x1] %vm380, %v1830
  %v1837 = vrot.slane %v238, 3
  %1838 = vrot.lane.b32.xlu0 %v1837, 64
  %v1839 = vpop.permute.xlu0 %1838
  %1841 = vst.msk [vmem:[#allocation2 + $0xe8] sm:$0x1] %vm380, %v1839
  %1843 = vst.msk [vmem:[#allocation2 + $0xe9] sm:$0x1] %vm380, %v1837
  %v1844 = vrot.slane %v267, 3
  %1845 = vrot.lane.b32.xlu0 %v1844, 64
  %v1846 = vpop.permute.xlu0 %1845
  %1848 = vst.msk [vmem:[#allocation2 + $0xea] sm:$0x1] %vm380, %v1846
  %1850 = vst.msk [vmem:[#allocation2 + $0xeb] sm:$0x1] %vm380, %v1844
  %v1851 = vrot.slane %v296, 3
  %1852 = vrot.lane.b32.xlu0 %v1851, 64
  %v1853 = vpop.permute.xlu0 %1852
  %1855 = vst.msk [vmem:[#allocation2 + $0xec] sm:$0x1] %vm380, %v1853
  %1857 = vst.msk [vmem:[#allocation2 + $0xed] sm:$0x1] %vm380, %v1851
  %v1858 = vrot.slane %v325, 3
  %1859 = vrot.lane.b32.xlu0 %v1858, 64
  %v1860 = vpop.permute.xlu0 %1859
  %1862 = vst.msk [vmem:[#allocation2 + $0xee] sm:$0x1] %vm380, %v1860
  %1864 = vst.msk [vmem:[#allocation2 + $0xef] sm:$0x1] %vm380, %v1858
  %v1865 = vrot.slane %v122, 4
  %1867 = vst.msk [vmem:[#allocation2 + $0x70] sm:$0x1] %vm327, %v1865
  %1868 = vrot.lane.b32.xlu0 %v1865, 64
  %v1869 = vpop.permute.xlu0 %1868
  %1871 = vst.msk [vmem:[#allocation2 + $0x71] sm:$0x1] %vm327, %v1869
  %v1872 = vrot.slane %v151, 4
  %1874 = vst.msk [vmem:[#allocation2 + $0x72] sm:$0x1] %vm327, %v1872
  %1875 = vrot.lane.b32.xlu0 %v1872, 64
  %v1876 = vpop.permute.xlu0 %1875
  %1878 = vst.msk [vmem:[#allocation2 + $0x73] sm:$0x1] %vm327, %v1876
  %v1879 = vrot.slane %v180, 4
  %1881 = vst.msk [vmem:[#allocation2 + $0x74] sm:$0x1] %vm327, %v1879
  %1882 = vrot.lane.b32.xlu0 %v1879, 64
  %v1883 = vpop.permute.xlu0 %1882
  %1885 = vst.msk [vmem:[#allocation2 + $0x75] sm:$0x1] %vm327, %v1883
  %v1886 = vrot.slane %v209, 4
  %1888 = vst.msk [vmem:[#allocation2 + $0x76] sm:$0x1] %vm327, %v1886
  %1889 = vrot.lane.b32.xlu0 %v1886, 64
  %v1890 = vpop.permute.xlu0 %1889
  %1892 = vst.msk [vmem:[#allocation2 + $0x77] sm:$0x1] %vm327, %v1890
  %v1893 = vrot.slane %v238, 4
  %1895 = vst.msk [vmem:[#allocation2 + $0xf0] sm:$0x1] %vm327, %v1893
  %1896 = vrot.lane.b32.xlu0 %v1893, 64
  %v1897 = vpop.permute.xlu0 %1896
  %1899 = vst.msk [vmem:[#allocation2 + $0xf1] sm:$0x1] %vm327, %v1897
  %v1900 = vrot.slane %v267, 4
  %1902 = vst.msk [vmem:[#allocation2 + $0xf2] sm:$0x1] %vm327, %v1900
  %1903 = vrot.lane.b32.xlu0 %v1900, 64
  %v1904 = vpop.permute.xlu0 %1903
  %1906 = vst.msk [vmem:[#allocation2 + $0xf3] sm:$0x1] %vm327, %v1904
  %v1907 = vrot.slane %v296, 4
  %1909 = vst.msk [vmem:[#allocation2 + $0xf4] sm:$0x1] %vm327, %v1907
  %1910 = vrot.lane.b32.xlu0 %v1907, 64
  %v1911 = vpop.permute.xlu0 %1910
  %1913 = vst.msk [vmem:[#allocation2 + $0xf5] sm:$0x1] %vm327, %v1911
  %v1914 = vrot.slane %v325, 4
  %1916 = vst.msk [vmem:[#allocation2 + $0xf6] sm:$0x1] %vm327, %v1914
  %1917 = vrot.lane.b32.xlu0 %v1914, 64
  %v1918 = vpop.permute.xlu0 %1917
  %1920 = vst.msk [vmem:[#allocation2 + $0xf7] sm:$0x1] %vm327, %v1918
  %v1921 = vrot.slane %v122, 5
  %1922 = vrot.lane.b32.xlu0 %v1921, 64
  %v1923 = vpop.permute.xlu0 %1922
  %1925 = vst.msk [vmem:[#allocation2 + $0x70] sm:$0x1] %vm380, %v1923
  %1927 = vst.msk [vmem:[#allocation2 + $0x71] sm:$0x1] %vm380, %v1921
  %v1928 = vrot.slane %v151, 5
  %1929 = vrot.lane.b32.xlu0 %v1928, 64
  %v1930 = vpop.permute.xlu0 %1929
  %1932 = vst.msk [vmem:[#allocation2 + $0x72] sm:$0x1] %vm380, %v1930
  %1934 = vst.msk [vmem:[#allocation2 + $0x73] sm:$0x1] %vm380, %v1928
  %v1935 = vrot.slane %v180, 5
  %1936 = vrot.lane.b32.xlu0 %v1935, 64
  %v1937 = vpop.permute.xlu0 %1936
  %1939 = vst.msk [vmem:[#allocation2 + $0x74] sm:$0x1] %vm380, %v1937
  %1941 = vst.msk [vmem:[#allocation2 + $0x75] sm:$0x1] %vm380, %v1935
  %v1942 = vrot.slane %v209, 5
  %1943 = vrot.lane.b32.xlu0 %v1942, 64
  %v1944 = vpop.permute.xlu0 %1943
  %1946 = vst.msk [vmem:[#allocation2 + $0x76] sm:$0x1] %vm380, %v1944
  %1948 = vst.msk [vmem:[#allocation2 + $0x77] sm:$0x1] %vm380, %v1942
  %v1949 = vrot.slane %v238, 5
  %1950 = vrot.lane.b32.xlu0 %v1949, 64
  %v1951 = vpop.permute.xlu0 %1950
  %1953 = vst.msk [vmem:[#allocation2 + $0xf0] sm:$0x1] %vm380, %v1951
  %1955 = vst.msk [vmem:[#allocation2 + $0xf1] sm:$0x1] %vm380, %v1949
  %v1956 = vrot.slane %v267, 5
  %1957 = vrot.lane.b32.xlu0 %v1956, 64
  %v1958 = vpop.permute.xlu0 %1957
  %1960 = vst.msk [vmem:[#allocation2 + $0xf2] sm:$0x1] %vm380, %v1958
  %1962 = vst.msk [vmem:[#allocation2 + $0xf3] sm:$0x1] %vm380, %v1956
  %v1963 = vrot.slane %v296, 5
  %1964 = vrot.lane.b32.xlu0 %v1963, 64
  %v1965 = vpop.permute.xlu0 %1964
  %1967 = vst.msk [vmem:[#allocation2 + $0xf4] sm:$0x1] %vm380, %v1965
  %1969 = vst.msk [vmem:[#allocation2 + $0xf5] sm:$0x1] %vm380, %v1963
  %v1970 = vrot.slane %v325, 5
  %1971 = vrot.lane.b32.xlu0 %v1970, 64
  %v1972 = vpop.permute.xlu0 %1971
  %1974 = vst.msk [vmem:[#allocation2 + $0xf6] sm:$0x1] %vm380, %v1972
  %1976 = vst.msk [vmem:[#allocation2 + $0xf7] sm:$0x1] %vm380, %v1970
  %v1977 = vrot.slane %v122, 6
  %1979 = vst.msk [vmem:[#allocation2 + $0x78] sm:$0x1] %vm327, %v1977
  %1980 = vrot.lane.b32.xlu0 %v1977, 64
  %v1981 = vpop.permute.xlu0 %1980
  %1983 = vst.msk [vmem:[#allocation2 + $0x79] sm:$0x1] %vm327, %v1981
  %v1984 = vrot.slane %v151, 6
  %1986 = vst.msk [vmem:[#allocation2 + $0x7a] sm:$0x1] %vm327, %v1984
  %1987 = vrot.lane.b32.xlu0 %v1984, 64
  %v1988 = vpop.permute.xlu0 %1987
  %1990 = vst.msk [vmem:[#allocation2 + $0x7b] sm:$0x1] %vm327, %v1988
  %v1991 = vrot.slane %v180, 6
  %1993 = vst.msk [vmem:[#allocation2 + $0x7c] sm:$0x1] %vm327, %v1991
  %1994 = vrot.lane.b32.xlu0 %v1991, 64
  %v1995 = vpop.permute.xlu0 %1994
  %1997 = vst.msk [vmem:[#allocation2 + $0x7d] sm:$0x1] %vm327, %v1995
  %v1998 = vrot.slane %v209, 6
  %2000 = vst.msk [vmem:[#allocation2 + $0x7e] sm:$0x1] %vm327, %v1998
  %2001 = vrot.lane.b32.xlu0 %v1998, 64
  %v2002 = vpop.permute.xlu0 %2001
  %2004 = vst.msk [vmem:[#allocation2 + $0x7f] sm:$0x1] %vm327, %v2002
  %v2005 = vrot.slane %v238, 6
  %2007 = vst.msk [vmem:[#allocation2 + $0xf8] sm:$0x1] %vm327, %v2005
  %2008 = vrot.lane.b32.xlu0 %v2005, 64
  %v2009 = vpop.permute.xlu0 %2008
  %2011 = vst.msk [vmem:[#allocation2 + $0xf9] sm:$0x1] %vm327, %v2009
  %v2012 = vrot.slane %v267, 6
  %2014 = vst.msk [vmem:[#allocation2 + $0xfa] sm:$0x1] %vm327, %v2012
  %2015 = vrot.lane.b32.xlu0 %v2012, 64
  %v2016 = vpop.permute.xlu0 %2015
  %2018 = vst.msk [vmem:[#allocation2 + $0xfb] sm:$0x1] %vm327, %v2016
  %v2019 = vrot.slane %v296, 6
  %2021 = vst.msk [vmem:[#allocation2 + $0xfc] sm:$0x1] %vm327, %v2019
  %2022 = vrot.lane.b32.xlu0 %v2019, 64
  %v2023 = vpop.permute.xlu0 %2022
  %2025 = vst.msk [vmem:[#allocation2 + $0xfd] sm:$0x1] %vm327, %v2023
  %v2026 = vrot.slane %v325, 6
  %2028 = vst.msk [vmem:[#allocation2 + $0xfe] sm:$0x1] %vm327, %v2026
  %2029 = vrot.lane.b32.xlu0 %v2026, 64
  %v2030 = vpop.permute.xlu0 %2029
  %2032 = vst.msk [vmem:[#allocation2 + $0xff] sm:$0x1] %vm327, %v2030
  %v2033 = vrot.slane %v122, 7
  %2034 = vrot.lane.b32.xlu0 %v2033, 64
  %v2035 = vpop.permute.xlu0 %2034
  %2037 = vst.msk [vmem:[#allocation2 + $0x78] sm:$0x1] %vm380, %v2035
  %2039 = vst.msk [vmem:[#allocation2 + $0x79] sm:$0x1] %vm380, %v2033
  %v2040 = vrot.slane %v151, 7
  %2041 = vrot.lane.b32.xlu0 %v2040, 64
  %v2042 = vpop.permute.xlu0 %2041
  %2044 = vst.msk [vmem:[#allocation2 + $0x7a] sm:$0x1] %vm380, %v2042
  %2046 = vst.msk [vmem:[#allocation2 + $0x7b] sm:$0x1] %vm380, %v2040
  %v2047 = vrot.slane %v180, 7
  %2048 = vrot.lane.b32.xlu0 %v2047, 64
  %v2049 = vpop.permute.xlu0 %2048
  %2051 = vst.msk [vmem:[#allocation2 + $0x7c] sm:$0x1] %vm380, %v2049
  %2053 = vst.msk [vmem:[#allocation2 + $0x7d] sm:$0x1] %vm380, %v2047
  %v2054 = vrot.slane %v209, 7
  %2055 = vrot.lane.b32.xlu0 %v2054, 64
  %v2056 = vpop.permute.xlu0 %2055
  %2058 = vst.msk [vmem:[#allocation2 + $0x7e] sm:$0x1] %vm380, %v2056
  %2060 = vst.msk [vmem:[#allocation2 + $0x7f] sm:$0x1] %vm380, %v2054
  %v2061 = vrot.slane %v238, 7
  %2062 = vrot.lane.b32.xlu0 %v2061, 64
  %v2063 = vpop.permute.xlu0 %2062
  %2065 = vst.msk [vmem:[#allocation2 + $0xf8] sm:$0x1] %vm380, %v2063
  %2067 = vst.msk [vmem:[#allocation2 + $0xf9] sm:$0x1] %vm380, %v2061
  %v2068 = vrot.slane %v267, 7
  %2069 = vrot.lane.b32.xlu0 %v2068, 64
  %v2070 = vpop.permute.xlu0 %2069
  %2072 = vst.msk [vmem:[#allocation2 + $0xfa] sm:$0x1] %vm380, %v2070
  %2074 = vst.msk [vmem:[#allocation2 + $0xfb] sm:$0x1] %vm380, %v2068
  %v2075 = vrot.slane %v296, 7
  %2076 = vrot.lane.b32.xlu0 %v2075, 64
  %v2077 = vpop.permute.xlu0 %2076
  %2079 = vst.msk [vmem:[#allocation2 + $0xfc] sm:$0x1] %vm380, %v2077
  %2081 = vst.msk [vmem:[#allocation2 + $0xfd] sm:$0x1] %vm380, %v2075
  %v2082 = vrot.slane %v325, 7
  %2083 = vrot.lane.b32.xlu0 %v2082, 64
  %v2084 = vpop.permute.xlu0 %2083
  %2086 = vst.msk [vmem:[#allocation2 + $0xfe] sm:$0x1] %vm380, %v2084
  %2088 = vst.msk [vmem:[#allocation2 + $0xff] sm:$0x1] %vm380, %v2082
  %v2089 = vlaneseq
  %v2090 = vand.u32 %v2089, 127
  %v2091 = vadd.s32 %v2090, 128
  %v2092 = vadd.s32 %v2090, 256
  %v2093 = vadd.s32 %v2090, 384
  %v2094 = vadd.s32 %v2090, 512
  %v2095 = vadd.s32 %v2090, 640
  %v2096 = vadd.s32 %v2090, 768
  %v2097 = vadd.s32 %v2090, 896
  %v2098 = vadd.s32 %v2090, 1024
  %v2099 = vadd.s32 %v2090, 1152
  %v2100 = vadd.s32 %v2090, 1280
  %v2101 = vadd.s32 %v2090, 1408
  %v2102 = vadd.s32 %v2090, 1536
  %v2103 = vadd.s32 %v2090, 1664
  %v2104 = vadd.s32 %v2090, 1792
  %v2105 = vadd.s32 %v2090, 1920
  %vm2106 = vcmp.lt.s32.totalorder %v2090, 0
  %v2107 = vsub.s32 0, %v2090
  %v2108 = vsel %vm2106, %v2107, %v2090
  %v2109 = vshrl.u32 %v2108, 6
  %v2110 = vand.u32 %v2108, 63
  %v2111 = vsub.s32 0, %v2110
  %v2112 = vsel %vm2106, %v2111, %v2110
  %vm2113 = vcmp.lt.s32.totalorder %v2091, 0
  %v2114 = vsub.s32 0, %v2091
  %v2115 = vsel %vm2113, %v2114, %v2091
  %v2116 = vshrl.u32 %v2115, 6
  %v2117 = vand.u32 %v2115, 63
  %v2118 = vsub.s32 0, %v2117
  %v2119 = vsel %vm2113, %v2118, %v2117
  %vm2120 = vcmp.lt.s32.totalorder %v2092, 0
  %v2121 = vsub.s32 0, %v2092
  %v2122 = vsel %vm2120, %v2121, %v2092
  %v2123 = vshrl.u32 %v2122, 6
  %v2124 = vand.u32 %v2122, 63
  %v2125 = vsub.s32 0, %v2124
  %v2126 = vsel %vm2120, %v2125, %v2124
  %vm2127 = vcmp.lt.s32.totalorder %v2093, 0
  %v2128 = vsub.s32 0, %v2093
  %v2129 = vsel %vm2127, %v2128, %v2093
  %v2130 = vshrl.u32 %v2129, 6
  %v2131 = vand.u32 %v2129, 63
  %v2132 = vsub.s32 0, %v2131
  %v2133 = vsel %vm2127, %v2132, %v2131
  %vm2134 = vcmp.lt.s32.totalorder %v2094, 0
  %v2135 = vsub.s32 0, %v2094
  %v2136 = vsel %vm2134, %v2135, %v2094
  %v2137 = vshrl.u32 %v2136, 6
  %v2138 = vand.u32 %v2136, 63
  %v2139 = vsub.s32 0, %v2138
  %v2140 = vsel %vm2134, %v2139, %v2138
  %vm2141 = vcmp.lt.s32.totalorder %v2095, 0
  %v2142 = vsub.s32 0, %v2095
  %v2143 = vsel %vm2141, %v2142, %v2095
  %v2144 = vshrl.u32 %v2143, 6
  %v2145 = vand.u32 %v2143, 63
  %v2146 = vsub.s32 0, %v2145
  %v2147 = vsel %vm2141, %v2146, %v2145
  %vm2148 = vcmp.lt.s32.totalorder %v2096, 0
  %v2149 = vsub.s32 0, %v2096
  %v2150 = vsel %vm2148, %v2149, %v2096
  %v2151 = vshrl.u32 %v2150, 6
  %v2152 = vand.u32 %v2150, 63
  %v2153 = vsub.s32 0, %v2152
  %v2154 = vsel %vm2148, %v2153, %v2152
  %vm2155 = vcmp.lt.s32.totalorder %v2097, 0
  %v2156 = vsub.s32 0, %v2097
  %v2157 = vsel %vm2155, %v2156, %v2097
  %v2158 = vshrl.u32 %v2157, 6
  %v2159 = vand.u32 %v2157, 63
  %v2160 = vsub.s32 0, %v2159
  %v2161 = vsel %vm2155, %v2160, %v2159
  %vm2162 = vcmp.lt.s32.totalorder %v2098, 0
  %v2163 = vsub.s32 0, %v2098
  %v2164 = vsel %vm2162, %v2163, %v2098
  %v2165 = vshrl.u32 %v2164, 6
  %v2166 = vand.u32 %v2164, 63
  %v2167 = vsub.s32 0, %v2166
  %v2168 = vsel %vm2162, %v2167, %v2166
  %vm2169 = vcmp.lt.s32.totalorder %v2099, 0
  %v2170 = vsub.s32 0, %v2099
  %v2171 = vsel %vm2169, %v2170, %v2099
  %v2172 = vshrl.u32 %v2171, 6
  %v2173 = vand.u32 %v2171, 63
  %v2174 = vsub.s32 0, %v2173
  %v2175 = vsel %vm2169, %v2174, %v2173
  %vm2176 = vcmp.lt.s32.totalorder %v2100, 0
  %v2177 = vsub.s32 0, %v2100
  %v2178 = vsel %vm2176, %v2177, %v2100
  %v2179 = vshrl.u32 %v2178, 6
  %v2180 = vand.u32 %v2178, 63
  %v2181 = vsub.s32 0, %v2180
  %v2182 = vsel %vm2176, %v2181, %v2180
  %vm2183 = vcmp.lt.s32.totalorder %v2101, 0
  %v2184 = vsub.s32 0, %v2101
  %v2185 = vsel %vm2183, %v2184, %v2101
  %v2186 = vshrl.u32 %v2185, 6
  %v2187 = vand.u32 %v2185, 63
  %v2188 = vsub.s32 0, %v2187
  %v2189 = vsel %vm2183, %v2188, %v2187
  %vm2190 = vcmp.lt.s32.totalorder %v2102, 0
  %v2191 = vsub.s32 0, %v2102
  %v2192 = vsel %vm2190, %v2191, %v2102
  %v2193 = vshrl.u32 %v2192, 6
  %v2194 = vand.u32 %v2192, 63
  %v2195 = vsub.s32 0, %v2194
  %v2196 = vsel %vm2190, %v2195, %v2194
  %vm2197 = vcmp.lt.s32.totalorder %v2103, 0
  %v2198 = vsub.s32 0, %v2103
  %v2199 = vsel %vm2197, %v2198, %v2103
  %v2200 = vshrl.u32 %v2199, 6
  %v2201 = vand.u32 %v2199, 63
  %v2202 = vsub.s32 0, %v2201
  %v2203 = vsel %vm2197, %v2202, %v2201
  %vm2204 = vcmp.lt.s32.totalorder %v2104, 0
  %v2205 = vsub.s32 0, %v2104
  %v2206 = vsel %vm2204, %v2205, %v2104
  %v2207 = vshrl.u32 %v2206, 6
  %v2208 = vand.u32 %v2206, 63
  %v2209 = vsub.s32 0, %v2208
  %v2210 = vsel %vm2204, %v2209, %v2208
  %vm2211 = vcmp.lt.s32.totalorder %v2105, 0
  %v2212 = vsub.s32 0, %v2105
  %v2213 = vsel %vm2211, %v2212, %v2105
  %v2214 = vshrl.u32 %v2213, 6
  %v2215 = vand.u32 %v2213, 63
  %v2216 = vsub.s32 0, %v2215
  %v2217 = vsel %vm2211, %v2216, %v2215
  %vm2218 = vcmp.ne.s32.totalorder %v2112, 0
  %vm2219 = vcmp.ne.s32.totalorder %v2119, 0
  %vm2220 = vcmp.ne.s32.totalorder %v2126, 0
  %vm2221 = vcmp.ne.s32.totalorder %v2133, 0
  %vm2222 = vcmp.ne.s32.totalorder %v2140, 0
  %vm2223 = vcmp.ne.s32.totalorder %v2147, 0
  %vm2224 = vcmp.ne.s32.totalorder %v2154, 0
  %vm2225 = vcmp.ne.s32.totalorder %v2161, 0
  %vm2226 = vcmp.ne.s32.totalorder %v2168, 0
  %vm2227 = vcmp.ne.s32.totalorder %v2175, 0
  %vm2228 = vcmp.ne.s32.totalorder %v2182, 0
  %vm2229 = vcmp.ne.s32.totalorder %v2189, 0
  %vm2230 = vcmp.ne.s32.totalorder %v2196, 0
  %vm2231 = vcmp.ne.s32.totalorder %v2203, 0
  %vm2232 = vcmp.ne.s32.totalorder %v2210, 0
  %vm2233 = vcmp.ne.s32.totalorder %v2217, 0
  %vm2234 = vcmp.lt.s32.totalorder %v2112, 0
  %vm2235 = vcmp.lt.s32.totalorder %v2119, 0
  %vm2236 = vcmp.lt.s32.totalorder %v2126, 0
  %vm2237 = vcmp.lt.s32.totalorder %v2133, 0
  %vm2238 = vcmp.lt.s32.totalorder %v2140, 0
  %vm2239 = vcmp.lt.s32.totalorder %v2147, 0
  %vm2240 = vcmp.lt.s32.totalorder %v2154, 0
  %vm2241 = vcmp.lt.s32.totalorder %v2161, 0
  %vm2242 = vcmp.lt.s32.totalorder %v2168, 0
  %vm2243 = vcmp.lt.s32.totalorder %v2175, 0
  %vm2244 = vcmp.lt.s32.totalorder %v2182, 0
  %vm2245 = vcmp.lt.s32.totalorder %v2189, 0
  %vm2246 = vcmp.lt.s32.totalorder %v2196, 0
  %vm2247 = vcmp.lt.s32.totalorder %v2203, 0
  %vm2248 = vcmp.lt.s32.totalorder %v2210, 0
  %vm2249 = vcmp.lt.s32.totalorder %v2217, 0
  %vm2250 = vmand %vm2234, %vm2218
  %vm2251 = vmand %vm2235, %vm2219
  %vm2252 = vmand %vm2236, %vm2220
  %vm2253 = vmand %vm2237, %vm2221
  %vm2254 = vmand %vm2238, %vm2222
  %vm2255 = vmand %vm2239, %vm2223
  %vm2256 = vmand %vm2240, %vm2224
  %vm2257 = vmand %vm2241, %vm2225
  %vm2258 = vmand %vm2242, %vm2226
  %vm2259 = vmand %vm2243, %vm2227
  %vm2260 = vmand %vm2244, %vm2228
  %vm2261 = vmand %vm2245, %vm2229
  %vm2262 = vmand %vm2246, %vm2230
  %vm2263 = vmand %vm2247, %vm2231
  %vm2264 = vmand %vm2248, %vm2232
  %vm2265 = vmand %vm2249, %vm2233
  %v2266 = vadd.s32 %v2112, 64
  %v2267 = vadd.s32 %v2119, 64
  %v2268 = vadd.s32 %v2126, 64
  %v2269 = vadd.s32 %v2133, 64
  %v2270 = vadd.s32 %v2140, 64
  %v2271 = vadd.s32 %v2147, 64
  %v2272 = vadd.s32 %v2154, 64
  %v2273 = vadd.s32 %v2161, 64
  %v2274 = vadd.s32 %v2168, 64
  %v2275 = vadd.s32 %v2175, 64
  %v2276 = vadd.s32 %v2182, 64
  %v2277 = vadd.s32 %v2189, 64
  %v2278 = vadd.s32 %v2196, 64
  %v2279 = vadd.s32 %v2203, 64
  %v2280 = vadd.s32 %v2210, 64
  %v2281 = vadd.s32 %v2217, 64
  %v2282 = vsel %vm2250, %v2266, %v2112
  %v2283 = vsel %vm2251, %v2267, %v2119
  %v2284 = vsel %vm2252, %v2268, %v2126
  %v2285 = vsel %vm2253, %v2269, %v2133
  %v2286 = vsel %vm2254, %v2270, %v2140
  %v2287 = vsel %vm2255, %v2271, %v2147
  %v2288 = vsel %vm2256, %v2272, %v2154
  %v2289 = vsel %vm2257, %v2273, %v2161
  %v2290 = vsel %vm2258, %v2274, %v2168
  %v2291 = vsel %vm2259, %v2275, %v2175
  %v2292 = vsel %vm2260, %v2276, %v2182
  %v2293 = vsel %vm2261, %v2277, %v2189
  %v2294 = vsel %vm2262, %v2278, %v2196
  %v2295 = vsel %vm2263, %v2279, %v2203
  %v2296 = vsel %vm2264, %v2280, %v2210
  %v2297 = vsel %vm2265, %v2281, %v2217
  %vm2298 = vcmp.lt.s32.totalorder %v2282, 0
  %v2299 = vsub.s32 0, %v2282
  %v2300 = vsel %vm2298, %v2299, %v2282
  %v2301 = vand.u32 %v2300, 65535
  %v2302 = vshrl.u32 %v2300, 16
  %v2304 = vmul.u32 %v2301, 9362
  %v2305 = vmul.u32 %v2301, 37449
  %v2306 = vmul.u32 %v2302, 9362
  %v2307 = vmul.u32 %v2302, 37449
  %v2308 = vshll.u32 %v2305, 16
  %v2309 = vshrl.u32 %v2305, 16
  %v2310 = vshll.u32 %v2306, 16
  %v2311 = vshrl.u32 %v2306, 16
  %vm2312 = vc.u32 %v2304, %v2308
  %v2313 = vsel %vm2312, 1, 0
  %v2314 = vadd.s32 %v2304, %v2308
  %v2315 = vadd.s32 %v2307, %v2313
  %vm2316 = vc.u32 %v2314, %v2310
  %v2317 = vsel %vm2316, 1, 0
  %v2318 = vadd.s32 %v2314, %v2310
  %v2319 = vadd.s32 %v2315, %v2317
  %v2320 = vadd.s32 %v2319, %v2309
  %v2321 = vadd.s32 %v2320, %v2311
  %vm2322 = vc.u32 %v2318, 2454267026
  %v2323 = vsel %vm2322, 1, 0
  %v2324 = vadd.s32 %v2321, %v2323
  %v2325 = vshrl.u32 %v2324, 2
  %v2326 = vmul.u32 %v2325, 7
  %v2327 = vsub.s32 %v2300, %v2326
  %v2328 = vsub.s32 0, %v2327
  %v2329 = vsel %vm2298, %v2328, %v2327
  %vm2330 = vcmp.lt.s32.totalorder %v2283, 0
  %v2331 = vsub.s32 0, %v2283
  %v2332 = vsel %vm2330, %v2331, %v2283
  %v2333 = vand.u32 %v2332, 65535
  %v2334 = vshrl.u32 %v2332, 16
  %v2336 = vmul.u32 %v2333, 9362
  %v2337 = vmul.u32 %v2333, 37449
  %v2338 = vmul.u32 %v2334, 9362
  %v2339 = vmul.u32 %v2334, 37449
  %v2340 = vshll.u32 %v2337, 16
  %v2341 = vshrl.u32 %v2337, 16
  %v2342 = vshll.u32 %v2338, 16
  %v2343 = vshrl.u32 %v2338, 16
  %vm2344 = vc.u32 %v2336, %v2340
  %v2345 = vsel %vm2344, 1, 0
  %v2346 = vadd.s32 %v2336, %v2340
  %v2347 = vadd.s32 %v2339, %v2345
  %vm2348 = vc.u32 %v2346, %v2342
  %v2349 = vsel %vm2348, 1, 0
  %v2350 = vadd.s32 %v2346, %v2342
  %v2351 = vadd.s32 %v2347, %v2349
  %v2352 = vadd.s32 %v2351, %v2341
  %v2353 = vadd.s32 %v2352, %v2343
  %vm2354 = vc.u32 %v2350, 2454267026
  %v2355 = vsel %vm2354, 1, 0
  %v2356 = vadd.s32 %v2353, %v2355
  %v2357 = vshrl.u32 %v2356, 2
  %v2358 = vmul.u32 %v2357, 7
  %v2359 = vsub.s32 %v2332, %v2358
  %v2360 = vsub.s32 0, %v2359
  %v2361 = vsel %vm2330, %v2360, %v2359
  %vm2362 = vcmp.lt.s32.totalorder %v2284, 0
  %v2363 = vsub.s32 0, %v2284
  %v2364 = vsel %vm2362, %v2363, %v2284
  %v2365 = vand.u32 %v2364, 65535
  %v2366 = vshrl.u32 %v2364, 16
  %v2368 = vmul.u32 %v2365, 9362
  %v2369 = vmul.u32 %v2365, 37449
  %v2370 = vmul.u32 %v2366, 9362
  %v2371 = vmul.u32 %v2366, 37449
  %v2372 = vshll.u32 %v2369, 16
  %v2373 = vshrl.u32 %v2369, 16
  %v2374 = vshll.u32 %v2370, 16
  %v2375 = vshrl.u32 %v2370, 16
  %vm2376 = vc.u32 %v2368, %v2372
  %v2377 = vsel %vm2376, 1, 0
  %v2378 = vadd.s32 %v2368, %v2372
  %v2379 = vadd.s32 %v2371, %v2377
  %vm2380 = vc.u32 %v2378, %v2374
  %v2381 = vsel %vm2380, 1, 0
  %v2382 = vadd.s32 %v2378, %v2374
  %v2383 = vadd.s32 %v2379, %v2381
  %v2384 = vadd.s32 %v2383, %v2373
  %v2385 = vadd.s32 %v2384, %v2375
  %vm2386 = vc.u32 %v2382, 2454267026
  %v2387 = vsel %vm2386, 1, 0
  %v2388 = vadd.s32 %v2385, %v2387
  %v2389 = vshrl.u32 %v2388, 2
  %v2390 = vmul.u32 %v2389, 7
  %v2391 = vsub.s32 %v2364, %v2390
  %v2392 = vsub.s32 0, %v2391
  %v2393 = vsel %vm2362, %v2392, %v2391
  %vm2394 = vcmp.lt.s32.totalorder %v2285, 0
  %v2395 = vsub.s32 0, %v2285
  %v2396 = vsel %vm2394, %v2395, %v2285
  %v2397 = vand.u32 %v2396, 65535
  %v2398 = vshrl.u32 %v2396, 16
  %v2400 = vmul.u32 %v2397, 9362
  %v2401 = vmul.u32 %v2397, 37449
  %v2402 = vmul.u32 %v2398, 9362
  %v2403 = vmul.u32 %v2398, 37449
  %v2404 = vshll.u32 %v2401, 16
  %v2405 = vshrl.u32 %v2401, 16
  %v2406 = vshll.u32 %v2402, 16
  %v2407 = vshrl.u32 %v2402, 16
  %vm2408 = vc.u32 %v2400, %v2404
  %v2409 = vsel %vm2408, 1, 0
  %v2410 = vadd.s32 %v2400, %v2404
  %v2411 = vadd.s32 %v2403, %v2409
  %vm2412 = vc.u32 %v2410, %v2406
  %v2413 = vsel %vm2412, 1, 0
  %v2414 = vadd.s32 %v2410, %v2406
  %v2415 = vadd.s32 %v2411, %v2413
  %v2416 = vadd.s32 %v2415, %v2405
  %v2417 = vadd.s32 %v2416, %v2407
  %vm2418 = vc.u32 %v2414, 2454267026
  %v2419 = vsel %vm2418, 1, 0
  %v2420 = vadd.s32 %v2417, %v2419
  %v2421 = vshrl.u32 %v2420, 2
  %v2422 = vmul.u32 %v2421, 7
  %v2423 = vsub.s32 %v2396, %v2422
  %v2424 = vsub.s32 0, %v2423
  %v2425 = vsel %vm2394, %v2424, %v2423
  %vm2426 = vcmp.lt.s32.totalorder %v2286, 0
  %v2427 = vsub.s32 0, %v2286
  %v2428 = vsel %vm2426, %v2427, %v2286
  %v2429 = vand.u32 %v2428, 65535
  %v2430 = vshrl.u32 %v2428, 16
  %v2432 = vmul.u32 %v2429, 9362
  %v2433 = vmul.u32 %v2429, 37449
  %v2434 = vmul.u32 %v2430, 9362
  %v2435 = vmul.u32 %v2430, 37449
  %v2436 = vshll.u32 %v2433, 16
  %v2437 = vshrl.u32 %v2433, 16
  %v2438 = vshll.u32 %v2434, 16
  %v2439 = vshrl.u32 %v2434, 16
  %vm2440 = vc.u32 %v2432, %v2436
  %v2441 = vsel %vm2440, 1, 0
  %v2442 = vadd.s32 %v2432, %v2436
  %v2443 = vadd.s32 %v2435, %v2441
  %vm2444 = vc.u32 %v2442, %v2438
  %v2445 = vsel %vm2444, 1, 0
  %v2446 = vadd.s32 %v2442, %v2438
  %v2447 = vadd.s32 %v2443, %v2445
  %v2448 = vadd.s32 %v2447, %v2437
  %v2449 = vadd.s32 %v2448, %v2439
  %vm2450 = vc.u32 %v2446, 2454267026
  %v2451 = vsel %vm2450, 1, 0
  %v2452 = vadd.s32 %v2449, %v2451
  %v2453 = vshrl.u32 %v2452, 2
  %v2454 = vmul.u32 %v2453, 7
  %v2455 = vsub.s32 %v2428, %v2454
  %v2456 = vsub.s32 0, %v2455
  %v2457 = vsel %vm2426, %v2456, %v2455
  %vm2458 = vcmp.lt.s32.totalorder %v2287, 0
  %v2459 = vsub.s32 0, %v2287
  %v2460 = vsel %vm2458, %v2459, %v2287
  %v2461 = vand.u32 %v2460, 65535
  %v2462 = vshrl.u32 %v2460, 16
  %v2464 = vmul.u32 %v2461, 9362
  %v2465 = vmul.u32 %v2461, 37449
  %v2466 = vmul.u32 %v2462, 9362
  %v2467 = vmul.u32 %v2462, 37449
  %v2468 = vshll.u32 %v2465, 16
  %v2469 = vshrl.u32 %v2465, 16
  %v2470 = vshll.u32 %v2466, 16
  %v2471 = vshrl.u32 %v2466, 16
  %vm2472 = vc.u32 %v2464, %v2468
  %v2473 = vsel %vm2472, 1, 0
  %v2474 = vadd.s32 %v2464, %v2468
  %v2475 = vadd.s32 %v2467, %v2473
  %vm2476 = vc.u32 %v2474, %v2470
  %v2477 = vsel %vm2476, 1, 0
  %v2478 = vadd.s32 %v2474, %v2470
  %v2479 = vadd.s32 %v2475, %v2477
  %v2480 = vadd.s32 %v2479, %v2469
  %v2481 = vadd.s32 %v2480, %v2471
  %vm2482 = vc.u32 %v2478, 2454267026
  %v2483 = vsel %vm2482, 1, 0
  %v2484 = vadd.s32 %v2481, %v2483
  %v2485 = vshrl.u32 %v2484, 2
  %v2486 = vmul.u32 %v2485, 7
  %v2487 = vsub.s32 %v2460, %v2486
  %v2488 = vsub.s32 0, %v2487
  %v2489 = vsel %vm2458, %v2488, %v2487
  %vm2490 = vcmp.lt.s32.totalorder %v2288, 0
  %v2491 = vsub.s32 0, %v2288
  %v2492 = vsel %vm2490, %v2491, %v2288
  %v2493 = vand.u32 %v2492, 65535
  %v2494 = vshrl.u32 %v2492, 16
  %v2496 = vmul.u32 %v2493, 9362
  %v2497 = vmul.u32 %v2493, 37449
  %v2498 = vmul.u32 %v2494, 9362
  %v2499 = vmul.u32 %v2494, 37449
  %v2500 = vshll.u32 %v2497, 16
  %v2501 = vshrl.u32 %v2497, 16
  %v2502 = vshll.u32 %v2498, 16
  %v2503 = vshrl.u32 %v2498, 16
  %vm2504 = vc.u32 %v2496, %v2500
  %v2505 = vsel %vm2504, 1, 0
  %v2506 = vadd.s32 %v2496, %v2500
  %v2507 = vadd.s32 %v2499, %v2505
  %vm2508 = vc.u32 %v2506, %v2502
  %v2509 = vsel %vm2508, 1, 0
  %v2510 = vadd.s32 %v2506, %v2502
  %v2511 = vadd.s32 %v2507, %v2509
  %v2512 = vadd.s32 %v2511, %v2501
  %v2513 = vadd.s32 %v2512, %v2503
  %vm2514 = vc.u32 %v2510, 2454267026
  %v2515 = vsel %vm2514, 1, 0
  %v2516 = vadd.s32 %v2513, %v2515
  %v2517 = vshrl.u32 %v2516, 2
  %v2518 = vmul.u32 %v2517, 7
  %v2519 = vsub.s32 %v2492, %v2518
  %v2520 = vsub.s32 0, %v2519
  %v2521 = vsel %vm2490, %v2520, %v2519
  %vm2522 = vcmp.lt.s32.totalorder %v2289, 0
  %v2523 = vsub.s32 0, %v2289
  %v2524 = vsel %vm2522, %v2523, %v2289
  %v2525 = vand.u32 %v2524, 65535
  %v2526 = vshrl.u32 %v2524, 16
  %v2528 = vmul.u32 %v2525, 9362
  %v2529 = vmul.u32 %v2525, 37449
  %v2530 = vmul.u32 %v2526, 9362
  %v2531 = vmul.u32 %v2526, 37449
  %v2532 = vshll.u32 %v2529, 16
  %v2533 = vshrl.u32 %v2529, 16
  %v2534 = vshll.u32 %v2530, 16
  %v2535 = vshrl.u32 %v2530, 16
  %vm2536 = vc.u32 %v2528, %v2532
  %v2537 = vsel %vm2536, 1, 0
  %v2538 = vadd.s32 %v2528, %v2532
  %v2539 = vadd.s32 %v2531, %v2537
  %vm2540 = vc.u32 %v2538, %v2534
  %v2541 = vsel %vm2540, 1, 0
  %v2542 = vadd.s32 %v2538, %v2534
  %v2543 = vadd.s32 %v2539, %v2541
  %v2544 = vadd.s32 %v2543, %v2533
  %v2545 = vadd.s32 %v2544, %v2535
  %vm2546 = vc.u32 %v2542, 2454267026
  %v2547 = vsel %vm2546, 1, 0
  %v2548 = vadd.s32 %v2545, %v2547
  %v2549 = vshrl.u32 %v2548, 2
  %v2550 = vmul.u32 %v2549, 7
  %v2551 = vsub.s32 %v2524, %v2550
  %v2552 = vsub.s32 0, %v2551
  %v2553 = vsel %vm2522, %v2552, %v2551
  %vm2554 = vcmp.lt.s32.totalorder %v2290, 0
  %v2555 = vsub.s32 0, %v2290
  %v2556 = vsel %vm2554, %v2555, %v2290
  %v2557 = vand.u32 %v2556, 65535
  %v2558 = vshrl.u32 %v2556, 16
  %v2560 = vmul.u32 %v2557, 9362
  %v2561 = vmul.u32 %v2557, 37449
  %v2562 = vmul.u32 %v2558, 9362
  %v2563 = vmul.u32 %v2558, 37449
  %v2564 = vshll.u32 %v2561, 16
  %v2565 = vshrl.u32 %v2561, 16
  %v2566 = vshll.u32 %v2562, 16
  %v2567 = vshrl.u32 %v2562, 16
  %vm2568 = vc.u32 %v2560, %v2564
  %v2569 = vsel %vm2568, 1, 0
  %v2570 = vadd.s32 %v2560, %v2564
  %v2571 = vadd.s32 %v2563, %v2569
  %vm2572 = vc.u32 %v2570, %v2566
  %v2573 = vsel %vm2572, 1, 0
  %v2574 = vadd.s32 %v2570, %v2566
  %v2575 = vadd.s32 %v2571, %v2573
  %v2576 = vadd.s32 %v2575, %v2565
  %v2577 = vadd.s32 %v2576, %v2567
  %vm2578 = vc.u32 %v2574, 2454267026
  %v2579 = vsel %vm2578, 1, 0
  %v2580 = vadd.s32 %v2577, %v2579
  %v2581 = vshrl.u32 %v2580, 2
  %v2582 = vmul.u32 %v2581, 7
  %v2583 = vsub.s32 %v2556, %v2582
  %v2584 = vsub.s32 0, %v2583
  %v2585 = vsel %vm2554, %v2584, %v2583
  %vm2586 = vcmp.lt.s32.totalorder %v2291, 0
  %v2587 = vsub.s32 0, %v2291
  %v2588 = vsel %vm2586, %v2587, %v2291
  %v2589 = vand.u32 %v2588, 65535
  %v2590 = vshrl.u32 %v2588, 16
  %v2592 = vmul.u32 %v2589, 9362
  %v2593 = vmul.u32 %v2589, 37449
  %v2594 = vmul.u32 %v2590, 9362
  %v2595 = vmul.u32 %v2590, 37449
  %v2596 = vshll.u32 %v2593, 16
  %v2597 = vshrl.u32 %v2593, 16
  %v2598 = vshll.u32 %v2594, 16
  %v2599 = vshrl.u32 %v2594, 16
  %vm2600 = vc.u32 %v2592, %v2596
  %v2601 = vsel %vm2600, 1, 0
  %v2602 = vadd.s32 %v2592, %v2596
  %v2603 = vadd.s32 %v2595, %v2601
  %vm2604 = vc.u32 %v2602, %v2598
  %v2605 = vsel %vm2604, 1, 0
  %v2606 = vadd.s32 %v2602, %v2598
  %v2607 = vadd.s32 %v2603, %v2605
  %v2608 = vadd.s32 %v2607, %v2597
  %v2609 = vadd.s32 %v2608, %v2599
  %vm2610 = vc.u32 %v2606, 2454267026
  %v2611 = vsel %vm2610, 1, 0
  %v2612 = vadd.s32 %v2609, %v2611
  %v2613 = vshrl.u32 %v2612, 2
  %v2614 = vmul.u32 %v2613, 7
  %v2615 = vsub.s32 %v2588, %v2614
  %v2616 = vsub.s32 0, %v2615
  %v2617 = vsel %vm2586, %v2616, %v2615
  %vm2618 = vcmp.lt.s32.totalorder %v2292, 0
  %v2619 = vsub.s32 0, %v2292
  %v2620 = vsel %vm2618, %v2619, %v2292
  %v2621 = vand.u32 %v2620, 65535
  %v2622 = vshrl.u32 %v2620, 16
  %v2624 = vmul.u32 %v2621, 9362
  %v2625 = vmul.u32 %v2621, 37449
  %v2626 = vmul.u32 %v2622, 9362
  %v2627 = vmul.u32 %v2622, 37449
  %v2628 = vshll.u32 %v2625, 16
  %v2629 = vshrl.u32 %v2625, 16
  %v2630 = vshll.u32 %v2626, 16
  %v2631 = vshrl.u32 %v2626, 16
  %vm2632 = vc.u32 %v2624, %v2628
  %v2633 = vsel %vm2632, 1, 0
  %v2634 = vadd.s32 %v2624, %v2628
  %v2635 = vadd.s32 %v2627, %v2633
  %vm2636 = vc.u32 %v2634, %v2630
  %v2637 = vsel %vm2636, 1, 0
  %v2638 = vadd.s32 %v2634, %v2630
  %v2639 = vadd.s32 %v2635, %v2637
  %v2640 = vadd.s32 %v2639, %v2629
  %v2641 = vadd.s32 %v2640, %v2631
  %vm2642 = vc.u32 %v2638, 2454267026
  %v2643 = vsel %vm2642, 1, 0
  %v2644 = vadd.s32 %v2641, %v2643
  %v2645 = vshrl.u32 %v2644, 2
  %v2646 = vmul.u32 %v2645, 7
  %v2647 = vsub.s32 %v2620, %v2646
  %v2648 = vsub.s32 0, %v2647
  %v2649 = vsel %vm2618, %v2648, %v2647
  %vm2650 = vcmp.lt.s32.totalorder %v2293, 0
  %v2651 = vsub.s32 0, %v2293
  %v2652 = vsel %vm2650, %v2651, %v2293
  %v2653 = vand.u32 %v2652, 65535
  %v2654 = vshrl.u32 %v2652, 16
  %v2656 = vmul.u32 %v2653, 9362
  %v2657 = vmul.u32 %v2653, 37449
  %v2658 = vmul.u32 %v2654, 9362
  %v2659 = vmul.u32 %v2654, 37449
  %v2660 = vshll.u32 %v2657, 16
  %v2661 = vshrl.u32 %v2657, 16
  %v2662 = vshll.u32 %v2658, 16
  %v2663 = vshrl.u32 %v2658, 16
  %vm2664 = vc.u32 %v2656, %v2660
  %v2665 = vsel %vm2664, 1, 0
  %v2666 = vadd.s32 %v2656, %v2660
  %v2667 = vadd.s32 %v2659, %v2665
  %vm2668 = vc.u32 %v2666, %v2662
  %v2669 = vsel %vm2668, 1, 0
  %v2670 = vadd.s32 %v2666, %v2662
  %v2671 = vadd.s32 %v2667, %v2669
  %v2672 = vadd.s32 %v2671, %v2661
  %v2673 = vadd.s32 %v2672, %v2663
  %vm2674 = vc.u32 %v2670, 2454267026
  %v2675 = vsel %vm2674, 1, 0
  %v2676 = vadd.s32 %v2673, %v2675
  %v2677 = vshrl.u32 %v2676, 2
  %v2678 = vmul.u32 %v2677, 7
  %v2679 = vsub.s32 %v2652, %v2678
  %v2680 = vsub.s32 0, %v2679
  %v2681 = vsel %vm2650, %v2680, %v2679
  %vm2682 = vcmp.lt.s32.totalorder %v2294, 0
  %v2683 = vsub.s32 0, %v2294
  %v2684 = vsel %vm2682, %v2683, %v2294
  %v2685 = vand.u32 %v2684, 65535
  %v2686 = vshrl.u32 %v2684, 16
  %v2688 = vmul.u32 %v2685, 9362
  %v2689 = vmul.u32 %v2685, 37449
  %v2690 = vmul.u32 %v2686, 9362
  %v2691 = vmul.u32 %v2686, 37449
  %v2692 = vshll.u32 %v2689, 16
  %v2693 = vshrl.u32 %v2689, 16
  %v2694 = vshll.u32 %v2690, 16
  %v2695 = vshrl.u32 %v2690, 16
  %vm2696 = vc.u32 %v2688, %v2692
  %v2697 = vsel %vm2696, 1, 0
  %v2698 = vadd.s32 %v2688, %v2692
  %v2699 = vadd.s32 %v2691, %v2697
  %vm2700 = vc.u32 %v2698, %v2694
  %v2701 = vsel %vm2700, 1, 0
  %v2702 = vadd.s32 %v2698, %v2694
  %v2703 = vadd.s32 %v2699, %v2701
  %v2704 = vadd.s32 %v2703, %v2693
  %v2705 = vadd.s32 %v2704, %v2695
  %vm2706 = vc.u32 %v2702, 2454267026
  %v2707 = vsel %vm2706, 1, 0
  %v2708 = vadd.s32 %v2705, %v2707
  %v2709 = vshrl.u32 %v2708, 2
  %v2710 = vmul.u32 %v2709, 7
  %v2711 = vsub.s32 %v2684, %v2710
  %v2712 = vsub.s32 0, %v2711
  %v2713 = vsel %vm2682, %v2712, %v2711
  %vm2714 = vcmp.lt.s32.totalorder %v2295, 0
  %v2715 = vsub.s32 0, %v2295
  %v2716 = vsel %vm2714, %v2715, %v2295
  %v2717 = vand.u32 %v2716, 65535
  %v2718 = vshrl.u32 %v2716, 16
  %v2720 = vmul.u32 %v2717, 9362
  %v2721 = vmul.u32 %v2717, 37449
  %v2722 = vmul.u32 %v2718, 9362
  %v2723 = vmul.u32 %v2718, 37449
  %v2724 = vshll.u32 %v2721, 16
  %v2725 = vshrl.u32 %v2721, 16
  %v2726 = vshll.u32 %v2722, 16
  %v2727 = vshrl.u32 %v2722, 16
  %vm2728 = vc.u32 %v2720, %v2724
  %v2729 = vsel %vm2728, 1, 0
  %v2730 = vadd.s32 %v2720, %v2724
  %v2731 = vadd.s32 %v2723, %v2729
  %vm2732 = vc.u32 %v2730, %v2726
  %v2733 = vsel %vm2732, 1, 0
  %v2734 = vadd.s32 %v2730, %v2726
  %v2735 = vadd.s32 %v2731, %v2733
  %v2736 = vadd.s32 %v2735, %v2725
  %v2737 = vadd.s32 %v2736, %v2727
  %vm2738 = vc.u32 %v2734, 2454267026
  %v2739 = vsel %vm2738, 1, 0
  %v2740 = vadd.s32 %v2737, %v2739
  %v2741 = vshrl.u32 %v2740, 2
  %v2742 = vmul.u32 %v2741, 7
  %v2743 = vsub.s32 %v2716, %v2742
  %v2744 = vsub.s32 0, %v2743
  %v2745 = vsel %vm2714, %v2744, %v2743
  %vm2746 = vcmp.lt.s32.totalorder %v2296, 0
  %v2747 = vsub.s32 0, %v2296
  %v2748 = vsel %vm2746, %v2747, %v2296
  %v2749 = vand.u32 %v2748, 65535
  %v2750 = vshrl.u32 %v2748, 16
  %v2752 = vmul.u32 %v2749, 9362
  %v2753 = vmul.u32 %v2749, 37449
  %v2754 = vmul.u32 %v2750, 9362
  %v2755 = vmul.u32 %v2750, 37449
  %v2756 = vshll.u32 %v2753, 16
  %v2757 = vshrl.u32 %v2753, 16
  %v2758 = vshll.u32 %v2754, 16
  %v2759 = vshrl.u32 %v2754, 16
  %vm2760 = vc.u32 %v2752, %v2756
  %v2761 = vsel %vm2760, 1, 0
  %v2762 = vadd.s32 %v2752, %v2756
  %v2763 = vadd.s32 %v2755, %v2761
  %vm2764 = vc.u32 %v2762, %v2758
  %v2765 = vsel %vm2764, 1, 0
  %v2766 = vadd.s32 %v2762, %v2758
  %v2767 = vadd.s32 %v2763, %v2765
  %v2768 = vadd.s32 %v2767, %v2757
  %v2769 = vadd.s32 %v2768, %v2759
  %vm2770 = vc.u32 %v2766, 2454267026
  %v2771 = vsel %vm2770, 1, 0
  %v2772 = vadd.s32 %v2769, %v2771
  %v2773 = vshrl.u32 %v2772, 2
  %v2774 = vmul.u32 %v2773, 7
  %v2775 = vsub.s32 %v2748, %v2774
  %v2776 = vsub.s32 0, %v2775
  %v2777 = vsel %vm2746, %v2776, %v2775
  %vm2778 = vcmp.lt.s32.totalorder %v2297, 0
  %v2779 = vsub.s32 0, %v2297
  %v2780 = vsel %vm2778, %v2779, %v2297
  %v2781 = vand.u32 %v2780, 65535
  %v2782 = vshrl.u32 %v2780, 16
  %v2784 = vmul.u32 %v2781, 9362
  %v2785 = vmul.u32 %v2781, 37449
  %v2786 = vmul.u32 %v2782, 9362
  %v2787 = vmul.u32 %v2782, 37449
  %v2788 = vshll.u32 %v2785, 16
  %v2789 = vshrl.u32 %v2785, 16
  %v2790 = vshll.u32 %v2786, 16
  %v2791 = vshrl.u32 %v2786, 16
  %vm2792 = vc.u32 %v2784, %v2788
  %v2793 = vsel %vm2792, 1, 0
  %v2794 = vadd.s32 %v2784, %v2788
  %v2795 = vadd.s32 %v2787, %v2793
  %vm2796 = vc.u32 %v2794, %v2790
  %v2797 = vsel %vm2796, 1, 0
  %v2798 = vadd.s32 %v2794, %v2790
  %v2799 = vadd.s32 %v2795, %v2797
  %v2800 = vadd.s32 %v2799, %v2789
  %v2801 = vadd.s32 %v2800, %v2791
  %vm2802 = vc.u32 %v2798, 2454267026
  %v2803 = vsel %vm2802, 1, 0
  %v2804 = vadd.s32 %v2801, %v2803
  %v2805 = vshrl.u32 %v2804, 2
  %v2806 = vmul.u32 %v2805, 7
  %v2807 = vsub.s32 %v2780, %v2806
  %v2808 = vsub.s32 0, %v2807
  %v2809 = vsel %vm2778, %v2808, %v2807
  %vm2810 = vcmp.ne.s32.totalorder %v2329, 0
  %vm2811 = vcmp.ne.s32.totalorder %v2361, 0
  %vm2812 = vcmp.ne.s32.totalorder %v2393, 0
  %vm2813 = vcmp.ne.s32.totalorder %v2425, 0
  %vm2814 = vcmp.ne.s32.totalorder %v2457, 0
  %vm2815 = vcmp.ne.s32.totalorder %v2489, 0
  %vm2816 = vcmp.ne.s32.totalorder %v2521, 0
  %vm2817 = vcmp.ne.s32.totalorder %v2553, 0
  %vm2818 = vcmp.ne.s32.totalorder %v2585, 0
  %vm2819 = vcmp.ne.s32.totalorder %v2617, 0
  %vm2820 = vcmp.ne.s32.totalorder %v2649, 0
  %vm2821 = vcmp.ne.s32.totalorder %v2681, 0
  %vm2822 = vcmp.ne.s32.totalorder %v2713, 0
  %vm2823 = vcmp.ne.s32.totalorder %v2745, 0
  %vm2824 = vcmp.ne.s32.totalorder %v2777, 0
  %vm2825 = vcmp.ne.s32.totalorder %v2809, 0
  %vm2826 = vcmp.lt.s32.totalorder %v2329, 0
  %vm2827 = vcmp.lt.s32.totalorder %v2361, 0
  %vm2828 = vcmp.lt.s32.totalorder %v2393, 0
  %vm2829 = vcmp.lt.s32.totalorder %v2425, 0
  %vm2830 = vcmp.lt.s32.totalorder %v2457, 0
  %vm2831 = vcmp.lt.s32.totalorder %v2489, 0
  %vm2832 = vcmp.lt.s32.totalorder %v2521, 0
  %vm2833 = vcmp.lt.s32.totalorder %v2553, 0
  %vm2834 = vcmp.lt.s32.totalorder %v2585, 0
  %vm2835 = vcmp.lt.s32.totalorder %v2617, 0
  %vm2836 = vcmp.lt.s32.totalorder %v2649, 0
  %vm2837 = vcmp.lt.s32.totalorder %v2681, 0
  %vm2838 = vcmp.lt.s32.totalorder %v2713, 0
  %vm2839 = vcmp.lt.s32.totalorder %v2745, 0
  %vm2840 = vcmp.lt.s32.totalorder %v2777, 0
  %vm2841 = vcmp.lt.s32.totalorder %v2809, 0
  %vm2842 = vmand %vm2826, %vm2810
  %vm2843 = vmand %vm2827, %vm2811
  %vm2844 = vmand %vm2828, %vm2812
  %vm2845 = vmand %vm2829, %vm2813
  %vm2846 = vmand %vm2830, %vm2814
  %vm2847 = vmand %vm2831, %vm2815
  %vm2848 = vmand %vm2832, %vm2816
  %vm2849 = vmand %vm2833, %vm2817
  %vm2850 = vmand %vm2834, %vm2818
  %vm2851 = vmand %vm2835, %vm2819
  %vm2852 = vmand %vm2836, %vm2820
  %vm2853 = vmand %vm2837, %vm2821
  %vm2854 = vmand %vm2838, %vm2822
  %vm2855 = vmand %vm2839, %vm2823
  %vm2856 = vmand %vm2840, %vm2824
  %vm2857 = vmand %vm2841, %vm2825
  %v2858 = vadd.s32 %v2329, 7
  %v2859 = vadd.s32 %v2361, 7
  %v2860 = vadd.s32 %v2393, 7
  %v2861 = vadd.s32 %v2425, 7
  %v2862 = vadd.s32 %v2457, 7
  %v2863 = vadd.s32 %v2489, 7
  %v2864 = vadd.s32 %v2521, 7
  %v2865 = vadd.s32 %v2553, 7
  %v2866 = vadd.s32 %v2585, 7
  %v2867 = vadd.s32 %v2617, 7
  %v2868 = vadd.s32 %v2649, 7
  %v2869 = vadd.s32 %v2681, 7
  %v2870 = vadd.s32 %v2713, 7
  %v2871 = vadd.s32 %v2745, 7
  %v2872 = vadd.s32 %v2777, 7
  %v2873 = vadd.s32 %v2809, 7
  %v2874 = vsel %vm2842, %v2858, %v2329
  %v2875 = vsel %vm2843, %v2859, %v2361
  %v2876 = vsel %vm2844, %v2860, %v2393
  %v2877 = vsel %vm2845, %v2861, %v2425
  %v2878 = vsel %vm2846, %v2862, %v2457
  %v2879 = vsel %vm2847, %v2863, %v2489
  %v2880 = vsel %vm2848, %v2864, %v2521
  %v2881 = vsel %vm2849, %v2865, %v2553
  %v2882 = vsel %vm2850, %v2866, %v2585
  %v2883 = vsel %vm2851, %v2867, %v2617
  %v2884 = vsel %vm2852, %v2868, %v2649
  %v2885 = vsel %vm2853, %v2869, %v2681
  %v2886 = vsel %vm2854, %v2870, %v2713
  %v2887 = vsel %vm2855, %v2871, %v2745
  %v2888 = vsel %vm2856, %v2872, %v2777
  %v2889 = vsel %vm2857, %v2873, %v2809
  %vm2890 = vcmp.lt.s32.totalorder %v2282, 49
  %vm2891 = vcmp.lt.s32.totalorder %v2283, 49
  %vm2892 = vcmp.lt.s32.totalorder %v2284, 49
  %vm2893 = vcmp.lt.s32.totalorder %v2285, 49
  %vm2894 = vcmp.lt.s32.totalorder %v2286, 49
  %vm2895 = vcmp.lt.s32.totalorder %v2287, 49
  %vm2896 = vcmp.lt.s32.totalorder %v2288, 49
  %vm2897 = vcmp.lt.s32.totalorder %v2289, 49
  %vm2898 = vcmp.lt.s32.totalorder %v2290, 49
  %vm2899 = vcmp.lt.s32.totalorder %v2291, 49
  %vm2900 = vcmp.lt.s32.totalorder %v2292, 49
  %vm2901 = vcmp.lt.s32.totalorder %v2293, 49
  %vm2902 = vcmp.lt.s32.totalorder %v2294, 49
  %vm2903 = vcmp.lt.s32.totalorder %v2295, 49
  %vm2904 = vcmp.lt.s32.totalorder %v2296, 49
  %vm2905 = vcmp.lt.s32.totalorder %v2297, 49
  %v2906 = vld [vmem:[#allocation2] sm:$0xff]
  %v2907 = vld [vmem:[#allocation2 + $0x8] sm:$0xff]
  %v2908 = vld [vmem:[#allocation2 + $0x10] sm:$0xff]
  %v2909 = vld [vmem:[#allocation2 + $0x18] sm:$0xff]
  %v2910 = vld [vmem:[#allocation2 + $0x20] sm:$0xff]
  %v2911 = vld [vmem:[#allocation2 + $0x28] sm:$0xff]
  %v2912 = vld [vmem:[#allocation2 + $0x30] sm:$0xff]
  %v2913 = vld [vmem:[#allocation2 + $0x38] sm:$0xff]
  %v2914 = vld [vmem:[#allocation2 + $0x40] sm:$0xff]
  %v2915 = vld [vmem:[#allocation2 + $0x48] sm:$0xff]
  %v2916 = vld [vmem:[#allocation2 + $0x50] sm:$0xff]
  %v2917 = vld [vmem:[#allocation2 + $0x58] sm:$0xff]
  %v2918 = vld [vmem:[#allocation2 + $0x60] sm:$0xff]
  %v2919 = vld [vmem:[#allocation2 + $0x68] sm:$0xff]
  %v2920 = vld [vmem:[#allocation2 + $0x70] sm:$0xff]
  %v2921 = vld [vmem:[#allocation2 + $0x78] sm:$0xff]
  %v2922 = vld [vmem:[#allocation2 + $0x80] sm:$0xff]
  %v2923 = vld [vmem:[#allocation2 + $0x88] sm:$0xff]
  %v2924 = vld [vmem:[#allocation2 + $0x90] sm:$0xff]
  %v2925 = vld [vmem:[#allocation2 + $0x98] sm:$0xff]
  %v2926 = vld [vmem:[#allocation2 + $0xa0] sm:$0xff]
  %v2927 = vld [vmem:[#allocation2 + $0xa8] sm:$0xff]
  %v2928 = vld [vmem:[#allocation2 + $0xb0] sm:$0xff]
  %v2929 = vld [vmem:[#allocation2 + $0xb8] sm:$0xff]
  %v2930 = vld [vmem:[#allocation2 + $0xc0] sm:$0xff]
  %v2931 = vld [vmem:[#allocation2 + $0xc8] sm:$0xff]
  %v2932 = vld [vmem:[#allocation2 + $0xd0] sm:$0xff]
  %v2933 = vld [vmem:[#allocation2 + $0xd8] sm:$0xff]
  %v2934 = vld [vmem:[#allocation2 + $0xe0] sm:$0xff]
  %v2935 = vld [vmem:[#allocation2 + $0xe8] sm:$0xff]
  %v2936 = vld [vmem:[#allocation2 + $0xf0] sm:$0xff]
  %v2937 = vld [vmem:[#allocation2 + $0xf8] sm:$0xff]
  %vm2938 = vcmp.ge.s32.totalorder %v2874, 2
  %vm2939 = vcmp.ge.s32.totalorder %v2875, 2
  %vm2940 = vcmp.ge.s32.totalorder %v2876, 2
  %vm2941 = vcmp.ge.s32.totalorder %v2877, 2
  %vm2942 = vcmp.ge.s32.totalorder %v2878, 2
  %vm2943 = vcmp.ge.s32.totalorder %v2879, 2
  %vm2944 = vcmp.ge.s32.totalorder %v2880, 2
  %vm2945 = vcmp.ge.s32.totalorder %v2881, 2
  %vm2946 = vcmp.ge.s32.totalorder %v2882, 2
  %vm2947 = vcmp.ge.s32.totalorder %v2883, 2
  %vm2948 = vcmp.ge.s32.totalorder %v2884, 2
  %vm2949 = vcmp.ge.s32.totalorder %v2885, 2
  %vm2950 = vcmp.ge.s32.totalorder %v2886, 2
  %vm2951 = vcmp.ge.s32.totalorder %v2887, 2
  %vm2952 = vcmp.ge.s32.totalorder %v2888, 2
  %vm2953 = vcmp.ge.s32.totalorder %v2889, 2
  %vm2954 = vmand %vm2890, %vm2938
  %vm2955 = vmand %vm2891, %vm2939
  %vm2956 = vmand %vm2892, %vm2940
  %vm2957 = vmand %vm2893, %vm2941
  %vm2958 = vmand %vm2894, %vm2942
  %vm2959 = vmand %vm2895, %vm2943
  %vm2960 = vmand %vm2896, %vm2944
  %vm2961 = vmand %vm2897, %vm2945
  %vm2962 = vmand %vm2898, %vm2946
  %vm2963 = vmand %vm2899, %vm2947
  %vm2964 = vmand %vm2900, %vm2948
  %vm2965 = vmand %vm2901, %vm2949
  %vm2966 = vmand %vm2902, %vm2950
  %vm2967 = vmand %vm2903, %vm2951
  %vm2968 = vmand %vm2904, %vm2952
  %vm2969 = vmand %vm2905, %vm2953
  %vm2970 = vcmp.le.s32.totalorder %v2874, 6
  %vm2971 = vcmp.le.s32.totalorder %v2875, 6
  %vm2972 = vcmp.le.s32.totalorder %v2876, 6
  %vm2973 = vcmp.le.s32.totalorder %v2877, 6
  %vm2974 = vcmp.le.s32.totalorder %v2878, 6
  %vm2975 = vcmp.le.s32.totalorder %v2879, 6
  %vm2976 = vcmp.le.s32.totalorder %v2880, 6
  %vm2977 = vcmp.le.s32.totalorder %v2881, 6
  %vm2978 = vcmp.le.s32.totalorder %v2882, 6
  %vm2979 = vcmp.le.s32.totalorder %v2883, 6
  %vm2980 = vcmp.le.s32.totalorder %v2884, 6
  %vm2981 = vcmp.le.s32.totalorder %v2885, 6
  %vm2982 = vcmp.le.s32.totalorder %v2886, 6
  %vm2983 = vcmp.le.s32.totalorder %v2887, 6
  %vm2984 = vcmp.le.s32.totalorder %v2888, 6
  %vm2985 = vcmp.le.s32.totalorder %v2889, 6
  %vm2986 = vmand %vm2954, %vm2970
  %vm2987 = vmand %vm2955, %vm2971
  %vm2988 = vmand %vm2956, %vm2972
  %vm2989 = vmand %vm2957, %vm2973
  %vm2990 = vmand %vm2958, %vm2974
  %vm2991 = vmand %vm2959, %vm2975
  %vm2992 = vmand %vm2960, %vm2976
  %vm2993 = vmand %vm2961, %vm2977
  %vm2994 = vmand %vm2962, %vm2978
  %vm2995 = vmand %vm2963, %vm2979
  %vm2996 = vmand %vm2964, %vm2980
  %vm2997 = vmand %vm2965, %vm2981
  %vm2998 = vmand %vm2966, %vm2982
  %vm2999 = vmand %vm2967, %vm2983
  %vm3000 = vmand %vm2968, %vm2984
  %vm3001 = vmand %vm2969, %vm2985
  %3002 = vrot.lane.b32.xlu0 %v2906, 2
  %v3003 = vpop.permute.xlu0 %3002
  %3004 = vrot.lane.b32.xlu0 %v2922, 2
  %v3005 = vpop.permute.xlu0 %3004
  %3006 = vrot.lane.b32.xlu0 %v2907, 2
  %v3007 = vpop.permute.xlu0 %3006
  %3008 = vrot.lane.b32.xlu0 %v2923, 2
  %v3009 = vpop.permute.xlu0 %3008
  %3010 = vrot.lane.b32.xlu0 %v2908, 2
  %v3011 = vpop.permute.xlu0 %3010
  %3012 = vrot.lane.b32.xlu0 %v2924, 2
  %v3013 = vpop.permute.xlu0 %3012
  %3014 = vrot.lane.b32.xlu0 %v2909, 2
  %v3015 = vpop.permute.xlu0 %3014
  %3016 = vrot.lane.b32.xlu0 %v2925, 2
  %v3017 = vpop.permute.xlu0 %3016
  %3018 = vrot.lane.b32.xlu0 %v2910, 2
  %v3019 = vpop.permute.xlu0 %3018
  %3020 = vrot.lane.b32.xlu0 %v2926, 2
  %v3021 = vpop.permute.xlu0 %3020
  %3022 = vrot.lane.b32.xlu0 %v2911, 2
  %v3023 = vpop.permute.xlu0 %3022
  %3024 = vrot.lane.b32.xlu0 %v2927, 2
  %v3025 = vpop.permute.xlu0 %3024
  %3026 = vrot.lane.b32.xlu0 %v2912, 2
  %v3027 = vpop.permute.xlu0 %3026
  %3028 = vrot.lane.b32.xlu0 %v2928, 2
  %v3029 = vpop.permute.xlu0 %3028
  %3030 = vrot.lane.b32.xlu0 %v2913, 2
  %v3031 = vpop.permute.xlu0 %3030
  %3032 = vrot.lane.b32.xlu0 %v2929, 2
  %v3033 = vpop.permute.xlu0 %3032
  %3034 = vrot.lane.b32.xlu0 %v2914, 2
  %v3035 = vpop.permute.xlu0 %3034
  %3036 = vrot.lane.b32.xlu0 %v2930, 2
  %v3037 = vpop.permute.xlu0 %3036
  %3038 = vrot.lane.b32.xlu0 %v2915, 2
  %v3039 = vpop.permute.xlu0 %3038
  %3040 = vrot.lane.b32.xlu0 %v2931, 2
  %v3041 = vpop.permute.xlu0 %3040
  %3042 = vrot.lane.b32.xlu0 %v2916, 2
  %v3043 = vpop.permute.xlu0 %3042
  %3044 = vrot.lane.b32.xlu0 %v2932, 2
  %v3045 = vpop.permute.xlu0 %3044
  %3046 = vrot.lane.b32.xlu0 %v2917, 2
  %v3047 = vpop.permute.xlu0 %3046
  %3048 = vrot.lane.b32.xlu0 %v2933, 2
  %v3049 = vpop.permute.xlu0 %3048
  %3050 = vrot.lane.b32.xlu0 %v2918, 2
  %v3051 = vpop.permute.xlu0 %3050
  %3052 = vrot.lane.b32.xlu0 %v2934, 2
  %v3053 = vpop.permute.xlu0 %3052
  %3054 = vrot.lane.b32.xlu0 %v2919, 2
  %v3055 = vpop.permute.xlu0 %3054
  %3056 = vrot.lane.b32.xlu0 %v2935, 2
  %v3057 = vpop.permute.xlu0 %3056
  %3058 = vrot.lane.b32.xlu0 %v2920, 2
  %v3059 = vpop.permute.xlu0 %3058
  %3060 = vrot.lane.b32.xlu0 %v2936, 2
  %v3061 = vpop.permute.xlu0 %3060
  %3062 = vrot.lane.b32.xlu0 %v2921, 2
  %v3063 = vpop.permute.xlu0 %3062
  %3064 = vrot.lane.b32.xlu0 %v2937, 2
  %v3065 = vpop.permute.xlu0 %3064
  %vm3066 = vcmp.lt.s32.totalorder %v2090, 2
  %v3067 = vsel %vm3066, %v3059, %v3063
  %v3068 = vsel %vm3066, %v3061, %v3065
  %v3069 = vsel %vm3066, %v3055, %v3059
  %v3070 = vsel %vm3066, %v3057, %v3061
  %v3071 = vsel %vm3066, %v3051, %v3055
  %v3072 = vsel %vm3066, %v3053, %v3057
  %v3073 = vsel %vm3066, %v3047, %v3051
  %v3074 = vsel %vm3066, %v3049, %v3053
  %v3075 = vsel %vm3066, %v3043, %v3047
  %v3076 = vsel %vm3066, %v3045, %v3049
  %v3077 = vsel %vm3066, %v3039, %v3043
  %v3078 = vsel %vm3066, %v3041, %v3045
  %v3079 = vsel %vm3066, %v3035, %v3039
  %v3080 = vsel %vm3066, %v3037, %v3041
  %v3081 = vsel %vm3066, %v3031, %v3035
  %v3082 = vsel %vm3066, %v3033, %v3037
  %v3083 = vsel %vm3066, %v3027, %v3031
  %v3084 = vsel %vm3066, %v3029, %v3033
  %v3085 = vsel %vm3066, %v3023, %v3027
  %v3086 = vsel %vm3066, %v3025, %v3029
  %v3087 = vsel %vm3066, %v3019, %v3023
  %v3088 = vsel %vm3066, %v3021, %v3025
  %v3089 = vsel %vm3066, %v3015, %v3019
  %v3090 = vsel %vm3066, %v3017, %v3021
  %v3091 = vsel %vm3066, %v3011, %v3015
  %v3092 = vsel %vm3066, %v3013, %v3017
  %v3093 = vsel %vm3066, %v3007, %v3011
  %v3094 = vsel %vm3066, %v3009, %v3013
  %v3095 = vsel %vm3066, %v3003, %v3007
  %v3096 = vsel %vm3066, %v3005, %v3009
  %v3097 = vsel %vm3066, %v3063, %v3003
  %v3098 = vsel %vm3066, %v3065, %v3005
  %v3099 = vsel %vm2986, 1, 0
  %v3100 = vsel %vm2987, 1, 0
  %v3101 = vsel %vm2988, 1, 0
  %v3102 = vsel %vm2989, 1, 0
  %v3103 = vsel %vm2990, 1, 0
  %v3104 = vsel %vm2991, 1, 0
  %v3105 = vsel %vm2992, 1, 0
  %v3106 = vsel %vm2993, 1, 0
  %v3107 = vsel %vm2994, 1, 0
  %v3108 = vsel %vm2995, 1, 0
  %v3109 = vsel %vm2996, 1, 0
  %v3110 = vsel %vm2997, 1, 0
  %v3111 = vsel %vm2998, 1, 0
  %v3112 = vsel %vm2999, 1, 0
  %v3113 = vsel %vm3000, 1, 0
  %v3114 = vsel %vm3001, 1, 0
  %vm3115 = vcmp.eq.s32.totalorder %v3099, 1
  %vm3116 = vcmp.eq.s32.totalorder %v3100, 1
  %vm3117 = vcmp.eq.s32.totalorder %v3101, 1
  %vm3118 = vcmp.eq.s32.totalorder %v3102, 1
  %vm3119 = vcmp.eq.s32.totalorder %v3103, 1
  %vm3120 = vcmp.eq.s32.totalorder %v3104, 1
  %vm3121 = vcmp.eq.s32.totalorder %v3105, 1
  %vm3122 = vcmp.eq.s32.totalorder %v3106, 1
  %vm3123 = vcmp.eq.s32.totalorder %v3107, 1
  %vm3124 = vcmp.eq.s32.totalorder %v3108, 1
  %vm3125 = vcmp.eq.s32.totalorder %v3109, 1
  %vm3126 = vcmp.eq.s32.totalorder %v3110, 1
  %vm3127 = vcmp.eq.s32.totalorder %v3111, 1
  %vm3128 = vcmp.eq.s32.totalorder %v3112, 1
  %vm3129 = vcmp.eq.s32.totalorder %v3113, 1
  %vm3130 = vcmp.eq.s32.totalorder %v3114, 1
  %v3131 = vsel %vm3115, %v3097, 0.0
  %v3132 = vsel %vm3116, %v3095, 0.0
  %v3133 = vsel %vm3117, %v3093, 0.0
  %v3134 = vsel %vm3118, %v3091, 0.0
  %v3135 = vsel %vm3119, %v3089, 0.0
  %v3136 = vsel %vm3120, %v3087, 0.0
  %v3137 = vsel %vm3121, %v3085, 0.0
  %v3138 = vsel %vm3122, %v3083, 0.0
  %v3139 = vsel %vm3123, %v3081, 0.0
  %v3140 = vsel %vm3124, %v3079, 0.0
  %v3141 = vsel %vm3125, %v3077, 0.0
  %v3142 = vsel %vm3126, %v3075, 0.0
  %v3143 = vsel %vm3127, %v3073, 0.0
  %v3144 = vsel %vm3128, %v3071, 0.0
  %v3145 = vsel %vm3129, %v3069, 0.0
  %v3146 = vsel %vm3130, %v3067, 0.0
  %v3147 = vsel %vm3115, %v3098, 0.0
  %v3148 = vsel %vm3116, %v3096, 0.0
  %v3149 = vsel %vm3117, %v3094, 0.0
  %v3150 = vsel %vm3118, %v3092, 0.0
  %v3151 = vsel %vm3119, %v3090, 0.0
  %v3152 = vsel %vm3120, %v3088, 0.0
  %v3153 = vsel %vm3121, %v3086, 0.0
  %v3154 = vsel %vm3122, %v3084, 0.0
  %v3155 = vsel %vm3123, %v3082, 0.0
  %v3156 = vsel %vm3124, %v3080, 0.0
  %v3157 = vsel %vm3125, %v3078, 0.0
  %v3158 = vsel %vm3126, %v3076, 0.0
  %v3159 = vsel %vm3127, %v3074, 0.0
  %v3160 = vsel %vm3128, %v3072, 0.0
  %v3161 = vsel %vm3129, %v3070, 0.0
  %v3162 = vsel %vm3130, %v3068, 0.0
  %3163 = vst [vmem:[#allocation3] sm:$0xff] %v3131
  %3164 = vst [vmem:[#allocation3 + $0x8] sm:$0xff] %v3132
  %3165 = vst [vmem:[#allocation3 + $0x10] sm:$0xff] %v3133
  %3166 = vst [vmem:[#allocation3 + $0x18] sm:$0xff] %v3134
  %3167 = vst [vmem:[#allocation3 + $0x20] sm:$0xff] %v3135
  %3168 = vst [vmem:[#allocation3 + $0x28] sm:$0xff] %v3136
  %3169 = vst [vmem:[#allocation3 + $0x30] sm:$0xff] %v3137
  %3170 = vst [vmem:[#allocation3 + $0x38] sm:$0xff] %v3138
  %3171 = vst [vmem:[#allocation3 + $0x40] sm:$0xff] %v3139
  %3172 = vst [vmem:[#allocation3 + $0x48] sm:$0xff] %v3140
  %3173 = vst [vmem:[#allocation3 + $0x50] sm:$0xff] %v3141
  %3174 = vst [vmem:[#allocation3 + $0x58] sm:$0xff] %v3142
  %3175 = vst [vmem:[#allocation3 + $0x60] sm:$0xff] %v3143
  %3176 = vst [vmem:[#allocation3 + $0x68] sm:$0xff] %v3144
  %3177 = vst [vmem:[#allocation3 + $0x70] sm:$0xff] %v3145
  %3178 = vst [vmem:[#allocation3 + $0x78] sm:$0xff] %v3146
  %3179 = vst [vmem:[#allocation3 + $0x80] sm:$0xff] %v3147
  %3180 = vst [vmem:[#allocation3 + $0x88] sm:$0xff] %v3148
  %3181 = vst [vmem:[#allocation3 + $0x90] sm:$0xff] %v3149
  %3182 = vst [vmem:[#allocation3 + $0x98] sm:$0xff] %v3150
  %3183 = vst [vmem:[#allocation3 + $0xa0] sm:$0xff] %v3151
  %3184 = vst [vmem:[#allocation3 + $0xa8] sm:$0xff] %v3152
  %3185 = vst [vmem:[#allocation3 + $0xb0] sm:$0xff] %v3153
  %3186 = vst [vmem:[#allocation3 + $0xb8] sm:$0xff] %v3154
  %3187 = vst [vmem:[#allocation3 + $0xc0] sm:$0xff] %v3155
  %3188 = vst [vmem:[#allocation3 + $0xc8] sm:$0xff] %v3156
  %3189 = vst [vmem:[#allocation3 + $0xd0] sm:$0xff] %v3157
  %3190 = vst [vmem:[#allocation3 + $0xd8] sm:$0xff] %v3158
  %3191 = vst [vmem:[#allocation3 + $0xe0] sm:$0xff] %v3159
  %3192 = vst [vmem:[#allocation3 + $0xe8] sm:$0xff] %v3160
  %3193 = vst [vmem:[#allocation3 + $0xf0] sm:$0xff] %v3161
  %3194 = vst [vmem:[#allocation3 + $0xf8] sm:$0xff] %v3162
  %vm3195 = vcmp.ge.s32.totalorder %v2874, 1
  %vm3196 = vcmp.ge.s32.totalorder %v2875, 1
  %vm3197 = vcmp.ge.s32.totalorder %v2876, 1
  %vm3198 = vcmp.ge.s32.totalorder %v2877, 1
  %vm3199 = vcmp.ge.s32.totalorder %v2878, 1
  %vm3200 = vcmp.ge.s32.totalorder %v2879, 1
  %vm3201 = vcmp.ge.s32.totalorder %v2880, 1
  %vm3202 = vcmp.ge.s32.totalorder %v2881, 1
  %vm3203 = vcmp.ge.s32.totalorder %v2882, 1
  %vm3204 = vcmp.ge.s32.totalorder %v2883, 1
  %vm3205 = vcmp.ge.s32.totalorder %v2884, 1
  %vm3206 = vcmp.ge.s32.totalorder %v2885, 1
  %vm3207 = vcmp.ge.s32.totalorder %v2886, 1
  %vm3208 = vcmp.ge.s32.totalorder %v2887, 1
  %vm3209 = vcmp.ge.s32.totalorder %v2888, 1
  %vm3210 = vcmp.ge.s32.totalorder %v2889, 1
  %vm3211 = vmand %vm2890, %vm3195
  %vm3212 = vmand %vm2891, %vm3196
  %vm3213 = vmand %vm2892, %vm3197
  %vm3214 = vmand %vm2893, %vm3198
  %vm3215 = vmand %vm2894, %vm3199
  %vm3216 = vmand %vm2895, %vm3200
  %vm3217 = vmand %vm2896, %vm3201
  %vm3218 = vmand %vm2897, %vm3202
  %vm3219 = vmand %vm2898, %vm3203
  %vm3220 = vmand %vm2899, %vm3204
  %vm3221 = vmand %vm2900, %vm3205
  %vm3222 = vmand %vm2901, %vm3206
  %vm3223 = vmand %vm2902, %vm3207
  %vm3224 = vmand %vm2903, %vm3208
  %vm3225 = vmand %vm2904, %vm3209
  %vm3226 = vmand %vm2905, %vm3210
  %vm3227 = vmand %vm3211, %vm2970
  %vm3228 = vmand %vm3212, %vm2971
  %vm3229 = vmand %vm3213, %vm2972
  %vm3230 = vmand %vm3214, %vm2973
  %vm3231 = vmand %vm3215, %vm2974
  %vm3232 = vmand %vm3216, %vm2975
  %vm3233 = vmand %vm3217, %vm2976
  %vm3234 = vmand %vm3218, %vm2977
  %vm3235 = vmand %vm3219, %vm2978
  %vm3236 = vmand %vm3220, %vm2979
  %vm3237 = vmand %vm3221, %vm2980
  %vm3238 = vmand %vm3222, %vm2981
  %vm3239 = vmand %vm3223, %vm2982
  %vm3240 = vmand %vm3224, %vm2983
  %vm3241 = vmand %vm3225, %vm2984
  %vm3242 = vmand %vm3226, %vm2985
  %3243 = vrot.lane.b32.xlu0 %v2906, 1
  %v3244 = vpop.permute.xlu0 %3243
  %3245 = vrot.lane.b32.xlu0 %v2922, 1
  %v3246 = vpop.permute.xlu0 %3245
  %3247 = vrot.lane.b32.xlu0 %v2907, 1
  %v3248 = vpop.permute.xlu0 %3247
  %3249 = vrot.lane.b32.xlu0 %v2923, 1
  %v3250 = vpop.permute.xlu0 %3249
  %3251 = vrot.lane.b32.xlu0 %v2908, 1
  %v3252 = vpop.permute.xlu0 %3251
  %3253 = vrot.lane.b32.xlu0 %v2924, 1
  %v3254 = vpop.permute.xlu0 %3253
  %3255 = vrot.lane.b32.xlu0 %v2909, 1
  %v3256 = vpop.permute.xlu0 %3255
  %3257 = vrot.lane.b32.xlu0 %v2925, 1
  %v3258 = vpop.permute.xlu0 %3257
  %3259 = vrot.lane.b32.xlu0 %v2910, 1
  %v3260 = vpop.permute.xlu0 %3259
  %3261 = vrot.lane.b32.xlu0 %v2926, 1
  %v3262 = vpop.permute.xlu0 %3261
  %3263 = vrot.lane.b32.xlu0 %v2911, 1
  %v3264 = vpop.permute.xlu0 %3263
  %3265 = vrot.lane.b32.xlu0 %v2927, 1
  %v3266 = vpop.permute.xlu0 %3265
  %3267 = vrot.lane.b32.xlu0 %v2912, 1
  %v3268 = vpop.permute.xlu0 %3267
  %3269 = vrot.lane.b32.xlu0 %v2928, 1
  %v3270 = vpop.permute.xlu0 %3269
  %3271 = vrot.lane.b32.xlu0 %v2913, 1
  %v3272 = vpop.permute.xlu0 %3271
  %3273 = vrot.lane.b32.xlu0 %v2929, 1
  %v3274 = vpop.permute.xlu0 %3273
  %3275 = vrot.lane.b32.xlu0 %v2914, 1
  %v3276 = vpop.permute.xlu0 %3275
  %3277 = vrot.lane.b32.xlu0 %v2930, 1
  %v3278 = vpop.permute.xlu0 %3277
  %3279 = vrot.lane.b32.xlu0 %v2915, 1
  %v3280 = vpop.permute.xlu0 %3279
  %3281 = vrot.lane.b32.xlu0 %v2931, 1
  %v3282 = vpop.permute.xlu0 %3281
  %3283 = vrot.lane.b32.xlu0 %v2916, 1
  %v3284 = vpop.permute.xlu0 %3283
  %3285 = vrot.lane.b32.xlu0 %v2932, 1
  %v3286 = vpop.permute.xlu0 %3285
  %3287 = vrot.lane.b32.xlu0 %v2917, 1
  %v3288 = vpop.permute.xlu0 %3287
  %3289 = vrot.lane.b32.xlu0 %v2933, 1
  %v3290 = vpop.permute.xlu0 %3289
  %3291 = vrot.lane.b32.xlu0 %v2918, 1
  %v3292 = vpop.permute.xlu0 %3291
  %3293 = vrot.lane.b32.xlu0 %v2934, 1
  %v3294 = vpop.permute.xlu0 %3293
  %3295 = vrot.lane.b32.xlu0 %v2919, 1
  %v3296 = vpop.permute.xlu0 %3295
  %3297 = vrot.lane.b32.xlu0 %v2935, 1
  %v3298 = vpop.permute.xlu0 %3297
  %3299 = vrot.lane.b32.xlu0 %v2920, 1
  %v3300 = vpop.permute.xlu0 %3299
  %3301 = vrot.lane.b32.xlu0 %v2936, 1
  %v3302 = vpop.permute.xlu0 %3301
  %3303 = vrot.lane.b32.xlu0 %v2921, 1
  %v3304 = vpop.permute.xlu0 %3303
  %3305 = vrot.lane.b32.xlu0 %v2937, 1
  %v3306 = vpop.permute.xlu0 %3305
  %vm3307 = vcmp.lt.s32.totalorder %v2090, 1
  %v3308 = vsel %vm3307, %v3300, %v3304
  %v3309 = vsel %vm3307, %v3302, %v3306
  %v3310 = vsel %vm3307, %v3296, %v3300
  %v3311 = vsel %vm3307, %v3298, %v3302
  %v3312 = vsel %vm3307, %v3292, %v3296
  %v3313 = vsel %vm3307, %v3294, %v3298
  %v3314 = vsel %vm3307, %v3288, %v3292
  %v3315 = vsel %vm3307, %v3290, %v3294
  %v3316 = vsel %vm3307, %v3284, %v3288
  %v3317 = vsel %vm3307, %v3286, %v3290
  %v3318 = vsel %vm3307, %v3280, %v3284
  %v3319 = vsel %vm3307, %v3282, %v3286
  %v3320 = vsel %vm3307, %v3276, %v3280
  %v3321 = vsel %vm3307, %v3278, %v3282
  %v3322 = vsel %vm3307, %v3272, %v3276
  %v3323 = vsel %vm3307, %v3274, %v3278
  %v3324 = vsel %vm3307, %v3268, %v3272
  %v3325 = vsel %vm3307, %v3270, %v3274
  %v3326 = vsel %vm3307, %v3264, %v3268
  %v3327 = vsel %vm3307, %v3266, %v3270
  %v3328 = vsel %vm3307, %v3260, %v3264
  %v3329 = vsel %vm3307, %v3262, %v3266
  %v3330 = vsel %vm3307, %v3256, %v3260
  %v3331 = vsel %vm3307, %v3258, %v3262
  %v3332 = vsel %vm3307, %v3252, %v3256
  %v3333 = vsel %vm3307, %v3254, %v3258
  %v3334 = vsel %vm3307, %v3248, %v3252
  %v3335 = vsel %vm3307, %v3250, %v3254
  %v3336 = vsel %vm3307, %v3244, %v3248
  %v3337 = vsel %vm3307, %v3246, %v3250
  %v3338 = vsel %vm3307, %v3304, %v3244
  %v3339 = vsel %vm3307, %v3306, %v3246
  %v3340 = vsel %vm3227, 1, 0
  %v3341 = vsel %vm3228, 1, 0
  %v3342 = vsel %vm3229, 1, 0
  %v3343 = vsel %vm3230, 1, 0
  %v3344 = vsel %vm3231, 1, 0
  %v3345 = vsel %vm3232, 1, 0
  %v3346 = vsel %vm3233, 1, 0
  %v3347 = vsel %vm3234, 1, 0
  %v3348 = vsel %vm3235, 1, 0
  %v3349 = vsel %vm3236, 1, 0
  %v3350 = vsel %vm3237, 1, 0
  %v3351 = vsel %vm3238, 1, 0
  %v3352 = vsel %vm3239, 1, 0
  %v3353 = vsel %vm3240, 1, 0
  %v3354 = vsel %vm3241, 1, 0
  %v3355 = vsel %vm3242, 1, 0
  %vm3356 = vcmp.eq.s32.totalorder %v3340, 1
  %vm3357 = vcmp.eq.s32.totalorder %v3341, 1
  %vm3358 = vcmp.eq.s32.totalorder %v3342, 1
  %vm3359 = vcmp.eq.s32.totalorder %v3343, 1
  %vm3360 = vcmp.eq.s32.totalorder %v3344, 1
  %vm3361 = vcmp.eq.s32.totalorder %v3345, 1
  %vm3362 = vcmp.eq.s32.totalorder %v3346, 1
  %vm3363 = vcmp.eq.s32.totalorder %v3347, 1
  %vm3364 = vcmp.eq.s32.totalorder %v3348, 1
  %vm3365 = vcmp.eq.s32.totalorder %v3349, 1
  %vm3366 = vcmp.eq.s32.totalorder %v3350, 1
  %vm3367 = vcmp.eq.s32.totalorder %v3351, 1
  %vm3368 = vcmp.eq.s32.totalorder %v3352, 1
  %vm3369 = vcmp.eq.s32.totalorder %v3353, 1
  %vm3370 = vcmp.eq.s32.totalorder %v3354, 1
  %vm3371 = vcmp.eq.s32.totalorder %v3355, 1
  %v3372 = vsel %vm3356, %v3338, 0.0
  %v3373 = vsel %vm3357, %v3336, 0.0
  %v3374 = vsel %vm3358, %v3334, 0.0
  %v3375 = vsel %vm3359, %v3332, 0.0
  %v3376 = vsel %vm3360, %v3330, 0.0
  %v3377 = vsel %vm3361, %v3328, 0.0
  %v3378 = vsel %vm3362, %v3326, 0.0
  %v3379 = vsel %vm3363, %v3324, 0.0
  %v3380 = vsel %vm3364, %v3322, 0.0
  %v3381 = vsel %vm3365, %v3320, 0.0
  %v3382 = vsel %vm3366, %v3318, 0.0
  %v3383 = vsel %vm3367, %v3316, 0.0
  %v3384 = vsel %vm3368, %v3314, 0.0
  %v3385 = vsel %vm3369, %v3312, 0.0
  %v3386 = vsel %vm3370, %v3310, 0.0
  %v3387 = vsel %vm3371, %v3308, 0.0
  %v3388 = vsel %vm3356, %v3339, 0.0
  %v3389 = vsel %vm3357, %v3337, 0.0
  %v3390 = vsel %vm3358, %v3335, 0.0
  %v3391 = vsel %vm3359, %v3333, 0.0
  %v3392 = vsel %vm3360, %v3331, 0.0
  %v3393 = vsel %vm3361, %v3329, 0.0
  %v3394 = vsel %vm3362, %v3327, 0.0
  %v3395 = vsel %vm3363, %v3325, 0.0
  %v3396 = vsel %vm3364, %v3323, 0.0
  %v3397 = vsel %vm3365, %v3321, 0.0
  %v3398 = vsel %vm3366, %v3319, 0.0
  %v3399 = vsel %vm3367, %v3317, 0.0
  %v3400 = vsel %vm3368, %v3315, 0.0
  %v3401 = vsel %vm3369, %v3313, 0.0
  %v3402 = vsel %vm3370, %v3311, 0.0
  %v3403 = vsel %vm3371, %v3309, 0.0
  %3404 = vst [vmem:[#allocation3 + $0x100] sm:$0xff] %v3372
  %3405 = vst [vmem:[#allocation3 + $0x108] sm:$0xff] %v3373
  %3406 = vst [vmem:[#allocation3 + $0x110] sm:$0xff] %v3374
  %3407 = vst [vmem:[#allocation3 + $0x118] sm:$0xff] %v3375
  %3408 = vst [vmem:[#allocation3 + $0x120] sm:$0xff] %v3376
  %3409 = vst [vmem:[#allocation3 + $0x128] sm:$0xff] %v3377
  %3410 = vst [vmem:[#allocation3 + $0x130] sm:$0xff] %v3378
  %3411 = vst [vmem:[#allocation3 + $0x138] sm:$0xff] %v3379
  %3412 = vst [vmem:[#allocation3 + $0x140] sm:$0xff] %v3380
  %3413 = vst [vmem:[#allocation3 + $0x148] sm:$0xff] %v3381
  %3414 = vst [vmem:[#allocation3 + $0x150] sm:$0xff] %v3382
  %3415 = vst [vmem:[#allocation3 + $0x158] sm:$0xff] %v3383
  %3416 = vst [vmem:[#allocation3 + $0x160] sm:$0xff] %v3384
  %3417 = vst [vmem:[#allocation3 + $0x168] sm:$0xff] %v3385
  %3418 = vst [vmem:[#allocation3 + $0x170] sm:$0xff] %v3386
  %3419 = vst [vmem:[#allocation3 + $0x178] sm:$0xff] %v3387
  %3420 = vst [vmem:[#allocation3 + $0x180] sm:$0xff] %v3388
  %3421 = vst [vmem:[#allocation3 + $0x188] sm:$0xff] %v3389
  %3422 = vst [vmem:[#allocation3 + $0x190] sm:$0xff] %v3390
  %3423 = vst [vmem:[#allocation3 + $0x198] sm:$0xff] %v3391
  %3424 = vst [vmem:[#allocation3 + $0x1a0] sm:$0xff] %v3392
  %3425 = vst [vmem:[#allocation3 + $0x1a8] sm:$0xff] %v3393
  %3426 = vst [vmem:[#allocation3 + $0x1b0] sm:$0xff] %v3394
  %3427 = vst [vmem:[#allocation3 + $0x1b8] sm:$0xff] %v3395
  %3428 = vst [vmem:[#allocation3 + $0x1c0] sm:$0xff] %v3396
  %3429 = vst [vmem:[#allocation3 + $0x1c8] sm:$0xff] %v3397
  %3430 = vst [vmem:[#allocation3 + $0x1d0] sm:$0xff] %v3398
  %3431 = vst [vmem:[#allocation3 + $0x1d8] sm:$0xff] %v3399
  %3432 = vst [vmem:[#allocation3 + $0x1e0] sm:$0xff] %v3400
  %3433 = vst [vmem:[#allocation3 + $0x1e8] sm:$0xff] %v3401
  %3434 = vst [vmem:[#allocation3 + $0x1f0] sm:$0xff] %v3402
  %3435 = vst [vmem:[#allocation3 + $0x1f8] sm:$0xff] %v3403
  %vm3436 = vcmp.ge.s32.totalorder %v2874, 0
  %vm3437 = vcmp.ge.s32.totalorder %v2875, 0
  %vm3438 = vcmp.ge.s32.totalorder %v2876, 0
  %vm3439 = vcmp.ge.s32.totalorder %v2877, 0
  %vm3440 = vcmp.ge.s32.totalorder %v2878, 0
  %vm3441 = vcmp.ge.s32.totalorder %v2879, 0
  %vm3442 = vcmp.ge.s32.totalorder %v2880, 0
  %vm3443 = vcmp.ge.s32.totalorder %v2881, 0
  %vm3444 = vcmp.ge.s32.totalorder %v2882, 0
  %vm3445 = vcmp.ge.s32.totalorder %v2883, 0
  %vm3446 = vcmp.ge.s32.totalorder %v2884, 0
  %vm3447 = vcmp.ge.s32.totalorder %v2885, 0
  %vm3448 = vcmp.ge.s32.totalorder %v2886, 0
  %vm3449 = vcmp.ge.s32.totalorder %v2887, 0
  %vm3450 = vcmp.ge.s32.totalorder %v2888, 0
  %vm3451 = vcmp.ge.s32.totalorder %v2889, 0
  %vm3452 = vmand %vm2890, %vm3436
  %vm3453 = vmand %vm2891, %vm3437
  %vm3454 = vmand %vm2892, %vm3438
  %vm3455 = vmand %vm2893, %vm3439
  %vm3456 = vmand %vm2894, %vm3440
  %vm3457 = vmand %vm2895, %vm3441
  %vm3458 = vmand %vm2896, %vm3442
  %vm3459 = vmand %vm2897, %vm3443
  %vm3460 = vmand %vm2898, %vm3444
  %vm3461 = vmand %vm2899, %vm3445
  %vm3462 = vmand %vm2900, %vm3446
  %vm3463 = vmand %vm2901, %vm3447
  %vm3464 = vmand %vm2902, %vm3448
  %vm3465 = vmand %vm2903, %vm3449
  %vm3466 = vmand %vm2904, %vm3450
  %vm3467 = vmand %vm2905, %vm3451
  %vm3468 = vcmp.le.s32.totalorder %v2874, 5
  %vm3469 = vcmp.le.s32.totalorder %v2875, 5
  %vm3470 = vcmp.le.s32.totalorder %v2876, 5
  %vm3471 = vcmp.le.s32.totalorder %v2877, 5
  %vm3472 = vcmp.le.s32.totalorder %v2878, 5
  %vm3473 = vcmp.le.s32.totalorder %v2879, 5
  %vm3474 = vcmp.le.s32.totalorder %v2880, 5
  %vm3475 = vcmp.le.s32.totalorder %v2881, 5
  %vm3476 = vcmp.le.s32.totalorder %v2882, 5
  %vm3477 = vcmp.le.s32.totalorder %v2883, 5
  %vm3478 = vcmp.le.s32.totalorder %v2884, 5
  %vm3479 = vcmp.le.s32.totalorder %v2885, 5
  %vm3480 = vcmp.le.s32.totalorder %v2886, 5
  %vm3481 = vcmp.le.s32.totalorder %v2887, 5
  %vm3482 = vcmp.le.s32.totalorder %v2888, 5
  %vm3483 = vcmp.le.s32.totalorder %v2889, 5
  %vm3484 = vmand %vm3452, %vm3468
  %vm3485 = vmand %vm3453, %vm3469
  %vm3486 = vmand %vm3454, %vm3470
  %vm3487 = vmand %vm3455, %vm3471
  %vm3488 = vmand %vm3456, %vm3472
  %vm3489 = vmand %vm3457, %vm3473
  %vm3490 = vmand %vm3458, %vm3474
  %vm3491 = vmand %vm3459, %vm3475
  %vm3492 = vmand %vm3460, %vm3476
  %vm3493 = vmand %vm3461, %vm3477
  %vm3494 = vmand %vm3462, %vm3478
  %vm3495 = vmand %vm3463, %vm3479
  %vm3496 = vmand %vm3464, %vm3480
  %vm3497 = vmand %vm3465, %vm3481
  %vm3498 = vmand %vm3466, %vm3482
  %vm3499 = vmand %vm3467, %vm3483
  %v3500 = vsel %vm3484, 1, 0
  %v3501 = vsel %vm3485, 1, 0
  %v3502 = vsel %vm3486, 1, 0
  %v3503 = vsel %vm3487, 1, 0
  %v3504 = vsel %vm3488, 1, 0
  %v3505 = vsel %vm3489, 1, 0
  %v3506 = vsel %vm3490, 1, 0
  %v3507 = vsel %vm3491, 1, 0
  %v3508 = vsel %vm3492, 1, 0
  %v3509 = vsel %vm3493, 1, 0
  %v3510 = vsel %vm3494, 1, 0
  %v3511 = vsel %vm3495, 1, 0
  %v3512 = vsel %vm3496, 1, 0
  %v3513 = vsel %vm3497, 1, 0
  %v3514 = vsel %vm3498, 1, 0
  %v3515 = vsel %vm3499, 1, 0
  %vm3516 = vcmp.eq.s32.totalorder %v3500, 1
  %vm3517 = vcmp.eq.s32.totalorder %v3501, 1
  %vm3518 = vcmp.eq.s32.totalorder %v3502, 1
  %vm3519 = vcmp.eq.s32.totalorder %v3503, 1
  %vm3520 = vcmp.eq.s32.totalorder %v3504, 1
  %vm3521 = vcmp.eq.s32.totalorder %v3505, 1
  %vm3522 = vcmp.eq.s32.totalorder %v3506, 1
  %vm3523 = vcmp.eq.s32.totalorder %v3507, 1
  %vm3524 = vcmp.eq.s32.totalorder %v3508, 1
  %vm3525 = vcmp.eq.s32.totalorder %v3509, 1
  %vm3526 = vcmp.eq.s32.totalorder %v3510, 1
  %vm3527 = vcmp.eq.s32.totalorder %v3511, 1
  %vm3528 = vcmp.eq.s32.totalorder %v3512, 1
  %vm3529 = vcmp.eq.s32.totalorder %v3513, 1
  %vm3530 = vcmp.eq.s32.totalorder %v3514, 1
  %vm3531 = vcmp.eq.s32.totalorder %v3515, 1
  %v3532 = vsel %vm3516, %v2906, 0.0
  %v3533 = vsel %vm3517, %v2907, 0.0
  %v3534 = vsel %vm3518, %v2908, 0.0
  %v3535 = vsel %vm3519, %v2909, 0.0
  %v3536 = vsel %vm3520, %v2910, 0.0
  %v3537 = vsel %vm3521, %v2911, 0.0
  %v3538 = vsel %vm3522, %v2912, 0.0
  %v3539 = vsel %vm3523, %v2913, 0.0
  %v3540 = vsel %vm3524, %v2914, 0.0
  %v3541 = vsel %vm3525, %v2915, 0.0
  %v3542 = vsel %vm3526, %v2916, 0.0
  %v3543 = vsel %vm3527, %v2917, 0.0
  %v3544 = vsel %vm3528, %v2918, 0.0
  %v3545 = vsel %vm3529, %v2919, 0.0
  %v3546 = vsel %vm3530, %v2920, 0.0
  %v3547 = vsel %vm3531, %v2921, 0.0
  %v3548 = vsel %vm3516, %v2922, 0.0
  %v3549 = vsel %vm3517, %v2923, 0.0
  %v3550 = vsel %vm3518, %v2924, 0.0
  %v3551 = vsel %vm3519, %v2925, 0.0
  %v3552 = vsel %vm3520, %v2926, 0.0
  %v3553 = vsel %vm3521, %v2927, 0.0
  %v3554 = vsel %vm3522, %v2928, 0.0
  %v3555 = vsel %vm3523, %v2929, 0.0
  %v3556 = vsel %vm3524, %v2930, 0.0
  %v3557 = vsel %vm3525, %v2931, 0.0
  %v3558 = vsel %vm3526, %v2932, 0.0
  %v3559 = vsel %vm3527, %v2933, 0.0
  %v3560 = vsel %vm3528, %v2934, 0.0
  %v3561 = vsel %vm3529, %v2935, 0.0
  %v3562 = vsel %vm3530, %v2936, 0.0
  %v3563 = vsel %vm3531, %v2937, 0.0
  %3564 = vst [vmem:[#allocation3 + $0x200] sm:$0xff] %v3532
  %3565 = vst [vmem:[#allocation3 + $0x208] sm:$0xff] %v3533
  %3566 = vst [vmem:[#allocation3 + $0x210] sm:$0xff] %v3534
  %3567 = vst [vmem:[#allocation3 + $0x218] sm:$0xff] %v3535
  %3568 = vst [vmem:[#allocation3 + $0x220] sm:$0xff] %v3536
  %3569 = vst [vmem:[#allocation3 + $0x228] sm:$0xff] %v3537
  %3570 = vst [vmem:[#allocation3 + $0x230] sm:$0xff] %v3538
  %3571 = vst [vmem:[#allocation3 + $0x238] sm:$0xff] %v3539
  %3572 = vst [vmem:[#allocation3 + $0x240] sm:$0xff] %v3540
  %3573 = vst [vmem:[#allocation3 + $0x248] sm:$0xff] %v3541
  %3574 = vst [vmem:[#allocation3 + $0x250] sm:$0xff] %v3542
  %3575 = vst [vmem:[#allocation3 + $0x258] sm:$0xff] %v3543
  %3576 = vst [vmem:[#allocation3 + $0x260] sm:$0xff] %v3544
  %3577 = vst [vmem:[#allocation3 + $0x268] sm:$0xff] %v3545
  %3578 = vst [vmem:[#allocation3 + $0x270] sm:$0xff] %v3546
  %3579 = vst [vmem:[#allocation3 + $0x278] sm:$0xff] %v3547
  %3580 = vst [vmem:[#allocation3 + $0x280] sm:$0xff] %v3548
  %3581 = vst [vmem:[#allocation3 + $0x288] sm:$0xff] %v3549
  %3582 = vst [vmem:[#allocation3 + $0x290] sm:$0xff] %v3550
  %3583 = vst [vmem:[#allocation3 + $0x298] sm:$0xff] %v3551
  %3584 = vst [vmem:[#allocation3 + $0x2a0] sm:$0xff] %v3552
  %3585 = vst [vmem:[#allocation3 + $0x2a8] sm:$0xff] %v3553
  %3586 = vst [vmem:[#allocation3 + $0x2b0] sm:$0xff] %v3554
  %3587 = vst [vmem:[#allocation3 + $0x2b8] sm:$0xff] %v3555
  %3588 = vst [vmem:[#allocation3 + $0x2c0] sm:$0xff] %v3556
  %3589 = vst [vmem:[#allocation3 + $0x2c8] sm:$0xff] %v3557
  %3590 = vst [vmem:[#allocation3 + $0x2d0] sm:$0xff] %v3558
  %3591 = vst [vmem:[#allocation3 + $0x2d8] sm:$0xff] %v3559
  %3592 = vst [vmem:[#allocation3 + $0x2e0] sm:$0xff] %v3560
  %3593 = vst [vmem:[#allocation3 + $0x2e8] sm:$0xff] %v3561
  %3594 = vst [vmem:[#allocation3 + $0x2f0] sm:$0xff] %v3562
  %3595 = vst [vmem:[#allocation3 + $0x2f8] sm:$0xff] %v3563
  %3596 = vst [vmem:[#allocation3 + $0x300] sm:$0xff] %v3372
  %3597 = vst [vmem:[#allocation3 + $0x308] sm:$0xff] %v3373
  %3598 = vst [vmem:[#allocation3 + $0x310] sm:$0xff] %v3374
  %3599 = vst [vmem:[#allocation3 + $0x318] sm:$0xff] %v3375
  %3600 = vst [vmem:[#allocation3 + $0x320] sm:$0xff] %v3376
  %3601 = vst [vmem:[#allocation3 + $0x328] sm:$0xff] %v3377
  %3602 = vst [vmem:[#allocation3 + $0x330] sm:$0xff] %v3378
  %3603 = vst [vmem:[#allocation3 + $0x338] sm:$0xff] %v3379
  %3604 = vst [vmem:[#allocation3 + $0x340] sm:$0xff] %v3380
  %3605 = vst [vmem:[#allocation3 + $0x348] sm:$0xff] %v3381
  %3606 = vst [vmem:[#allocation3 + $0x350] sm:$0xff] %v3382
  %3607 = vst [vmem:[#allocation3 + $0x358] sm:$0xff] %v3383
  %3608 = vst [vmem:[#allocation3 + $0x360] sm:$0xff] %v3384
  %3609 = vst [vmem:[#allocation3 + $0x368] sm:$0xff] %v3385
  %3610 = vst [vmem:[#allocation3 + $0x370] sm:$0xff] %v3386
  %3611 = vst [vmem:[#allocation3 + $0x378] sm:$0xff] %v3387
  %3612 = vst [vmem:[#allocation3 + $0x380] sm:$0xff] %v3388
  %3613 = vst [vmem:[#allocation3 + $0x388] sm:$0xff] %v3389
  %3614 = vst [vmem:[#allocation3 + $0x390] sm:$0xff] %v3390
  %3615 = vst [vmem:[#allocation3 + $0x398] sm:$0xff] %v3391
  %3616 = vst [vmem:[#allocation3 + $0x3a0] sm:$0xff] %v3392
  %3617 = vst [vmem:[#allocation3 + $0x3a8] sm:$0xff] %v3393
  %3618 = vst [vmem:[#allocation3 + $0x3b0] sm:$0xff] %v3394
  %3619 = vst [vmem:[#allocation3 + $0x3b8] sm:$0xff] %v3395
  %3620 = vst [vmem:[#allocation3 + $0x3c0] sm:$0xff] %v3396
  %3621 = vst [vmem:[#allocation3 + $0x3c8] sm:$0xff] %v3397
  %3622 = vst [vmem:[#allocation3 + $0x3d0] sm:$0xff] %v3398
  %3623 = vst [vmem:[#allocation3 + $0x3d8] sm:$0xff] %v3399
  %3624 = vst [vmem:[#allocation3 + $0x3e0] sm:$0xff] %v3400
  %3625 = vst [vmem:[#allocation3 + $0x3e8] sm:$0xff] %v3401
  %3626 = vst [vmem:[#allocation3 + $0x3f0] sm:$0xff] %v3402
  %3627 = vst [vmem:[#allocation3 + $0x3f8] sm:$0xff] %v3403
  %vm3628 = vmand %vm3452, %vm2970
  %vm3629 = vmand %vm3453, %vm2971
  %vm3630 = vmand %vm3454, %vm2972
  %vm3631 = vmand %vm3455, %vm2973
  %vm3632 = vmand %vm3456, %vm2974
  %vm3633 = vmand %vm3457, %vm2975
  %vm3634 = vmand %vm3458, %vm2976
  %vm3635 = vmand %vm3459, %vm2977
  %vm3636 = vmand %vm3460, %vm2978
  %vm3637 = vmand %vm3461, %vm2979
  %vm3638 = vmand %vm3462, %vm2980
  %vm3639 = vmand %vm3463, %vm2981
  %vm3640 = vmand %vm3464, %vm2982
  %vm3641 = vmand %vm3465, %vm2983
  %vm3642 = vmand %vm3466, %vm2984
  %vm3643 = vmand %vm3467, %vm2985
  %v3644 = vsel %vm3628, 1, 0
  %v3645 = vsel %vm3629, 1, 0
  %v3646 = vsel %vm3630, 1, 0
  %v3647 = vsel %vm3631, 1, 0
  %v3648 = vsel %vm3632, 1, 0
  %v3649 = vsel %vm3633, 1, 0
  %v3650 = vsel %vm3634, 1, 0
  %v3651 = vsel %vm3635, 1, 0
  %v3652 = vsel %vm3636, 1, 0
  %v3653 = vsel %vm3637, 1, 0
  %v3654 = vsel %vm3638, 1, 0
  %v3655 = vsel %vm3639, 1, 0
  %v3656 = vsel %vm3640, 1, 0
  %v3657 = vsel %vm3641, 1, 0
  %v3658 = vsel %vm3642, 1, 0
  %v3659 = vsel %vm3643, 1, 0
  %vm3660 = vcmp.eq.s32.totalorder %v3644, 1
  %vm3661 = vcmp.eq.s32.totalorder %v3645, 1
  %vm3662 = vcmp.eq.s32.totalorder %v3646, 1
  %vm3663 = vcmp.eq.s32.totalorder %v3647, 1
  %vm3664 = vcmp.eq.s32.totalorder %v3648, 1
  %vm3665 = vcmp.eq.s32.totalorder %v3649, 1
  %vm3666 = vcmp.eq.s32.totalorder %v3650, 1
  %vm3667 = vcmp.eq.s32.totalorder %v3651, 1
  %vm3668 = vcmp.eq.s32.totalorder %v3652, 1
  %vm3669 = vcmp.eq.s32.totalorder %v3653, 1
  %vm3670 = vcmp.eq.s32.totalorder %v3654, 1
  %vm3671 = vcmp.eq.s32.totalorder %v3655, 1
  %vm3672 = vcmp.eq.s32.totalorder %v3656, 1
  %vm3673 = vcmp.eq.s32.totalorder %v3657, 1
  %vm3674 = vcmp.eq.s32.totalorder %v3658, 1
  %vm3675 = vcmp.eq.s32.totalorder %v3659, 1
  %v3676 = vsel %vm3660, %v2906, 0.0
  %v3677 = vsel %vm3661, %v2907, 0.0
  %v3678 = vsel %vm3662, %v2908, 0.0
  %v3679 = vsel %vm3663, %v2909, 0.0
  %v3680 = vsel %vm3664, %v2910, 0.0
  %v3681 = vsel %vm3665, %v2911, 0.0
  %v3682 = vsel %vm3666, %v2912, 0.0
  %v3683 = vsel %vm3667, %v2913, 0.0
  %v3684 = vsel %vm3668, %v2914, 0.0
  %v3685 = vsel %vm3669, %v2915, 0.0
  %v3686 = vsel %vm3670, %v2916, 0.0
  %v3687 = vsel %vm3671, %v2917, 0.0
  %v3688 = vsel %vm3672, %v2918, 0.0
  %v3689 = vsel %vm3673, %v2919, 0.0
  %v3690 = vsel %vm3674, %v2920, 0.0
  %v3691 = vsel %vm3675, %v2921, 0.0
  %v3692 = vsel %vm3660, %v2922, 0.0
  %v3693 = vsel %vm3661, %v2923, 0.0
  %v3694 = vsel %vm3662, %v2924, 0.0
  %v3695 = vsel %vm3663, %v2925, 0.0
  %v3696 = vsel %vm3664, %v2926, 0.0
  %v3697 = vsel %vm3665, %v2927, 0.0
  %v3698 = vsel %vm3666, %v2928, 0.0
  %v3699 = vsel %vm3667, %v2929, 0.0
  %v3700 = vsel %vm3668, %v2930, 0.0
  %v3701 = vsel %vm3669, %v2931, 0.0
  %v3702 = vsel %vm3670, %v2932, 0.0
  %v3703 = vsel %vm3671, %v2933, 0.0
  %v3704 = vsel %vm3672, %v2934, 0.0
  %v3705 = vsel %vm3673, %v2935, 0.0
  %v3706 = vsel %vm3674, %v2936, 0.0
  %v3707 = vsel %vm3675, %v2937, 0.0
  %3708 = vst [vmem:[#allocation3 + $0x400] sm:$0xff] %v3676
  %3709 = vst [vmem:[#allocation3 + $0x408] sm:$0xff] %v3677
  %3710 = vst [vmem:[#allocation3 + $0x410] sm:$0xff] %v3678
  %3711 = vst [vmem:[#allocation3 + $0x418] sm:$0xff] %v3679
  %3712 = vst [vmem:[#allocation3 + $0x420] sm:$0xff] %v3680
  %3713 = vst [vmem:[#allocation3 + $0x428] sm:$0xff] %v3681
  %3714 = vst [vmem:[#allocation3 + $0x430] sm:$0xff] %v3682
  %3715 = vst [vmem:[#allocation3 + $0x438] sm:$0xff] %v3683
  %3716 = vst [vmem:[#allocation3 + $0x440] sm:$0xff] %v3684
  %3717 = vst [vmem:[#allocation3 + $0x448] sm:$0xff] %v3685
  %3718 = vst [vmem:[#allocation3 + $0x450] sm:$0xff] %v3686
  %3719 = vst [vmem:[#allocation3 + $0x458] sm:$0xff] %v3687
  %3720 = vst [vmem:[#allocation3 + $0x460] sm:$0xff] %v3688
  %3721 = vst [vmem:[#allocation3 + $0x468] sm:$0xff] %v3689
  %3722 = vst [vmem:[#allocation3 + $0x470] sm:$0xff] %v3690
  %3723 = vst [vmem:[#allocation3 + $0x478] sm:$0xff] %v3691
  %3724 = vst [vmem:[#allocation3 + $0x480] sm:$0xff] %v3692
  %3725 = vst [vmem:[#allocation3 + $0x488] sm:$0xff] %v3693
  %3726 = vst [vmem:[#allocation3 + $0x490] sm:$0xff] %v3694
  %3727 = vst [vmem:[#allocation3 + $0x498] sm:$0xff] %v3695
  %3728 = vst [vmem:[#allocation3 + $0x4a0] sm:$0xff] %v3696
  %3729 = vst [vmem:[#allocation3 + $0x4a8] sm:$0xff] %v3697
  %3730 = vst [vmem:[#allocation3 + $0x4b0] sm:$0xff] %v3698
  %3731 = vst [vmem:[#allocation3 + $0x4b8] sm:$0xff] %v3699
  %3732 = vst [vmem:[#allocation3 + $0x4c0] sm:$0xff] %v3700
  %3733 = vst [vmem:[#allocation3 + $0x4c8] sm:$0xff] %v3701
  %3734 = vst [vmem:[#allocation3 + $0x4d0] sm:$0xff] %v3702
  %3735 = vst [vmem:[#allocation3 + $0x4d8] sm:$0xff] %v3703
  %3736 = vst [vmem:[#allocation3 + $0x4e0] sm:$0xff] %v3704
  %3737 = vst [vmem:[#allocation3 + $0x4e8] sm:$0xff] %v3705
  %3738 = vst [vmem:[#allocation3 + $0x4f0] sm:$0xff] %v3706
  %3739 = vst [vmem:[#allocation3 + $0x4f8] sm:$0xff] %v3707
  %3740 = vrot.lane.b32.xlu0 %v2906, 127
  %v3741 = vpop.permute.xlu0 %3740
  %3742 = vrot.lane.b32.xlu0 %v2922, 127
  %v3743 = vpop.permute.xlu0 %3742
  %3744 = vrot.lane.b32.xlu0 %v2907, 127
  %v3745 = vpop.permute.xlu0 %3744
  %3746 = vrot.lane.b32.xlu0 %v2923, 127
  %v3747 = vpop.permute.xlu0 %3746
  %3748 = vrot.lane.b32.xlu0 %v2908, 127
  %v3749 = vpop.permute.xlu0 %3748
  %3750 = vrot.lane.b32.xlu0 %v2924, 127
  %v3751 = vpop.permute.xlu0 %3750
  %3752 = vrot.lane.b32.xlu0 %v2909, 127
  %v3753 = vpop.permute.xlu0 %3752
  %3754 = vrot.lane.b32.xlu0 %v2925, 127
  %v3755 = vpop.permute.xlu0 %3754
  %3756 = vrot.lane.b32.xlu0 %v2910, 127
  %v3757 = vpop.permute.xlu0 %3756
  %3758 = vrot.lane.b32.xlu0 %v2926, 127
  %v3759 = vpop.permute.xlu0 %3758
  %3760 = vrot.lane.b32.xlu0 %v2911, 127
  %v3761 = vpop.permute.xlu0 %3760
  %3762 = vrot.lane.b32.xlu0 %v2927, 127
  %v3763 = vpop.permute.xlu0 %3762
  %3764 = vrot.lane.b32.xlu0 %v2912, 127
  %v3765 = vpop.permute.xlu0 %3764
  %3766 = vrot.lane.b32.xlu0 %v2928, 127
  %v3767 = vpop.permute.xlu0 %3766
  %3768 = vrot.lane.b32.xlu0 %v2913, 127
  %v3769 = vpop.permute.xlu0 %3768
  %3770 = vrot.lane.b32.xlu0 %v2929, 127
  %v3771 = vpop.permute.xlu0 %3770
  %3772 = vrot.lane.b32.xlu0 %v2914, 127
  %v3773 = vpop.permute.xlu0 %3772
  %3774 = vrot.lane.b32.xlu0 %v2930, 127
  %v3775 = vpop.permute.xlu0 %3774
  %3776 = vrot.lane.b32.xlu0 %v2915, 127
  %v3777 = vpop.permute.xlu0 %3776
  %3778 = vrot.lane.b32.xlu0 %v2931, 127
  %v3779 = vpop.permute.xlu0 %3778
  %3780 = vrot.lane.b32.xlu0 %v2916, 127
  %v3781 = vpop.permute.xlu0 %3780
  %3782 = vrot.lane.b32.xlu0 %v2932, 127
  %v3783 = vpop.permute.xlu0 %3782
  %3784 = vrot.lane.b32.xlu0 %v2917, 127
  %v3785 = vpop.permute.xlu0 %3784
  %3786 = vrot.lane.b32.xlu0 %v2933, 127
  %v3787 = vpop.permute.xlu0 %3786
  %3788 = vrot.lane.b32.xlu0 %v2918, 127
  %v3789 = vpop.permute.xlu0 %3788
  %3790 = vrot.lane.b32.xlu0 %v2934, 127
  %v3791 = vpop.permute.xlu0 %3790
  %3792 = vrot.lane.b32.xlu0 %v2919, 127
  %v3793 = vpop.permute.xlu0 %3792
  %3794 = vrot.lane.b32.xlu0 %v2935, 127
  %v3795 = vpop.permute.xlu0 %3794
  %3796 = vrot.lane.b32.xlu0 %v2920, 127
  %v3797 = vpop.permute.xlu0 %3796
  %3798 = vrot.lane.b32.xlu0 %v2936, 127
  %v3799 = vpop.permute.xlu0 %3798
  %3800 = vrot.lane.b32.xlu0 %v2921, 127
  %v3801 = vpop.permute.xlu0 %3800
  %3802 = vrot.lane.b32.xlu0 %v2937, 127
  %v3803 = vpop.permute.xlu0 %3802
  %vm3804 = vcmp.lt.s32.totalorder %v2090, 127
  %v3805 = vsel %vm3804, %v3797, %v3801
  %v3806 = vsel %vm3804, %v3799, %v3803
  %v3807 = vsel %vm3804, %v3793, %v3797
  %v3808 = vsel %vm3804, %v3795, %v3799
  %v3809 = vsel %vm3804, %v3789, %v3793
  %v3810 = vsel %vm3804, %v3791, %v3795
  %v3811 = vsel %vm3804, %v3785, %v3789
  %v3812 = vsel %vm3804, %v3787, %v3791
  %v3813 = vsel %vm3804, %v3781, %v3785
  %v3814 = vsel %vm3804, %v3783, %v3787
  %v3815 = vsel %vm3804, %v3777, %v3781
  %v3816 = vsel %vm3804, %v3779, %v3783
  %v3817 = vsel %vm3804, %v3773, %v3777
  %v3818 = vsel %vm3804, %v3775, %v3779
  %v3819 = vsel %vm3804, %v3769, %v3773
  %v3820 = vsel %vm3804, %v3771, %v3775
  %v3821 = vsel %vm3804, %v3765, %v3769
  %v3822 = vsel %vm3804, %v3767, %v3771
  %v3823 = vsel %vm3804, %v3761, %v3765
  %v3824 = vsel %vm3804, %v3763, %v3767
  %v3825 = vsel %vm3804, %v3757, %v3761
  %v3826 = vsel %vm3804, %v3759, %v3763
  %v3827 = vsel %vm3804, %v3753, %v3757
  %v3828 = vsel %vm3804, %v3755, %v3759
  %v3829 = vsel %vm3804, %v3749, %v3753
  %v3830 = vsel %vm3804, %v3751, %v3755
  %v3831 = vsel %vm3804, %v3745, %v3749
  %v3832 = vsel %vm3804, %v3747, %v3751
  %v3833 = vsel %vm3804, %v3741, %v3745
  %v3834 = vsel %vm3804, %v3743, %v3747
  %v3835 = vsel %vm3804, %v3801, %v3741
  %v3836 = vsel %vm3804, %v3803, %v3743
  %v3837 = vsel %vm3516, %v3833, 0.0
  %v3838 = vsel %vm3517, %v3831, 0.0
  %v3839 = vsel %vm3518, %v3829, 0.0
  %v3840 = vsel %vm3519, %v3827, 0.0
  %v3841 = vsel %vm3520, %v3825, 0.0
  %v3842 = vsel %vm3521, %v3823, 0.0
  %v3843 = vsel %vm3522, %v3821, 0.0
  %v3844 = vsel %vm3523, %v3819, 0.0
  %v3845 = vsel %vm3524, %v3817, 0.0
  %v3846 = vsel %vm3525, %v3815, 0.0
  %v3847 = vsel %vm3526, %v3813, 0.0
  %v3848 = vsel %vm3527, %v3811, 0.0
  %v3849 = vsel %vm3528, %v3809, 0.0
  %v3850 = vsel %vm3529, %v3807, 0.0
  %v3851 = vsel %vm3530, %v3805, 0.0
  %v3852 = vsel %vm3531, %v3835, 0.0
  %v3853 = vsel %vm3516, %v3834, 0.0
  %v3854 = vsel %vm3517, %v3832, 0.0
  %v3855 = vsel %vm3518, %v3830, 0.0
  %v3856 = vsel %vm3519, %v3828, 0.0
  %v3857 = vsel %vm3520, %v3826, 0.0
  %v3858 = vsel %vm3521, %v3824, 0.0
  %v3859 = vsel %vm3522, %v3822, 0.0
  %v3860 = vsel %vm3523, %v3820, 0.0
  %v3861 = vsel %vm3524, %v3818, 0.0
  %v3862 = vsel %vm3525, %v3816, 0.0
  %v3863 = vsel %vm3526, %v3814, 0.0
  %v3864 = vsel %vm3527, %v3812, 0.0
  %v3865 = vsel %vm3528, %v3810, 0.0
  %v3866 = vsel %vm3529, %v3808, 0.0
  %v3867 = vsel %vm3530, %v3806, 0.0
  %v3868 = vsel %vm3531, %v3836, 0.0
  %3869 = vst [vmem:[#allocation3 + $0x500] sm:$0xff] %v3837
  %3870 = vst [vmem:[#allocation3 + $0x508] sm:$0xff] %v3838
  %3871 = vst [vmem:[#allocation3 + $0x510] sm:$0xff] %v3839
  %3872 = vst [vmem:[#allocation3 + $0x518] sm:$0xff] %v3840
  %3873 = vst [vmem:[#allocation3 + $0x520] sm:$0xff] %v3841
  %3874 = vst [vmem:[#allocation3 + $0x528] sm:$0xff] %v3842
  %3875 = vst [vmem:[#allocation3 + $0x530] sm:$0xff] %v3843
  %3876 = vst [vmem:[#allocation3 + $0x538] sm:$0xff] %v3844
  %3877 = vst [vmem:[#allocation3 + $0x540] sm:$0xff] %v3845
  %3878 = vst [vmem:[#allocation3 + $0x548] sm:$0xff] %v3846
  %3879 = vst [vmem:[#allocation3 + $0x550] sm:$0xff] %v3847
  %3880 = vst [vmem:[#allocation3 + $0x558] sm:$0xff] %v3848
  %3881 = vst [vmem:[#allocation3 + $0x560] sm:$0xff] %v3849
  %3882 = vst [vmem:[#allocation3 + $0x568] sm:$0xff] %v3850
  %3883 = vst [vmem:[#allocation3 + $0x570] sm:$0xff] %v3851
  %3884 = vst [vmem:[#allocation3 + $0x578] sm:$0xff] %v3852
  %3885 = vst [vmem:[#allocation3 + $0x580] sm:$0xff] %v3853
  %3886 = vst [vmem:[#allocation3 + $0x588] sm:$0xff] %v3854
  %3887 = vst [vmem:[#allocation3 + $0x590] sm:$0xff] %v3855
  %3888 = vst [vmem:[#allocation3 + $0x598] sm:$0xff] %v3856
  %3889 = vst [vmem:[#allocation3 + $0x5a0] sm:$0xff] %v3857
  %3890 = vst [vmem:[#allocation3 + $0x5a8] sm:$0xff] %v3858
  %3891 = vst [vmem:[#allocation3 + $0x5b0] sm:$0xff] %v3859
  %3892 = vst [vmem:[#allocation3 + $0x5b8] sm:$0xff] %v3860
  %3893 = vst [vmem:[#allocation3 + $0x5c0] sm:$0xff] %v3861
  %3894 = vst [vmem:[#allocation3 + $0x5c8] sm:$0xff] %v3862
  %3895 = vst [vmem:[#allocation3 + $0x5d0] sm:$0xff] %v3863
  %3896 = vst [vmem:[#allocation3 + $0x5d8] sm:$0xff] %v3864
  %3897 = vst [vmem:[#allocation3 + $0x5e0] sm:$0xff] %v3865
  %3898 = vst [vmem:[#allocation3 + $0x5e8] sm:$0xff] %v3866
  %3899 = vst [vmem:[#allocation3 + $0x5f0] sm:$0xff] %v3867
  %3900 = vst [vmem:[#allocation3 + $0x5f8] sm:$0xff] %v3868
  %v3901 = vsel %vm3356, %v2906, 0.0
  %v3902 = vsel %vm3357, %v2907, 0.0
  %v3903 = vsel %vm3358, %v2908, 0.0
  %v3904 = vsel %vm3359, %v2909, 0.0
  %v3905 = vsel %vm3360, %v2910, 0.0
  %v3906 = vsel %vm3361, %v2911, 0.0
  %v3907 = vsel %vm3362, %v2912, 0.0
  %v3908 = vsel %vm3363, %v2913, 0.0
  %v3909 = vsel %vm3364, %v2914, 0.0
  %v3910 = vsel %vm3365, %v2915, 0.0
  %v3911 = vsel %vm3366, %v2916, 0.0
  %v3912 = vsel %vm3367, %v2917, 0.0
  %v3913 = vsel %vm3368, %v2918, 0.0
  %v3914 = vsel %vm3369, %v2919, 0.0
  %v3915 = vsel %vm3370, %v2920, 0.0
  %v3916 = vsel %vm3371, %v2921, 0.0
  %v3917 = vsel %vm3356, %v2922, 0.0
  %v3918 = vsel %vm3357, %v2923, 0.0
  %v3919 = vsel %vm3358, %v2924, 0.0
  %v3920 = vsel %vm3359, %v2925, 0.0
  %v3921 = vsel %vm3360, %v2926, 0.0
  %v3922 = vsel %vm3361, %v2927, 0.0
  %v3923 = vsel %vm3362, %v2928, 0.0
  %v3924 = vsel %vm3363, %v2929, 0.0
  %v3925 = vsel %vm3364, %v2930, 0.0
  %v3926 = vsel %vm3365, %v2931, 0.0
  %v3927 = vsel %vm3366, %v2932, 0.0
  %v3928 = vsel %vm3367, %v2933, 0.0
  %v3929 = vsel %vm3368, %v2934, 0.0
  %v3930 = vsel %vm3369, %v2935, 0.0
  %v3931 = vsel %vm3370, %v2936, 0.0
  %v3932 = vsel %vm3371, %v2937, 0.0
  %3933 = vst [vmem:[#allocation3 + $0x600] sm:$0xff] %v3901
  %3934 = vst [vmem:[#allocation3 + $0x608] sm:$0xff] %v3902
  %3935 = vst [vmem:[#allocation3 + $0x610] sm:$0xff] %v3903
  %3936 = vst [vmem:[#allocation3 + $0x618] sm:$0xff] %v3904
  %3937 = vst [vmem:[#allocation3 + $0x620] sm:$0xff] %v3905
  %3938 = vst [vmem:[#allocation3 + $0x628] sm:$0xff] %v3906
  %3939 = vst [vmem:[#allocation3 + $0x630] sm:$0xff] %v3907
  %3940 = vst [vmem:[#allocation3 + $0x638] sm:$0xff] %v3908
  %3941 = vst [vmem:[#allocation3 + $0x640] sm:$0xff] %v3909
  %3942 = vst [vmem:[#allocation3 + $0x648] sm:$0xff] %v3910
  %3943 = vst [vmem:[#allocation3 + $0x650] sm:$0xff] %v3911
  %3944 = vst [vmem:[#allocation3 + $0x658] sm:$0xff] %v3912
  %3945 = vst [vmem:[#allocation3 + $0x660] sm:$0xff] %v3913
  %3946 = vst [vmem:[#allocation3 + $0x668] sm:$0xff] %v3914
  %3947 = vst [vmem:[#allocation3 + $0x670] sm:$0xff] %v3915
  %3948 = vst [vmem:[#allocation3 + $0x678] sm:$0xff] %v3916
  %3949 = vst [vmem:[#allocation3 + $0x680] sm:$0xff] %v3917
  %3950 = vst [vmem:[#allocation3 + $0x688] sm:$0xff] %v3918
  %3951 = vst [vmem:[#allocation3 + $0x690] sm:$0xff] %v3919
  %3952 = vst [vmem:[#allocation3 + $0x698] sm:$0xff] %v3920
  %3953 = vst [vmem:[#allocation3 + $0x6a0] sm:$0xff] %v3921
  %3954 = vst [vmem:[#allocation3 + $0x6a8] sm:$0xff] %v3922
  %3955 = vst [vmem:[#allocation3 + $0x6b0] sm:$0xff] %v3923
  %3956 = vst [vmem:[#allocation3 + $0x6b8] sm:$0xff] %v3924
  %3957 = vst [vmem:[#allocation3 + $0x6c0] sm:$0xff] %v3925
  %3958 = vst [vmem:[#allocation3 + $0x6c8] sm:$0xff] %v3926
  %3959 = vst [vmem:[#allocation3 + $0x6d0] sm:$0xff] %v3927
  %3960 = vst [vmem:[#allocation3 + $0x6d8] sm:$0xff] %v3928
  %3961 = vst [vmem:[#allocation3 + $0x6e0] sm:$0xff] %v3929
  %3962 = vst [vmem:[#allocation3 + $0x6e8] sm:$0xff] %v3930
  %3963 = vst [vmem:[#allocation3 + $0x6f0] sm:$0xff] %v3931
  %3964 = vst [vmem:[#allocation3 + $0x6f8] sm:$0xff] %v3932
  %3965 = vst [vmem:[#allocation3 + $0x700] sm:$0xff] %v3837
  %3966 = vst [vmem:[#allocation3 + $0x708] sm:$0xff] %v3838
  %3967 = vst [vmem:[#allocation3 + $0x710] sm:$0xff] %v3839
  %3968 = vst [vmem:[#allocation3 + $0x718] sm:$0xff] %v3840
  %3969 = vst [vmem:[#allocation3 + $0x720] sm:$0xff] %v3841
  %3970 = vst [vmem:[#allocation3 + $0x728] sm:$0xff] %v3842
  %3971 = vst [vmem:[#allocation3 + $0x730] sm:$0xff] %v3843
  %3972 = vst [vmem:[#allocation3 + $0x738] sm:$0xff] %v3844
  %3973 = vst [vmem:[#allocation3 + $0x740] sm:$0xff] %v3845
  %3974 = vst [vmem:[#allocation3 + $0x748] sm:$0xff] %v3846
  %3975 = vst [vmem:[#allocation3 + $0x750] sm:$0xff] %v3847
  %3976 = vst [vmem:[#allocation3 + $0x758] sm:$0xff] %v3848
  %3977 = vst [vmem:[#allocation3 + $0x760] sm:$0xff] %v3849
  %3978 = vst [vmem:[#allocation3 + $0x768] sm:$0xff] %v3850
  %3979 = vst [vmem:[#allocation3 + $0x770] sm:$0xff] %v3851
  %3980 = vst [vmem:[#allocation3 + $0x778] sm:$0xff] %v3852
  %3981 = vst [vmem:[#allocation3 + $0x780] sm:$0xff] %v3853
  %3982 = vst [vmem:[#allocation3 + $0x788] sm:$0xff] %v3854
  %3983 = vst [vmem:[#allocation3 + $0x790] sm:$0xff] %v3855
  %3984 = vst [vmem:[#allocation3 + $0x798] sm:$0xff] %v3856
  %3985 = vst [vmem:[#allocation3 + $0x7a0] sm:$0xff] %v3857
  %3986 = vst [vmem:[#allocation3 + $0x7a8] sm:$0xff] %v3858
  %3987 = vst [vmem:[#allocation3 + $0x7b0] sm:$0xff] %v3859
  %3988 = vst [vmem:[#allocation3 + $0x7b8] sm:$0xff] %v3860
  %3989 = vst [vmem:[#allocation3 + $0x7c0] sm:$0xff] %v3861
  %3990 = vst [vmem:[#allocation3 + $0x7c8] sm:$0xff] %v3862
  %3991 = vst [vmem:[#allocation3 + $0x7d0] sm:$0xff] %v3863
  %3992 = vst [vmem:[#allocation3 + $0x7d8] sm:$0xff] %v3864
  %3993 = vst [vmem:[#allocation3 + $0x7e0] sm:$0xff] %v3865
  %3994 = vst [vmem:[#allocation3 + $0x7e8] sm:$0xff] %v3866
  %3995 = vst [vmem:[#allocation3 + $0x7f0] sm:$0xff] %v3867
  %3996 = vst [vmem:[#allocation3 + $0x7f8] sm:$0xff] %v3868
  %vm3997 = vcmp.le.s32.totalorder %v2874, 4
  %vm3998 = vcmp.le.s32.totalorder %v2875, 4
  %vm3999 = vcmp.le.s32.totalorder %v2876, 4
  %vm4000 = vcmp.le.s32.totalorder %v2877, 4
  %vm4001 = vcmp.le.s32.totalorder %v2878, 4
  %vm4002 = vcmp.le.s32.totalorder %v2879, 4
  %vm4003 = vcmp.le.s32.totalorder %v2880, 4
  %vm4004 = vcmp.le.s32.totalorder %v2881, 4
  %vm4005 = vcmp.le.s32.totalorder %v2882, 4
  %vm4006 = vcmp.le.s32.totalorder %v2883, 4
  %vm4007 = vcmp.le.s32.totalorder %v2884, 4
  %vm4008 = vcmp.le.s32.totalorder %v2885, 4
  %vm4009 = vcmp.le.s32.totalorder %v2886, 4
  %vm4010 = vcmp.le.s32.totalorder %v2887, 4
  %vm4011 = vcmp.le.s32.totalorder %v2888, 4
  %vm4012 = vcmp.le.s32.totalorder %v2889, 4
  %vm4013 = vmand %vm3452, %vm3997
  %vm4014 = vmand %vm3453, %vm3998
  %vm4015 = vmand %vm3454, %vm3999
  %vm4016 = vmand %vm3455, %vm4000
  %vm4017 = vmand %vm3456, %vm4001
  %vm4018 = vmand %vm3457, %vm4002
  %vm4019 = vmand %vm3458, %vm4003
  %vm4020 = vmand %vm3459, %vm4004
  %vm4021 = vmand %vm3460, %vm4005
  %vm4022 = vmand %vm3461, %vm4006
  %vm4023 = vmand %vm3462, %vm4007
  %vm4024 = vmand %vm3463, %vm4008
  %vm4025 = vmand %vm3464, %vm4009
  %vm4026 = vmand %vm3465, %vm4010
  %vm4027 = vmand %vm3466, %vm4011
  %vm4028 = vmand %vm3467, %vm4012
  %4029 = vrot.lane.b32.xlu0 %v2906, 126
  %v4030 = vpop.permute.xlu0 %4029
  %4031 = vrot.lane.b32.xlu0 %v2922, 126
  %v4032 = vpop.permute.xlu0 %4031
  %4033 = vrot.lane.b32.xlu0 %v2907, 126
  %v4034 = vpop.permute.xlu0 %4033
  %4035 = vrot.lane.b32.xlu0 %v2923, 126
  %v4036 = vpop.permute.xlu0 %4035
  %4037 = vrot.lane.b32.xlu0 %v2908, 126
  %v4038 = vpop.permute.xlu0 %4037
  %4039 = vrot.lane.b32.xlu0 %v2924, 126
  %v4040 = vpop.permute.xlu0 %4039
  %4041 = vrot.lane.b32.xlu0 %v2909, 126
  %v4042 = vpop.permute.xlu0 %4041
  %4043 = vrot.lane.b32.xlu0 %v2925, 126
  %v4044 = vpop.permute.xlu0 %4043
  %4045 = vrot.lane.b32.xlu0 %v2910, 126
  %v4046 = vpop.permute.xlu0 %4045
  %4047 = vrot.lane.b32.xlu0 %v2926, 126
  %v4048 = vpop.permute.xlu0 %4047
  %4049 = vrot.lane.b32.xlu0 %v2911, 126
  %v4050 = vpop.permute.xlu0 %4049
  %4051 = vrot.lane.b32.xlu0 %v2927, 126
  %v4052 = vpop.permute.xlu0 %4051
  %4053 = vrot.lane.b32.xlu0 %v2912, 126
  %v4054 = vpop.permute.xlu0 %4053
  %4055 = vrot.lane.b32.xlu0 %v2928, 126
  %v4056 = vpop.permute.xlu0 %4055
  %4057 = vrot.lane.b32.xlu0 %v2913, 126
  %v4058 = vpop.permute.xlu0 %4057
  %4059 = vrot.lane.b32.xlu0 %v2929, 126
  %v4060 = vpop.permute.xlu0 %4059
  %4061 = vrot.lane.b32.xlu0 %v2914, 126
  %v4062 = vpop.permute.xlu0 %4061
  %4063 = vrot.lane.b32.xlu0 %v2930, 126
  %v4064 = vpop.permute.xlu0 %4063
  %4065 = vrot.lane.b32.xlu0 %v2915, 126
  %v4066 = vpop.permute.xlu0 %4065
  %4067 = vrot.lane.b32.xlu0 %v2931, 126
  %v4068 = vpop.permute.xlu0 %4067
  %4069 = vrot.lane.b32.xlu0 %v2916, 126
  %v4070 = vpop.permute.xlu0 %4069
  %4071 = vrot.lane.b32.xlu0 %v2932, 126
  %v4072 = vpop.permute.xlu0 %4071
  %4073 = vrot.lane.b32.xlu0 %v2917, 126
  %v4074 = vpop.permute.xlu0 %4073
  %4075 = vrot.lane.b32.xlu0 %v2933, 126
  %v4076 = vpop.permute.xlu0 %4075
  %4077 = vrot.lane.b32.xlu0 %v2918, 126
  %v4078 = vpop.permute.xlu0 %4077
  %4079 = vrot.lane.b32.xlu0 %v2934, 126
  %v4080 = vpop.permute.xlu0 %4079
  %4081 = vrot.lane.b32.xlu0 %v2919, 126
  %v4082 = vpop.permute.xlu0 %4081
  %4083 = vrot.lane.b32.xlu0 %v2935, 126
  %v4084 = vpop.permute.xlu0 %4083
  %4085 = vrot.lane.b32.xlu0 %v2920, 126
  %v4086 = vpop.permute.xlu0 %4085
  %4087 = vrot.lane.b32.xlu0 %v2936, 126
  %v4088 = vpop.permute.xlu0 %4087
  %4089 = vrot.lane.b32.xlu0 %v2921, 126
  %v4090 = vpop.permute.xlu0 %4089
  %4091 = vrot.lane.b32.xlu0 %v2937, 126
  %v4092 = vpop.permute.xlu0 %4091
  %vm4093 = vcmp.lt.s32.totalorder %v2090, 126
  %v4094 = vsel %vm4093, %v4086, %v4090
  %v4095 = vsel %vm4093, %v4088, %v4092
  %v4096 = vsel %vm4093, %v4082, %v4086
  %v4097 = vsel %vm4093, %v4084, %v4088
  %v4098 = vsel %vm4093, %v4078, %v4082
  %v4099 = vsel %vm4093, %v4080, %v4084
  %v4100 = vsel %vm4093, %v4074, %v4078
  %v4101 = vsel %vm4093, %v4076, %v4080
  %v4102 = vsel %vm4093, %v4070, %v4074
  %v4103 = vsel %vm4093, %v4072, %v4076
  %v4104 = vsel %vm4093, %v4066, %v4070
  %v4105 = vsel %vm4093, %v4068, %v4072
  %v4106 = vsel %vm4093, %v4062, %v4066
  %v4107 = vsel %vm4093, %v4064, %v4068
  %v4108 = vsel %vm4093, %v4058, %v4062
  %v4109 = vsel %vm4093, %v4060, %v4064
  %v4110 = vsel %vm4093, %v4054, %v4058
  %v4111 = vsel %vm4093, %v4056, %v4060
  %v4112 = vsel %vm4093, %v4050, %v4054
  %v4113 = vsel %vm4093, %v4052, %v4056
  %v4114 = vsel %vm4093, %v4046, %v4050
  %v4115 = vsel %vm4093, %v4048, %v4052
  %v4116 = vsel %vm4093, %v4042, %v4046
  %v4117 = vsel %vm4093, %v4044, %v4048
  %v4118 = vsel %vm4093, %v4038, %v4042
  %v4119 = vsel %vm4093, %v4040, %v4044
  %v4120 = vsel %vm4093, %v4034, %v4038
  %v4121 = vsel %vm4093, %v4036, %v4040
  %v4122 = vsel %vm4093, %v4030, %v4034
  %v4123 = vsel %vm4093, %v4032, %v4036
  %v4124 = vsel %vm4093, %v4090, %v4030
  %v4125 = vsel %vm4093, %v4092, %v4032
  %v4126 = vsel %vm4013, 1, 0
  %v4127 = vsel %vm4014, 1, 0
  %v4128 = vsel %vm4015, 1, 0
  %v4129 = vsel %vm4016, 1, 0
  %v4130 = vsel %vm4017, 1, 0
  %v4131 = vsel %vm4018, 1, 0
  %v4132 = vsel %vm4019, 1, 0
  %v4133 = vsel %vm4020, 1, 0
  %v4134 = vsel %vm4021, 1, 0
  %v4135 = vsel %vm4022, 1, 0
  %v4136 = vsel %vm4023, 1, 0
  %v4137 = vsel %vm4024, 1, 0
  %v4138 = vsel %vm4025, 1, 0
  %v4139 = vsel %vm4026, 1, 0
  %v4140 = vsel %vm4027, 1, 0
  %v4141 = vsel %vm4028, 1, 0
  %vm4142 = vcmp.eq.s32.totalorder %v4126, 1
  %vm4143 = vcmp.eq.s32.totalorder %v4127, 1
  %vm4144 = vcmp.eq.s32.totalorder %v4128, 1
  %vm4145 = vcmp.eq.s32.totalorder %v4129, 1
  %vm4146 = vcmp.eq.s32.totalorder %v4130, 1
  %vm4147 = vcmp.eq.s32.totalorder %v4131, 1
  %vm4148 = vcmp.eq.s32.totalorder %v4132, 1
  %vm4149 = vcmp.eq.s32.totalorder %v4133, 1
  %vm4150 = vcmp.eq.s32.totalorder %v4134, 1
  %vm4151 = vcmp.eq.s32.totalorder %v4135, 1
  %vm4152 = vcmp.eq.s32.totalorder %v4136, 1
  %vm4153 = vcmp.eq.s32.totalorder %v4137, 1
  %vm4154 = vcmp.eq.s32.totalorder %v4138, 1
  %vm4155 = vcmp.eq.s32.totalorder %v4139, 1
  %vm4156 = vcmp.eq.s32.totalorder %v4140, 1
  %vm4157 = vcmp.eq.s32.totalorder %v4141, 1
  %v4158 = vsel %vm4142, %v4122, 0.0
  %v4159 = vsel %vm4143, %v4120, 0.0
  %v4160 = vsel %vm4144, %v4118, 0.0
  %v4161 = vsel %vm4145, %v4116, 0.0
  %v4162 = vsel %vm4146, %v4114, 0.0
  %v4163 = vsel %vm4147, %v4112, 0.0
  %v4164 = vsel %vm4148, %v4110, 0.0
  %v4165 = vsel %vm4149, %v4108, 0.0
  %v4166 = vsel %vm4150, %v4106, 0.0
  %v4167 = vsel %vm4151, %v4104, 0.0
  %v4168 = vsel %vm4152, %v4102, 0.0
  %v4169 = vsel %vm4153, %v4100, 0.0
  %v4170 = vsel %vm4154, %v4098, 0.0
  %v4171 = vsel %vm4155, %v4096, 0.0
  %v4172 = vsel %vm4156, %v4094, 0.0
  %v4173 = vsel %vm4157, %v4124, 0.0
  %v4174 = vsel %vm4142, %v4123, 0.0
  %v4175 = vsel %vm4143, %v4121, 0.0
  %v4176 = vsel %vm4144, %v4119, 0.0
  %v4177 = vsel %vm4145, %v4117, 0.0
  %v4178 = vsel %vm4146, %v4115, 0.0
  %v4179 = vsel %vm4147, %v4113, 0.0
  %v4180 = vsel %vm4148, %v4111, 0.0
  %v4181 = vsel %vm4149, %v4109, 0.0
  %v4182 = vsel %vm4150, %v4107, 0.0
  %v4183 = vsel %vm4151, %v4105, 0.0
  %v4184 = vsel %vm4152, %v4103, 0.0
  %v4185 = vsel %vm4153, %v4101, 0.0
  %v4186 = vsel %vm4154, %v4099, 0.0
  %v4187 = vsel %vm4155, %v4097, 0.0
  %v4188 = vsel %vm4156, %v4095, 0.0
  %v4189 = vsel %vm4157, %v4125, 0.0
  %4190 = vst [vmem:[#allocation3 + $0x800] sm:$0xff] %v4158
  %4191 = vst [vmem:[#allocation3 + $0x808] sm:$0xff] %v4159
  %4192 = vst [vmem:[#allocation3 + $0x810] sm:$0xff] %v4160
  %4193 = vst [vmem:[#allocation3 + $0x818] sm:$0xff] %v4161
  %4194 = vst [vmem:[#allocation3 + $0x820] sm:$0xff] %v4162
  %4195 = vst [vmem:[#allocation3 + $0x828] sm:$0xff] %v4163
  %4196 = vst [vmem:[#allocation3 + $0x830] sm:$0xff] %v4164
  %4197 = vst [vmem:[#allocation3 + $0x838] sm:$0xff] %v4165
  %4198 = vst [vmem:[#allocation3 + $0x840] sm:$0xff] %v4166
  %4199 = vst [vmem:[#allocation3 + $0x848] sm:$0xff] %v4167
  %4200 = vst [vmem:[#allocation3 + $0x850] sm:$0xff] %v4168
  %4201 = vst [vmem:[#allocation3 + $0x858] sm:$0xff] %v4169
  %4202 = vst [vmem:[#allocation3 + $0x860] sm:$0xff] %v4170
  %4203 = vst [vmem:[#allocation3 + $0x868] sm:$0xff] %v4171
  %4204 = vst [vmem:[#allocation3 + $0x870] sm:$0xff] %v4172
  %4205 = vst [vmem:[#allocation3 + $0x878] sm:$0xff] %v4173
  %4206 = vst [vmem:[#allocation3 + $0x880] sm:$0xff] %v4174
  %4207 = vst [vmem:[#allocation3 + $0x888] sm:$0xff] %v4175
  %4208 = vst [vmem:[#allocation3 + $0x890] sm:$0xff] %v4176
  %4209 = vst [vmem:[#allocation3 + $0x898] sm:$0xff] %v4177
  %4210 = vst [vmem:[#allocation3 + $0x8a0] sm:$0xff] %v4178
  %4211 = vst [vmem:[#allocation3 + $0x8a8] sm:$0xff] %v4179
  %4212 = vst [vmem:[#allocation3 + $0x8b0] sm:$0xff] %v4180
  %4213 = vst [vmem:[#allocation3 + $0x8b8] sm:$0xff] %v4181
  %4214 = vst [vmem:[#allocation3 + $0x8c0] sm:$0xff] %v4182
  %4215 = vst [vmem:[#allocation3 + $0x8c8] sm:$0xff] %v4183
  %4216 = vst [vmem:[#allocation3 + $0x8d0] sm:$0xff] %v4184
  %4217 = vst [vmem:[#allocation3 + $0x8d8] sm:$0xff] %v4185
  %4218 = vst [vmem:[#allocation3 + $0x8e0] sm:$0xff] %v4186
  %4219 = vst [vmem:[#allocation3 + $0x8e8] sm:$0xff] %v4187
  %4220 = vst [vmem:[#allocation3 + $0x8f0] sm:$0xff] %v4188
  %4221 = vst [vmem:[#allocation3 + $0x8f8] sm:$0xff] %v4189
  %v4222 = vld [vmem:[%s2] sm:$0xff]
  %v4223 = vld [vmem:[%s2 + $0x8] sm:$0xff]
  %v4224 = vld [vmem:[%s2 + $0x10] sm:$0xff]
  %v4225 = vld [vmem:[%s2 + $0x18] sm:$0xff]
  %v4226 = vld [vmem:[%s2 + $0x20] sm:$0xff]
  %v4227 = vld [vmem:[%s2 + $0x28] sm:$0xff]
  %v4228 = vld [vmem:[%s2 + $0x30] sm:$0xff]
  %v4229 = vld [vmem:[%s2 + $0x38] sm:$0xff]
  %v4230 = vld [vmem:[#allocation3] sm:$0xff]
  %v4231 = vld [vmem:[#allocation3 + $0x8] sm:$0xff]
  %v4232 = vld [vmem:[#allocation3 + $0x10] sm:$0xff]
  %v4233 = vld [vmem:[#allocation3 + $0x18] sm:$0xff]
  %v4234 = vld [vmem:[#allocation3 + $0x20] sm:$0xff]
  %v4235 = vld [vmem:[#allocation3 + $0x28] sm:$0xff]
  %v4236 = vld [vmem:[#allocation3 + $0x30] sm:$0xff]
  %v4237 = vld [vmem:[#allocation3 + $0x38] sm:$0xff]
  %v4238 = vld [vmem:[#allocation3 + $0x40] sm:$0xff]
  %v4239 = vld [vmem:[#allocation3 + $0x48] sm:$0xff]
  %v4240 = vld [vmem:[#allocation3 + $0x50] sm:$0xff]
  %v4241 = vld [vmem:[#allocation3 + $0x58] sm:$0xff]
  %v4242 = vld [vmem:[#allocation3 + $0x60] sm:$0xff]
  %v4243 = vld [vmem:[#allocation3 + $0x68] sm:$0xff]
  %v4244 = vld [vmem:[#allocation3 + $0x70] sm:$0xff]
  %v4245 = vld [vmem:[#allocation3 + $0x78] sm:$0xff]
  %v4246 = vld [vmem:[#allocation3 + $0x80] sm:$0xff]
  %v4247 = vld [vmem:[#allocation3 + $0x88] sm:$0xff]
  %v4248 = vld [vmem:[#allocation3 + $0x90] sm:$0xff]
  %v4249 = vld [vmem:[#allocation3 + $0x98] sm:$0xff]
  %v4250 = vld [vmem:[#allocation3 + $0xa0] sm:$0xff]
  %v4251 = vld [vmem:[#allocation3 + $0xa8] sm:$0xff]
  %v4252 = vld [vmem:[#allocation3 + $0xb0] sm:$0xff]
  %v4253 = vld [vmem:[#allocation3 + $0xb8] sm:$0xff]
  %v4254 = vld [vmem:[#allocation3 + $0xc0] sm:$0xff]
  %v4255 = vld [vmem:[#allocation3 + $0xc8] sm:$0xff]
  %v4256 = vld [vmem:[#allocation3 + $0xd0] sm:$0xff]
  %v4257 = vld [vmem:[#allocation3 + $0xd8] sm:$0xff]
  %v4258 = vld [vmem:[#allocation3 + $0xe0] sm:$0xff]
  %v4259 = vld [vmem:[#allocation3 + $0xe8] sm:$0xff]
  %v4260 = vld [vmem:[#allocation3 + $0xf0] sm:$0xff]
  %v4261 = vld [vmem:[#allocation3 + $0xf8] sm:$0xff]
  %v4262 = vld [vmem:[#allocation3 + $0x100] sm:$0xff]
  %v4263 = vld [vmem:[#allocation3 + $0x108] sm:$0xff]
  %v4264 = vld [vmem:[#allocation3 + $0x110] sm:$0xff]
  %v4265 = vld [vmem:[#allocation3 + $0x118] sm:$0xff]
  %v4266 = vld [vmem:[#allocation3 + $0x120] sm:$0xff]
  %v4267 = vld [vmem:[#allocation3 + $0x128] sm:$0xff]
  %v4268 = vld [vmem:[#allocation3 + $0x130] sm:$0xff]
  %v4269 = vld [vmem:[#allocation3 + $0x138] sm:$0xff]
  %v4270 = vld [vmem:[#allocation3 + $0x140] sm:$0xff]
  %v4271 = vld [vmem:[#allocation3 + $0x148] sm:$0xff]
  %v4272 = vld [vmem:[#allocation3 + $0x150] sm:$0xff]
  %v4273 = vld [vmem:[#allocation3 + $0x158] sm:$0xff]
  %v4274 = vld [vmem:[#allocation3 + $0x160] sm:$0xff]
  %v4275 = vld [vmem:[#allocation3 + $0x168] sm:$0xff]
  %v4276 = vld [vmem:[#allocation3 + $0x170] sm:$0xff]
  %v4277 = vld [vmem:[#allocation3 + $0x178] sm:$0xff]
  %v4278 = vld [vmem:[#allocation3 + $0x180] sm:$0xff]
  %v4279 = vld [vmem:[#allocation3 + $0x188] sm:$0xff]
  %v4280 = vld [vmem:[#allocation3 + $0x190] sm:$0xff]
  %v4281 = vld [vmem:[#allocation3 + $0x198] sm:$0xff]
  %v4282 = vld [vmem:[#allocation3 + $0x1a0] sm:$0xff]
  %v4283 = vld [vmem:[#allocation3 + $0x1a8] sm:$0xff]
  %v4284 = vld [vmem:[#allocation3 + $0x1b0] sm:$0xff]
  %v4285 = vld [vmem:[#allocation3 + $0x1b8] sm:$0xff]
  %v4286 = vld [vmem:[#allocation3 + $0x1c0] sm:$0xff]
  %v4287 = vld [vmem:[#allocation3 + $0x1c8] sm:$0xff]
  %v4288 = vld [vmem:[#allocation3 + $0x1d0] sm:$0xff]
  %v4289 = vld [vmem:[#allocation3 + $0x1d8] sm:$0xff]
  %v4290 = vld [vmem:[#allocation3 + $0x1e0] sm:$0xff]
  %v4291 = vld [vmem:[#allocation3 + $0x1e8] sm:$0xff]
  %v4292 = vld [vmem:[#allocation3 + $0x1f0] sm:$0xff]
  %v4293 = vld [vmem:[#allocation3 + $0x1f8] sm:$0xff]
  %v4294 = vld [vmem:[#allocation3 + $0x200] sm:$0xff]
  %v4295 = vld [vmem:[#allocation3 + $0x208] sm:$0xff]
  %v4296 = vld [vmem:[#allocation3 + $0x210] sm:$0xff]
  %v4297 = vld [vmem:[#allocation3 + $0x218] sm:$0xff]
  %v4298 = vld [vmem:[#allocation3 + $0x220] sm:$0xff]
  %v4299 = vld [vmem:[#allocation3 + $0x228] sm:$0xff]
  %v4300 = vld [vmem:[#allocation3 + $0x230] sm:$0xff]
  %v4301 = vld [vmem:[#allocation3 + $0x238] sm:$0xff]
  %v4302 = vld [vmem:[#allocation3 + $0x240] sm:$0xff]
  %v4303 = vld [vmem:[#allocation3 + $0x248] sm:$0xff]
  %v4304 = vld [vmem:[#allocation3 + $0x250] sm:$0xff]
  %v4305 = vld [vmem:[#allocation3 + $0x258] sm:$0xff]
  %v4306 = vld [vmem:[#allocation3 + $0x260] sm:$0xff]
  %v4307 = vld [vmem:[#allocation3 + $0x268] sm:$0xff]
  %v4308 = vld [vmem:[#allocation3 + $0x270] sm:$0xff]
  %v4309 = vld [vmem:[#allocation3 + $0x278] sm:$0xff]
  %v4310 = vld [vmem:[#allocation3 + $0x280] sm:$0xff]
  %v4311 = vld [vmem:[#allocation3 + $0x288] sm:$0xff]
  %v4312 = vld [vmem:[#allocation3 + $0x290] sm:$0xff]
  %v4313 = vld [vmem:[#allocation3 + $0x298] sm:$0xff]
  %v4314 = vld [vmem:[#allocation3 + $0x2a0] sm:$0xff]
  %v4315 = vld [vmem:[#allocation3 + $0x2a8] sm:$0xff]
  %v4316 = vld [vmem:[#allocation3 + $0x2b0] sm:$0xff]
  %v4317 = vld [vmem:[#allocation3 + $0x2b8] sm:$0xff]
  %v4318 = vld [vmem:[#allocation3 + $0x2c0] sm:$0xff]
  %v4319 = vld [vmem:[#allocation3 + $0x2c8] sm:$0xff]
  %v4320 = vld [vmem:[#allocation3 + $0x2d0] sm:$0xff]
  %v4321 = vld [vmem:[#allocation3 + $0x2d8] sm:$0xff]
  %v4322 = vld [vmem:[#allocation3 + $0x2e0] sm:$0xff]
  %v4323 = vld [vmem:[#allocation3 + $0x2e8] sm:$0xff]
  %v4324 = vld [vmem:[#allocation3 + $0x2f0] sm:$0xff]
  %v4325 = vld [vmem:[#allocation3 + $0x2f8] sm:$0xff]
  %v4326 = vld [vmem:[#allocation3 + $0x300] sm:$0xff]
  %v4327 = vld [vmem:[#allocation3 + $0x308] sm:$0xff]
  %v4328 = vld [vmem:[#allocation3 + $0x310] sm:$0xff]
  %v4329 = vld [vmem:[#allocation3 + $0x318] sm:$0xff]
  %v4330 = vld [vmem:[#allocation3 + $0x320] sm:$0xff]
  %v4331 = vld [vmem:[#allocation3 + $0x328] sm:$0xff]
  %v4332 = vld [vmem:[#allocation3 + $0x330] sm:$0xff]
  %v4333 = vld [vmem:[#allocation3 + $0x338] sm:$0xff]
  %v4334 = vld [vmem:[#allocation3 + $0x340] sm:$0xff]
  %v4335 = vld [vmem:[#allocation3 + $0x348] sm:$0xff]
  %v4336 = vld [vmem:[#allocation3 + $0x350] sm:$0xff]
  %v4337 = vld [vmem:[#allocation3 + $0x358] sm:$0xff]
  %v4338 = vld [vmem:[#allocation3 + $0x360] sm:$0xff]
  %v4339 = vld [vmem:[#allocation3 + $0x368] sm:$0xff]
  %v4340 = vld [vmem:[#allocation3 + $0x370] sm:$0xff]
  %v4341 = vld [vmem:[#allocation3 + $0x378] sm:$0xff]
  %v4342 = vld [vmem:[#allocation3 + $0x380] sm:$0xff]
  %v4343 = vld [vmem:[#allocation3 + $0x388] sm:$0xff]
  %v4344 = vld [vmem:[#allocation3 + $0x390] sm:$0xff]
  %v4345 = vld [vmem:[#allocation3 + $0x398] sm:$0xff]
  %v4346 = vld [vmem:[#allocation3 + $0x3a0] sm:$0xff]
  %v4347 = vld [vmem:[#allocation3 + $0x3a8] sm:$0xff]
  %v4348 = vld [vmem:[#allocation3 + $0x3b0] sm:$0xff]
  %v4349 = vld [vmem:[#allocation3 + $0x3b8] sm:$0xff]
  %v4350 = vld [vmem:[#allocation3 + $0x3c0] sm:$0xff]
  %v4351 = vld [vmem:[#allocation3 + $0x3c8] sm:$0xff]
  %v4352 = vld [vmem:[#allocation3 + $0x3d0] sm:$0xff]
  %v4353 = vld [vmem:[#allocation3 + $0x3d8] sm:$0xff]
  %v4354 = vld [vmem:[#allocation3 + $0x3e0] sm:$0xff]
  %v4355 = vld [vmem:[#allocation3 + $0x3e8] sm:$0xff]
  %v4356 = vld [vmem:[#allocation3 + $0x3f0] sm:$0xff]
  %v4357 = vld [vmem:[#allocation3 + $0x3f8] sm:$0xff]
  %v4358 = vld [vmem:[#allocation3 + $0x400] sm:$0xff]
  %v4359 = vld [vmem:[#allocation3 + $0x408] sm:$0xff]
  %v4360 = vld [vmem:[#allocation3 + $0x410] sm:$0xff]
  %v4361 = vld [vmem:[#allocation3 + $0x418] sm:$0xff]
  %v4362 = vld [vmem:[#allocation3 + $0x420] sm:$0xff]
  %v4363 = vld [vmem:[#allocation3 + $0x428] sm:$0xff]
  %v4364 = vld [vmem:[#allocation3 + $0x430] sm:$0xff]
  %v4365 = vld [vmem:[#allocation3 + $0x438] sm:$0xff]
  %v4366 = vld [vmem:[#allocation3 + $0x440] sm:$0xff]
  %v4367 = vld [vmem:[#allocation3 + $0x448] sm:$0xff]
  %v4368 = vld [vmem:[#allocation3 + $0x450] sm:$0xff]
  %v4369 = vld [vmem:[#allocation3 + $0x458] sm:$0xff]
  %v4370 = vld [vmem:[#allocation3 + $0x460] sm:$0xff]
  %v4371 = vld [vmem:[#allocation3 + $0x468] sm:$0xff]
  %v4372 = vld [vmem:[#allocation3 + $0x470] sm:$0xff]
  %v4373 = vld [vmem:[#allocation3 + $0x478] sm:$0xff]
  %v4374 = vld [vmem:[#allocation3 + $0x480] sm:$0xff]
  %v4375 = vld [vmem:[#allocation3 + $0x488] sm:$0xff]
  %v4376 = vld [vmem:[#allocation3 + $0x490] sm:$0xff]
  %v4377 = vld [vmem:[#allocation3 + $0x498] sm:$0xff]
  %v4378 = vld [vmem:[#allocation3 + $0x4a0] sm:$0xff]
  %v4379 = vld [vmem:[#allocation3 + $0x4a8] sm:$0xff]
  %v4380 = vld [vmem:[#allocation3 + $0x4b0] sm:$0xff]
  %v4381 = vld [vmem:[#allocation3 + $0x4b8] sm:$0xff]
  %v4382 = vld [vmem:[#allocation3 + $0x4c0] sm:$0xff]
  %v4383 = vld [vmem:[#allocation3 + $0x4c8] sm:$0xff]
  %v4384 = vld [vmem:[#allocation3 + $0x4d0] sm:$0xff]
  %v4385 = vld [vmem:[#allocation3 + $0x4d8] sm:$0xff]
  %v4386 = vld [vmem:[#allocation3 + $0x4e0] sm:$0xff]
  %v4387 = vld [vmem:[#allocation3 + $0x4e8] sm:$0xff]
  %v4388 = vld [vmem:[#allocation3 + $0x4f0] sm:$0xff]
  %v4389 = vld [vmem:[#allocation3 + $0x4f8] sm:$0xff]
  %v4390 = vld [vmem:[#allocation3 + $0x500] sm:$0xff]
  %v4391 = vld [vmem:[#allocation3 + $0x508] sm:$0xff]
  %v4392 = vld [vmem:[#allocation3 + $0x510] sm:$0xff]
  %v4393 = vld [vmem:[#allocation3 + $0x518] sm:$0xff]
  %v4394 = vld [vmem:[#allocation3 + $0x520] sm:$0xff]
  %v4395 = vld [vmem:[#allocation3 + $0x528] sm:$0xff]
  %v4396 = vld [vmem:[#allocation3 + $0x530] sm:$0xff]
  %v4397 = vld [vmem:[#allocation3 + $0x538] sm:$0xff]
  %v4398 = vld [vmem:[#allocation3 + $0x540] sm:$0xff]
  %v4399 = vld [vmem:[#allocation3 + $0x548] sm:$0xff]
  %v4400 = vld [vmem:[#allocation3 + $0x550] sm:$0xff]
  %v4401 = vld [vmem:[#allocation3 + $0x558] sm:$0xff]
  %v4402 = vld [vmem:[#allocation3 + $0x560] sm:$0xff]
  %v4403 = vld [vmem:[#allocation3 + $0x568] sm:$0xff]
  %v4404 = vld [vmem:[#allocation3 + $0x570] sm:$0xff]
  %v4405 = vld [vmem:[#allocation3 + $0x578] sm:$0xff]
  %v4406 = vld [vmem:[#allocation3 + $0x580] sm:$0xff]
  %v4407 = vld [vmem:[#allocation3 + $0x588] sm:$0xff]
  %v4408 = vld [vmem:[#allocation3 + $0x590] sm:$0xff]
  %v4409 = vld [vmem:[#allocation3 + $0x598] sm:$0xff]
  %v4410 = vld [vmem:[#allocation3 + $0x5a0] sm:$0xff]
  %v4411 = vld [vmem:[#allocation3 + $0x5a8] sm:$0xff]
  %v4412 = vld [vmem:[#allocation3 + $0x5b0] sm:$0xff]
  %v4413 = vld [vmem:[#allocation3 + $0x5b8] sm:$0xff]
  %v4414 = vld [vmem:[#allocation3 + $0x5c0] sm:$0xff]
  %v4415 = vld [vmem:[#allocation3 + $0x5c8] sm:$0xff]
  %v4416 = vld [vmem:[#allocation3 + $0x5d0] sm:$0xff]
  %v4417 = vld [vmem:[#allocation3 + $0x5d8] sm:$0xff]
  %v4418 = vld [vmem:[#allocation3 + $0x5e0] sm:$0xff]
  %v4419 = vld [vmem:[#allocation3 + $0x5e8] sm:$0xff]
  %v4420 = vld [vmem:[#allocation3 + $0x5f0] sm:$0xff]
  %v4421 = vld [vmem:[#allocation3 + $0x5f8] sm:$0xff]
  %v4422 = vld [vmem:[#allocation3 + $0x600] sm:$0xff]
  %v4423 = vld [vmem:[#allocation3 + $0x608] sm:$0xff]
  %v4424 = vld [vmem:[#allocation3 + $0x610] sm:$0xff]
  %v4425 = vld [vmem:[#allocation3 + $0x618] sm:$0xff]
  %v4426 = vld [vmem:[#allocation3 + $0x620] sm:$0xff]
  %v4427 = vld [vmem:[#allocation3 + $0x628] sm:$0xff]
  %v4428 = vld [vmem:[#allocation3 + $0x630] sm:$0xff]
  %v4429 = vld [vmem:[#allocation3 + $0x638] sm:$0xff]
  %v4430 = vld [vmem:[#allocation3 + $0x640] sm:$0xff]
  %v4431 = vld [vmem:[#allocation3 + $0x648] sm:$0xff]
  %v4432 = vld [vmem:[#allocation3 + $0x650] sm:$0xff]
  %v4433 = vld [vmem:[#allocation3 + $0x658] sm:$0xff]
  %v4434 = vld [vmem:[#allocation3 + $0x660] sm:$0xff]
  %v4435 = vld [vmem:[#allocation3 + $0x668] sm:$0xff]
  %v4436 = vld [vmem:[#allocation3 + $0x670] sm:$0xff]
  %v4437 = vld [vmem:[#allocation3 + $0x678] sm:$0xff]
  %v4438 = vld [vmem:[#allocation3 + $0x680] sm:$0xff]
  %v4439 = vld [vmem:[#allocation3 + $0x688] sm:$0xff]
  %v4440 = vld [vmem:[#allocation3 + $0x690] sm:$0xff]
  %v4441 = vld [vmem:[#allocation3 + $0x698] sm:$0xff]
  %v4442 = vld [vmem:[#allocation3 + $0x6a0] sm:$0xff]
  %v4443 = vld [vmem:[#allocation3 + $0x6a8] sm:$0xff]
  %v4444 = vld [vmem:[#allocation3 + $0x6b0] sm:$0xff]
  %v4445 = vld [vmem:[#allocation3 + $0x6b8] sm:$0xff]
  %v4446 = vld [vmem:[#allocation3 + $0x6c0] sm:$0xff]
  %v4447 = vld [vmem:[#allocation3 + $0x6c8] sm:$0xff]
  %v4448 = vld [vmem:[#allocation3 + $0x6d0] sm:$0xff]
  %v4449 = vld [vmem:[#allocation3 + $0x6d8] sm:$0xff]
  %v4450 = vld [vmem:[#allocation3 + $0x6e0] sm:$0xff]
  %v4451 = vld [vmem:[#allocation3 + $0x6e8] sm:$0xff]
  %v4452 = vld [vmem:[#allocation3 + $0x6f0] sm:$0xff]
  %v4453 = vld [vmem:[#allocation3 + $0x6f8] sm:$0xff]
  %v4454 = vld [vmem:[#allocation3 + $0x700] sm:$0xff]
  %v4455 = vld [vmem:[#allocation3 + $0x708] sm:$0xff]
  %v4456 = vld [vmem:[#allocation3 + $0x710] sm:$0xff]
  %v4457 = vld [vmem:[#allocation3 + $0x718] sm:$0xff]
  %v4458 = vld [vmem:[#allocation3 + $0x720] sm:$0xff]
  %v4459 = vld [vmem:[#allocation3 + $0x728] sm:$0xff]
  %v4460 = vld [vmem:[#allocation3 + $0x730] sm:$0xff]
  %v4461 = vld [vmem:[#allocation3 + $0x738] sm:$0xff]
  %v4462 = vld [vmem:[#allocation3 + $0x740] sm:$0xff]
  %v4463 = vld [vmem:[#allocation3 + $0x748] sm:$0xff]
  %v4464 = vld [vmem:[#allocation3 + $0x750] sm:$0xff]
  %v4465 = vld [vmem:[#allocation3 + $0x758] sm:$0xff]
  %v4466 = vld [vmem:[#allocation3 + $0x760] sm:$0xff]
  %v4467 = vld [vmem:[#allocation3 + $0x768] sm:$0xff]
  %v4468 = vld [vmem:[#allocation3 + $0x770] sm:$0xff]
  %v4469 = vld [vmem:[#allocation3 + $0x778] sm:$0xff]
  %v4470 = vld [vmem:[#allocation3 + $0x780] sm:$0xff]
  %v4471 = vld [vmem:[#allocation3 + $0x788] sm:$0xff]
  %v4472 = vld [vmem:[#allocation3 + $0x790] sm:$0xff]
  %v4473 = vld [vmem:[#allocation3 + $0x798] sm:$0xff]
  %v4474 = vld [vmem:[#allocation3 + $0x7a0] sm:$0xff]
  %v4475 = vld [vmem:[#allocation3 + $0x7a8] sm:$0xff]
  %v4476 = vld [vmem:[#allocation3 + $0x7b0] sm:$0xff]
  %v4477 = vld [vmem:[#allocation3 + $0x7b8] sm:$0xff]
  %v4478 = vld [vmem:[#allocation3 + $0x7c0] sm:$0xff]
  %v4479 = vld [vmem:[#allocation3 + $0x7c8] sm:$0xff]
  %v4480 = vld [vmem:[#allocation3 + $0x7d0] sm:$0xff]
  %v4481 = vld [vmem:[#allocation3 + $0x7d8] sm:$0xff]
  %v4482 = vld [vmem:[#allocation3 + $0x7e0] sm:$0xff]
  %v4483 = vld [vmem:[#allocation3 + $0x7e8] sm:$0xff]
  %v4484 = vld [vmem:[#allocation3 + $0x7f0] sm:$0xff]
  %v4485 = vld [vmem:[#allocation3 + $0x7f8] sm:$0xff]
  %v4486 = vld [vmem:[#allocation3 + $0x800] sm:$0xff]
  %v4487 = vld [vmem:[#allocation3 + $0x808] sm:$0xff]
  %v4488 = vld [vmem:[#allocation3 + $0x810] sm:$0xff]
  %v4489 = vld [vmem:[#allocation3 + $0x818] sm:$0xff]
  %v4490 = vld [vmem:[#allocation3 + $0x820] sm:$0xff]
  %v4491 = vld [vmem:[#allocation3 + $0x828] sm:$0xff]
  %v4492 = vld [vmem:[#allocation3 + $0x830] sm:$0xff]
  %v4493 = vld [vmem:[#allocation3 + $0x838] sm:$0xff]
  %v4494 = vld [vmem:[#allocation3 + $0x840] sm:$0xff]
  %v4495 = vld [vmem:[#allocation3 + $0x848] sm:$0xff]
  %v4496 = vld [vmem:[#allocation3 + $0x850] sm:$0xff]
  %v4497 = vld [vmem:[#allocation3 + $0x858] sm:$0xff]
  %v4498 = vld [vmem:[#allocation3 + $0x860] sm:$0xff]
  %v4499 = vld [vmem:[#allocation3 + $0x868] sm:$0xff]
  %v4500 = vld [vmem:[#allocation3 + $0x870] sm:$0xff]
  %v4501 = vld [vmem:[#allocation3 + $0x878] sm:$0xff]
  %v4502 = vld [vmem:[#allocation3 + $0x880] sm:$0xff]
  %v4503 = vld [vmem:[#allocation3 + $0x888] sm:$0xff]
  %v4504 = vld [vmem:[#allocation3 + $0x890] sm:$0xff]
  %v4505 = vld [vmem:[#allocation3 + $0x898] sm:$0xff]
  %v4506 = vld [vmem:[#allocation3 + $0x8a0] sm:$0xff]
  %v4507 = vld [vmem:[#allocation3 + $0x8a8] sm:$0xff]
  %v4508 = vld [vmem:[#allocation3 + $0x8b0] sm:$0xff]
  %v4509 = vld [vmem:[#allocation3 + $0x8b8] sm:$0xff]
  %v4510 = vld [vmem:[#allocation3 + $0x8c0] sm:$0xff]
  %v4511 = vld [vmem:[#allocation3 + $0x8c8] sm:$0xff]
  %v4512 = vld [vmem:[#allocation3 + $0x8d0] sm:$0xff]
  %v4513 = vld [vmem:[#allocation3 + $0x8d8] sm:$0xff]
  %v4514 = vld [vmem:[#allocation3 + $0x8e0] sm:$0xff]
  %v4515 = vld [vmem:[#allocation3 + $0x8e8] sm:$0xff]
  %v4516 = vld [vmem:[#allocation3 + $0x8f0] sm:$0xff]
  %v4517 = vld [vmem:[#allocation3 + $0x8f8] sm:$0xff]
  %vm4518 = vcmask 130048
  %v4520 = vsel %vm4518, %v4223, 0
  %v4523 = vsel %vm4518, %v4225, 0
  %v4526 = vsel %vm4518, %v4227, 0
  %v4529 = vsel %vm4518, %v4229, 0
  %4531 = vmatpush.msra.mxu0 %v4470
  %4532 = vmatpush.msra.mxu0 %v4454
  %4533 = vmatpush.msra.mxu0 %v4438
  %4534 = vmatpush.msra.mxu0 %v4422
  %4535 = vmatpush.msra.mxu0 %v4406
  %4536 = vmatpush.msra.mxu0 %v4390
  %4537 = vmatpush.msra.mxu0 %v4374
  %4538 = vmatpush.msra.mxu0 %v4358
  %4539 = vmatpush.msra.mxu0 %v4342
  %4540 = vmatpush.msra.mxu0 %v4326
  %4541 = vmatpush.msra.mxu0 %v4310
  %4542 = vmatpush.msra.mxu0 %v4294
  %4543 = vmatpush.msra.mxu0 %v4278
  %4544 = vmatpush.msra.mxu0 %v4262
  %4545 = vmatpush.msra.mxu0 %v4246
  %4546 = vmatpush.msra.mxu0 %v4230
  %4547 = vmatmul.f32.gmra.mxu0 %v4222
  %v4548 = vpop.f32.mrf.mxu0
  %v4549 = vadd.f32 0.0, %v4548
  %4550 = vmatmul.f32.gmra.mxu0 %v4224
  %v4551 = vpop.f32.mrf.mxu0
  %v4552 = vadd.f32 0.0, %v4551
  %4553 = vmatmul.f32.gmra.mxu0 %v4226
  %v4554 = vpop.f32.mrf.mxu0
  %v4555 = vadd.f32 0.0, %v4554
  %4556 = vmatmul.f32.gmra.mxu0 %v4228
  %v4557 = vpop.f32.mrf.mxu0
  %v4558 = vadd.f32 0.0, %v4557
  %4559 = vdwg.mxu0
  %4560 = vmatpush.msra.mxu0 0.0
  %4561 = vmatpush.msra.mxu0 0.0
  %4562 = vmatpush.msra.mxu0 0.0
  %4563 = vmatpush.msra.mxu0 0.0
  %4564 = vmatpush.msra.mxu0 0.0
  %4565 = vmatpush.msra.mxu0 0.0
  %4566 = vmatpush.msra.mxu0 0.0
  %4567 = vmatpush.msra.mxu0 0.0
  %4568 = vmatpush.msra.mxu0 0.0
  %4569 = vmatpush.msra.mxu0 0.0
  %4570 = vmatpush.msra.mxu0 0.0
  %4571 = vmatpush.msra.mxu0 0.0
  %4572 = vmatpush.msra.mxu0 0.0
  %4573 = vmatpush.msra.mxu0 0.0
  %4574 = vmatpush.msra.mxu0 %v4502
  %4575 = vmatpush.msra.mxu0 %v4486
  %4576 = vmatmul.f32.gmra.mxu0 %v4520
  %v4577 = vpop.f32.mrf.mxu0
  %v4578 = vadd.f32 %v4549, %v4577
  %4579 = vmatmul.f32.gmra.mxu0 %v4523
  %v4580 = vpop.f32.mrf.mxu0
  %v4581 = vadd.f32 %v4552, %v4580
  %4582 = vmatmul.f32.gmra.mxu0 %v4526
  %v4583 = vpop.f32.mrf.mxu0
  %v4584 = vadd.f32 %v4555, %v4583
  %4585 = vmatmul.f32.gmra.mxu0 %v4529
  %v4586 = vpop.f32.mrf.mxu0
  %v4587 = vadd.f32 %v4558, %v4586
  %4588 = vdwg.mxu0
  %4589 = vmatpush.msra.mxu0 %v4471
  %4590 = vmatpush.msra.mxu0 %v4455
  %4591 = vmatpush.msra.mxu0 %v4439
  %4592 = vmatpush.msra.mxu0 %v4423
  %4593 = vmatpush.msra.mxu0 %v4407
  %4594 = vmatpush.msra.mxu0 %v4391
  %4595 = vmatpush.msra.mxu0 %v4375
  %4596 = vmatpush.msra.mxu0 %v4359
  %4597 = vmatpush.msra.mxu0 %v4343
  %4598 = vmatpush.msra.mxu0 %v4327
  %4599 = vmatpush.msra.mxu0 %v4311
  %4600 = vmatpush.msra.mxu0 %v4295
  %4601 = vmatpush.msra.mxu0 %v4279
  %4602 = vmatpush.msra.mxu0 %v4263
  %4603 = vmatpush.msra.mxu0 %v4247
  %4604 = vmatpush.msra.mxu0 %v4231
  %4605 = vmatmul.f32.gmra.mxu0 %v4222
  %v4606 = vpop.f32.mrf.mxu0
  %v4607 = vadd.f32 0.0, %v4606
  %4608 = vmatmul.f32.gmra.mxu0 %v4224
  %v4609 = vpop.f32.mrf.mxu0
  %v4610 = vadd.f32 0.0, %v4609
  %4611 = vmatmul.f32.gmra.mxu0 %v4226
  %v4612 = vpop.f32.mrf.mxu0
  %v4613 = vadd.f32 0.0, %v4612
  %4614 = vmatmul.f32.gmra.mxu0 %v4228
  %v4615 = vpop.f32.mrf.mxu0
  %v4616 = vadd.f32 0.0, %v4615
  %4617 = vdwg.mxu0
  %4618 = vmatpush.msra.mxu0 0.0
  %4619 = vmatpush.msra.mxu0 0.0
  %4620 = vmatpush.msra.mxu0 0.0
  %4621 = vmatpush.msra.mxu0 0.0
  %4622 = vmatpush.msra.mxu0 0.0
  %4623 = vmatpush.msra.mxu0 0.0
  %4624 = vmatpush.msra.mxu0 0.0
  %4625 = vmatpush.msra.mxu0 0.0
  %4626 = vmatpush.msra.mxu0 0.0
  %4627 = vmatpush.msra.mxu0 0.0
  %4628 = vmatpush.msra.mxu0 0.0
  %4629 = vmatpush.msra.mxu0 0.0
  %4630 = vmatpush.msra.mxu0 0.0
  %4631 = vmatpush.msra.mxu0 0.0
  %4632 = vmatpush.msra.mxu0 %v4503
  %4633 = vmatpush.msra.mxu0 %v4487
  %4634 = vmatmul.f32.gmra.mxu0 %v4520
  %v4635 = vpop.f32.mrf.mxu0
  %v4636 = vadd.f32 %v4607, %v4635
  %4637 = vmatmul.f32.gmra.mxu0 %v4523
  %v4638 = vpop.f32.mrf.mxu0
  %v4639 = vadd.f32 %v4610, %v4638
  %4640 = vmatmul.f32.gmra.mxu0 %v4526
  %v4641 = vpop.f32.mrf.mxu0
  %v4642 = vadd.f32 %v4613, %v4641
  %4643 = vmatmul.f32.gmra.mxu0 %v4529
  %v4644 = vpop.f32.mrf.mxu0
  %v4645 = vadd.f32 %v4616, %v4644
  %4646 = vdwg.mxu0
  %4647 = vmatpush.msra.mxu0 %v4472
  %4648 = vmatpush.msra.mxu0 %v4456
  %4649 = vmatpush.msra.mxu0 %v4440
  %4650 = vmatpush.msra.mxu0 %v4424
  %4651 = vmatpush.msra.mxu0 %v4408
  %4652 = vmatpush.msra.mxu0 %v4392
  %4653 = vmatpush.msra.mxu0 %v4376
  %4654 = vmatpush.msra.mxu0 %v4360
  %4655 = vmatpush.msra.mxu0 %v4344
  %4656 = vmatpush.msra.mxu0 %v4328
  %4657 = vmatpush.msra.mxu0 %v4312
  %4658 = vmatpush.msra.mxu0 %v4296
  %4659 = vmatpush.msra.mxu0 %v4280
  %4660 = vmatpush.msra.mxu0 %v4264
  %4661 = vmatpush.msra.mxu0 %v4248
  %4662 = vmatpush.msra.mxu0 %v4232
  %4663 = vmatmul.f32.gmra.mxu0 %v4222
  %v4664 = vpop.f32.mrf.mxu0
  %v4665 = vadd.f32 0.0, %v4664
  %4666 = vmatmul.f32.gmra.mxu0 %v4224
  %v4667 = vpop.f32.mrf.mxu0
  %v4668 = vadd.f32 0.0, %v4667
  %4669 = vmatmul.f32.gmra.mxu0 %v4226
  %v4670 = vpop.f32.mrf.mxu0
  %v4671 = vadd.f32 0.0, %v4670
  %4672 = vmatmul.f32.gmra.mxu0 %v4228
  %v4673 = vpop.f32.mrf.mxu0
  %v4674 = vadd.f32 0.0, %v4673
  %4675 = vdwg.mxu0
  %4676 = vmatpush.msra.mxu0 0.0
  %4677 = vmatpush.msra.mxu0 0.0
  %4678 = vmatpush.msra.mxu0 0.0
  %4679 = vmatpush.msra.mxu0 0.0
  %4680 = vmatpush.msra.mxu0 0.0
  %4681 = vmatpush.msra.mxu0 0.0
  %4682 = vmatpush.msra.mxu0 0.0
  %4683 = vmatpush.msra.mxu0 0.0
  %4684 = vmatpush.msra.mxu0 0.0
  %4685 = vmatpush.msra.mxu0 0.0
  %4686 = vmatpush.msra.mxu0 0.0
  %4687 = vmatpush.msra.mxu0 0.0
  %4688 = vmatpush.msra.mxu0 0.0
  %4689 = vmatpush.msra.mxu0 0.0
  %4690 = vmatpush.msra.mxu0 %v4504
  %4691 = vmatpush.msra.mxu0 %v4488
  %4692 = vmatmul.f32.gmra.mxu0 %v4520
  %v4693 = vpop.f32.mrf.mxu0
  %v4694 = vadd.f32 %v4665, %v4693
  %4695 = vmatmul.f32.gmra.mxu0 %v4523
  %v4696 = vpop.f32.mrf.mxu0
  %v4697 = vadd.f32 %v4668, %v4696
  %4698 = vmatmul.f32.gmra.mxu0 %v4526
  %v4699 = vpop.f32.mrf.mxu0
  %v4700 = vadd.f32 %v4671, %v4699
  %4701 = vmatmul.f32.gmra.mxu0 %v4529
  %v4702 = vpop.f32.mrf.mxu0
  %v4703 = vadd.f32 %v4674, %v4702
  %4704 = vdwg.mxu0
  %4705 = vmatpush.msra.mxu0 %v4473
  %4706 = vmatpush.msra.mxu0 %v4457
  %4707 = vmatpush.msra.mxu0 %v4441
  %4708 = vmatpush.msra.mxu0 %v4425
  %4709 = vmatpush.msra.mxu0 %v4409
  %4710 = vmatpush.msra.mxu0 %v4393
  %4711 = vmatpush.msra.mxu0 %v4377
  %4712 = vmatpush.msra.mxu0 %v4361
  %4713 = vmatpush.msra.mxu0 %v4345
  %4714 = vmatpush.msra.mxu0 %v4329
  %4715 = vmatpush.msra.mxu0 %v4313
  %4716 = vmatpush.msra.mxu0 %v4297
  %4717 = vmatpush.msra.mxu0 %v4281
  %4718 = vmatpush.msra.mxu0 %v4265
  %4719 = vmatpush.msra.mxu0 %v4249
  %4720 = vmatpush.msra.mxu0 %v4233
  %4721 = vmatmul.f32.gmra.mxu0 %v4222
  %v4722 = vpop.f32.mrf.mxu0
  %v4723 = vadd.f32 0.0, %v4722
  %4724 = vmatmul.f32.gmra.mxu0 %v4224
  %v4725 = vpop.f32.mrf.mxu0
  %v4726 = vadd.f32 0.0, %v4725
  %4727 = vmatmul.f32.gmra.mxu0 %v4226
  %v4728 = vpop.f32.mrf.mxu0
  %v4729 = vadd.f32 0.0, %v4728
  %4730 = vmatmul.f32.gmra.mxu0 %v4228
  %v4731 = vpop.f32.mrf.mxu0
  %v4732 = vadd.f32 0.0, %v4731
  %4733 = vdwg.mxu0
  %4734 = vmatpush.msra.mxu0 0.0
  %4735 = vmatpush.msra.mxu0 0.0
  %4736 = vmatpush.msra.mxu0 0.0
  %4737 = vmatpush.msra.mxu0 0.0
  %4738 = vmatpush.msra.mxu0 0.0
  %4739 = vmatpush.msra.mxu0 0.0
  %4740 = vmatpush.msra.mxu0 0.0
  %4741 = vmatpush.msra.mxu0 0.0
  %4742 = vmatpush.msra.mxu0 0.0
  %4743 = vmatpush.msra.mxu0 0.0
  %4744 = vmatpush.msra.mxu0 0.0
  %4745 = vmatpush.msra.mxu0 0.0
  %4746 = vmatpush.msra.mxu0 0.0
  %4747 = vmatpush.msra.mxu0 0.0
  %4748 = vmatpush.msra.mxu0 %v4505
  %4749 = vmatpush.msra.mxu0 %v4489
  %4750 = vmatmul.f32.gmra.mxu0 %v4520
  %v4751 = vpop.f32.mrf.mxu0
  %v4752 = vadd.f32 %v4723, %v4751
  %4753 = vmatmul.f32.gmra.mxu0 %v4523
  %v4754 = vpop.f32.mrf.mxu0
  %v4755 = vadd.f32 %v4726, %v4754
  %4756 = vmatmul.f32.gmra.mxu0 %v4526
  %v4757 = vpop.f32.mrf.mxu0
  %v4758 = vadd.f32 %v4729, %v4757
  %4759 = vmatmul.f32.gmra.mxu0 %v4529
  %v4760 = vpop.f32.mrf.mxu0
  %v4761 = vadd.f32 %v4732, %v4760
  %4762 = vdwg.mxu0
  %4763 = vmatpush.msra.mxu0 %v4474
  %4764 = vmatpush.msra.mxu0 %v4458
  %4765 = vmatpush.msra.mxu0 %v4442
  %4766 = vmatpush.msra.mxu0 %v4426
  %4767 = vmatpush.msra.mxu0 %v4410
  %4768 = vmatpush.msra.mxu0 %v4394
  %4769 = vmatpush.msra.mxu0 %v4378
  %4770 = vmatpush.msra.mxu0 %v4362
  %4771 = vmatpush.msra.mxu0 %v4346
  %4772 = vmatpush.msra.mxu0 %v4330
  %4773 = vmatpush.msra.mxu0 %v4314
  %4774 = vmatpush.msra.mxu0 %v4298
  %4775 = vmatpush.msra.mxu0 %v4282
  %4776 = vmatpush.msra.mxu0 %v4266
  %4777 = vmatpush.msra.mxu0 %v4250
  %4778 = vmatpush.msra.mxu0 %v4234
  %4779 = vmatmul.f32.gmra.mxu0 %v4222
  %v4780 = vpop.f32.mrf.mxu0
  %v4781 = vadd.f32 0.0, %v4780
  %4782 = vmatmul.f32.gmra.mxu0 %v4224
  %v4783 = vpop.f32.mrf.mxu0
  %v4784 = vadd.f32 0.0, %v4783
  %4785 = vmatmul.f32.gmra.mxu0 %v4226
  %v4786 = vpop.f32.mrf.mxu0
  %v4787 = vadd.f32 0.0, %v4786
  %4788 = vmatmul.f32.gmra.mxu0 %v4228
  %v4789 = vpop.f32.mrf.mxu0
  %v4790 = vadd.f32 0.0, %v4789
  %4791 = vdwg.mxu0
  %4792 = vmatpush.msra.mxu0 0.0
  %4793 = vmatpush.msra.mxu0 0.0
  %4794 = vmatpush.msra.mxu0 0.0
  %4795 = vmatpush.msra.mxu0 0.0
  %4796 = vmatpush.msra.mxu0 0.0
  %4797 = vmatpush.msra.mxu0 0.0
  %4798 = vmatpush.msra.mxu0 0.0
  %4799 = vmatpush.msra.mxu0 0.0
  %4800 = vmatpush.msra.mxu0 0.0
  %4801 = vmatpush.msra.mxu0 0.0
  %4802 = vmatpush.msra.mxu0 0.0
  %4803 = vmatpush.msra.mxu0 0.0
  %4804 = vmatpush.msra.mxu0 0.0
  %4805 = vmatpush.msra.mxu0 0.0
  %4806 = vmatpush.msra.mxu0 %v4506
  %4807 = vmatpush.msra.mxu0 %v4490
  %4808 = vmatmul.f32.gmra.mxu0 %v4520
  %v4809 = vpop.f32.mrf.mxu0
  %v4810 = vadd.f32 %v4781, %v4809
  %4811 = vmatmul.f32.gmra.mxu0 %v4523
  %v4812 = vpop.f32.mrf.mxu0
  %v4813 = vadd.f32 %v4784, %v4812
  %4814 = vmatmul.f32.gmra.mxu0 %v4526
  %v4815 = vpop.f32.mrf.mxu0
  %v4816 = vadd.f32 %v4787, %v4815
  %4817 = vmatmul.f32.gmra.mxu0 %v4529
  %v4818 = vpop.f32.mrf.mxu0
  %v4819 = vadd.f32 %v4790, %v4818
  %4820 = vdwg.mxu0
  %4821 = vmatpush.msra.mxu0 %v4475
  %4822 = vmatpush.msra.mxu0 %v4459
  %4823 = vmatpush.msra.mxu0 %v4443
  %4824 = vmatpush.msra.mxu0 %v4427
  %4825 = vmatpush.msra.mxu0 %v4411
  %4826 = vmatpush.msra.mxu0 %v4395
  %4827 = vmatpush.msra.mxu0 %v4379
  %4828 = vmatpush.msra.mxu0 %v4363
  %4829 = vmatpush.msra.mxu0 %v4347
  %4830 = vmatpush.msra.mxu0 %v4331
  %4831 = vmatpush.msra.mxu0 %v4315
  %4832 = vmatpush.msra.mxu0 %v4299
  %4833 = vmatpush.msra.mxu0 %v4283
  %4834 = vmatpush.msra.mxu0 %v4267
  %4835 = vmatpush.msra.mxu0 %v4251
  %4836 = vmatpush.msra.mxu0 %v4235
  %4837 = vmatmul.f32.gmra.mxu0 %v4222
  %v4838 = vpop.f32.mrf.mxu0
  %v4839 = vadd.f32 0.0, %v4838
  %4840 = vmatmul.f32.gmra.mxu0 %v4224
  %v4841 = vpop.f32.mrf.mxu0
  %v4842 = vadd.f32 0.0, %v4841
  %4843 = vmatmul.f32.gmra.mxu0 %v4226
  %v4844 = vpop.f32.mrf.mxu0
  %v4845 = vadd.f32 0.0, %v4844
  %4846 = vmatmul.f32.gmra.mxu0 %v4228
  %v4847 = vpop.f32.mrf.mxu0
  %v4848 = vadd.f32 0.0, %v4847
  %4849 = vdwg.mxu0
  %4850 = vmatpush.msra.mxu0 0.0
  %4851 = vmatpush.msra.mxu0 0.0
  %4852 = vmatpush.msra.mxu0 0.0
  %4853 = vmatpush.msra.mxu0 0.0
  %4854 = vmatpush.msra.mxu0 0.0
  %4855 = vmatpush.msra.mxu0 0.0
  %4856 = vmatpush.msra.mxu0 0.0
  %4857 = vmatpush.msra.mxu0 0.0
  %4858 = vmatpush.msra.mxu0 0.0
  %4859 = vmatpush.msra.mxu0 0.0
  %4860 = vmatpush.msra.mxu0 0.0
  %4861 = vmatpush.msra.mxu0 0.0
  %4862 = vmatpush.msra.mxu0 0.0
  %4863 = vmatpush.msra.mxu0 0.0
  %4864 = vmatpush.msra.mxu0 %v4507
  %4865 = vmatpush.msra.mxu0 %v4491
  %4866 = vmatmul.f32.gmra.mxu0 %v4520
  %v4867 = vpop.f32.mrf.mxu0
  %v4868 = vadd.f32 %v4839, %v4867
  %4869 = vmatmul.f32.gmra.mxu0 %v4523
  %v4870 = vpop.f32.mrf.mxu0
  %v4871 = vadd.f32 %v4842, %v4870
  %4872 = vmatmul.f32.gmra.mxu0 %v4526
  %v4873 = vpop.f32.mrf.mxu0
  %v4874 = vadd.f32 %v4845, %v4873
  %4875 = vmatmul.f32.gmra.mxu0 %v4529
  %v4876 = vpop.f32.mrf.mxu0
  %v4877 = vadd.f32 %v4848, %v4876
  %4878 = vdwg.mxu0
  %4879 = vmatpush.msra.mxu0 %v4476
  %4880 = vmatpush.msra.mxu0 %v4460
  %4881 = vmatpush.msra.mxu0 %v4444
  %4882 = vmatpush.msra.mxu0 %v4428
  %4883 = vmatpush.msra.mxu0 %v4412
  %4884 = vmatpush.msra.mxu0 %v4396
  %4885 = vmatpush.msra.mxu0 %v4380
  %4886 = vmatpush.msra.mxu0 %v4364
  %4887 = vmatpush.msra.mxu0 %v4348
  %4888 = vmatpush.msra.mxu0 %v4332
  %4889 = vmatpush.msra.mxu0 %v4316
  %4890 = vmatpush.msra.mxu0 %v4300
  %4891 = vmatpush.msra.mxu0 %v4284
  %4892 = vmatpush.msra.mxu0 %v4268
  %4893 = vmatpush.msra.mxu0 %v4252
  %4894 = vmatpush.msra.mxu0 %v4236
  %4895 = vmatmul.f32.gmra.mxu0 %v4222
  %v4896 = vpop.f32.mrf.mxu0
  %v4897 = vadd.f32 0.0, %v4896
  %4898 = vmatmul.f32.gmra.mxu0 %v4224
  %v4899 = vpop.f32.mrf.mxu0
  %v4900 = vadd.f32 0.0, %v4899
  %4901 = vmatmul.f32.gmra.mxu0 %v4226
  %v4902 = vpop.f32.mrf.mxu0
  %v4903 = vadd.f32 0.0, %v4902
  %4904 = vmatmul.f32.gmra.mxu0 %v4228
  %v4905 = vpop.f32.mrf.mxu0
  %v4906 = vadd.f32 0.0, %v4905
  %4907 = vdwg.mxu0
  %4908 = vmatpush.msra.mxu0 0.0
  %4909 = vmatpush.msra.mxu0 0.0
  %4910 = vmatpush.msra.mxu0 0.0
  %4911 = vmatpush.msra.mxu0 0.0
  %4912 = vmatpush.msra.mxu0 0.0
  %4913 = vmatpush.msra.mxu0 0.0
  %4914 = vmatpush.msra.mxu0 0.0
  %4915 = vmatpush.msra.mxu0 0.0
  %4916 = vmatpush.msra.mxu0 0.0
  %4917 = vmatpush.msra.mxu0 0.0
  %4918 = vmatpush.msra.mxu0 0.0
  %4919 = vmatpush.msra.mxu0 0.0
  %4920 = vmatpush.msra.mxu0 0.0
  %4921 = vmatpush.msra.mxu0 0.0
  %4922 = vmatpush.msra.mxu0 %v4508
  %4923 = vmatpush.msra.mxu0 %v4492
  %4924 = vmatmul.f32.gmra.mxu0 %v4520
  %v4925 = vpop.f32.mrf.mxu0
  %v4926 = vadd.f32 %v4897, %v4925
  %4927 = vmatmul.f32.gmra.mxu0 %v4523
  %v4928 = vpop.f32.mrf.mxu0
  %v4929 = vadd.f32 %v4900, %v4928
  %4930 = vmatmul.f32.gmra.mxu0 %v4526
  %v4931 = vpop.f32.mrf.mxu0
  %v4932 = vadd.f32 %v4903, %v4931
  %4933 = vmatmul.f32.gmra.mxu0 %v4529
  %v4934 = vpop.f32.mrf.mxu0
  %v4935 = vadd.f32 %v4906, %v4934
  %4936 = vdwg.mxu0
  %4937 = vmatpush.msra.mxu0 %v4477
  %4938 = vmatpush.msra.mxu0 %v4461
  %4939 = vmatpush.msra.mxu0 %v4445
  %4940 = vmatpush.msra.mxu0 %v4429
  %4941 = vmatpush.msra.mxu0 %v4413
  %4942 = vmatpush.msra.mxu0 %v4397
  %4943 = vmatpush.msra.mxu0 %v4381
  %4944 = vmatpush.msra.mxu0 %v4365
  %4945 = vmatpush.msra.mxu0 %v4349
  %4946 = vmatpush.msra.mxu0 %v4333
  %4947 = vmatpush.msra.mxu0 %v4317
  %4948 = vmatpush.msra.mxu0 %v4301
  %4949 = vmatpush.msra.mxu0 %v4285
  %4950 = vmatpush.msra.mxu0 %v4269
  %4951 = vmatpush.msra.mxu0 %v4253
  %4952 = vmatpush.msra.mxu0 %v4237
  %4953 = vmatmul.f32.gmra.mxu0 %v4222
  %v4954 = vpop.f32.mrf.mxu0
  %v4955 = vadd.f32 0.0, %v4954
  %4956 = vmatmul.f32.gmra.mxu0 %v4224
  %v4957 = vpop.f32.mrf.mxu0
  %v4958 = vadd.f32 0.0, %v4957
  %4959 = vmatmul.f32.gmra.mxu0 %v4226
  %v4960 = vpop.f32.mrf.mxu0
  %v4961 = vadd.f32 0.0, %v4960
  %4962 = vmatmul.f32.gmra.mxu0 %v4228
  %v4963 = vpop.f32.mrf.mxu0
  %v4964 = vadd.f32 0.0, %v4963
  %4965 = vdwg.mxu0
  %4966 = vmatpush.msra.mxu0 0.0
  %4967 = vmatpush.msra.mxu0 0.0
  %4968 = vmatpush.msra.mxu0 0.0
  %4969 = vmatpush.msra.mxu0 0.0
  %4970 = vmatpush.msra.mxu0 0.0
  %4971 = vmatpush.msra.mxu0 0.0
  %4972 = vmatpush.msra.mxu0 0.0
  %4973 = vmatpush.msra.mxu0 0.0
  %4974 = vmatpush.msra.mxu0 0.0
  %4975 = vmatpush.msra.mxu0 0.0
  %4976 = vmatpush.msra.mxu0 0.0
  %4977 = vmatpush.msra.mxu0 0.0
  %4978 = vmatpush.msra.mxu0 0.0
  %4979 = vmatpush.msra.mxu0 0.0
  %4980 = vmatpush.msra.mxu0 %v4509
  %4981 = vmatpush.msra.mxu0 %v4493
  %4982 = vmatmul.f32.gmra.mxu0 %v4520
  %v4983 = vpop.f32.mrf.mxu0
  %v4984 = vadd.f32 %v4955, %v4983
  %4985 = vmatmul.f32.gmra.mxu0 %v4523
  %v4986 = vpop.f32.mrf.mxu0
  %v4987 = vadd.f32 %v4958, %v4986
  %4988 = vmatmul.f32.gmra.mxu0 %v4526
  %v4989 = vpop.f32.mrf.mxu0
  %v4990 = vadd.f32 %v4961, %v4989
  %4991 = vmatmul.f32.gmra.mxu0 %v4529
  %v4992 = vpop.f32.mrf.mxu0
  %v4993 = vadd.f32 %v4964, %v4992
  %4994 = vdwg.mxu0
  %4995 = vmatpush.msra.mxu0 %v4478
  %4996 = vmatpush.msra.mxu0 %v4462
  %4997 = vmatpush.msra.mxu0 %v4446
  %4998 = vmatpush.msra.mxu0 %v4430
  %4999 = vmatpush.msra.mxu0 %v4414
  %5000 = vmatpush.msra.mxu0 %v4398
  %5001 = vmatpush.msra.mxu0 %v4382
  %5002 = vmatpush.msra.mxu0 %v4366
  %5003 = vmatpush.msra.mxu0 %v4350
  %5004 = vmatpush.msra.mxu0 %v4334
  %5005 = vmatpush.msra.mxu0 %v4318
  %5006 = vmatpush.msra.mxu0 %v4302
  %5007 = vmatpush.msra.mxu0 %v4286
  %5008 = vmatpush.msra.mxu0 %v4270
  %5009 = vmatpush.msra.mxu0 %v4254
  %5010 = vmatpush.msra.mxu0 %v4238
  %5011 = vmatmul.f32.gmra.mxu0 %v4222
  %v5012 = vpop.f32.mrf.mxu0
  %v5013 = vadd.f32 0.0, %v5012
  %5014 = vmatmul.f32.gmra.mxu0 %v4224
  %v5015 = vpop.f32.mrf.mxu0
  %v5016 = vadd.f32 0.0, %v5015
  %5017 = vmatmul.f32.gmra.mxu0 %v4226
  %v5018 = vpop.f32.mrf.mxu0
  %v5019 = vadd.f32 0.0, %v5018
  %5020 = vmatmul.f32.gmra.mxu0 %v4228
  %v5021 = vpop.f32.mrf.mxu0
  %v5022 = vadd.f32 0.0, %v5021
  %5023 = vdwg.mxu0
  %5024 = vmatpush.msra.mxu0 0.0
  %5025 = vmatpush.msra.mxu0 0.0
  %5026 = vmatpush.msra.mxu0 0.0
  %5027 = vmatpush.msra.mxu0 0.0
  %5028 = vmatpush.msra.mxu0 0.0
  %5029 = vmatpush.msra.mxu0 0.0
  %5030 = vmatpush.msra.mxu0 0.0
  %5031 = vmatpush.msra.mxu0 0.0
  %5032 = vmatpush.msra.mxu0 0.0
  %5033 = vmatpush.msra.mxu0 0.0
  %5034 = vmatpush.msra.mxu0 0.0
  %5035 = vmatpush.msra.mxu0 0.0
  %5036 = vmatpush.msra.mxu0 0.0
  %5037 = vmatpush.msra.mxu0 0.0
  %5038 = vmatpush.msra.mxu0 %v4510
  %5039 = vmatpush.msra.mxu0 %v4494
  %5040 = vmatmul.f32.gmra.mxu0 %v4520
  %v5041 = vpop.f32.mrf.mxu0
  %v5042 = vadd.f32 %v5013, %v5041
  %5043 = vmatmul.f32.gmra.mxu0 %v4523
  %v5044 = vpop.f32.mrf.mxu0
  %v5045 = vadd.f32 %v5016, %v5044
  %5046 = vmatmul.f32.gmra.mxu0 %v4526
  %v5047 = vpop.f32.mrf.mxu0
  %v5048 = vadd.f32 %v5019, %v5047
  %5049 = vmatmul.f32.gmra.mxu0 %v4529
  %v5050 = vpop.f32.mrf.mxu0
  %v5051 = vadd.f32 %v5022, %v5050
  %5052 = vdwg.mxu0
  %5053 = vmatpush.msra.mxu0 %v4479
  %5054 = vmatpush.msra.mxu0 %v4463
  %5055 = vmatpush.msra.mxu0 %v4447
  %5056 = vmatpush.msra.mxu0 %v4431
  %5057 = vmatpush.msra.mxu0 %v4415
  %5058 = vmatpush.msra.mxu0 %v4399
  %5059 = vmatpush.msra.mxu0 %v4383
  %5060 = vmatpush.msra.mxu0 %v4367
  %5061 = vmatpush.msra.mxu0 %v4351
  %5062 = vmatpush.msra.mxu0 %v4335
  %5063 = vmatpush.msra.mxu0 %v4319
  %5064 = vmatpush.msra.mxu0 %v4303
  %5065 = vmatpush.msra.mxu0 %v4287
  %5066 = vmatpush.msra.mxu0 %v4271
  %5067 = vmatpush.msra.mxu0 %v4255
  %5068 = vmatpush.msra.mxu0 %v4239
  %5069 = vmatmul.f32.gmra.mxu0 %v4222
  %v5070 = vpop.f32.mrf.mxu0
  %v5071 = vadd.f32 0.0, %v5070
  %5072 = vmatmul.f32.gmra.mxu0 %v4224
  %v5073 = vpop.f32.mrf.mxu0
  %v5074 = vadd.f32 0.0, %v5073
  %5075 = vmatmul.f32.gmra.mxu0 %v4226
  %v5076 = vpop.f32.mrf.mxu0
  %v5077 = vadd.f32 0.0, %v5076
  %5078 = vmatmul.f32.gmra.mxu0 %v4228
  %v5079 = vpop.f32.mrf.mxu0
  %v5080 = vadd.f32 0.0, %v5079
  %5081 = vdwg.mxu0
  %5082 = vmatpush.msra.mxu0 0.0
  %5083 = vmatpush.msra.mxu0 0.0
  %5084 = vmatpush.msra.mxu0 0.0
  %5085 = vmatpush.msra.mxu0 0.0
  %5086 = vmatpush.msra.mxu0 0.0
  %5087 = vmatpush.msra.mxu0 0.0
  %5088 = vmatpush.msra.mxu0 0.0
  %5089 = vmatpush.msra.mxu0 0.0
  %5090 = vmatpush.msra.mxu0 0.0
  %5091 = vmatpush.msra.mxu0 0.0
  %5092 = vmatpush.msra.mxu0 0.0
  %5093 = vmatpush.msra.mxu0 0.0
  %5094 = vmatpush.msra.mxu0 0.0
  %5095 = vmatpush.msra.mxu0 0.0
  %5096 = vmatpush.msra.mxu0 %v4511
  %5097 = vmatpush.msra.mxu0 %v4495
  %5098 = vmatmul.f32.gmra.mxu0 %v4520
  %v5099 = vpop.f32.mrf.mxu0
  %v5100 = vadd.f32 %v5071, %v5099
  %5101 = vmatmul.f32.gmra.mxu0 %v4523
  %v5102 = vpop.f32.mrf.mxu0
  %v5103 = vadd.f32 %v5074, %v5102
  %5104 = vmatmul.f32.gmra.mxu0 %v4526
  %v5105 = vpop.f32.mrf.mxu0
  %v5106 = vadd.f32 %v5077, %v5105
  %5107 = vmatmul.f32.gmra.mxu0 %v4529
  %v5108 = vpop.f32.mrf.mxu0
  %v5109 = vadd.f32 %v5080, %v5108
  %5110 = vdwg.mxu0
  %5111 = vmatpush.msra.mxu0 %v4480
  %5112 = vmatpush.msra.mxu0 %v4464
  %5113 = vmatpush.msra.mxu0 %v4448
  %5114 = vmatpush.msra.mxu0 %v4432
  %5115 = vmatpush.msra.mxu0 %v4416
  %5116 = vmatpush.msra.mxu0 %v4400
  %5117 = vmatpush.msra.mxu0 %v4384
  %5118 = vmatpush.msra.mxu0 %v4368
  %5119 = vmatpush.msra.mxu0 %v4352
  %5120 = vmatpush.msra.mxu0 %v4336
  %5121 = vmatpush.msra.mxu0 %v4320
  %5122 = vmatpush.msra.mxu0 %v4304
  %5123 = vmatpush.msra.mxu0 %v4288
  %5124 = vmatpush.msra.mxu0 %v4272
  %5125 = vmatpush.msra.mxu0 %v4256
  %5126 = vmatpush.msra.mxu0 %v4240
  %5127 = vmatmul.f32.gmra.mxu0 %v4222
  %v5128 = vpop.f32.mrf.mxu0
  %v5129 = vadd.f32 0.0, %v5128
  %5130 = vmatmul.f32.gmra.mxu0 %v4224
  %v5131 = vpop.f32.mrf.mxu0
  %v5132 = vadd.f32 0.0, %v5131
  %5133 = vmatmul.f32.gmra.mxu0 %v4226
  %v5134 = vpop.f32.mrf.mxu0
  %v5135 = vadd.f32 0.0, %v5134
  %5136 = vmatmul.f32.gmra.mxu0 %v4228
  %v5137 = vpop.f32.mrf.mxu0
  %v5138 = vadd.f32 0.0, %v5137
  %5139 = vdwg.mxu0
  %5140 = vmatpush.msra.mxu0 0.0
  %5141 = vmatpush.msra.mxu0 0.0
  %5142 = vmatpush.msra.mxu0 0.0
  %5143 = vmatpush.msra.mxu0 0.0
  %5144 = vmatpush.msra.mxu0 0.0
  %5145 = vmatpush.msra.mxu0 0.0
  %5146 = vmatpush.msra.mxu0 0.0
  %5147 = vmatpush.msra.mxu0 0.0
  %5148 = vmatpush.msra.mxu0 0.0
  %5149 = vmatpush.msra.mxu0 0.0
  %5150 = vmatpush.msra.mxu0 0.0
  %5151 = vmatpush.msra.mxu0 0.0
  %5152 = vmatpush.msra.mxu0 0.0
  %5153 = vmatpush.msra.mxu0 0.0
  %5154 = vmatpush.msra.mxu0 %v4512
  %5155 = vmatpush.msra.mxu0 %v4496
  %5156 = vmatmul.f32.gmra.mxu0 %v4520
  %v5157 = vpop.f32.mrf.mxu0
  %v5158 = vadd.f32 %v5129, %v5157
  %5159 = vmatmul.f32.gmra.mxu0 %v4523
  %v5160 = vpop.f32.mrf.mxu0
  %v5161 = vadd.f32 %v5132, %v5160
  %5162 = vmatmul.f32.gmra.mxu0 %v4526
  %v5163 = vpop.f32.mrf.mxu0
  %v5164 = vadd.f32 %v5135, %v5163
  %5165 = vmatmul.f32.gmra.mxu0 %v4529
  %v5166 = vpop.f32.mrf.mxu0
  %v5167 = vadd.f32 %v5138, %v5166
  %5168 = vdwg.mxu0
  %5169 = vmatpush.msra.mxu0 %v4481
  %5170 = vmatpush.msra.mxu0 %v4465
  %5171 = vmatpush.msra.mxu0 %v4449
  %5172 = vmatpush.msra.mxu0 %v4433
  %5173 = vmatpush.msra.mxu0 %v4417
  %5174 = vmatpush.msra.mxu0 %v4401
  %5175 = vmatpush.msra.mxu0 %v4385
  %5176 = vmatpush.msra.mxu0 %v4369
  %5177 = vmatpush.msra.mxu0 %v4353
  %5178 = vmatpush.msra.mxu0 %v4337
  %5179 = vmatpush.msra.mxu0 %v4321
  %5180 = vmatpush.msra.mxu0 %v4305
  %5181 = vmatpush.msra.mxu0 %v4289
  %5182 = vmatpush.msra.mxu0 %v4273
  %5183 = vmatpush.msra.mxu0 %v4257
  %5184 = vmatpush.msra.mxu0 %v4241
  %5185 = vmatmul.f32.gmra.mxu0 %v4222
  %v5186 = vpop.f32.mrf.mxu0
  %v5187 = vadd.f32 0.0, %v5186
  %5188 = vmatmul.f32.gmra.mxu0 %v4224
  %v5189 = vpop.f32.mrf.mxu0
  %v5190 = vadd.f32 0.0, %v5189
  %5191 = vmatmul.f32.gmra.mxu0 %v4226
  %v5192 = vpop.f32.mrf.mxu0
  %v5193 = vadd.f32 0.0, %v5192
  %5194 = vmatmul.f32.gmra.mxu0 %v4228
  %v5195 = vpop.f32.mrf.mxu0
  %v5196 = vadd.f32 0.0, %v5195
  %5197 = vdwg.mxu0
  %5198 = vmatpush.msra.mxu0 0.0
  %5199 = vmatpush.msra.mxu0 0.0
  %5200 = vmatpush.msra.mxu0 0.0
  %5201 = vmatpush.msra.mxu0 0.0
  %5202 = vmatpush.msra.mxu0 0.0
  %5203 = vmatpush.msra.mxu0 0.0
  %5204 = vmatpush.msra.mxu0 0.0
  %5205 = vmatpush.msra.mxu0 0.0
  %5206 = vmatpush.msra.mxu0 0.0
  %5207 = vmatpush.msra.mxu0 0.0
  %5208 = vmatpush.msra.mxu0 0.0
  %5209 = vmatpush.msra.mxu0 0.0
  %5210 = vmatpush.msra.mxu0 0.0
  %5211 = vmatpush.msra.mxu0 0.0
  %5212 = vmatpush.msra.mxu0 %v4513
  %5213 = vmatpush.msra.mxu0 %v4497
  %5214 = vmatmul.f32.gmra.mxu0 %v4520
  %v5215 = vpop.f32.mrf.mxu0
  %v5216 = vadd.f32 %v5187, %v5215
  %5217 = vmatmul.f32.gmra.mxu0 %v4523
  %v5218 = vpop.f32.mrf.mxu0
  %v5219 = vadd.f32 %v5190, %v5218
  %5220 = vmatmul.f32.gmra.mxu0 %v4526
  %v5221 = vpop.f32.mrf.mxu0
  %v5222 = vadd.f32 %v5193, %v5221
  %5223 = vmatmul.f32.gmra.mxu0 %v4529
  %v5224 = vpop.f32.mrf.mxu0
  %v5225 = vadd.f32 %v5196, %v5224
  %5226 = vdwg.mxu0
  %5227 = vmatpush.msra.mxu0 %v4482
  %5228 = vmatpush.msra.mxu0 %v4466
  %5229 = vmatpush.msra.mxu0 %v4450
  %5230 = vmatpush.msra.mxu0 %v4434
  %5231 = vmatpush.msra.mxu0 %v4418
  %5232 = vmatpush.msra.mxu0 %v4402
  %5233 = vmatpush.msra.mxu0 %v4386
  %5234 = vmatpush.msra.mxu0 %v4370
  %5235 = vmatpush.msra.mxu0 %v4354
  %5236 = vmatpush.msra.mxu0 %v4338
  %5237 = vmatpush.msra.mxu0 %v4322
  %5238 = vmatpush.msra.mxu0 %v4306
  %5239 = vmatpush.msra.mxu0 %v4290
  %5240 = vmatpush.msra.mxu0 %v4274
  %5241 = vmatpush.msra.mxu0 %v4258
  %5242 = vmatpush.msra.mxu0 %v4242
  %5243 = vmatmul.f32.gmra.mxu0 %v4222
  %v5244 = vpop.f32.mrf.mxu0
  %v5245 = vadd.f32 0.0, %v5244
  %5246 = vmatmul.f32.gmra.mxu0 %v4224
  %v5247 = vpop.f32.mrf.mxu0
  %v5248 = vadd.f32 0.0, %v5247
  %5249 = vmatmul.f32.gmra.mxu0 %v4226
  %v5250 = vpop.f32.mrf.mxu0
  %v5251 = vadd.f32 0.0, %v5250
  %5252 = vmatmul.f32.gmra.mxu0 %v4228
  %v5253 = vpop.f32.mrf.mxu0
  %v5254 = vadd.f32 0.0, %v5253
  %5255 = vdwg.mxu0
  %5256 = vmatpush.msra.mxu0 0.0
  %5257 = vmatpush.msra.mxu0 0.0
  %5258 = vmatpush.msra.mxu0 0.0
  %5259 = vmatpush.msra.mxu0 0.0
  %5260 = vmatpush.msra.mxu0 0.0
  %5261 = vmatpush.msra.mxu0 0.0
  %5262 = vmatpush.msra.mxu0 0.0
  %5263 = vmatpush.msra.mxu0 0.0
  %5264 = vmatpush.msra.mxu0 0.0
  %5265 = vmatpush.msra.mxu0 0.0
  %5266 = vmatpush.msra.mxu0 0.0
  %5267 = vmatpush.msra.mxu0 0.0
  %5268 = vmatpush.msra.mxu0 0.0
  %5269 = vmatpush.msra.mxu0 0.0
  %5270 = vmatpush.msra.mxu0 %v4514
  %5271 = vmatpush.msra.mxu0 %v4498
  %5272 = vmatmul.f32.gmra.mxu0 %v4520
  %v5273 = vpop.f32.mrf.mxu0
  %v5274 = vadd.f32 %v5245, %v5273
  %5275 = vmatmul.f32.gmra.mxu0 %v4523
  %v5276 = vpop.f32.mrf.mxu0
  %v5277 = vadd.f32 %v5248, %v5276
  %5278 = vmatmul.f32.gmra.mxu0 %v4526
  %v5279 = vpop.f32.mrf.mxu0
  %v5280 = vadd.f32 %v5251, %v5279
  %5281 = vmatmul.f32.gmra.mxu0 %v4529
  %v5282 = vpop.f32.mrf.mxu0
  %v5283 = vadd.f32 %v5254, %v5282
  %5284 = vdwg.mxu0
  %5285 = vmatpush.msra.mxu0 %v4483
  %5286 = vmatpush.msra.mxu0 %v4467
  %5287 = vmatpush.msra.mxu0 %v4451
  %5288 = vmatpush.msra.mxu0 %v4435
  %5289 = vmatpush.msra.mxu0 %v4419
  %5290 = vmatpush.msra.mxu0 %v4403
  %5291 = vmatpush.msra.mxu0 %v4387
  %5292 = vmatpush.msra.mxu0 %v4371
  %5293 = vmatpush.msra.mxu0 %v4355
  %5294 = vmatpush.msra.mxu0 %v4339
  %5295 = vmatpush.msra.mxu0 %v4323
  %5296 = vmatpush.msra.mxu0 %v4307
  %5297 = vmatpush.msra.mxu0 %v4291
  %5298 = vmatpush.msra.mxu0 %v4275
  %5299 = vmatpush.msra.mxu0 %v4259
  %5300 = vmatpush.msra.mxu0 %v4243
  %5301 = vmatmul.f32.gmra.mxu0 %v4222
  %v5302 = vpop.f32.mrf.mxu0
  %v5303 = vadd.f32 0.0, %v5302
  %5304 = vmatmul.f32.gmra.mxu0 %v4224
  %v5305 = vpop.f32.mrf.mxu0
  %v5306 = vadd.f32 0.0, %v5305
  %5307 = vmatmul.f32.gmra.mxu0 %v4226
  %v5308 = vpop.f32.mrf.mxu0
  %v5309 = vadd.f32 0.0, %v5308
  %5310 = vmatmul.f32.gmra.mxu0 %v4228
  %v5311 = vpop.f32.mrf.mxu0
  %v5312 = vadd.f32 0.0, %v5311
  %5313 = vdwg.mxu0
  %5314 = vmatpush.msra.mxu0 0.0
  %5315 = vmatpush.msra.mxu0 0.0
  %5316 = vmatpush.msra.mxu0 0.0
  %5317 = vmatpush.msra.mxu0 0.0
  %5318 = vmatpush.msra.mxu0 0.0
  %5319 = vmatpush.msra.mxu0 0.0
  %5320 = vmatpush.msra.mxu0 0.0
  %5321 = vmatpush.msra.mxu0 0.0
  %5322 = vmatpush.msra.mxu0 0.0
  %5323 = vmatpush.msra.mxu0 0.0
  %5324 = vmatpush.msra.mxu0 0.0
  %5325 = vmatpush.msra.mxu0 0.0
  %5326 = vmatpush.msra.mxu0 0.0
  %5327 = vmatpush.msra.mxu0 0.0
  %5328 = vmatpush.msra.mxu0 %v4515
  %5329 = vmatpush.msra.mxu0 %v4499
  %5330 = vmatmul.f32.gmra.mxu0 %v4520
  %v5331 = vpop.f32.mrf.mxu0
  %v5332 = vadd.f32 %v5303, %v5331
  %5333 = vmatmul.f32.gmra.mxu0 %v4523
  %v5334 = vpop.f32.mrf.mxu0
  %v5335 = vadd.f32 %v5306, %v5334
  %5336 = vmatmul.f32.gmra.mxu0 %v4526
  %v5337 = vpop.f32.mrf.mxu0
  %v5338 = vadd.f32 %v5309, %v5337
  %5339 = vmatmul.f32.gmra.mxu0 %v4529
  %v5340 = vpop.f32.mrf.mxu0
  %v5341 = vadd.f32 %v5312, %v5340
  %5342 = vdwg.mxu0
  %5343 = vmatpush.msra.mxu0 %v4484
  %5344 = vmatpush.msra.mxu0 %v4468
  %5345 = vmatpush.msra.mxu0 %v4452
  %5346 = vmatpush.msra.mxu0 %v4436
  %5347 = vmatpush.msra.mxu0 %v4420
  %5348 = vmatpush.msra.mxu0 %v4404
  %5349 = vmatpush.msra.mxu0 %v4388
  %5350 = vmatpush.msra.mxu0 %v4372
  %5351 = vmatpush.msra.mxu0 %v4356
  %5352 = vmatpush.msra.mxu0 %v4340
  %5353 = vmatpush.msra.mxu0 %v4324
  %5354 = vmatpush.msra.mxu0 %v4308
  %5355 = vmatpush.msra.mxu0 %v4292
  %5356 = vmatpush.msra.mxu0 %v4276
  %5357 = vmatpush.msra.mxu0 %v4260
  %5358 = vmatpush.msra.mxu0 %v4244
  %5359 = vmatmul.f32.gmra.mxu0 %v4222
  %v5360 = vpop.f32.mrf.mxu0
  %v5361 = vadd.f32 0.0, %v5360
  %5362 = vmatmul.f32.gmra.mxu0 %v4224
  %v5363 = vpop.f32.mrf.mxu0
  %v5364 = vadd.f32 0.0, %v5363
  %5365 = vmatmul.f32.gmra.mxu0 %v4226
  %v5366 = vpop.f32.mrf.mxu0
  %v5367 = vadd.f32 0.0, %v5366
  %5368 = vmatmul.f32.gmra.mxu0 %v4228
  %v5369 = vpop.f32.mrf.mxu0
  %v5370 = vadd.f32 0.0, %v5369
  %5371 = vdwg.mxu0
  %5372 = vmatpush.msra.mxu0 0.0
  %5373 = vmatpush.msra.mxu0 0.0
  %5374 = vmatpush.msra.mxu0 0.0
  %5375 = vmatpush.msra.mxu0 0.0
  %5376 = vmatpush.msra.mxu0 0.0
  %5377 = vmatpush.msra.mxu0 0.0
  %5378 = vmatpush.msra.mxu0 0.0
  %5379 = vmatpush.msra.mxu0 0.0
  %5380 = vmatpush.msra.mxu0 0.0
  %5381 = vmatpush.msra.mxu0 0.0
  %5382 = vmatpush.msra.mxu0 0.0
  %5383 = vmatpush.msra.mxu0 0.0
  %5384 = vmatpush.msra.mxu0 0.0
  %5385 = vmatpush.msra.mxu0 0.0
  %5386 = vmatpush.msra.mxu0 %v4516
  %5387 = vmatpush.msra.mxu0 %v4500
  %5388 = vmatmul.f32.gmra.mxu0 %v4520
  %v5389 = vpop.f32.mrf.mxu0
  %v5390 = vadd.f32 %v5361, %v5389
  %5391 = vmatmul.f32.gmra.mxu0 %v4523
  %v5392 = vpop.f32.mrf.mxu0
  %v5393 = vadd.f32 %v5364, %v5392
  %5394 = vmatmul.f32.gmra.mxu0 %v4526
  %v5395 = vpop.f32.mrf.mxu0
  %v5396 = vadd.f32 %v5367, %v5395
  %5397 = vmatmul.f32.gmra.mxu0 %v4529
  %v5398 = vpop.f32.mrf.mxu0
  %v5399 = vadd.f32 %v5370, %v5398
  %5400 = vdwg.mxu0
  %5401 = vmatpush.msra.mxu0 %v4485
  %5402 = vmatpush.msra.mxu0 %v4469
  %5403 = vmatpush.msra.mxu0 %v4453
  %5404 = vmatpush.msra.mxu0 %v4437
  %5405 = vmatpush.msra.mxu0 %v4421
  %5406 = vmatpush.msra.mxu0 %v4405
  %5407 = vmatpush.msra.mxu0 %v4389
  %5408 = vmatpush.msra.mxu0 %v4373
  %5409 = vmatpush.msra.mxu0 %v4357
  %5410 = vmatpush.msra.mxu0 %v4341
  %5411 = vmatpush.msra.mxu0 %v4325
  %5412 = vmatpush.msra.mxu0 %v4309
  %5413 = vmatpush.msra.mxu0 %v4293
  %5414 = vmatpush.msra.mxu0 %v4277
  %5415 = vmatpush.msra.mxu0 %v4261
  %5416 = vmatpush.msra.mxu0 %v4245
  %5417 = vmatmul.f32.gmra.mxu0 %v4222
  %v5418 = vpop.f32.mrf.mxu0
  %v5419 = vadd.f32 0.0, %v5418
  %5420 = vmatmul.f32.gmra.mxu0 %v4224
  %v5421 = vpop.f32.mrf.mxu0
  %v5422 = vadd.f32 0.0, %v5421
  %5423 = vmatmul.f32.gmra.mxu0 %v4226
  %v5424 = vpop.f32.mrf.mxu0
  %v5425 = vadd.f32 0.0, %v5424
  %5426 = vmatmul.f32.gmra.mxu0 %v4228
  %v5427 = vpop.f32.mrf.mxu0
  %v5428 = vadd.f32 0.0, %v5427
  %5429 = vdwg.mxu0
  %5430 = vmatpush.msra.mxu0 0.0
  %5431 = vmatpush.msra.mxu0 0.0
  %5432 = vmatpush.msra.mxu0 0.0
  %5433 = vmatpush.msra.mxu0 0.0
  %5434 = vmatpush.msra.mxu0 0.0
  %5435 = vmatpush.msra.mxu0 0.0
  %5436 = vmatpush.msra.mxu0 0.0
  %5437 = vmatpush.msra.mxu0 0.0
  %5438 = vmatpush.msra.mxu0 0.0
  %5439 = vmatpush.msra.mxu0 0.0
  %5440 = vmatpush.msra.mxu0 0.0
  %5441 = vmatpush.msra.mxu0 0.0
  %5442 = vmatpush.msra.mxu0 0.0
  %5443 = vmatpush.msra.mxu0 0.0
  %5444 = vmatpush.msra.mxu0 %v4517
  %5445 = vmatpush.msra.mxu0 %v4501
  %5446 = vmatmul.f32.gmra.mxu0 %v4520
  %v5447 = vpop.f32.mrf.mxu0
  %v5448 = vadd.f32 %v5419, %v5447
  %5449 = vmatmul.f32.gmra.mxu0 %v4523
  %v5450 = vpop.f32.mrf.mxu0
  %v5451 = vadd.f32 %v5422, %v5450
  %5452 = vmatmul.f32.gmra.mxu0 %v4526
  %v5453 = vpop.f32.mrf.mxu0
  %v5454 = vadd.f32 %v5425, %v5453
  %5455 = vmatmul.f32.gmra.mxu0 %v4529
  %v5456 = vpop.f32.mrf.mxu0
  %v5457 = vadd.f32 %v5428, %v5456
  %5458 = vdwg.mxu0
  %5459 = vst [vmem:[%s3] sm:$0xff] %v4578
  %5460 = vst [vmem:[%s3 + $0x8] sm:$0xff] %v4636
  %5461 = vst [vmem:[%s3 + $0x10] sm:$0xff] %v4694
  %5462 = vst [vmem:[%s3 + $0x18] sm:$0xff] %v4752
  %5463 = vst [vmem:[%s3 + $0x20] sm:$0xff] %v4810
  %5464 = vst [vmem:[%s3 + $0x28] sm:$0xff] %v4868
  %5465 = vst [vmem:[%s3 + $0x30] sm:$0xff] %v4926
  %5466 = vst [vmem:[%s3 + $0x38] sm:$0xff] %v4984
  %5467 = vst [vmem:[%s3 + $0x40] sm:$0xff] %v5042
  %5468 = vst [vmem:[%s3 + $0x48] sm:$0xff] %v5100
  %5469 = vst [vmem:[%s3 + $0x50] sm:$0xff] %v5158
  %5470 = vst [vmem:[%s3 + $0x58] sm:$0xff] %v5216
  %5471 = vst [vmem:[%s3 + $0x60] sm:$0xff] %v5274
  %5472 = vst [vmem:[%s3 + $0x68] sm:$0xff] %v5332
  %5473 = vst [vmem:[%s3 + $0x70] sm:$0xff] %v5390
  %5474 = vst [vmem:[%s3 + $0x78] sm:$0xff] %v5448
  %5475 = vst [vmem:[%s3 + $0x80] sm:$0xff] %v4581
  %5476 = vst [vmem:[%s3 + $0x88] sm:$0xff] %v4639
  %5477 = vst [vmem:[%s3 + $0x90] sm:$0xff] %v4697
  %5478 = vst [vmem:[%s3 + $0x98] sm:$0xff] %v4755
  %5479 = vst [vmem:[%s3 + $0xa0] sm:$0xff] %v4813
  %5480 = vst [vmem:[%s3 + $0xa8] sm:$0xff] %v4871
  %5481 = vst [vmem:[%s3 + $0xb0] sm:$0xff] %v4929
  %5482 = vst [vmem:[%s3 + $0xb8] sm:$0xff] %v4987
  %5483 = vst [vmem:[%s3 + $0xc0] sm:$0xff] %v5045
  %5484 = vst [vmem:[%s3 + $0xc8] sm:$0xff] %v5103
  %5485 = vst [vmem:[%s3 + $0xd0] sm:$0xff] %v5161
  %5486 = vst [vmem:[%s3 + $0xd8] sm:$0xff] %v5219
  %5487 = vst [vmem:[%s3 + $0xe0] sm:$0xff] %v5277
  %5488 = vst [vmem:[%s3 + $0xe8] sm:$0xff] %v5335
  %5489 = vst [vmem:[%s3 + $0xf0] sm:$0xff] %v5393
  %5490 = vst [vmem:[%s3 + $0xf8] sm:$0xff] %v5451
  %5491 = vst [vmem:[%s3 + $0x100] sm:$0xff] %v4584
  %5492 = vst [vmem:[%s3 + $0x108] sm:$0xff] %v4642
  %5493 = vst [vmem:[%s3 + $0x110] sm:$0xff] %v4700
  %5494 = vst [vmem:[%s3 + $0x118] sm:$0xff] %v4758
  %5495 = vst [vmem:[%s3 + $0x120] sm:$0xff] %v4816
  %5496 = vst [vmem:[%s3 + $0x128] sm:$0xff] %v4874
  %5497 = vst [vmem:[%s3 + $0x130] sm:$0xff] %v4932
  %5498 = vst [vmem:[%s3 + $0x138] sm:$0xff] %v4990
  %5499 = vst [vmem:[%s3 + $0x140] sm:$0xff] %v5048
  %5500 = vst [vmem:[%s3 + $0x148] sm:$0xff] %v5106
  %5501 = vst [vmem:[%s3 + $0x150] sm:$0xff] %v5164
  %5502 = vst [vmem:[%s3 + $0x158] sm:$0xff] %v5222
  %5503 = vst [vmem:[%s3 + $0x160] sm:$0xff] %v5280
  %5504 = vst [vmem:[%s3 + $0x168] sm:$0xff] %v5338
  %5505 = vst [vmem:[%s3 + $0x170] sm:$0xff] %v5396
  %5506 = vst [vmem:[%s3 + $0x178] sm:$0xff] %v5454
  %5507 = vst [vmem:[%s3 + $0x180] sm:$0xff] %v4587
  %5508 = vst [vmem:[%s3 + $0x188] sm:$0xff] %v4645
  %5509 = vst [vmem:[%s3 + $0x190] sm:$0xff] %v4703
  %5510 = vst [vmem:[%s3 + $0x198] sm:$0xff] %v4761
  %5511 = vst [vmem:[%s3 + $0x1a0] sm:$0xff] %v4819
  %5512 = vst [vmem:[%s3 + $0x1a8] sm:$0xff] %v4877
  %5513 = vst [vmem:[%s3 + $0x1b0] sm:$0xff] %v4935
  %5514 = vst [vmem:[%s3 + $0x1b8] sm:$0xff] %v4993
  %5515 = vst [vmem:[%s3 + $0x1c0] sm:$0xff] %v5051
  %5516 = vst [vmem:[%s3 + $0x1c8] sm:$0xff] %v5109
  %5517 = vst [vmem:[%s3 + $0x1d0] sm:$0xff] %v5167
  %5518 = vst [vmem:[%s3 + $0x1d8] sm:$0xff] %v5225
  %5519 = vst [vmem:[%s3 + $0x1e0] sm:$0xff] %v5283
  %5520 = vst [vmem:[%s3 + $0x1e8] sm:$0xff] %v5341
  %5521 = vst [vmem:[%s3 + $0x1f0] sm:$0xff] %v5399
  %5522 = vst [vmem:[%s3 + $0x1f8] sm:$0xff] %v5457
  // Predicated region
  $region14: #{forward.1} parent=0 // pred_check
    _
  $region15: #{forward.1} parent=0 // pred_check_branch
    %5524 = sbr.rel (0) target = $region17
  $region16: #{forward.1} parent=0 // pred_region
    _
  $region17: #{forward.1} parent=0 // pred_fallthru
    _
  // Predicated region
  $region18: #{forward.1} parent=0 // pred_check
    _
  $region19: #{forward.1} parent=0 // pred_check_branch
    %5526 = sbr.rel (0) target = $region21
  $region20: #{forward.1} parent=0 // pred_region
    _
  $region21: #{forward.1} parent=0 // pred_fallthru
    _

</llo_original>
